<compile_context>
chip_gen: v7x
topology: tpu7x:2x2x1
jax: 0.10.0
libtpu: 0.0.40
codegen_flags: <defaults>
</compile_context>

<pallas_src>
import functools

import jax
import jax.numpy as jnp
from jax import lax
from jax.experimental import pallas as pl
from jax.experimental.pallas import tpu as pltpu

EPS = 1e-5
LRELU_SLOPE = 0.2
Y_PAD = 128                       # 100 label features padded to one lane tile
C0P, C1P, C2P, C3P, C4P = 128, 128, 256, 384, 128   # 101,120,250,270,100 padded
# feature-map heights are fixed by the module: 16 -> 13 -> 10 -> 7 -> 4 -> 1


def _round_up(x, m):
    return (x + m - 1) // m * m


# ----------------------------------------------------------------------------
# In-kernel helpers (traced inside the single fused kernel)
# ----------------------------------------------------------------------------
def _conv_blocks(src_ref, w_ref, batch, h_in, h_out, k_pad, yc=None, taps=4):
    """Per-batch (h_out, Cout) f32 pre-activation blocks via accumulating
    shift-matmuls:  acc += src[b*h_in+kh : +h_out, :] @ W_kh   (no im2col)."""
    blocks = []
    for b in range(batch):                      # static, tiny batch
        acc = None
        for kh in range(taps):                  # static 4 taps
            a = src_ref[b * h_in + kh: b * h_in + kh + h_out, :].astype(jnp.bfloat16)
            w = w_ref[kh * k_pad: (kh + 1) * k_pad, :]
            d = jnp.dot(a, w, preferred_element_type=jnp.float32)
            acc = d if acc is None else acc + d
        if yc is not None:
            acc = acc + yc[b:b + 1, :]          # broadcast label contribution
        blocks.append(acc)
    return blocks


def _bn_lrelu(blocks, n_rows, bn_ref):
    """bias-add + train-mode BatchNorm (biased var over all n_rows rows) +
    LeakyReLU, computed from per-batch blocks without concatenation."""
    bias = bn_ref[0:1, :]
    gamma = bn_ref[1:2, :]
    beta = bn_ref[2:3, :]
    pre = [blk + bias for blk in blocks]
    total = pre[0].sum(axis=0, keepdims=True)
    for blk in pre[1:]:
        total = total + blk.sum(axis=0, keepdims=True)
    mean = total * (1.0 / n_rows)
    ssq = jnp.sum((pre[0] - mean) ** 2, axis=0, keepdims=True)
    for blk in pre[1:]:
        ssq = ssq + jnp.sum((blk - mean) ** 2, axis=0, keepdims=True)
    scale = gamma * lax.rsqrt(ssq * (1.0 / n_rows) + EPS)
    outs = []
    for blk in pre:
        h = (blk - mean) * scale + beta
        outs.append(jnp.where(h >= 0.0, h, LRELU_SLOPE * h))
    return outs


def _store_blocks(dst_ref, blocks, h_out):
    for b, blk in enumerate(blocks):
        dst_ref[b * h_out:(b + 1) * h_out, :] = blk.astype(dst_ref.dtype)


# ----------------------------------------------------------------------------
# The fused kernel
# ----------------------------------------------------------------------------
def _disc_kernel(x_ref, y_ref,
                 w0x_ref, w0y_ref, bn0_ref,
                 w1_ref, bn1_ref,
                 w2h_ref, w2y_ref, bn2_ref,
                 w3_ref, bn3_ref,
                 wl1_ref, bn1d_ref,
                 wl2h_ref, wl2y_ref, bl2_ref,
                 fm_ref, sig_ref, raw_ref,
                 h1_ref, h2_ref, h3_ref,
                 *, batch, p_pad):
    B = batch
    y_f32 = y_ref[...]                                  # (B, 128) f32
    y_bf = y_f32.astype(jnp.bfloat16)

    # conv_cond_concat's broadcast label channels collapse to per-batch vectors
    yc0 = jnp.dot(y_bf, w0y_ref[...], preferred_element_type=jnp.float32)  # (B, C0P)
    yc2 = jnp.dot(y_bf, w2y_ref[...], preferred_element_type=jnp.float32)  # (B, C2P)

    # ---- h0 = lrelu(bn0(h0_prev(cat(x, yb)))) ; fm output ref is the h0 buffer
    blocks = _conv_blocks(x_ref, w0x_ref, B, 16, 13, p_pad, yc=yc0)
    blocks = _bn_lrelu(blocks, B * 13, bn0_ref)
    _store_blocks(fm_ref, blocks, 13)

    # ---- h1 = lrelu(bn1(h1_prev(h0)))
    blocks = _bn_lrelu(_conv_blocks(fm_ref, w1_ref, B, 13, 10, C0P), B * 10, bn1_ref)
    _store_blocks(h1_ref, blocks, 10)

    # ---- h2 = lrelu(bn2(h2_prev(cat(h1, yb))))   (label part via split-K yc2)
    blocks = _bn_lrelu(_conv_blocks(h1_ref, w2h_ref, B, 10, 7, C1P, yc=yc2),
                       B * 7, bn2_ref)
    _store_blocks(h2_ref, blocks, 7)

    # ---- h3 = lrelu(bn3(h3_prev(h2)))
    blocks = _bn_lrelu(_conv_blocks(h2_ref, w3_ref, B, 7, 4, C2P), B * 4, bn3_ref)
    _store_blocks(h3_ref, blocks, 4)

    # ---- head: linear1 (as a 4-tap contraction) -> bn1d -> lrelu
    blocks = _bn_lrelu(_conv_blocks(h3_ref, wl1_ref, B, 4, 1, C3P), B, bn1d_ref)

    # ---- cat(h4, y) -> linear2 -> sigmoid, as VPU multiply + lane reductions
    wl2h = wl2h_ref[...]
    wl2y = wl2y_ref[...]
    bl2 = bl2_ref[...]
    for b, h4 in enumerate(blocks):                     # h4: (1, C4P) f32
        h5 = (jnp.sum(h4 * wl2h, axis=-1, keepdims=True)
              + jnp.sum(y_f32[b:b + 1, :] * wl2y, axis=-1, keepdims=True)
              + bl2)
        raw_ref[b:b + 1, :] = h5
        sig_ref[b:b + 1, :] = jax.nn.sigmoid(h5)


# ----------------------------------------------------------------------------
# pallas_call wrapper (single launch, grid=(1,), everything as full VMEM blocks)
# ----------------------------------------------------------------------------
def _full(shape):
    n = len(shape)
    return pl.BlockSpec(shape, lambda i: (0,) * n)


def fused_discriminator(x2d, y_emb, q, batch, p_pad):
    B = batch
    kernel = functools.partial(_disc_kernel, batch=B, p_pad=p_pad)
    args = (x2d, y_emb,
            q["w0x"], q["w0y"], q["bn0"],
            q["w1"], q["bn1"],
            q["w2h"], q["w2y"], q["bn2"],
            q["w3"], q["bn3"],
            q["wl1"], q["bn1d"],
            q["wl2h"], q["wl2y"], q["bl2"])
    in_specs = [_full(a.shape) for a in args]
    out_shape = (jax.ShapeDtypeStruct((B * 13, C0P), jnp.float32),   # fm slab (h0)
                 jax.ShapeDtypeStruct((B, 1), jnp.float32),          # sigmoid(h5)
                 jax.ShapeDtypeStruct((B, 1), jnp.float32))          # h5
    out_specs = (_full((B * 13, C0P)), _full((B, 1)), _full((B, 1)))
    scratch = [pltpu.VMEM((B * 10, C1P), jnp.float32),   # h1
               pltpu.VMEM((B * 7, C2P), jnp.float32),    # h2
               pltpu.VMEM((B * 4, C3P), jnp.float32)]    # h3

    flops = 2 * B * (13 * 4 * p_pad * C0P + Y_PAD * C0P
                     + 10 * 4 * C0P * C1P
                     + 7 * 4 * C1P * C2P + Y_PAD * C2P
                     + 4 * 4 * C2P * C3P
                     + 4 * C3P * C4P
                     + 2 * C4P)
    bytes_accessed = int(sum(a.size * a.dtype.itemsize for a in args)
                         + (B * 13 * C0P + 2 * B) * 4)
    return pl.pallas_call(
        kernel,
        out_shape=out_shape,
        grid=(1,),
        in_specs=in_specs,
        out_specs=out_specs,
        scratch_shapes=scratch,
        compiler_params=pltpu.CompilerParams(dimension_semantics=("arbitrary",)),
        cost_estimate=pl.CostEstimate(flops=int(flops),
                                      transcendentals=1024 + 2 * B,
                                      bytes_accessed=bytes_accessed),
    )(*args)


# ----------------------------------------------------------------------------
# Parameters: PyTorch-shaped init, then one-time padded/bf16 re-layout
# ----------------------------------------------------------------------------
def init_params(key, pitch_range):
    P = pitch_range
    keys = jax.random.split(key, 32)
    nrm = lambda k, shape, s=0.05: s * jax.random.normal(k, shape, dtype=jnp.float32)
    p = {}
    p["h0_prev_w"] = nrm(keys[0], (101, 101, 4, P))   # Conv2d(101,101,(4,P))
    p["h0_prev_b"] = nrm(keys[1], (101,))
    p["h1_prev_w"] = nrm(keys[2], (120, 101, 4, 1))   # Conv2d(101,120,(4,1))
    p["h1_prev_b"] = nrm(keys[3], (120,))
    p["h2_prev_w"] = nrm(keys[4], (250, 220, 4, 1))   # Conv2d(220,250,(4,1))
    p["h2_prev_b"] = nrm(keys[5], (250,))
    p["h3_prev_w"] = nrm(keys[6], (270, 250, 4, 1))   # Conv2d(250,270,(4,1))
    p["h3_prev_b"] = nrm(keys[7], (270,))
    p["linear1_w"] = nrm(keys[8], (100, 1080))        # Linear(1080, 100)
    p["linear1_b"] = nrm(keys[9], (100,))
    p["linear2_w"] = nrm(keys[10], (1, 200))          # Linear(200, 1)
    p["linear2_b"] = nrm(keys[11], (1,))
    p["emb"] = nrm(keys[12], (25, 100), s=1.0)        # Embedding(25, 100)
    for i, (name, c) in enumerate((("bn0", 101), ("bn1", 120), ("bn2", 250),
                                   ("bn3", 270), ("bn1d", 100))):
        p[name + "_g"] = 1.0 + nrm(keys[13 + i], (c,), 0.1)
        p[name + "_beta"] = nrm(keys[20 + i], (c,), 0.1)
    return p


def _padded_row(v, n):
    return jnp.pad(v, (0, n - v.shape[0])).reshape(1, n).astype(jnp.float32)


def _bn_pack(bias, gamma, beta, n):
    # rows: [bias; gamma; beta], zero-padded lanes (padded channels output 0)
    return jnp.concatenate([_padded_row(bias, n), _padded_row(gamma, n),
                            _padded_row(beta, n)], axis=0)


def prepare_params(p, pitch_range):
    """One-time weight re-layouts: split-K for the label channels, per-tap
    matmul blocks, channel padding to 128 multiples, bf16 MXU weights."""
    P = pitch_range
    Pp = _round_up(P, 128)
    bf = jnp.bfloat16
    q = {}
    # h0_prev over conv_cond_concat(x, yb): x-channel taps + collapsed label part
    w0x = p["h0_prev_w"][:, 0, :, :].transpose(1, 2, 0)            # (4, P, 101)
    w0x = jnp.pad(w0x, ((0, 0), (0, Pp - P), (0, C0P - 101)))
    q["w0x"] = w0x.reshape(4 * Pp, C0P).astype(bf)
    w0y = p["h0_prev_w"][:, 1:, :, :].sum(axis=(2, 3)).T           # (100, 101)
    q["w0y"] = jnp.pad(w0y, ((0, Y_PAD - 100), (0, C0P - 101))).astype(bf)
    q["bn0"] = _bn_pack(p["h0_prev_b"], p["bn0_g"], p["bn0_beta"], C0P)
    # h1_prev (plain (4,1) conv)
    w1 = p["h1_prev_w"][:, :, :, 0].transpose(2, 1, 0)             # (4, 101, 120)
    w1 = jnp.pad(w1, ((0, 0), (0, C0P - 101), (0, C1P - 120)))
    q["w1"] = w1.reshape(4 * C0P, C1P).astype(bf)
    q["bn1"] = _bn_pack(p["h1_prev_b"], p["bn1_g"], p["bn1_beta"], C1P)
    # h2_prev over conv_cond_concat(h1, yb): split [h1(120ch) ; y(100ch)]
    w2h = p["h2_prev_w"][:, :120, :, 0].transpose(2, 1, 0)         # (4, 120, 250)
    w2h = jnp.pad(w2h, ((0, 0), (0, C1P - 120), (0, C2P - 250)))
    q["w2h"] = w2h.reshape(4 * C1P, C2P).astype(bf)
    w2y = p["h2_prev_w"][:, 120:, :, 0].sum(axis=2).T              # (100, 250)
    q["w2y"] = jnp.pad(w2y, ((0, Y_PAD - 100), (0, C2P - 250))).astype(bf)
    q["bn2"] = _bn_pack(p["h2_prev_b"], p["bn2_g"], p["bn2_beta"], C2P)
    # h3_prev
    w3 = p["h3_prev_w"][:, :, :, 0].transpose(2, 1, 0)             # (4, 250, 270)
    w3 = jnp.pad(w3, ((0, 0), (0, C2P - 250), (0, C3P - 270)))
    q["w3"] = w3.reshape(4 * C2P, C3P).astype(bf)
    q["bn3"] = _bn_pack(p["h3_prev_b"], p["bn3_g"], p["bn3_beta"], C3P)
    # linear1: permute PyTorch's NCHW flatten (c*4+h) into per-tap (270,100) blocks
    wl1 = p["linear1_w"].reshape(100, 270, 4).transpose(2, 1, 0)   # (4, 270, 100)
    wl1 = jnp.pad(wl1, ((0, 0), (0, C3P - 270), (0, C4P - 100)))
    q["wl1"] = wl1.reshape(4 * C3P, C4P).astype(bf)
    q["bn1d"] = _bn_pack(p["linear1_b"], p["bn1d_g"], p["bn1d_beta"], C4P)
    # linear2: split-K rows for torch.cat((h4, y), 1), evaluated as lane reduces
    q["wl2h"] = jnp.pad(p["linear2_w"][:, :100],
                        ((0, 0), (0, C4P - 100))).astype(jnp.float32)
    q["wl2y"] = jnp.pad(p["linear2_w"][:, 100:],
                        ((0, 0), (0, Y_PAD - 100))).astype(jnp.float32)
    q["bl2"] = p["linear2_b"].reshape(1, 1).astype(jnp.float32)
    # embedding table padded to 128 lanes (padded features are zero everywhere)
    q["emb"] = jnp.pad(p["emb"], ((0, 0), (0, Y_PAD - 100))).astype(jnp.float32)
    return q


# ----------------------------------------------------------------------------
# Forward pass (jitted at the call site)
# ----------------------------------------------------------------------------
def discriminator_forward(params, x, y, batch_size, pitch_range):
    """Returns (h5_sigmoid, h5, fm) like the PyTorch module (train-mode BN)."""
    B, P = batch_size, pitch_range
    Pp = _round_up(P, 128)
    q = params

    y_emb = q["emb"][y]                                # (B, 128) embedding gather
    x2d = x.reshape(B * 16, P)                         # W axis (pitch) -> lanes
    if Pp != P:
        x2d = jnp.pad(x2d, ((0, 0), (0, Pp - P)))
    x2d = x2d.astype(jnp.float32)

    fm_slab, h5_sig, h5 = fused_discriminator(x2d, y_emb, q, B, Pp)

    # fm back to NCHW (B, 101, 13, 1); padded channels (101..127) are dropped
    fm = fm_slab.reshape(B, 13, C0P)[:, :, :101].transpose(0, 2, 1)[..., None]
    return h5_sig, h5, fm


# ----------------------------------------------------------------------------
if __name__ == "__main__":
    B = 2
    PITCH_RANGE = 128   # standard MidiNet pitch range; x is (B, 1, 16, PITCH_RANGE)

    key = jax.random.PRNGKey(0)
    kp, kx, ky = jax.random.split(key, 3)

    raw = init_params(kp, PITCH_RANGE)
    params = prepare_params(raw, PITCH_RANGE)

    x = jax.random.normal(kx, (B, 1, 16, PITCH_RANGE), dtype=jnp.float32)
    y = jax.random.randint(ky, (B,), 0, 25)

    fwd = jax.jit(discriminator_forward, static_argnums=(3, 4))
    h5_sig, h5, fm = fwd(params, x, y, B, PITCH_RANGE)
    jax.block_until_ready((h5_sig, h5, fm))

    assert h5_sig.shape == (B, 1) and h5.shape == (B, 1), (h5_sig.shape, h5.shape)
    assert fm.shape == (B, 101, 13, 1), fm.shape
    assert h5_sig.dtype == jnp.float32 and h5.dtype == jnp.float32
    assert bool(jnp.all((h5_sig >= 0.0) & (h5_sig <= 1.0)))   # sigmoid range
    assert bool(jnp.all(jnp.isfinite(h5))) and bool(jnp.all(jnp.isfinite(fm)))
    print("KERNEL_OK")
</pallas_src>

<mosaic_0001>
module attributes {stable_mosaic.version = 11 : i64} {
  func.func @_disc_kernel(%arg0: i32, %arg1: memref<32x128xf32, #tpu.memory_space<vmem>>, %arg2: memref<2x128xf32, #tpu.memory_space<vmem>>, %arg3: memref<512x128xbf16, #tpu.memory_space<vmem>>, %arg4: memref<128x128xbf16, #tpu.memory_space<vmem>>, %arg5: memref<3x128xf32, #tpu.memory_space<vmem>>, %arg6: memref<512x128xbf16, #tpu.memory_space<vmem>>, %arg7: memref<3x128xf32, #tpu.memory_space<vmem>>, %arg8: memref<512x256xbf16, #tpu.memory_space<vmem>>, %arg9: memref<128x256xbf16, #tpu.memory_space<vmem>>, %arg10: memref<3x256xf32, #tpu.memory_space<vmem>>, %arg11: memref<1024x384xbf16, #tpu.memory_space<vmem>>, %arg12: memref<3x384xf32, #tpu.memory_space<vmem>>, %arg13: memref<1536x128xbf16, #tpu.memory_space<vmem>>, %arg14: memref<3x128xf32, #tpu.memory_space<vmem>>, %arg15: memref<1x128xf32, #tpu.memory_space<vmem>>, %arg16: memref<1x128xf32, #tpu.memory_space<vmem>>, %arg17: memref<1x1xf32, #tpu.memory_space<vmem>>, %arg18: memref<26x128xf32, #tpu.memory_space<vmem>>, %arg19: memref<2x1xf32, #tpu.memory_space<vmem>>, %arg20: memref<2x1xf32, #tpu.memory_space<vmem>>, %arg21: memref<20x128xf32, #tpu.memory_space<vmem>>, %arg22: memref<14x256xf32, #tpu.memory_space<vmem>>, %arg23: memref<8x384xf32, #tpu.memory_space<vmem>>) attributes {dimension_semantics = [#tpu.dimension_semantics<arbitrary>], iteration_bounds = array<i64: 1>, scalar_prefetch = 0 : i64, scratch_operands = 3 : i64, tpu.core_type = #tpu.core_type<tc>, window_params = [{pipeline_mode = #tpu.pipeline_mode<synchronous>, transform_indices = @transform_0, window_bounds = array<i64: 32, 128>}, {pipeline_mode = #tpu.pipeline_mode<synchronous>, transform_indices = @transform_1, window_bounds = array<i64: 2, 128>}, {pipeline_mode = #tpu.pipeline_mode<synchronous>, transform_indices = @transform_2, window_bounds = array<i64: 512, 128>}, {pipeline_mode = #tpu.pipeline_mode<synchronous>, transform_indices = @transform_3, window_bounds = array<i64: 128, 128>}, {pipeline_mode = #tpu.pipeline_mode<synchronous>, transform_indices = @transform_4, window_bounds = array<i64: 3, 128>}, {pipeline_mode = #tpu.pipeline_mode<synchronous>, transform_indices = @transform_5, window_bounds = array<i64: 512, 128>}, {pipeline_mode = #tpu.pipeline_mode<synchronous>, transform_indices = @transform_6, window_bounds = array<i64: 3, 128>}, {pipeline_mode = #tpu.pipeline_mode<synchronous>, transform_indices = @transform_7, window_bounds = array<i64: 512, 256>}, {pipeline_mode = #tpu.pipeline_mode<synchronous>, transform_indices = @transform_8, window_bounds = array<i64: 128, 256>}, {pipeline_mode = #tpu.pipeline_mode<synchronous>, transform_indices = @transform_9, window_bounds = array<i64: 3, 256>}, {pipeline_mode = #tpu.pipeline_mode<synchronous>, transform_indices = @transform_10, window_bounds = array<i64: 1024, 384>}, {pipeline_mode = #tpu.pipeline_mode<synchronous>, transform_indices = @transform_11, window_bounds = array<i64: 3, 384>}, {pipeline_mode = #tpu.pipeline_mode<synchronous>, transform_indices = @transform_12, window_bounds = array<i64: 1536, 128>}, {pipeline_mode = #tpu.pipeline_mode<synchronous>, transform_indices = @transform_13, window_bounds = array<i64: 3, 128>}, {pipeline_mode = #tpu.pipeline_mode<synchronous>, transform_indices = @transform_14, window_bounds = array<i64: 1, 128>}, {pipeline_mode = #tpu.pipeline_mode<synchronous>, transform_indices = @transform_15, window_bounds = array<i64: 1, 128>}, {pipeline_mode = #tpu.pipeline_mode<synchronous>, transform_indices = @transform_16, window_bounds = array<i64: 1, 1>}, {pipeline_mode = #tpu.pipeline_mode<synchronous>, transform_indices = @transform_17, window_bounds = array<i64: 26, 128>}, {pipeline_mode = #tpu.pipeline_mode<synchronous>, transform_indices = @transform_18, window_bounds = array<i64: 2, 1>}, {pipeline_mode = #tpu.pipeline_mode<synchronous>, transform_indices = @transform_19, window_bounds = array<i64: 2, 1>}]} {
    %c0 = arith.constant 0 : index
    %c0_0 = arith.constant 0 : index
    %0 = vector.load %arg2[%c0, %c0_0] : memref<2x128xf32, #tpu.memory_space<vmem>>, vector<2x128xf32>
    %1 = arith.truncf %0 : vector<2x128xf32> to vector<2x128xbf16>
    %c0_1 = arith.constant 0 : index
    %c0_2 = arith.constant 0 : index
    %2 = vector.load %arg4[%c0_1, %c0_2] : memref<128x128xbf16, #tpu.memory_space<vmem>>, vector<128x128xbf16>
    %cst = arith.constant dense<0.000000e+00> : vector<2x128xf32>
    %3 = tpu.matmul %1, %2, %cst {dimension_numbers = #tpu.dot_dimension_numbers<[1], [0], [0], [1], [0, 0, 1, 1], [], []>} : vector<2x128xbf16>, vector<128x128xbf16>, vector<2x128xf32> -> vector<2x128xf32>
    %c0_3 = arith.constant 0 : index
    %c0_4 = arith.constant 0 : index
    %4 = vector.load %arg9[%c0_3, %c0_4] : memref<128x256xbf16, #tpu.memory_space<vmem>>, vector<128x256xbf16>
    %cst_5 = arith.constant dense<0.000000e+00> : vector<2x256xf32>
    %5 = tpu.matmul %1, %4, %cst_5 {dimension_numbers = #tpu.dot_dimension_numbers<[1], [0], [0], [1], [0, 0, 1, 1], [], []>} : vector<2x128xbf16>, vector<128x256xbf16>, vector<2x256xf32> -> vector<2x256xf32>
    %c0_6 = arith.constant 0 : index
    %c0_7 = arith.constant 0 : index
    %6 = vector.load %arg1[%c0_6, %c0_7] : memref<32x128xf32, #tpu.memory_space<vmem>>, vector<13x128xf32>
    %7 = arith.truncf %6 : vector<13x128xf32> to vector<13x128xbf16>
    %c0_8 = arith.constant 0 : index
    %c0_9 = arith.constant 0 : index
    %8 = vector.load %arg3[%c0_8, %c0_9] : memref<512x128xbf16, #tpu.memory_space<vmem>>, vector<128x128xbf16>
    %cst_10 = arith.constant dense<0.000000e+00> : vector<13x128xf32>
    %9 = tpu.matmul %7, %8, %cst_10 {dimension_numbers = #tpu.dot_dimension_numbers<[1], [0], [0], [1], [0, 0, 1, 1], [], []>} : vector<13x128xbf16>, vector<128x128xbf16>, vector<13x128xf32> -> vector<13x128xf32>
    %c1 = arith.constant 1 : index
    %c0_11 = arith.constant 0 : index
    %10 = vector.load %arg1[%c1, %c0_11] : memref<32x128xf32, #tpu.memory_space<vmem>>, vector<13x128xf32>
    %11 = arith.truncf %10 : vector<13x128xf32> to vector<13x128xbf16>
    %c128 = arith.constant 128 : index
    %c0_12 = arith.constant 0 : index
    %12 = vector.load %arg3[%c128, %c0_12] : memref<512x128xbf16, #tpu.memory_space<vmem>>, vector<128x128xbf16>
    %cst_13 = arith.constant dense<0.000000e+00> : vector<13x128xf32>
    %13 = tpu.matmul %11, %12, %cst_13 {dimension_numbers = #tpu.dot_dimension_numbers<[1], [0], [0], [1], [0, 0, 1, 1], [], []>} : vector<13x128xbf16>, vector<128x128xbf16>, vector<13x128xf32> -> vector<13x128xf32>
    %14 = arith.addf %9, %13 : vector<13x128xf32>
    %c2 = arith.constant 2 : index
    %c0_14 = arith.constant 0 : index
    %15 = vector.load %arg1[%c2, %c0_14] : memref<32x128xf32, #tpu.memory_space<vmem>>, vector<13x128xf32>
    %16 = arith.truncf %15 : vector<13x128xf32> to vector<13x128xbf16>
    %c256 = arith.constant 256 : index
    %c0_15 = arith.constant 0 : index
    %17 = vector.load %arg3[%c256, %c0_15] : memref<512x128xbf16, #tpu.memory_space<vmem>>, vector<128x128xbf16>
    %cst_16 = arith.constant dense<0.000000e+00> : vector<13x128xf32>
    %18 = tpu.matmul %16, %17, %cst_16 {dimension_numbers = #tpu.dot_dimension_numbers<[1], [0], [0], [1], [0, 0, 1, 1], [], []>} : vector<13x128xbf16>, vector<128x128xbf16>, vector<13x128xf32> -> vector<13x128xf32>
    %19 = arith.addf %14, %18 : vector<13x128xf32>
    %c3 = arith.constant 3 : index
    %c0_17 = arith.constant 0 : index
    %20 = vector.load %arg1[%c3, %c0_17] : memref<32x128xf32, #tpu.memory_space<vmem>>, vector<13x128xf32>
    %21 = arith.truncf %20 : vector<13x128xf32> to vector<13x128xbf16>
    %c384 = arith.constant 384 : index
    %c0_18 = arith.constant 0 : index
    %22 = vector.load %arg3[%c384, %c0_18] : memref<512x128xbf16, #tpu.memory_space<vmem>>, vector<128x128xbf16>
    %cst_19 = arith.constant dense<0.000000e+00> : vector<13x128xf32>
    %23 = tpu.matmul %21, %22, %cst_19 {dimension_numbers = #tpu.dot_dimension_numbers<[1], [0], [0], [1], [0, 0, 1, 1], [], []>} : vector<13x128xbf16>, vector<128x128xbf16>, vector<13x128xf32> -> vector<13x128xf32>
    %24 = arith.addf %19, %23 : vector<13x128xf32>
    %25 = vector.extract_strided_slice %3 {offsets = [0, 0], sizes = [1, 128], strides = [1, 1]} : vector<2x128xf32> to vector<1x128xf32>
    %26 = vector.broadcast %25 : vector<1x128xf32> to vector<13x128xf32>
    %27 = arith.addf %24, %26 : vector<13x128xf32>
    %c16 = arith.constant 16 : index
    %c0_20 = arith.constant 0 : index
    %28 = vector.load %arg1[%c16, %c0_20] : memref<32x128xf32, #tpu.memory_space<vmem>>, vector<13x128xf32>
    %29 = arith.truncf %28 : vector<13x128xf32> to vector<13x128xbf16>
    %c0_21 = arith.constant 0 : index
    %c0_22 = arith.constant 0 : index
    %30 = vector.load %arg3[%c0_21, %c0_22] : memref<512x128xbf16, #tpu.memory_space<vmem>>, vector<128x128xbf16>
    %cst_23 = arith.constant dense<0.000000e+00> : vector<13x128xf32>
    %31 = tpu.matmul %29, %30, %cst_23 {dimension_numbers = #tpu.dot_dimension_numbers<[1], [0], [0], [1], [0, 0, 1, 1], [], []>} : vector<13x128xbf16>, vector<128x128xbf16>, vector<13x128xf32> -> vector<13x128xf32>
    %c17 = arith.constant 17 : index
    %c0_24 = arith.constant 0 : index
    %32 = vector.load %arg1[%c17, %c0_24] : memref<32x128xf32, #tpu.memory_space<vmem>>, vector<13x128xf32>
    %33 = arith.truncf %32 : vector<13x128xf32> to vector<13x128xbf16>
    %c128_25 = arith.constant 128 : index
    %c0_26 = arith.constant 0 : index
    %34 = vector.load %arg3[%c128_25, %c0_26] : memref<512x128xbf16, #tpu.memory_space<vmem>>, vector<128x128xbf16>
    %cst_27 = arith.constant dense<0.000000e+00> : vector<13x128xf32>
    %35 = tpu.matmul %33, %34, %cst_27 {dimension_numbers = #tpu.dot_dimension_numbers<[1], [0], [0], [1], [0, 0, 1, 1], [], []>} : vector<13x128xbf16>, vector<128x128xbf16>, vector<13x128xf32> -> vector<13x128xf32>
    %36 = arith.addf %31, %35 : vector<13x128xf32>
    %c18 = arith.constant 18 : index
    %c0_28 = arith.constant 0 : index
    %37 = vector.load %arg1[%c18, %c0_28] : memref<32x128xf32, #tpu.memory_space<vmem>>, vector<13x128xf32>
    %38 = arith.truncf %37 : vector<13x128xf32> to vector<13x128xbf16>
    %c256_29 = arith.constant 256 : index
    %c0_30 = arith.constant 0 : index
    %39 = vector.load %arg3[%c256_29, %c0_30] : memref<512x128xbf16, #tpu.memory_space<vmem>>, vector<128x128xbf16>
    %cst_31 = arith.constant dense<0.000000e+00> : vector<13x128xf32>
    %40 = tpu.matmul %38, %39, %cst_31 {dimension_numbers = #tpu.dot_dimension_numbers<[1], [0], [0], [1], [0, 0, 1, 1], [], []>} : vector<13x128xbf16>, vector<128x128xbf16>, vector<13x128xf32> -> vector<13x128xf32>
    %41 = arith.addf %36, %40 : vector<13x128xf32>
    %c19 = arith.constant 19 : index
    %c0_32 = arith.constant 0 : index
    %42 = vector.load %arg1[%c19, %c0_32] : memref<32x128xf32, #tpu.memory_space<vmem>>, vector<13x128xf32>
    %43 = arith.truncf %42 : vector<13x128xf32> to vector<13x128xbf16>
    %c384_33 = arith.constant 384 : index
    %c0_34 = arith.constant 0 : index
    %44 = vector.load %arg3[%c384_33, %c0_34] : memref<512x128xbf16, #tpu.memory_space<vmem>>, vector<128x128xbf16>
    %cst_35 = arith.constant dense<0.000000e+00> : vector<13x128xf32>
    %45 = tpu.matmul %43, %44, %cst_35 {dimension_numbers = #tpu.dot_dimension_numbers<[1], [0], [0], [1], [0, 0, 1, 1], [], []>} : vector<13x128xbf16>, vector<128x128xbf16>, vector<13x128xf32> -> vector<13x128xf32>
    %46 = arith.addf %41, %45 : vector<13x128xf32>
    %47 = vector.extract_strided_slice %3 {offsets = [1, 0], sizes = [1, 128], strides = [1, 1]} : vector<2x128xf32> to vector<1x128xf32>
    %48 = vector.broadcast %47 : vector<1x128xf32> to vector<13x128xf32>
    %49 = arith.addf %46, %48 : vector<13x128xf32>
    %c0_36 = arith.constant 0 : index
    %c0_37 = arith.constant 0 : index
    %50 = vector.load %arg5[%c0_36, %c0_37] : memref<3x128xf32, #tpu.memory_space<vmem>>, vector<1x128xf32>
    %c1_38 = arith.constant 1 : index
    %c0_39 = arith.constant 0 : index
    %51 = vector.load %arg5[%c1_38, %c0_39] : memref<3x128xf32, #tpu.memory_space<vmem>>, vector<1x128xf32>
    %c2_40 = arith.constant 2 : index
    %c0_41 = arith.constant 0 : index
    %52 = vector.load %arg5[%c2_40, %c0_41] : memref<3x128xf32, #tpu.memory_space<vmem>>, vector<1x128xf32>
    %53 = vector.broadcast %50 : vector<1x128xf32> to vector<13x128xf32>
    %54 = arith.addf %27, %53 : vector<13x128xf32>
    %55 = vector.broadcast %50 : vector<1x128xf32> to vector<13x128xf32>
    %56 = arith.addf %49, %55 : vector<13x128xf32>
    %cst_42 = arith.constant dense<0.000000e+00> : vector<128xf32>
    %57 = vector.multi_reduction <add>, %54, %cst_42 [0] : vector<13x128xf32> to vector<128xf32>
    %58 = vector.shape_cast %57 : vector<128xf32> to vector<1x128xf32>
    %cst_43 = arith.constant dense<0.000000e+00> : vector<128xf32>
    %59 = vector.multi_reduction <add>, %56, %cst_43 [0] : vector<13x128xf32> to vector<128xf32>
    %60 = vector.shape_cast %59 : vector<128xf32> to vector<1x128xf32>
    %61 = arith.addf %58, %60 : vector<1x128xf32>
    %cst_44 = arith.constant 0.0384615399 : f32
    %62 = vector.broadcast %cst_44 : f32 to vector<1x128xf32>
    %63 = arith.mulf %61, %62 : vector<1x128xf32>
    %64 = vector.broadcast %63 : vector<1x128xf32> to vector<13x128xf32>
    %65 = arith.subf %54, %64 : vector<13x128xf32>
    %66 = arith.mulf %65, %65 : vector<13x128xf32>
    %cst_45 = arith.constant dense<0.000000e+00> : vector<128xf32>
    %67 = vector.multi_reduction <add>, %66, %cst_45 [0] : vector<13x128xf32> to vector<128xf32>
    %68 = vector.shape_cast %67 : vector<128xf32> to vector<1x128xf32>
    %69 = vector.broadcast %63 : vector<1x128xf32> to vector<13x128xf32>
    %70 = arith.subf %56, %69 : vector<13x128xf32>
    %71 = arith.mulf %70, %70 : vector<13x128xf32>
    %cst_46 = arith.constant dense<0.000000e+00> : vector<128xf32>
    %72 = vector.multi_reduction <add>, %71, %cst_46 [0] : vector<13x128xf32> to vector<128xf32>
    %73 = vector.shape_cast %72 : vector<128xf32> to vector<1x128xf32>
    %74 = arith.addf %68, %73 : vector<1x128xf32>
    %cst_47 = arith.constant 0.0384615399 : f32
    %75 = vector.broadcast %cst_47 : f32 to vector<1x128xf32>
    %76 = arith.mulf %74, %75 : vector<1x128xf32>
    %cst_48 = arith.constant 9.99999974E-6 : f32
    %77 = vector.broadcast %cst_48 : f32 to vector<1x128xf32>
    %78 = arith.addf %76, %77 : vector<1x128xf32>
    %79 = math.rsqrt %78 : vector<1x128xf32>
    %80 = arith.mulf %51, %79 : vector<1x128xf32>
    %81 = vector.broadcast %63 : vector<1x128xf32> to vector<13x128xf32>
    %82 = arith.subf %54, %81 : vector<13x128xf32>
    %83 = vector.broadcast %80 : vector<1x128xf32> to vector<13x128xf32>
    %84 = arith.mulf %82, %83 : vector<13x128xf32>
    %85 = vector.broadcast %52 : vector<1x128xf32> to vector<13x128xf32>
    %86 = arith.addf %84, %85 : vector<13x128xf32>
    %cst_49 = arith.constant 0.000000e+00 : f32
    %87 = vector.broadcast %cst_49 : f32 to vector<13x128xf32>
    %88 = arith.cmpf oge, %86, %87 : vector<13x128xf32>
    %cst_50 = arith.constant 2.000000e-01 : f32
    %89 = vector.broadcast %cst_50 : f32 to vector<13x128xf32>
    %90 = arith.mulf %89, %86 : vector<13x128xf32>
    %91 = arith.select %88, %86, %90 : vector<13x128xi1>, vector<13x128xf32>
    %92 = vector.broadcast %63 : vector<1x128xf32> to vector<13x128xf32>
    %93 = arith.subf %56, %92 : vector<13x128xf32>
    %94 = vector.broadcast %80 : vector<1x128xf32> to vector<13x128xf32>
    %95 = arith.mulf %93, %94 : vector<13x128xf32>
    %96 = vector.broadcast %52 : vector<1x128xf32> to vector<13x128xf32>
    %97 = arith.addf %95, %96 : vector<13x128xf32>
    %cst_51 = arith.constant 0.000000e+00 : f32
    %98 = vector.broadcast %cst_51 : f32 to vector<13x128xf32>
    %99 = arith.cmpf oge, %97, %98 : vector<13x128xf32>
    %cst_52 = arith.constant 2.000000e-01 : f32
    %100 = vector.broadcast %cst_52 : f32 to vector<13x128xf32>
    %101 = arith.mulf %100, %97 : vector<13x128xf32>
    %102 = arith.select %99, %97, %101 : vector<13x128xi1>, vector<13x128xf32>
    %c0_53 = arith.constant 0 : index
    %c0_54 = arith.constant 0 : index
    %103 = vector.load %arg18[%c0_53, %c0_54] : memref<26x128xf32, #tpu.memory_space<vmem>>, vector<13x128xf32>
    tpu.vector_store %arg18[%c0_53, %c0_54], %91 {strides = array<i32>} : memref<26x128xf32, #tpu.memory_space<vmem>>, vector<13x128xf32>,
    %c13 = arith.constant 13 : index
    %c0_55 = arith.constant 0 : index
    %104 = vector.load %arg18[%c13, %c0_55] : memref<26x128xf32, #tpu.memory_space<vmem>>, vector<13x128xf32>
    tpu.vector_store %arg18[%c13, %c0_55], %102 {strides = array<i32>} : memref<26x128xf32, #tpu.memory_space<vmem>>, vector<13x128xf32>,
    %c0_56 = arith.constant 0 : index
    %c0_57 = arith.constant 0 : index
    %105 = vector.load %arg18[%c0_56, %c0_57] : memref<26x128xf32, #tpu.memory_space<vmem>>, vector<10x128xf32>
    %106 = arith.truncf %105 : vector<10x128xf32> to vector<10x128xbf16>
    %c0_58 = arith.constant 0 : index
    %c0_59 = arith.constant 0 : index
    %107 = vector.load %arg6[%c0_58, %c0_59] : memref<512x128xbf16, #tpu.memory_space<vmem>>, vector<128x128xbf16>
    %cst_60 = arith.constant dense<0.000000e+00> : vector<10x128xf32>
    %108 = tpu.matmul %106, %107, %cst_60 {dimension_numbers = #tpu.dot_dimension_numbers<[1], [0], [0], [1], [0, 0, 1, 1], [], []>} : vector<10x128xbf16>, vector<128x128xbf16>, vector<10x128xf32> -> vector<10x128xf32>
    %c1_61 = arith.constant 1 : index
    %c0_62 = arith.constant 0 : index
    %109 = vector.load %arg18[%c1_61, %c0_62] : memref<26x128xf32, #tpu.memory_space<vmem>>, vector<10x128xf32>
    %110 = arith.truncf %109 : vector<10x128xf32> to vector<10x128xbf16>
    %c128_63 = arith.constant 128 : index
    %c0_64 = arith.constant 0 : index
    %111 = vector.load %arg6[%c128_63, %c0_64] : memref<512x128xbf16, #tpu.memory_space<vmem>>, vector<128x128xbf16>
    %cst_65 = arith.constant dense<0.000000e+00> : vector<10x128xf32>
    %112 = tpu.matmul %110, %111, %cst_65 {dimension_numbers = #tpu.dot_dimension_numbers<[1], [0], [0], [1], [0, 0, 1, 1], [], []>} : vector<10x128xbf16>, vector<128x128xbf16>, vector<10x128xf32> -> vector<10x128xf32>
    %113 = arith.addf %108, %112 : vector<10x128xf32>
    %c2_66 = arith.constant 2 : index
    %c0_67 = arith.constant 0 : index
    %114 = vector.load %arg18[%c2_66, %c0_67] : memref<26x128xf32, #tpu.memory_space<vmem>>, vector<10x128xf32>
    %115 = arith.truncf %114 : vector<10x128xf32> to vector<10x128xbf16>
    %c256_68 = arith.constant 256 : index
    %c0_69 = arith.constant 0 : index
    %116 = vector.load %arg6[%c256_68, %c0_69] : memref<512x128xbf16, #tpu.memory_space<vmem>>, vector<128x128xbf16>
    %cst_70 = arith.constant dense<0.000000e+00> : vector<10x128xf32>
    %117 = tpu.matmul %115, %116, %cst_70 {dimension_numbers = #tpu.dot_dimension_numbers<[1], [0], [0], [1], [0, 0, 1, 1], [], []>} : vector<10x128xbf16>, vector<128x128xbf16>, vector<10x128xf32> -> vector<10x128xf32>
    %118 = arith.addf %113, %117 : vector<10x128xf32>
    %c3_71 = arith.constant 3 : index
    %c0_72 = arith.constant 0 : index
    %119 = vector.load %arg18[%c3_71, %c0_72] : memref<26x128xf32, #tpu.memory_space<vmem>>, vector<10x128xf32>
    %120 = arith.truncf %119 : vector<10x128xf32> to vector<10x128xbf16>
    %c384_73 = arith.constant 384 : index
    %c0_74 = arith.constant 0 : index
    %121 = vector.load %arg6[%c384_73, %c0_74] : memref<512x128xbf16, #tpu.memory_space<vmem>>, vector<128x128xbf16>
    %cst_75 = arith.constant dense<0.000000e+00> : vector<10x128xf32>
    %122 = tpu.matmul %120, %121, %cst_75 {dimension_numbers = #tpu.dot_dimension_numbers<[1], [0], [0], [1], [0, 0, 1, 1], [], []>} : vector<10x128xbf16>, vector<128x128xbf16>, vector<10x128xf32> -> vector<10x128xf32>
    %123 = arith.addf %118, %122 : vector<10x128xf32>
    %c13_76 = arith.constant 13 : index
    %c0_77 = arith.constant 0 : index
    %124 = vector.load %arg18[%c13_76, %c0_77] : memref<26x128xf32, #tpu.memory_space<vmem>>, vector<10x128xf32>
    %125 = arith.truncf %124 : vector<10x128xf32> to vector<10x128xbf16>
    %c0_78 = arith.constant 0 : index
    %c0_79 = arith.constant 0 : index
    %126 = vector.load %arg6[%c0_78, %c0_79] : memref<512x128xbf16, #tpu.memory_space<vmem>>, vector<128x128xbf16>
    %cst_80 = arith.constant dense<0.000000e+00> : vector<10x128xf32>
    %127 = tpu.matmul %125, %126, %cst_80 {dimension_numbers = #tpu.dot_dimension_numbers<[1], [0], [0], [1], [0, 0, 1, 1], [], []>} : vector<10x128xbf16>, vector<128x128xbf16>, vector<10x128xf32> -> vector<10x128xf32>
    %c14 = arith.constant 14 : index
    %c0_81 = arith.constant 0 : index
    %128 = vector.load %arg18[%c14, %c0_81] : memref<26x128xf32, #tpu.memory_space<vmem>>, vector<10x128xf32>
    %129 = arith.truncf %128 : vector<10x128xf32> to vector<10x128xbf16>
    %c128_82 = arith.constant 128 : index
    %c0_83 = arith.constant 0 : index
    %130 = vector.load %arg6[%c128_82, %c0_83] : memref<512x128xbf16, #tpu.memory_space<vmem>>, vector<128x128xbf16>
    %cst_84 = arith.constant dense<0.000000e+00> : vector<10x128xf32>
    %131 = tpu.matmul %129, %130, %cst_84 {dimension_numbers = #tpu.dot_dimension_numbers<[1], [0], [0], [1], [0, 0, 1, 1], [], []>} : vector<10x128xbf16>, vector<128x128xbf16>, vector<10x128xf32> -> vector<10x128xf32>
    %132 = arith.addf %127, %131 : vector<10x128xf32>
    %c15 = arith.constant 15 : index
    %c0_85 = arith.constant 0 : index
    %133 = vector.load %arg18[%c15, %c0_85] : memref<26x128xf32, #tpu.memory_space<vmem>>, vector<10x128xf32>
    %134 = arith.truncf %133 : vector<10x128xf32> to vector<10x128xbf16>
    %c256_86 = arith.constant 256 : index
    %c0_87 = arith.constant 0 : index
    %135 = vector.load %arg6[%c256_86, %c0_87] : memref<512x128xbf16, #tpu.memory_space<vmem>>, vector<128x128xbf16>
    %cst_88 = arith.constant dense<0.000000e+00> : vector<10x128xf32>
    %136 = tpu.matmul %134, %135, %cst_88 {dimension_numbers = #tpu.dot_dimension_numbers<[1], [0], [0], [1], [0, 0, 1, 1], [], []>} : vector<10x128xbf16>, vector<128x128xbf16>, vector<10x128xf32> -> vector<10x128xf32>
    %137 = arith.addf %132, %136 : vector<10x128xf32>
    %c16_89 = arith.constant 16 : index
    %c0_90 = arith.constant 0 : index
    %138 = vector.load %arg18[%c16_89, %c0_90] : memref<26x128xf32, #tpu.memory_space<vmem>>, vector<10x128xf32>
    %139 = arith.truncf %138 : vector<10x128xf32> to vector<10x128xbf16>
    %c384_91 = arith.constant 384 : index
    %c0_92 = arith.constant 0 : index
    %140 = vector.load %arg6[%c384_91, %c0_92] : memref<512x128xbf16, #tpu.memory_space<vmem>>, vector<128x128xbf16>
    %cst_93 = arith.constant dense<0.000000e+00> : vector<10x128xf32>
    %141 = tpu.matmul %139, %140, %cst_93 {dimension_numbers = #tpu.dot_dimension_numbers<[1], [0], [0], [1], [0, 0, 1, 1], [], []>} : vector<10x128xbf16>, vector<128x128xbf16>, vector<10x128xf32> -> vector<10x128xf32>
    %142 = arith.addf %137, %141 : vector<10x128xf32>
    %c0_94 = arith.constant 0 : index
    %c0_95 = arith.constant 0 : index
    %143 = vector.load %arg7[%c0_94, %c0_95] : memref<3x128xf32, #tpu.memory_space<vmem>>, vector<1x128xf32>
    %c1_96 = arith.constant 1 : index
    %c0_97 = arith.constant 0 : index
    %144 = vector.load %arg7[%c1_96, %c0_97] : memref<3x128xf32, #tpu.memory_space<vmem>>, vector<1x128xf32>
    %c2_98 = arith.constant 2 : index
    %c0_99 = arith.constant 0 : index
    %145 = vector.load %arg7[%c2_98, %c0_99] : memref<3x128xf32, #tpu.memory_space<vmem>>, vector<1x128xf32>
    %146 = vector.broadcast %143 : vector<1x128xf32> to vector<10x128xf32>
    %147 = arith.addf %123, %146 : vector<10x128xf32>
    %148 = vector.broadcast %143 : vector<1x128xf32> to vector<10x128xf32>
    %149 = arith.addf %142, %148 : vector<10x128xf32>
    %cst_100 = arith.constant dense<0.000000e+00> : vector<128xf32>
    %150 = vector.multi_reduction <add>, %147, %cst_100 [0] : vector<10x128xf32> to vector<128xf32>
    %151 = vector.shape_cast %150 : vector<128xf32> to vector<1x128xf32>
    %cst_101 = arith.constant dense<0.000000e+00> : vector<128xf32>
    %152 = vector.multi_reduction <add>, %149, %cst_101 [0] : vector<10x128xf32> to vector<128xf32>
    %153 = vector.shape_cast %152 : vector<128xf32> to vector<1x128xf32>
    %154 = arith.addf %151, %153 : vector<1x128xf32>
    %cst_102 = arith.constant 5.000000e-02 : f32
    %155 = vector.broadcast %cst_102 : f32 to vector<1x128xf32>
    %156 = arith.mulf %154, %155 : vector<1x128xf32>
    %157 = vector.broadcast %156 : vector<1x128xf32> to vector<10x128xf32>
    %158 = arith.subf %147, %157 : vector<10x128xf32>
    %159 = arith.mulf %158, %158 : vector<10x128xf32>
    %cst_103 = arith.constant dense<0.000000e+00> : vector<128xf32>
    %160 = vector.multi_reduction <add>, %159, %cst_103 [0] : vector<10x128xf32> to vector<128xf32>
    %161 = vector.shape_cast %160 : vector<128xf32> to vector<1x128xf32>
    %162 = vector.broadcast %156 : vector<1x128xf32> to vector<10x128xf32>
    %163 = arith.subf %149, %162 : vector<10x128xf32>
    %164 = arith.mulf %163, %163 : vector<10x128xf32>
    %cst_104 = arith.constant dense<0.000000e+00> : vector<128xf32>
    %165 = vector.multi_reduction <add>, %164, %cst_104 [0] : vector<10x128xf32> to vector<128xf32>
    %166 = vector.shape_cast %165 : vector<128xf32> to vector<1x128xf32>
    %167 = arith.addf %161, %166 : vector<1x128xf32>
    %cst_105 = arith.constant 5.000000e-02 : f32
    %168 = vector.broadcast %cst_105 : f32 to vector<1x128xf32>
    %169 = arith.mulf %167, %168 : vector<1x128xf32>
    %cst_106 = arith.constant 9.99999974E-6 : f32
    %170 = vector.broadcast %cst_106 : f32 to vector<1x128xf32>
    %171 = arith.addf %169, %170 : vector<1x128xf32>
    %172 = math.rsqrt %171 : vector<1x128xf32>
    %173 = arith.mulf %144, %172 : vector<1x128xf32>
    %174 = vector.broadcast %156 : vector<1x128xf32> to vector<10x128xf32>
    %175 = arith.subf %147, %174 : vector<10x128xf32>
    %176 = vector.broadcast %173 : vector<1x128xf32> to vector<10x128xf32>
    %177 = arith.mulf %175, %176 : vector<10x128xf32>
    %178 = vector.broadcast %145 : vector<1x128xf32> to vector<10x128xf32>
    %179 = arith.addf %177, %178 : vector<10x128xf32>
    %cst_107 = arith.constant 0.000000e+00 : f32
    %180 = vector.broadcast %cst_107 : f32 to vector<10x128xf32>
    %181 = arith.cmpf oge, %179, %180 : vector<10x128xf32>
    %cst_108 = arith.constant 2.000000e-01 : f32
    %182 = vector.broadcast %cst_108 : f32 to vector<10x128xf32>
    %183 = arith.mulf %182, %179 : vector<10x128xf32>
    %184 = arith.select %181, %179, %183 : vector<10x128xi1>, vector<10x128xf32>
    %185 = vector.broadcast %156 : vector<1x128xf32> to vector<10x128xf32>
    %186 = arith.subf %149, %185 : vector<10x128xf32>
    %187 = vector.broadcast %173 : vector<1x128xf32> to vector<10x128xf32>
    %188 = arith.mulf %186, %187 : vector<10x128xf32>
    %189 = vector.broadcast %145 : vector<1x128xf32> to vector<10x128xf32>
    %190 = arith.addf %188, %189 : vector<10x128xf32>
    %cst_109 = arith.constant 0.000000e+00 : f32
    %191 = vector.broadcast %cst_109 : f32 to vector<10x128xf32>
    %192 = arith.cmpf oge, %190, %191 : vector<10x128xf32>
    %cst_110 = arith.constant 2.000000e-01 : f32
    %193 = vector.broadcast %cst_110 : f32 to vector<10x128xf32>
    %194 = arith.mulf %193, %190 : vector<10x128xf32>
    %195 = arith.select %192, %190, %194 : vector<10x128xi1>, vector<10x128xf32>
    %c0_111 = arith.constant 0 : index
    %c0_112 = arith.constant 0 : index
    %196 = vector.load %arg21[%c0_111, %c0_112] : memref<20x128xf32, #tpu.memory_space<vmem>>, vector<10x128xf32>
    tpu.vector_store %arg21[%c0_111, %c0_112], %184 {strides = array<i32>} : memref<20x128xf32, #tpu.memory_space<vmem>>, vector<10x128xf32>,
    %c10 = arith.constant 10 : index
    %c0_113 = arith.constant 0 : index
    %197 = vector.load %arg21[%c10, %c0_113] : memref<20x128xf32, #tpu.memory_space<vmem>>, vector<10x128xf32>
    tpu.vector_store %arg21[%c10, %c0_113], %195 {strides = array<i32>} : memref<20x128xf32, #tpu.memory_space<vmem>>, vector<10x128xf32>,
    %c0_114 = arith.constant 0 : index
    %c0_115 = arith.constant 0 : index
    %198 = vector.load %arg21[%c0_114, %c0_115] : memref<20x128xf32, #tpu.memory_space<vmem>>, vector<7x128xf32>
    %199 = arith.truncf %198 : vector<7x128xf32> to vector<7x128xbf16>
    %c0_116 = arith.constant 0 : index
    %c0_117 = arith.constant 0 : index
    %200 = vector.load %arg8[%c0_116, %c0_117] : memref<512x256xbf16, #tpu.memory_space<vmem>>, vector<128x256xbf16>
    %cst_118 = arith.constant dense<0.000000e+00> : vector<7x256xf32>
    %201 = tpu.matmul %199, %200, %cst_118 {dimension_numbers = #tpu.dot_dimension_numbers<[1], [0], [0], [1], [0, 0, 1, 1], [], []>} : vector<7x128xbf16>, vector<128x256xbf16>, vector<7x256xf32> -> vector<7x256xf32>
    %c1_119 = arith.constant 1 : index
    %c0_120 = arith.constant 0 : index
    %202 = vector.load %arg21[%c1_119, %c0_120] : memref<20x128xf32, #tpu.memory_space<vmem>>, vector<7x128xf32>
    %203 = arith.truncf %202 : vector<7x128xf32> to vector<7x128xbf16>
    %c128_121 = arith.constant 128 : index
    %c0_122 = arith.constant 0 : index
    %204 = vector.load %arg8[%c128_121, %c0_122] : memref<512x256xbf16, #tpu.memory_space<vmem>>, vector<128x256xbf16>
    %cst_123 = arith.constant dense<0.000000e+00> : vector<7x256xf32>
    %205 = tpu.matmul %203, %204, %cst_123 {dimension_numbers = #tpu.dot_dimension_numbers<[1], [0], [0], [1], [0, 0, 1, 1], [], []>} : vector<7x128xbf16>, vector<128x256xbf16>, vector<7x256xf32> -> vector<7x256xf32>
    %206 = arith.addf %201, %205 : vector<7x256xf32>
    %c2_124 = arith.constant 2 : index
    %c0_125 = arith.constant 0 : index
    %207 = vector.load %arg21[%c2_124, %c0_125] : memref<20x128xf32, #tpu.memory_space<vmem>>, vector<7x128xf32>
    %208 = arith.truncf %207 : vector<7x128xf32> to vector<7x128xbf16>
    %c256_126 = arith.constant 256 : index
    %c0_127 = arith.constant 0 : index
    %209 = vector.load %arg8[%c256_126, %c0_127] : memref<512x256xbf16, #tpu.memory_space<vmem>>, vector<128x256xbf16>
    %cst_128 = arith.constant dense<0.000000e+00> : vector<7x256xf32>
    %210 = tpu.matmul %208, %209, %cst_128 {dimension_numbers = #tpu.dot_dimension_numbers<[1], [0], [0], [1], [0, 0, 1, 1], [], []>} : vector<7x128xbf16>, vector<128x256xbf16>, vector<7x256xf32> -> vector<7x256xf32>
    %211 = arith.addf %206, %210 : vector<7x256xf32>
    %c3_129 = arith.constant 3 : index
    %c0_130 = arith.constant 0 : index
    %212 = vector.load %arg21[%c3_129, %c0_130] : memref<20x128xf32, #tpu.memory_space<vmem>>, vector<7x128xf32>
    %213 = arith.truncf %212 : vector<7x128xf32> to vector<7x128xbf16>
    %c384_131 = arith.constant 384 : index
    %c0_132 = arith.constant 0 : index
    %214 = vector.load %arg8[%c384_131, %c0_132] : memref<512x256xbf16, #tpu.memory_space<vmem>>, vector<128x256xbf16>
    %cst_133 = arith.constant dense<0.000000e+00> : vector<7x256xf32>
    %215 = tpu.matmul %213, %214, %cst_133 {dimension_numbers = #tpu.dot_dimension_numbers<[1], [0], [0], [1], [0, 0, 1, 1], [], []>} : vector<7x128xbf16>, vector<128x256xbf16>, vector<7x256xf32> -> vector<7x256xf32>
    %216 = arith.addf %211, %215 : vector<7x256xf32>
    %217 = vector.extract_strided_slice %5 {offsets = [0, 0], sizes = [1, 256], strides = [1, 1]} : vector<2x256xf32> to vector<1x256xf32>
    %218 = vector.broadcast %217 : vector<1x256xf32> to vector<7x256xf32>
    %219 = arith.addf %216, %218 : vector<7x256xf32>
    %c10_134 = arith.constant 10 : index
    %c0_135 = arith.constant 0 : index
    %220 = vector.load %arg21[%c10_134, %c0_135] : memref<20x128xf32, #tpu.memory_space<vmem>>, vector<7x128xf32>
    %221 = arith.truncf %220 : vector<7x128xf32> to vector<7x128xbf16>
    %c0_136 = arith.constant 0 : index
    %c0_137 = arith.constant 0 : index
    %222 = vector.load %arg8[%c0_136, %c0_137] : memref<512x256xbf16, #tpu.memory_space<vmem>>, vector<128x256xbf16>
    %cst_138 = arith.constant dense<0.000000e+00> : vector<7x256xf32>
    %223 = tpu.matmul %221, %222, %cst_138 {dimension_numbers = #tpu.dot_dimension_numbers<[1], [0], [0], [1], [0, 0, 1, 1], [], []>} : vector<7x128xbf16>, vector<128x256xbf16>, vector<7x256xf32> -> vector<7x256xf32>
    %c11 = arith.constant 11 : index
    %c0_139 = arith.constant 0 : index
    %224 = vector.load %arg21[%c11, %c0_139] : memref<20x128xf32, #tpu.memory_space<vmem>>, vector<7x128xf32>
    %225 = arith.truncf %224 : vector<7x128xf32> to vector<7x128xbf16>
    %c128_140 = arith.constant 128 : index
    %c0_141 = arith.constant 0 : index
    %226 = vector.load %arg8[%c128_140, %c0_141] : memref<512x256xbf16, #tpu.memory_space<vmem>>, vector<128x256xbf16>
    %cst_142 = arith.constant dense<0.000000e+00> : vector<7x256xf32>
    %227 = tpu.matmul %225, %226, %cst_142 {dimension_numbers = #tpu.dot_dimension_numbers<[1], [0], [0], [1], [0, 0, 1, 1], [], []>} : vector<7x128xbf16>, vector<128x256xbf16>, vector<7x256xf32> -> vector<7x256xf32>
    %228 = arith.addf %223, %227 : vector<7x256xf32>
    %c12 = arith.constant 12 : index
    %c0_143 = arith.constant 0 : index
    %229 = vector.load %arg21[%c12, %c0_143] : memref<20x128xf32, #tpu.memory_space<vmem>>, vector<7x128xf32>
    %230 = arith.truncf %229 : vector<7x128xf32> to vector<7x128xbf16>
    %c256_144 = arith.constant 256 : index
    %c0_145 = arith.constant 0 : index
    %231 = vector.load %arg8[%c256_144, %c0_145] : memref<512x256xbf16, #tpu.memory_space<vmem>>, vector<128x256xbf16>
    %cst_146 = arith.constant dense<0.000000e+00> : vector<7x256xf32>
    %232 = tpu.matmul %230, %231, %cst_146 {dimension_numbers = #tpu.dot_dimension_numbers<[1], [0], [0], [1], [0, 0, 1, 1], [], []>} : vector<7x128xbf16>, vector<128x256xbf16>, vector<7x256xf32> -> vector<7x256xf32>
    %233 = arith.addf %228, %232 : vector<7x256xf32>
    %c13_147 = arith.constant 13 : index
    %c0_148 = arith.constant 0 : index
    %234 = vector.load %arg21[%c13_147, %c0_148] : memref<20x128xf32, #tpu.memory_space<vmem>>, vector<7x128xf32>
    %235 = arith.truncf %234 : vector<7x128xf32> to vector<7x128xbf16>
    %c384_149 = arith.constant 384 : index
    %c0_150 = arith.constant 0 : index
    %236 = vector.load %arg8[%c384_149, %c0_150] : memref<512x256xbf16, #tpu.memory_space<vmem>>, vector<128x256xbf16>
    %cst_151 = arith.constant dense<0.000000e+00> : vector<7x256xf32>
    %237 = tpu.matmul %235, %236, %cst_151 {dimension_numbers = #tpu.dot_dimension_numbers<[1], [0], [0], [1], [0, 0, 1, 1], [], []>} : vector<7x128xbf16>, vector<128x256xbf16>, vector<7x256xf32> -> vector<7x256xf32>
    %238 = arith.addf %233, %237 : vector<7x256xf32>
    %239 = vector.extract_strided_slice %5 {offsets = [1, 0], sizes = [1, 256], strides = [1, 1]} : vector<2x256xf32> to vector<1x256xf32>
    %240 = vector.broadcast %239 : vector<1x256xf32> to vector<7x256xf32>
    %241 = arith.addf %238, %240 : vector<7x256xf32>
    %c0_152 = arith.constant 0 : index
    %c0_153 = arith.constant 0 : index
    %242 = vector.load %arg10[%c0_152, %c0_153] : memref<3x256xf32, #tpu.memory_space<vmem>>, vector<1x256xf32>
    %c1_154 = arith.constant 1 : index
    %c0_155 = arith.constant 0 : index
    %243 = vector.load %arg10[%c1_154, %c0_155] : memref<3x256xf32, #tpu.memory_space<vmem>>, vector<1x256xf32>
    %c2_156 = arith.constant 2 : index
    %c0_157 = arith.constant 0 : index
    %244 = vector.load %arg10[%c2_156, %c0_157] : memref<3x256xf32, #tpu.memory_space<vmem>>, vector<1x256xf32>
    %245 = vector.broadcast %242 : vector<1x256xf32> to vector<7x256xf32>
    %246 = arith.addf %219, %245 : vector<7x256xf32>
    %247 = vector.broadcast %242 : vector<1x256xf32> to vector<7x256xf32>
    %248 = arith.addf %241, %247 : vector<7x256xf32>
    %cst_158 = arith.constant dense<0.000000e+00> : vector<256xf32>
    %249 = vector.multi_reduction <add>, %246, %cst_158 [0] : vector<7x256xf32> to vector<256xf32>
    %250 = vector.shape_cast %249 : vector<256xf32> to vector<1x256xf32>
    %cst_159 = arith.constant dense<0.000000e+00> : vector<256xf32>
    %251 = vector.multi_reduction <add>, %248, %cst_159 [0] : vector<7x256xf32> to vector<256xf32>
    %252 = vector.shape_cast %251 : vector<256xf32> to vector<1x256xf32>
    %253 = arith.addf %250, %252 : vector<1x256xf32>
    %cst_160 = arith.constant 0.0714285746 : f32
    %254 = vector.broadcast %cst_160 : f32 to vector<1x256xf32>
    %255 = arith.mulf %253, %254 : vector<1x256xf32>
    %256 = vector.broadcast %255 : vector<1x256xf32> to vector<7x256xf32>
    %257 = arith.subf %246, %256 : vector<7x256xf32>
    %258 = arith.mulf %257, %257 : vector<7x256xf32>
    %cst_161 = arith.constant dense<0.000000e+00> : vector<256xf32>
    %259 = vector.multi_reduction <add>, %258, %cst_161 [0] : vector<7x256xf32> to vector<256xf32>
    %260 = vector.shape_cast %259 : vector<256xf32> to vector<1x256xf32>
    %261 = vector.broadcast %255 : vector<1x256xf32> to vector<7x256xf32>
    %262 = arith.subf %248, %261 : vector<7x256xf32>
    %263 = arith.mulf %262, %262 : vector<7x256xf32>
    %cst_162 = arith.constant dense<0.000000e+00> : vector<256xf32>
    %264 = vector.multi_reduction <add>, %263, %cst_162 [0] : vector<7x256xf32> to vector<256xf32>
    %265 = vector.shape_cast %264 : vector<256xf32> to vector<1x256xf32>
    %266 = arith.addf %260, %265 : vector<1x256xf32>
    %cst_163 = arith.constant 0.0714285746 : f32
    %267 = vector.broadcast %cst_163 : f32 to vector<1x256xf32>
    %268 = arith.mulf %266, %267 : vector<1x256xf32>
    %cst_164 = arith.constant 9.99999974E-6 : f32
    %269 = vector.broadcast %cst_164 : f32 to vector<1x256xf32>
    %270 = arith.addf %268, %269 : vector<1x256xf32>
    %271 = math.rsqrt %270 : vector<1x256xf32>
    %272 = arith.mulf %243, %271 : vector<1x256xf32>
    %273 = vector.broadcast %255 : vector<1x256xf32> to vector<7x256xf32>
    %274 = arith.subf %246, %273 : vector<7x256xf32>
    %275 = vector.broadcast %272 : vector<1x256xf32> to vector<7x256xf32>
    %276 = arith.mulf %274, %275 : vector<7x256xf32>
    %277 = vector.broadcast %244 : vector<1x256xf32> to vector<7x256xf32>
    %278 = arith.addf %276, %277 : vector<7x256xf32>
    %cst_165 = arith.constant 0.000000e+00 : f32
    %279 = vector.broadcast %cst_165 : f32 to vector<7x256xf32>
    %280 = arith.cmpf oge, %278, %279 : vector<7x256xf32>
    %cst_166 = arith.constant 2.000000e-01 : f32
    %281 = vector.broadcast %cst_166 : f32 to vector<7x256xf32>
    %282 = arith.mulf %281, %278 : vector<7x256xf32>
    %283 = arith.select %280, %278, %282 : vector<7x256xi1>, vector<7x256xf32>
    %284 = vector.broadcast %255 : vector<1x256xf32> to vector<7x256xf32>
    %285 = arith.subf %248, %284 : vector<7x256xf32>
    %286 = vector.broadcast %272 : vector<1x256xf32> to vector<7x256xf32>
    %287 = arith.mulf %285, %286 : vector<7x256xf32>
    %288 = vector.broadcast %244 : vector<1x256xf32> to vector<7x256xf32>
    %289 = arith.addf %287, %288 : vector<7x256xf32>
    %cst_167 = arith.constant 0.000000e+00 : f32
    %290 = vector.broadcast %cst_167 : f32 to vector<7x256xf32>
    %291 = arith.cmpf oge, %289, %290 : vector<7x256xf32>
    %cst_168 = arith.constant 2.000000e-01 : f32
    %292 = vector.broadcast %cst_168 : f32 to vector<7x256xf32>
    %293 = arith.mulf %292, %289 : vector<7x256xf32>
    %294 = arith.select %291, %289, %293 : vector<7x256xi1>, vector<7x256xf32>
    %c0_169 = arith.constant 0 : index
    %c0_170 = arith.constant 0 : index
    %295 = vector.load %arg22[%c0_169, %c0_170] : memref<14x256xf32, #tpu.memory_space<vmem>>, vector<7x256xf32>
    tpu.vector_store %arg22[%c0_169, %c0_170], %283 {strides = array<i32>} : memref<14x256xf32, #tpu.memory_space<vmem>>, vector<7x256xf32>,
    %c7 = arith.constant 7 : index
    %c0_171 = arith.constant 0 : index
    %296 = vector.load %arg22[%c7, %c0_171] : memref<14x256xf32, #tpu.memory_space<vmem>>, vector<7x256xf32>
    tpu.vector_store %arg22[%c7, %c0_171], %294 {strides = array<i32>} : memref<14x256xf32, #tpu.memory_space<vmem>>, vector<7x256xf32>,
    %c0_172 = arith.constant 0 : index
    %c0_173 = arith.constant 0 : index
    %297 = vector.load %arg22[%c0_172, %c0_173] : memref<14x256xf32, #tpu.memory_space<vmem>>, vector<4x256xf32>
    %298 = arith.truncf %297 : vector<4x256xf32> to vector<4x256xbf16>
    %c0_174 = arith.constant 0 : index
    %c0_175 = arith.constant 0 : index
    %299 = vector.load %arg11[%c0_174, %c0_175] : memref<1024x384xbf16, #tpu.memory_space<vmem>>, vector<256x384xbf16>
    %cst_176 = arith.constant dense<0.000000e+00> : vector<4x384xf32>
    %300 = tpu.matmul %298, %299, %cst_176 {dimension_numbers = #tpu.dot_dimension_numbers<[1], [0], [0], [1], [0, 0, 1, 1], [], []>} : vector<4x256xbf16>, vector<256x384xbf16>, vector<4x384xf32> -> vector<4x384xf32>
    %c1_177 = arith.constant 1 : index
    %c0_178 = arith.constant 0 : index
    %301 = vector.load %arg22[%c1_177, %c0_178] : memref<14x256xf32, #tpu.memory_space<vmem>>, vector<4x256xf32>
    %302 = arith.truncf %301 : vector<4x256xf32> to vector<4x256xbf16>
    %c256_179 = arith.constant 256 : index
    %c0_180 = arith.constant 0 : index
    %303 = vector.load %arg11[%c256_179, %c0_180] : memref<1024x384xbf16, #tpu.memory_space<vmem>>, vector<256x384xbf16>
    %cst_181 = arith.constant dense<0.000000e+00> : vector<4x384xf32>
    %304 = tpu.matmul %302, %303, %cst_181 {dimension_numbers = #tpu.dot_dimension_numbers<[1], [0], [0], [1], [0, 0, 1, 1], [], []>} : vector<4x256xbf16>, vector<256x384xbf16>, vector<4x384xf32> -> vector<4x384xf32>
    %305 = arith.addf %300, %304 : vector<4x384xf32>
    %c2_182 = arith.constant 2 : index
    %c0_183 = arith.constant 0 : index
    %306 = vector.load %arg22[%c2_182, %c0_183] : memref<14x256xf32, #tpu.memory_space<vmem>>, vector<4x256xf32>
    %307 = arith.truncf %306 : vector<4x256xf32> to vector<4x256xbf16>
    %c512 = arith.constant 512 : index
    %c0_184 = arith.constant 0 : index
    %308 = vector.load %arg11[%c512, %c0_184] : memref<1024x384xbf16, #tpu.memory_space<vmem>>, vector<256x384xbf16>
    %cst_185 = arith.constant dense<0.000000e+00> : vector<4x384xf32>
    %309 = tpu.matmul %307, %308, %cst_185 {dimension_numbers = #tpu.dot_dimension_numbers<[1], [0], [0], [1], [0, 0, 1, 1], [], []>} : vector<4x256xbf16>, vector<256x384xbf16>, vector<4x384xf32> -> vector<4x384xf32>
    %310 = arith.addf %305, %309 : vector<4x384xf32>
    %c3_186 = arith.constant 3 : index
    %c0_187 = arith.constant 0 : index
    %311 = vector.load %arg22[%c3_186, %c0_187] : memref<14x256xf32, #tpu.memory_space<vmem>>, vector<4x256xf32>
    %312 = arith.truncf %311 : vector<4x256xf32> to vector<4x256xbf16>
    %c768 = arith.constant 768 : index
    %c0_188 = arith.constant 0 : index
    %313 = vector.load %arg11[%c768, %c0_188] : memref<1024x384xbf16, #tpu.memory_space<vmem>>, vector<256x384xbf16>
    %cst_189 = arith.constant dense<0.000000e+00> : vector<4x384xf32>
    %314 = tpu.matmul %312, %313, %cst_189 {dimension_numbers = #tpu.dot_dimension_numbers<[1], [0], [0], [1], [0, 0, 1, 1], [], []>} : vector<4x256xbf16>, vector<256x384xbf16>, vector<4x384xf32> -> vector<4x384xf32>
    %315 = arith.addf %310, %314 : vector<4x384xf32>
    %c7_190 = arith.constant 7 : index
    %c0_191 = arith.constant 0 : index
    %316 = vector.load %arg22[%c7_190, %c0_191] : memref<14x256xf32, #tpu.memory_space<vmem>>, vector<4x256xf32>
    %317 = arith.truncf %316 : vector<4x256xf32> to vector<4x256xbf16>
    %c0_192 = arith.constant 0 : index
    %c0_193 = arith.constant 0 : index
    %318 = vector.load %arg11[%c0_192, %c0_193] : memref<1024x384xbf16, #tpu.memory_space<vmem>>, vector<256x384xbf16>
    %cst_194 = arith.constant dense<0.000000e+00> : vector<4x384xf32>
    %319 = tpu.matmul %317, %318, %cst_194 {dimension_numbers = #tpu.dot_dimension_numbers<[1], [0], [0], [1], [0, 0, 1, 1], [], []>} : vector<4x256xbf16>, vector<256x384xbf16>, vector<4x384xf32> -> vector<4x384xf32>
    %c8 = arith.constant 8 : index
    %c0_195 = arith.constant 0 : index
    %320 = vector.load %arg22[%c8, %c0_195] : memref<14x256xf32, #tpu.memory_space<vmem>>, vector<4x256xf32>
    %321 = arith.truncf %320 : vector<4x256xf32> to vector<4x256xbf16>
    %c256_196 = arith.constant 256 : index
    %c0_197 = arith.constant 0 : index
    %322 = vector.load %arg11[%c256_196, %c0_197] : memref<1024x384xbf16, #tpu.memory_space<vmem>>, vector<256x384xbf16>
    %cst_198 = arith.constant dense<0.000000e+00> : vector<4x384xf32>
    %323 = tpu.matmul %321, %322, %cst_198 {dimension_numbers = #tpu.dot_dimension_numbers<[1], [0], [0], [1], [0, 0, 1, 1], [], []>} : vector<4x256xbf16>, vector<256x384xbf16>, vector<4x384xf32> -> vector<4x384xf32>
    %324 = arith.addf %319, %323 : vector<4x384xf32>
    %c9 = arith.constant 9 : index
    %c0_199 = arith.constant 0 : index
    %325 = vector.load %arg22[%c9, %c0_199] : memref<14x256xf32, #tpu.memory_space<vmem>>, vector<4x256xf32>
    %326 = arith.truncf %325 : vector<4x256xf32> to vector<4x256xbf16>
    %c512_200 = arith.constant 512 : index
    %c0_201 = arith.constant 0 : index
    %327 = vector.load %arg11[%c512_200, %c0_201] : memref<1024x384xbf16, #tpu.memory_space<vmem>>, vector<256x384xbf16>
    %cst_202 = arith.constant dense<0.000000e+00> : vector<4x384xf32>
    %328 = tpu.matmul %326, %327, %cst_202 {dimension_numbers = #tpu.dot_dimension_numbers<[1], [0], [0], [1], [0, 0, 1, 1], [], []>} : vector<4x256xbf16>, vector<256x384xbf16>, vector<4x384xf32> -> vector<4x384xf32>
    %329 = arith.addf %324, %328 : vector<4x384xf32>
    %c10_203 = arith.constant 10 : index
    %c0_204 = arith.constant 0 : index
    %330 = vector.load %arg22[%c10_203, %c0_204] : memref<14x256xf32, #tpu.memory_space<vmem>>, vector<4x256xf32>
    %331 = arith.truncf %330 : vector<4x256xf32> to vector<4x256xbf16>
    %c768_205 = arith.constant 768 : index
    %c0_206 = arith.constant 0 : index
    %332 = vector.load %arg11[%c768_205, %c0_206] : memref<1024x384xbf16, #tpu.memory_space<vmem>>, vector<256x384xbf16>
    %cst_207 = arith.constant dense<0.000000e+00> : vector<4x384xf32>
    %333 = tpu.matmul %331, %332, %cst_207 {dimension_numbers = #tpu.dot_dimension_numbers<[1], [0], [0], [1], [0, 0, 1, 1], [], []>} : vector<4x256xbf16>, vector<256x384xbf16>, vector<4x384xf32> -> vector<4x384xf32>
    %334 = arith.addf %329, %333 : vector<4x384xf32>
    %c0_208 = arith.constant 0 : index
    %c0_209 = arith.constant 0 : index
    %335 = vector.load %arg12[%c0_208, %c0_209] : memref<3x384xf32, #tpu.memory_space<vmem>>, vector<1x384xf32>
    %c1_210 = arith.constant 1 : index
    %c0_211 = arith.constant 0 : index
    %336 = vector.load %arg12[%c1_210, %c0_211] : memref<3x384xf32, #tpu.memory_space<vmem>>, vector<1x384xf32>
    %c2_212 = arith.constant 2 : index
    %c0_213 = arith.constant 0 : index
    %337 = vector.load %arg12[%c2_212, %c0_213] : memref<3x384xf32, #tpu.memory_space<vmem>>, vector<1x384xf32>
    %338 = vector.broadcast %335 : vector<1x384xf32> to vector<4x384xf32>
    %339 = arith.addf %315, %338 : vector<4x384xf32>
    %340 = vector.broadcast %335 : vector<1x384xf32> to vector<4x384xf32>
    %341 = arith.addf %334, %340 : vector<4x384xf32>
    %cst_214 = arith.constant dense<0.000000e+00> : vector<384xf32>
    %342 = vector.multi_reduction <add>, %339, %cst_214 [0] : vector<4x384xf32> to vector<384xf32>
    %343 = vector.shape_cast %342 : vector<384xf32> to vector<1x384xf32>
    %cst_215 = arith.constant dense<0.000000e+00> : vector<384xf32>
    %344 = vector.multi_reduction <add>, %341, %cst_215 [0] : vector<4x384xf32> to vector<384xf32>
    %345 = vector.shape_cast %344 : vector<384xf32> to vector<1x384xf32>
    %346 = arith.addf %343, %345 : vector<1x384xf32>
    %cst_216 = arith.constant 1.250000e-01 : f32
    %347 = vector.broadcast %cst_216 : f32 to vector<1x384xf32>
    %348 = arith.mulf %346, %347 : vector<1x384xf32>
    %349 = vector.broadcast %348 : vector<1x384xf32> to vector<4x384xf32>
    %350 = arith.subf %339, %349 : vector<4x384xf32>
    %351 = arith.mulf %350, %350 : vector<4x384xf32>
    %cst_217 = arith.constant dense<0.000000e+00> : vector<384xf32>
    %352 = vector.multi_reduction <add>, %351, %cst_217 [0] : vector<4x384xf32> to vector<384xf32>
    %353 = vector.shape_cast %352 : vector<384xf32> to vector<1x384xf32>
    %354 = vector.broadcast %348 : vector<1x384xf32> to vector<4x384xf32>
    %355 = arith.subf %341, %354 : vector<4x384xf32>
    %356 = arith.mulf %355, %355 : vector<4x384xf32>
    %cst_218 = arith.constant dense<0.000000e+00> : vector<384xf32>
    %357 = vector.multi_reduction <add>, %356, %cst_218 [0] : vector<4x384xf32> to vector<384xf32>
    %358 = vector.shape_cast %357 : vector<384xf32> to vector<1x384xf32>
    %359 = arith.addf %353, %358 : vector<1x384xf32>
    %cst_219 = arith.constant 1.250000e-01 : f32
    %360 = vector.broadcast %cst_219 : f32 to vector<1x384xf32>
    %361 = arith.mulf %359, %360 : vector<1x384xf32>
    %cst_220 = arith.constant 9.99999974E-6 : f32
    %362 = vector.broadcast %cst_220 : f32 to vector<1x384xf32>
    %363 = arith.addf %361, %362 : vector<1x384xf32>
    %364 = math.rsqrt %363 : vector<1x384xf32>
    %365 = arith.mulf %336, %364 : vector<1x384xf32>
    %366 = vector.broadcast %348 : vector<1x384xf32> to vector<4x384xf32>
    %367 = arith.subf %339, %366 : vector<4x384xf32>
    %368 = vector.broadcast %365 : vector<1x384xf32> to vector<4x384xf32>
    %369 = arith.mulf %367, %368 : vector<4x384xf32>
    %370 = vector.broadcast %337 : vector<1x384xf32> to vector<4x384xf32>
    %371 = arith.addf %369, %370 : vector<4x384xf32>
    %cst_221 = arith.constant 0.000000e+00 : f32
    %372 = vector.broadcast %cst_221 : f32 to vector<4x384xf32>
    %373 = arith.cmpf oge, %371, %372 : vector<4x384xf32>
    %cst_222 = arith.constant 2.000000e-01 : f32
    %374 = vector.broadcast %cst_222 : f32 to vector<4x384xf32>
    %375 = arith.mulf %374, %371 : vector<4x384xf32>
    %376 = arith.select %373, %371, %375 : vector<4x384xi1>, vector<4x384xf32>
    %377 = vector.broadcast %348 : vector<1x384xf32> to vector<4x384xf32>
    %378 = arith.subf %341, %377 : vector<4x384xf32>
    %379 = vector.broadcast %365 : vector<1x384xf32> to vector<4x384xf32>
    %380 = arith.mulf %378, %379 : vector<4x384xf32>
    %381 = vector.broadcast %337 : vector<1x384xf32> to vector<4x384xf32>
    %382 = arith.addf %380, %381 : vector<4x384xf32>
    %cst_223 = arith.constant 0.000000e+00 : f32
    %383 = vector.broadcast %cst_223 : f32 to vector<4x384xf32>
    %384 = arith.cmpf oge, %382, %383 : vector<4x384xf32>
    %cst_224 = arith.constant 2.000000e-01 : f32
    %385 = vector.broadcast %cst_224 : f32 to vector<4x384xf32>
    %386 = arith.mulf %385, %382 : vector<4x384xf32>
    %387 = arith.select %384, %382, %386 : vector<4x384xi1>, vector<4x384xf32>
    %c0_225 = arith.constant 0 : index
    %c0_226 = arith.constant 0 : index
    %388 = vector.load %arg23[%c0_225, %c0_226] : memref<8x384xf32, #tpu.memory_space<vmem>>, vector<4x384xf32>
    tpu.vector_store %arg23[%c0_225, %c0_226], %376 {strides = array<i32>} : memref<8x384xf32, #tpu.memory_space<vmem>>, vector<4x384xf32>,
    %c4 = arith.constant 4 : index
    %c0_227 = arith.constant 0 : index
    %389 = vector.load %arg23[%c4, %c0_227] : memref<8x384xf32, #tpu.memory_space<vmem>>, vector<4x384xf32>
    tpu.vector_store %arg23[%c4, %c0_227], %387 {strides = array<i32>} : memref<8x384xf32, #tpu.memory_space<vmem>>, vector<4x384xf32>,
    %c0_228 = arith.constant 0 : index
    %c0_229 = arith.constant 0 : index
    %390 = vector.load %arg23[%c0_228, %c0_229] : memref<8x384xf32, #tpu.memory_space<vmem>>, vector<1x384xf32>
    %391 = arith.truncf %390 : vector<1x384xf32> to vector<1x384xbf16>
    %c0_230 = arith.constant 0 : index
    %c0_231 = arith.constant 0 : index
    %392 = vector.load %arg13[%c0_230, %c0_231] : memref<1536x128xbf16, #tpu.memory_space<vmem>>, vector<384x128xbf16>
    %cst_232 = arith.constant dense<0.000000e+00> : vector<1x128xf32>
    %393 = tpu.matmul %391, %392, %cst_232 {dimension_numbers = #tpu.dot_dimension_numbers<[1], [0], [0], [1], [0, 0, 1, 1], [], []>} : vector<1x384xbf16>, vector<384x128xbf16>, vector<1x128xf32> -> vector<1x128xf32>
    %c1_233 = arith.constant 1 : index
    %c0_234 = arith.constant 0 : index
    %394 = vector.load %arg23[%c1_233, %c0_234] : memref<8x384xf32, #tpu.memory_space<vmem>>, vector<1x384xf32>
    %395 = arith.truncf %394 : vector<1x384xf32> to vector<1x384xbf16>
    %c384_235 = arith.constant 384 : index
    %c0_236 = arith.constant 0 : index
    %396 = vector.load %arg13[%c384_235, %c0_236] : memref<1536x128xbf16, #tpu.memory_space<vmem>>, vector<384x128xbf16>
    %cst_237 = arith.constant dense<0.000000e+00> : vector<1x128xf32>
    %397 = tpu.matmul %395, %396, %cst_237 {dimension_numbers = #tpu.dot_dimension_numbers<[1], [0], [0], [1], [0, 0, 1, 1], [], []>} : vector<1x384xbf16>, vector<384x128xbf16>, vector<1x128xf32> -> vector<1x128xf32>
    %398 = arith.addf %393, %397 : vector<1x128xf32>
    %c2_238 = arith.constant 2 : index
    %c0_239 = arith.constant 0 : index
    %399 = vector.load %arg23[%c2_238, %c0_239] : memref<8x384xf32, #tpu.memory_space<vmem>>, vector<1x384xf32>
    %400 = arith.truncf %399 : vector<1x384xf32> to vector<1x384xbf16>
    %c768_240 = arith.constant 768 : index
    %c0_241 = arith.constant 0 : index
    %401 = vector.load %arg13[%c768_240, %c0_241] : memref<1536x128xbf16, #tpu.memory_space<vmem>>, vector<384x128xbf16>
    %cst_242 = arith.constant dense<0.000000e+00> : vector<1x128xf32>
    %402 = tpu.matmul %400, %401, %cst_242 {dimension_numbers = #tpu.dot_dimension_numbers<[1], [0], [0], [1], [0, 0, 1, 1], [], []>} : vector<1x384xbf16>, vector<384x128xbf16>, vector<1x128xf32> -> vector<1x128xf32>
    %403 = arith.addf %398, %402 : vector<1x128xf32>
    %c3_243 = arith.constant 3 : index
    %c0_244 = arith.constant 0 : index
    %404 = vector.load %arg23[%c3_243, %c0_244] : memref<8x384xf32, #tpu.memory_space<vmem>>, vector<1x384xf32>
    %405 = arith.truncf %404 : vector<1x384xf32> to vector<1x384xbf16>
    %c1152 = arith.constant 1152 : index
    %c0_245 = arith.constant 0 : index
    %406 = vector.load %arg13[%c1152, %c0_245] : memref<1536x128xbf16, #tpu.memory_space<vmem>>, vector<384x128xbf16>
    %cst_246 = arith.constant dense<0.000000e+00> : vector<1x128xf32>
    %407 = tpu.matmul %405, %406, %cst_246 {dimension_numbers = #tpu.dot_dimension_numbers<[1], [0], [0], [1], [0, 0, 1, 1], [], []>} : vector<1x384xbf16>, vector<384x128xbf16>, vector<1x128xf32> -> vector<1x128xf32>
    %408 = arith.addf %403, %407 : vector<1x128xf32>
    %c4_247 = arith.constant 4 : index
    %c0_248 = arith.constant 0 : index
    %409 = vector.load %arg23[%c4_247, %c0_248] : memref<8x384xf32, #tpu.memory_space<vmem>>, vector<1x384xf32>
    %410 = arith.truncf %409 : vector<1x384xf32> to vector<1x384xbf16>
    %c0_249 = arith.constant 0 : index
    %c0_250 = arith.constant 0 : index
    %411 = vector.load %arg13[%c0_249, %c0_250] : memref<1536x128xbf16, #tpu.memory_space<vmem>>, vector<384x128xbf16>
    %cst_251 = arith.constant dense<0.000000e+00> : vector<1x128xf32>
    %412 = tpu.matmul %410, %411, %cst_251 {dimension_numbers = #tpu.dot_dimension_numbers<[1], [0], [0], [1], [0, 0, 1, 1], [], []>} : vector<1x384xbf16>, vector<384x128xbf16>, vector<1x128xf32> -> vector<1x128xf32>
    %c5 = arith.constant 5 : index
    %c0_252 = arith.constant 0 : index
    %413 = vector.load %arg23[%c5, %c0_252] : memref<8x384xf32, #tpu.memory_space<vmem>>, vector<1x384xf32>
    %414 = arith.truncf %413 : vector<1x384xf32> to vector<1x384xbf16>
    %c384_253 = arith.constant 384 : index
    %c0_254 = arith.constant 0 : index
    %415 = vector.load %arg13[%c384_253, %c0_254] : memref<1536x128xbf16, #tpu.memory_space<vmem>>, vector<384x128xbf16>
    %cst_255 = arith.constant dense<0.000000e+00> : vector<1x128xf32>
    %416 = tpu.matmul %414, %415, %cst_255 {dimension_numbers = #tpu.dot_dimension_numbers<[1], [0], [0], [1], [0, 0, 1, 1], [], []>} : vector<1x384xbf16>, vector<384x128xbf16>, vector<1x128xf32> -> vector<1x128xf32>
    %417 = arith.addf %412, %416 : vector<1x128xf32>
    %c6 = arith.constant 6 : index
    %c0_256 = arith.constant 0 : index
    %418 = vector.load %arg23[%c6, %c0_256] : memref<8x384xf32, #tpu.memory_space<vmem>>, vector<1x384xf32>
    %419 = arith.truncf %418 : vector<1x384xf32> to vector<1x384xbf16>
    %c768_257 = arith.constant 768 : index
    %c0_258 = arith.constant 0 : index
    %420 = vector.load %arg13[%c768_257, %c0_258] : memref<1536x128xbf16, #tpu.memory_space<vmem>>, vector<384x128xbf16>
    %cst_259 = arith.constant dense<0.000000e+00> : vector<1x128xf32>
    %421 = tpu.matmul %419, %420, %cst_259 {dimension_numbers = #tpu.dot_dimension_numbers<[1], [0], [0], [1], [0, 0, 1, 1], [], []>} : vector<1x384xbf16>, vector<384x128xbf16>, vector<1x128xf32> -> vector<1x128xf32>
    %422 = arith.addf %417, %421 : vector<1x128xf32>
    %c7_260 = arith.constant 7 : index
    %c0_261 = arith.constant 0 : index
    %423 = vector.load %arg23[%c7_260, %c0_261] : memref<8x384xf32, #tpu.memory_space<vmem>>, vector<1x384xf32>
    %424 = arith.truncf %423 : vector<1x384xf32> to vector<1x384xbf16>
    %c1152_262 = arith.constant 1152 : index
    %c0_263 = arith.constant 0 : index
    %425 = vector.load %arg13[%c1152_262, %c0_263] : memref<1536x128xbf16, #tpu.memory_space<vmem>>, vector<384x128xbf16>
    %cst_264 = arith.constant dense<0.000000e+00> : vector<1x128xf32>
    %426 = tpu.matmul %424, %425, %cst_264 {dimension_numbers = #tpu.dot_dimension_numbers<[1], [0], [0], [1], [0, 0, 1, 1], [], []>} : vector<1x384xbf16>, vector<384x128xbf16>, vector<1x128xf32> -> vector<1x128xf32>
    %427 = arith.addf %422, %426 : vector<1x128xf32>
    %c0_265 = arith.constant 0 : index
    %c0_266 = arith.constant 0 : index
    %428 = vector.load %arg14[%c0_265, %c0_266] : memref<3x128xf32, #tpu.memory_space<vmem>>, vector<1x128xf32>
    %c1_267 = arith.constant 1 : index
    %c0_268 = arith.constant 0 : index
    %429 = vector.load %arg14[%c1_267, %c0_268] : memref<3x128xf32, #tpu.memory_space<vmem>>, vector<1x128xf32>
    %c2_269 = arith.constant 2 : index
    %c0_270 = arith.constant 0 : index
    %430 = vector.load %arg14[%c2_269, %c0_270] : memref<3x128xf32, #tpu.memory_space<vmem>>, vector<1x128xf32>
    %431 = arith.addf %408, %428 : vector<1x128xf32>
    %432 = arith.addf %427, %428 : vector<1x128xf32>
    %cst_271 = arith.constant dense<0.000000e+00> : vector<128xf32>
    %433 = vector.multi_reduction <add>, %431, %cst_271 [0] : vector<1x128xf32> to vector<128xf32>
    %434 = vector.shape_cast %433 : vector<128xf32> to vector<1x128xf32>
    %cst_272 = arith.constant dense<0.000000e+00> : vector<128xf32>
    %435 = vector.multi_reduction <add>, %432, %cst_272 [0] : vector<1x128xf32> to vector<128xf32>
    %436 = vector.shape_cast %435 : vector<128xf32> to vector<1x128xf32>
    %437 = arith.addf %434, %436 : vector<1x128xf32>
    %cst_273 = arith.constant 5.000000e-01 : f32
    %438 = vector.broadcast %cst_273 : f32 to vector<1x128xf32>
    %439 = arith.mulf %437, %438 : vector<1x128xf32>
    %440 = arith.subf %431, %439 : vector<1x128xf32>
    %441 = arith.mulf %440, %440 : vector<1x128xf32>
    %cst_274 = arith.constant dense<0.000000e+00> : vector<128xf32>
    %442 = vector.multi_reduction <add>, %441, %cst_274 [0] : vector<1x128xf32> to vector<128xf32>
    %443 = vector.shape_cast %442 : vector<128xf32> to vector<1x128xf32>
    %444 = arith.subf %432, %439 : vector<1x128xf32>
    %445 = arith.mulf %444, %444 : vector<1x128xf32>
    %cst_275 = arith.constant dense<0.000000e+00> : vector<128xf32>
    %446 = vector.multi_reduction <add>, %445, %cst_275 [0] : vector<1x128xf32> to vector<128xf32>
    %447 = vector.shape_cast %446 : vector<128xf32> to vector<1x128xf32>
    %448 = arith.addf %443, %447 : vector<1x128xf32>
    %cst_276 = arith.constant 5.000000e-01 : f32
    %449 = vector.broadcast %cst_276 : f32 to vector<1x128xf32>
    %450 = arith.mulf %448, %449 : vector<1x128xf32>
    %cst_277 = arith.constant 9.99999974E-6 : f32
    %451 = vector.broadcast %cst_277 : f32 to vector<1x128xf32>
    %452 = arith.addf %450, %451 : vector<1x128xf32>
    %453 = math.rsqrt %452 : vector<1x128xf32>
    %454 = arith.mulf %429, %453 : vector<1x128xf32>
    %455 = arith.subf %431, %439 : vector<1x128xf32>
    %456 = arith.mulf %455, %454 : vector<1x128xf32>
    %457 = arith.addf %456, %430 : vector<1x128xf32>
    %cst_278 = arith.constant 0.000000e+00 : f32
    %458 = vector.broadcast %cst_278 : f32 to vector<1x128xf32>
    %459 = arith.cmpf oge, %457, %458 : vector<1x128xf32>
    %cst_279 = arith.constant 2.000000e-01 : f32
    %460 = vector.broadcast %cst_279 : f32 to vector<1x128xf32>
    %461 = arith.mulf %460, %457 : vector<1x128xf32>
    %462 = arith.select %459, %457, %461 : vector<1x128xi1>, vector<1x128xf32>
    %463 = arith.subf %432, %439 : vector<1x128xf32>
    %464 = arith.mulf %463, %454 : vector<1x128xf32>
    %465 = arith.addf %464, %430 : vector<1x128xf32>
    %cst_280 = arith.constant 0.000000e+00 : f32
    %466 = vector.broadcast %cst_280 : f32 to vector<1x128xf32>
    %467 = arith.cmpf oge, %465, %466 : vector<1x128xf32>
    %cst_281 = arith.constant 2.000000e-01 : f32
    %468 = vector.broadcast %cst_281 : f32 to vector<1x128xf32>
    %469 = arith.mulf %468, %465 : vector<1x128xf32>
    %470 = arith.select %467, %465, %469 : vector<1x128xi1>, vector<1x128xf32>
    %c0_282 = arith.constant 0 : index
    %c0_283 = arith.constant 0 : index
    %471 = vector.load %arg15[%c0_282, %c0_283] : memref<1x128xf32, #tpu.memory_space<vmem>>, vector<1x128xf32>
    %c0_284 = arith.constant 0 : index
    %c0_285 = arith.constant 0 : index
    %472 = vector.load %arg16[%c0_284, %c0_285] : memref<1x128xf32, #tpu.memory_space<vmem>>, vector<1x128xf32>
    %c0_286 = arith.constant 0 : index
    %c0_287 = arith.constant 0 : index
    %473 = vector.load %arg17[%c0_286, %c0_287] : memref<1x1xf32, #tpu.memory_space<vmem>>, vector<1x1xf32>
    %474 = arith.mulf %462, %471 : vector<1x128xf32>
    %cst_288 = arith.constant dense<0.000000e+00> : vector<1xf32>
    %475 = vector.multi_reduction <add>, %474, %cst_288 [1] : vector<1x128xf32> to vector<1xf32>
    %476 = vector.shape_cast %475 : vector<1xf32> to vector<1x1xf32>
    %477 = vector.extract_strided_slice %0 {offsets = [0, 0], sizes = [1, 128], strides = [1, 1]} : vector<2x128xf32> to vector<1x128xf32>
    %478 = arith.mulf %477, %472 : vector<1x128xf32>
    %cst_289 = arith.constant dense<0.000000e+00> : vector<1xf32>
    %479 = vector.multi_reduction <add>, %478, %cst_289 [1] : vector<1x128xf32> to vector<1xf32>
    %480 = vector.shape_cast %479 : vector<1xf32> to vector<1x1xf32>
    %481 = arith.addf %476, %480 : vector<1x1xf32>
    %482 = arith.addf %481, %473 : vector<1x1xf32>
    %c0_290 = arith.constant 0 : index
    %c0_291 = arith.constant 0 : index
    %483 = vector.load %arg20[%c0_290, %c0_291] : memref<2x1xf32, #tpu.memory_space<vmem>>, vector<1x1xf32>
    tpu.vector_store %arg20[%c0_290, %c0_291], %482 {strides = array<i32>} : memref<2x1xf32, #tpu.memory_space<vmem>>, vector<1x1xf32>,
    %484 = arith.negf %482 : vector<1x1xf32>
    %485 = math.exp %484 : vector<1x1xf32>
    %cst_292 = arith.constant 1.000000e+00 : f32
    %486 = vector.broadcast %cst_292 : f32 to vector<1x1xf32>
    %487 = arith.addf %486, %485 : vector<1x1xf32>
    %488 = arith.divf %486, %487 : vector<1x1xf32>
    %c0_293 = arith.constant 0 : index
    %c0_294 = arith.constant 0 : index
    %489 = vector.load %arg19[%c0_293, %c0_294] : memref<2x1xf32, #tpu.memory_space<vmem>>, vector<1x1xf32>
    tpu.vector_store %arg19[%c0_293, %c0_294], %488 {strides = array<i32>} : memref<2x1xf32, #tpu.memory_space<vmem>>, vector<1x1xf32>,
    %490 = arith.mulf %470, %471 : vector<1x128xf32>
    %cst_295 = arith.constant dense<0.000000e+00> : vector<1xf32>
    %491 = vector.multi_reduction <add>, %490, %cst_295 [1] : vector<1x128xf32> to vector<1xf32>
    %492 = vector.shape_cast %491 : vector<1xf32> to vector<1x1xf32>
    %493 = vector.extract_strided_slice %0 {offsets = [1, 0], sizes = [1, 128], strides = [1, 1]} : vector<2x128xf32> to vector<1x128xf32>
    %494 = arith.mulf %493, %472 : vector<1x128xf32>
    %cst_296 = arith.constant dense<0.000000e+00> : vector<1xf32>
    %495 = vector.multi_reduction <add>, %494, %cst_296 [1] : vector<1x128xf32> to vector<1xf32>
    %496 = vector.shape_cast %495 : vector<1xf32> to vector<1x1xf32>
    %497 = arith.addf %492, %496 : vector<1x1xf32>
    %498 = arith.addf %497, %473 : vector<1x1xf32>
    %c1_297 = arith.constant 1 : index
    %c0_298 = arith.constant 0 : index
    %499 = vector.load %arg20[%c1_297, %c0_298] : memref<2x1xf32, #tpu.memory_space<vmem>>, vector<1x1xf32>
    tpu.vector_store %arg20[%c1_297, %c0_298], %498 {strides = array<i32>} : memref<2x1xf32, #tpu.memory_space<vmem>>, vector<1x1xf32>,
    %500 = arith.negf %498 : vector<1x1xf32>
    %501 = math.exp %500 : vector<1x1xf32>
    %cst_299 = arith.constant 1.000000e+00 : f32
    %502 = vector.broadcast %cst_299 : f32 to vector<1x1xf32>
    %503 = arith.addf %502, %501 : vector<1x1xf32>
    %504 = arith.divf %502, %503 : vector<1x1xf32>
    %c1_300 = arith.constant 1 : index
    %c0_301 = arith.constant 0 : index
    %505 = vector.load %arg19[%c1_300, %c0_301] : memref<2x1xf32, #tpu.memory_space<vmem>>, vector<1x1xf32>
    tpu.vector_store %arg19[%c1_300, %c0_301], %504 {strides = array<i32>} : memref<2x1xf32, #tpu.memory_space<vmem>>, vector<1x1xf32>,
    return
  }
  func.func @transform_0(%arg0: i32) -> (i32, i32) {
    %c0_i32 = arith.constant 0 : i32
    %c0_i32_0 = arith.constant 0 : i32
    %c0_i32_1 = arith.constant 0 : i32
    return %c0_i32, %c0_i32_0 : i32, i32
  }
  func.func @transform_1(%arg0: i32) -> (i32, i32) {
    %c0_i32 = arith.constant 0 : i32
    %c0_i32_0 = arith.constant 0 : i32
    %c0_i32_1 = arith.constant 0 : i32
    return %c0_i32, %c0_i32_0 : i32, i32
  }
  func.func @transform_2(%arg0: i32) -> (i32, i32) {
    %c0_i32 = arith.constant 0 : i32
    %c0_i32_0 = arith.constant 0 : i32
    %c0_i32_1 = arith.constant 0 : i32
    return %c0_i32, %c0_i32_0 : i32, i32
  }
  func.func @transform_3(%arg0: i32) -> (i32, i32) {
    %c0_i32 = arith.constant 0 : i32
    %c0_i32_0 = arith.constant 0 : i32
    %c0_i32_1 = arith.constant 0 : i32
    return %c0_i32, %c0_i32_0 : i32, i32
  }
  func.func @transform_4(%arg0: i32) -> (i32, i32) {
    %c0_i32 = arith.constant 0 : i32
    %c0_i32_0 = arith.constant 0 : i32
    %c0_i32_1 = arith.constant 0 : i32
    return %c0_i32, %c0_i32_0 : i32, i32
  }
  func.func @transform_5(%arg0: i32) -> (i32, i32) {
    %c0_i32 = arith.constant 0 : i32
    %c0_i32_0 = arith.constant 0 : i32
    %c0_i32_1 = arith.constant 0 : i32
    return %c0_i32, %c0_i32_0 : i32, i32
  }
  func.func @transform_6(%arg0: i32) -> (i32, i32) {
    %c0_i32 = arith.constant 0 : i32
    %c0_i32_0 = arith.constant 0 : i32
    %c0_i32_1 = arith.constant 0 : i32
    return %c0_i32, %c0_i32_0 : i32, i32
  }
  func.func @transform_7(%arg0: i32) -> (i32, i32) {
    %c0_i32 = arith.constant 0 : i32
    %c0_i32_0 = arith.constant 0 : i32
    %c0_i32_1 = arith.constant 0 : i32
    return %c0_i32, %c0_i32_0 : i32, i32
  }
  func.func @transform_8(%arg0: i32) -> (i32, i32) {
    %c0_i32 = arith.constant 0 : i32
    %c0_i32_0 = arith.constant 0 : i32
    %c0_i32_1 = arith.constant 0 : i32
    return %c0_i32, %c0_i32_0 : i32, i32
  }
  func.func @transform_9(%arg0: i32) -> (i32, i32) {
    %c0_i32 = arith.constant 0 : i32
    %c0_i32_0 = arith.constant 0 : i32
    %c0_i32_1 = arith.constant 0 : i32
    return %c0_i32, %c0_i32_0 : i32, i32
  }
  func.func @transform_10(%arg0: i32) -> (i32, i32) {
    %c0_i32 = arith.constant 0 : i32
    %c0_i32_0 = arith.constant 0 : i32
    %c0_i32_1 = arith.constant 0 : i32
    return %c0_i32, %c0_i32_0 : i32, i32
  }
  func.func @transform_11(%arg0: i32) -> (i32, i32) {
    %c0_i32 = arith.constant 0 : i32
    %c0_i32_0 = arith.constant 0 : i32
    %c0_i32_1 = arith.constant 0 : i32
    return %c0_i32, %c0_i32_0 : i32, i32
  }
  func.func @transform_12(%arg0: i32) -> (i32, i32) {
    %c0_i32 = arith.constant 0 : i32
    %c0_i32_0 = arith.constant 0 : i32
    %c0_i32_1 = arith.constant 0 : i32
    return %c0_i32, %c0_i32_0 : i32, i32
  }
  func.func @transform_13(%arg0: i32) -> (i32, i32) {
    %c0_i32 = arith.constant 0 : i32
    %c0_i32_0 = arith.constant 0 : i32
    %c0_i32_1 = arith.constant 0 : i32
    return %c0_i32, %c0_i32_0 : i32, i32
  }
  func.func @transform_14(%arg0: i32) -> (i32, i32) {
    %c0_i32 = arith.constant 0 : i32
    %c0_i32_0 = arith.constant 0 : i32
    %c0_i32_1 = arith.constant 0 : i32
    return %c0_i32, %c0_i32_0 : i32, i32
  }
  func.func @transform_15(%arg0: i32) -> (i32, i32) {
    %c0_i32 = arith.constant 0 : i32
    %c0_i32_0 = arith.constant 0 : i32
    %c0_i32_1 = arith.constant 0 : i32
    return %c0_i32, %c0_i32_0 : i32, i32
  }
  func.func @transform_16(%arg0: i32) -> (i32, i32) {
    %c0_i32 = arith.constant 0 : i32
    %c0_i32_0 = arith.constant 0 : i32
    %c0_i32_1 = arith.constant 0 : i32
    return %c0_i32, %c0_i32_0 : i32, i32
  }
  func.func @transform_17(%arg0: i32) -> (i32, i32) {
    %c0_i32 = arith.constant 0 : i32
    %c0_i32_0 = arith.constant 0 : i32
    %c0_i32_1 = arith.constant 0 : i32
    return %c0_i32, %c0_i32_0 : i32, i32
  }
  func.func @transform_18(%arg0: i32) -> (i32, i32) {
    %c0_i32 = arith.constant 0 : i32
    %c0_i32_0 = arith.constant 0 : i32
    %c0_i32_1 = arith.constant 0 : i32
    return %c0_i32, %c0_i32_0 : i32, i32
  }
  func.func @transform_19(%arg0: i32) -> (i32, i32) {
    %c0_i32 = arith.constant 0 : i32
    %c0_i32_0 = arith.constant 0 : i32
    %c0_i32_1 = arith.constant 0 : i32
    return %c0_i32, %c0_i32_0 : i32, i32
  }
}

</mosaic_0001>

<llo_original>
// kernel: discriminator_forward.1
$region0: #{discriminator_forward.1}
  #allocation0 [shape = 'u32[]', space=smem, size = 0x4, offset = 0x4, fixed_abs, tag = 'smem constant byte address 0x4 - core index']
  #allocation1 [shape = 'u32[144,128]{1,0:T(1,128)}', space=vmem, size = 0x12000, scoped, tag = 'internal scratch']
  #allocation2 [shape = 'f32[20,128]{1,0:T(8,128)}', space=vmem, size = 0x3000, scoped, tag = 'scratch operand']
  #allocation3 [shape = 'f32[14,256]{1,0:T(8,128)}', space=vmem, size = 0x4000, scoped, tag = 'scratch operand']
  #allocation4 [shape = 'f32[8,384]{1,0:T(8,128)}', space=vmem, size = 0x3000, scoped, tag = 'scratch operand']
  #allocation5 [shape = 'f32[1,1]{1,0:T(1,128)S(1)}', space=vmem, size = 0x200, scoped, tag = 'scoped memory for discriminator_forward.1']
  %s0 = inlined_call_operand.vmem [shape: f32[32,128], index: 0, kind: input, shape index: {}]
  %s1 = inlined_call_operand.vmem [shape: f32[2,128], index: 1, kind: input, shape index: {}]
  %s2 = inlined_call_operand.hbm [shape: bf16[512,128], index: 2, kind: input, shape index: {}]
  %s3 = inlined_call_operand.vmem [shape: bf16[128,128], index: 3, kind: input, shape index: {}]
  %s4 = inlined_call_operand.hbm [shape: f32[3,128], index: 4, kind: input, shape index: {}]
  %s5 = inlined_call_operand.hbm [shape: bf16[512,128], index: 5, kind: input, shape index: {}]
  %s6 = inlined_call_operand.hbm [shape: f32[3,128], index: 6, kind: input, shape index: {}]
  %s7 = inlined_call_operand.hbm [shape: bf16[512,256], index: 7, kind: input, shape index: {}]
  %s8 = inlined_call_operand.hbm [shape: bf16[128,256], index: 8, kind: input, shape index: {}]
  %s9 = inlined_call_operand.hbm [shape: f32[3,256], index: 9, kind: input, shape index: {}]
  %s10 = inlined_call_operand.hbm [shape: bf16[1024,384], index: 10, kind: input, shape index: {}]
  %s11 = inlined_call_operand.hbm [shape: f32[3,384], index: 11, kind: input, shape index: {}]
  %s12 = inlined_call_operand.hbm [shape: bf16[1536,128], index: 12, kind: input, shape index: {}]
  %s13 = inlined_call_operand.hbm [shape: f32[3,128], index: 13, kind: input, shape index: {}]
  %s14 = inlined_call_operand.hbm [shape: f32[1,128], index: 14, kind: input, shape index: {}]
  %s15 = inlined_call_operand.hbm [shape: f32[1,128], index: 15, kind: input, shape index: {}]
  %s16 = inlined_call_operand.<no memory space> [shape: f32[1,1], index: 16, kind: input, shape index: {}]
  %s17 = inlined_call_operand.vmem [shape: f32[26,128], index: 17, kind: output, shape index: {0}]
  %s18 = inlined_call_operand.vmem [shape: f32[2,1], index: 18, kind: output, shape index: {1}]
  %s19 = inlined_call_operand.vmem [shape: f32[2,1], index: 19, kind: output, shape index: {2}]
  %20 = xla_tuple %s17, %s18, %s19
  %s21 = sld [smem:[#allocation0]]
  $region146: #{discriminator_forward.1} parent=0
    _
  %s23 = ssub.s32 1, %s21
  %s24 = scalar_select 0, %s23, %s21
  %v25 = vstv %s16
  %26 = vst [vmem:[#allocation5] sm:$0x1] %v25
  $region1: #{discriminator_forward.1} parent=0
    #allocation6 [shape = 'u8[131072]{0}', space=vmem, size = 0x20000, scoped, tag = 'input window, operand 2, single buffered']
    #allocation7 [shape = 's32[1]{0}', space=sflag, size = 0x4, scoped, tag = 'scoped memory for discriminator_forward.1']
    #allocation8 [shape = 'u8[2048]{0}', space=vmem, size = 0x800, scoped, tag = 'input window, operand 4, single buffered']
    #allocation9 [shape = 's32[1]{0}', space=sflag, size = 0x4, scoped, tag = 'scoped memory for discriminator_forward.1']
    #allocation10 [shape = 'u8[131072]{0}', space=vmem, size = 0x20000, scoped, tag = 'input window, operand 5, single buffered']
    #allocation11 [shape = 'u8[2048]{0}', space=vmem, size = 0x800, scoped, tag = 'input window, operand 6, single buffered']
    #allocation12 [shape = 's32[1]{0}', space=sflag, size = 0x4, scoped, tag = 'scoped memory for discriminator_forward.1']
    #allocation13 [shape = 'u8[262144]{0}', space=vmem, size = 0x40000, scoped, tag = 'input window, operand 7, single buffered']
    #allocation14 [shape = 'u8[65536]{0}', space=vmem, size = 0x10000, scoped, tag = 'input window, operand 8, single buffered']
    #allocation15 [shape = 's32[1]{0}', space=sflag, size = 0x4, scoped, tag = 'scoped memory for discriminator_forward.1']
    #allocation16 [shape = 'u8[4096]{0}', space=vmem, size = 0x1000, scoped, tag = 'input window, operand 9, single buffered']
    #allocation17 [shape = 'u8[786432]{0}', space=vmem, size = 0xc0000, scoped, tag = 'input window, operand 10, single buffered']
    #allocation18 [shape = 's32[1]{0}', space=sflag, size = 0x4, scoped, tag = 'scoped memory for discriminator_forward.1']
    #allocation19 [shape = 'u8[6144]{0}', space=vmem, size = 0x1800, scoped, tag = 'input window, operand 11, single buffered']
    #allocation20 [shape = 'u8[393216]{0}', space=vmem, size = 0x60000, scoped, tag = 'input window, operand 12, single buffered']
    #allocation21 [shape = 's32[1]{0}', space=sflag, size = 0x4, scoped, tag = 'scoped memory for discriminator_forward.1']
    #allocation22 [shape = 'u8[2048]{0}', space=vmem, size = 0x800, scoped, tag = 'input window, operand 13, single buffered']
    #allocation23 [shape = 'u8[512]{0}', space=vmem, size = 0x400, scoped, tag = 'input window, operand 14, single buffered']
    #allocation24 [shape = 's32[1]{0}', space=sflag, size = 0x4, scoped, tag = 'scoped memory for discriminator_forward.1']
    #allocation25 [shape = 'u8[512]{0}', space=vmem, size = 0x400, scoped, tag = 'input window, operand 15, single buffered']
    %27 = vsyncpa [#allocation7], 0
    %28 = vsyncpa [#allocation9], 0
    %29 = vsyncpa [#allocation12], 0
    %30 = vsyncpa [#allocation15], 0
    %31 = vsyncpa [#allocation18], 0
    %32 = vsyncpa [#allocation21], 0
    %33 = vsyncpa [#allocation24], 0
    // Predicated region
    $region2: #{discriminator_forward.1} parent=1 // pred_check
      _
    $region3: #{discriminator_forward.1} parent=1 // pred_check_branch
      %35 = sbr.rel (0) target = $region5
    $region4: #{discriminator_forward.1} parent=1 // pred_region
      _
    $region5: #{discriminator_forward.1} parent=1 // pred_fallthru
      _
    // Predicated region
    $region6: #{discriminator_forward.1} parent=1 // pred_check
      _
    $region7: #{discriminator_forward.1} parent=1 // pred_check_branch
      %37 = sbr.rel (0) target = $region9
    $region8: #{discriminator_forward.1} parent=1 // pred_region
      _
    $region9: #{discriminator_forward.1} parent=1 // pred_fallthru
      _
    // Predicated region
    $region10: #{discriminator_forward.1} parent=1 // pred_check
      _
    $region11: #{discriminator_forward.1} parent=1 // pred_check_branch
      %39 = sbr.rel (0) target = $region13
    $region12: #{discriminator_forward.1} parent=1 // pred_region
      %s41 = ssub.s32 4096, 4096
      %42 = vsyncadd [#allocation7], %s41
      %s43 = sshll.u32 [#allocation6], 4
      %s44 = int_to_ptr.vmem [resolvable:$true] %s43
      %49 = dma.hbm_to_vmem [thread:$0]  %s2, 4096, %s44, [#allocation7], 64, 64, 4
    $region13: #{discriminator_forward.1} parent=1 // pred_fallthru
      _
    // Predicated region
    $region14: #{discriminator_forward.1} parent=1 // pred_check
      _
    $region15: #{discriminator_forward.1} parent=1 // pred_check_branch
      %51 = sbr.rel (0) target = $region17
    $region16: #{discriminator_forward.1} parent=1 // pred_region
      _
    $region17: #{discriminator_forward.1} parent=1 // pred_fallthru
      _
    // Predicated region
    $region18: #{discriminator_forward.1} parent=1 // pred_check
      _
    $region19: #{discriminator_forward.1} parent=1 // pred_check_branch
      %53 = sbr.rel (0) target = $region21
    $region20: #{discriminator_forward.1} parent=1 // pred_region
      %s55 = ssub.s32 64, 64
      %56 = vsyncadd [#allocation9], %s55
      %s58 = sshll.u32 [#allocation8], 4
      %s59 = int_to_ptr.vmem [resolvable:$true] %s58
      %61 = dma.hbm_to_vmem [thread:$0]  %s4, 64, %s59, [#allocation9]
    $region21: #{discriminator_forward.1} parent=1 // pred_fallthru
      _
    // Predicated region
    $region22: #{discriminator_forward.1} parent=1 // pred_check
      _
    $region23: #{discriminator_forward.1} parent=1 // pred_check_branch
      %63 = sbr.rel (0) target = $region25
    $region24: #{discriminator_forward.1} parent=1 // pred_region
      %s65 = ssub.s32 4096, 4096
      %66 = vsyncadd [#allocation9], %s65
      %s67 = sshll.u32 [#allocation10], 4
      %s68 = int_to_ptr.vmem [resolvable:$true] %s67
      %73 = dma.hbm_to_vmem [thread:$0]  %s5, 4096, %s68, [#allocation9], 64, 64, 4
    $region25: #{discriminator_forward.1} parent=1 // pred_fallthru
      _
    // Predicated region
    $region26: #{discriminator_forward.1} parent=1 // pred_check
      _
    $region27: #{discriminator_forward.1} parent=1 // pred_check_branch
      %75 = sbr.rel (0) target = $region29
    $region28: #{discriminator_forward.1} parent=1 // pred_region
      %s77 = ssub.s32 64, 64
      %78 = vsyncadd [#allocation12], %s77
      %s80 = sshll.u32 [#allocation11], 4
      %s81 = int_to_ptr.vmem [resolvable:$true] %s80
      %83 = dma.hbm_to_vmem [thread:$0]  %s6, 64, %s81, [#allocation12]
    $region29: #{discriminator_forward.1} parent=1 // pred_fallthru
      _
    // Predicated region
    $region30: #{discriminator_forward.1} parent=1 // pred_check
      _
    $region31: #{discriminator_forward.1} parent=1 // pred_check_branch
      %85 = sbr.rel (0) target = $region33
    $region32: #{discriminator_forward.1} parent=1 // pred_region
      %s87 = ssub.s32 8192, 8192
      %88 = vsyncadd [#allocation12], %s87
      %s89 = sshll.u32 [#allocation13], 4
      %s90 = int_to_ptr.vmem [resolvable:$true] %s89
      %95 = dma.hbm_to_vmem [thread:$0]  %s7, 8192, %s90, [#allocation12], 128, 128, 8
    $region33: #{discriminator_forward.1} parent=1 // pred_fallthru
      _
    // Predicated region
    $region34: #{discriminator_forward.1} parent=1 // pred_check
      _
    $region35: #{discriminator_forward.1} parent=1 // pred_check_branch
      %97 = sbr.rel (0) target = $region37
    $region36: #{discriminator_forward.1} parent=1 // pred_region
      %s99 = ssub.s32 2048, 2048
      %100 = vsyncadd [#allocation15], %s99
      %s101 = sshll.u32 [#allocation14], 4
      %s102 = int_to_ptr.vmem [resolvable:$true] %s101
      %107 = dma.hbm_to_vmem [thread:$0]  %s8, 2048, %s102, [#allocation15], 128, 128, 8
    $region37: #{discriminator_forward.1} parent=1 // pred_fallthru
      _
    // Predicated region
    $region38: #{discriminator_forward.1} parent=1 // pred_check
      _
    $region39: #{discriminator_forward.1} parent=1 // pred_check_branch
      %109 = sbr.rel (0) target = $region41
    $region40: #{discriminator_forward.1} parent=1 // pred_region
      %s111 = ssub.s32 128, 128
      %112 = vsyncadd [#allocation15], %s111
      %s114 = sshll.u32 [#allocation16], 4
      %s115 = int_to_ptr.vmem [resolvable:$true] %s114
      %117 = dma.hbm_to_vmem [thread:$0]  %s9, 128, %s115, [#allocation15]
    $region41: #{discriminator_forward.1} parent=1 // pred_fallthru
      _
    // Predicated region
    $region42: #{discriminator_forward.1} parent=1 // pred_check
      _
    $region43: #{discriminator_forward.1} parent=1 // pred_check_branch
      %119 = sbr.rel (0) target = $region45
    $region44: #{discriminator_forward.1} parent=1 // pred_region
      %s121 = ssub.s32 24576, 24576
      %122 = vsyncadd [#allocation18], %s121
      %s123 = sshll.u32 [#allocation17], 4
      %s124 = int_to_ptr.vmem [resolvable:$true] %s123
      %129 = dma.hbm_to_vmem [thread:$0]  %s10, 24576, %s124, [#allocation18], 192, 192, 12
    $region45: #{discriminator_forward.1} parent=1 // pred_fallthru
      _
    // Predicated region
    $region46: #{discriminator_forward.1} parent=1 // pred_check
      _
    $region47: #{discriminator_forward.1} parent=1 // pred_check_branch
      %131 = sbr.rel (0) target = $region49
    $region48: #{discriminator_forward.1} parent=1 // pred_region
      %s133 = ssub.s32 192, 192
      %134 = vsyncadd [#allocation18], %s133
      %s136 = sshll.u32 [#allocation19], 4
      %s137 = int_to_ptr.vmem [resolvable:$true] %s136
      %139 = dma.hbm_to_vmem [thread:$0]  %s11, 192, %s137, [#allocation18]
    $region49: #{discriminator_forward.1} parent=1 // pred_fallthru
      _
    // Predicated region
    $region50: #{discriminator_forward.1} parent=1 // pred_check
      _
    $region51: #{discriminator_forward.1} parent=1 // pred_check_branch
      %141 = sbr.rel (0) target = $region53
    $region52: #{discriminator_forward.1} parent=1 // pred_region
      %s143 = ssub.s32 12288, 12288
      %144 = vsyncadd [#allocation21], %s143
      %s145 = sshll.u32 [#allocation20], 4
      %s146 = int_to_ptr.vmem [resolvable:$true] %s145
      %151 = dma.hbm_to_vmem [thread:$0]  %s12, 12288, %s146, [#allocation21], 64, 64, 4
    $region53: #{discriminator_forward.1} parent=1 // pred_fallthru
      _
    // Predicated region
    $region54: #{discriminator_forward.1} parent=1 // pred_check
      _
    $region55: #{discriminator_forward.1} parent=1 // pred_check_branch
      %153 = sbr.rel (0) target = $region57
    $region56: #{discriminator_forward.1} parent=1 // pred_region
      %s155 = ssub.s32 64, 64
      %156 = vsyncadd [#allocation21], %s155
      %s158 = sshll.u32 [#allocation22], 4
      %s159 = int_to_ptr.vmem [resolvable:$true] %s158
      %161 = dma.hbm_to_vmem [thread:$0]  %s13, 64, %s159, [#allocation21]
    $region57: #{discriminator_forward.1} parent=1 // pred_fallthru
      _
    // Predicated region
    $region58: #{discriminator_forward.1} parent=1 // pred_check
      _
    $region59: #{discriminator_forward.1} parent=1 // pred_check_branch
      %163 = sbr.rel (0) target = $region61
    $region60: #{discriminator_forward.1} parent=1 // pred_region
      %s165 = ssub.s32 16, 16
      %166 = vsyncadd [#allocation24], %s165
      %s168 = sshll.u32 [#allocation23], 4
      %s169 = int_to_ptr.vmem [resolvable:$true] %s168
      %171 = dma.hbm_to_vmem [thread:$0]  %s14, 16, %s169, [#allocation24]
    $region61: #{discriminator_forward.1} parent=1 // pred_fallthru
      _
    // Predicated region
    $region62: #{discriminator_forward.1} parent=1 // pred_check
      _
    $region63: #{discriminator_forward.1} parent=1 // pred_check_branch
      %173 = sbr.rel (0) target = $region65
    $region64: #{discriminator_forward.1} parent=1 // pred_region
      %s175 = ssub.s32 16, 16
      %176 = vsyncadd [#allocation24], %s175
      %s178 = sshll.u32 [#allocation25], 4
      %s179 = int_to_ptr.vmem [resolvable:$true] %s178
      %181 = dma.hbm_to_vmem [thread:$0]  %s15, 16, %s179, [#allocation24]
    $region65: #{discriminator_forward.1} parent=1 // pred_fallthru
      _
    // Predicated region
    $region66: #{discriminator_forward.1} parent=1 // pred_check
      _
    $region67: #{discriminator_forward.1} parent=1 // pred_check_branch
      %183 = sbr.rel (0) target = $region69
    $region68: #{discriminator_forward.1} parent=1 // pred_region
      _
    $region69: #{discriminator_forward.1} parent=1 // pred_fallthru
      _
    // Predicated region
    $region70: #{discriminator_forward.1} parent=1 // pred_check
      _
    $region71: #{discriminator_forward.1} parent=1 // pred_check_branch
      %185 = sbr.rel (0) target = $region73
    $region72: #{discriminator_forward.1} parent=1 // pred_region
      %186 = dma.done [#allocation7], 4096
    $region73: #{discriminator_forward.1} parent=1 // pred_fallthru
      _
    // Predicated region
    $region74: #{discriminator_forward.1} parent=1 // pred_check
      _
    $region75: #{discriminator_forward.1} parent=1 // pred_check_branch
      %188 = sbr.rel (0) target = $region77
    $region76: #{discriminator_forward.1} parent=1 // pred_region
      %189 = dma.done [#allocation9], 64
    $region77: #{discriminator_forward.1} parent=1 // pred_fallthru
      _
    // Predicated region
    $region78: #{discriminator_forward.1} parent=1 // pred_check
      _
    $region79: #{discriminator_forward.1} parent=1 // pred_check_branch
      %191 = sbr.rel (0) target = $region81
    $region80: #{discriminator_forward.1} parent=1 // pred_region
      %192 = dma.done [#allocation9], 4096
    $region81: #{discriminator_forward.1} parent=1 // pred_fallthru
      _
    // Predicated region
    $region82: #{discriminator_forward.1} parent=1 // pred_check
      _
    $region83: #{discriminator_forward.1} parent=1 // pred_check_branch
      %194 = sbr.rel (0) target = $region85
    $region84: #{discriminator_forward.1} parent=1 // pred_region
      %195 = dma.done [#allocation12], 64
    $region85: #{discriminator_forward.1} parent=1 // pred_fallthru
      _
    // Predicated region
    $region86: #{discriminator_forward.1} parent=1 // pred_check
      _
    $region87: #{discriminator_forward.1} parent=1 // pred_check_branch
      %197 = sbr.rel (0) target = $region89
    $region88: #{discriminator_forward.1} parent=1 // pred_region
      %198 = dma.done [#allocation12], 8192
    $region89: #{discriminator_forward.1} parent=1 // pred_fallthru
      _
    // Predicated region
    $region90: #{discriminator_forward.1} parent=1 // pred_check
      _
    $region91: #{discriminator_forward.1} parent=1 // pred_check_branch
      %200 = sbr.rel (0) target = $region93
    $region92: #{discriminator_forward.1} parent=1 // pred_region
      %201 = dma.done [#allocation15], 2048
    $region93: #{discriminator_forward.1} parent=1 // pred_fallthru
      _
    // Predicated region
    $region94: #{discriminator_forward.1} parent=1 // pred_check
      _
    $region95: #{discriminator_forward.1} parent=1 // pred_check_branch
      %203 = sbr.rel (0) target = $region97
    $region96: #{discriminator_forward.1} parent=1 // pred_region
      %204 = dma.done [#allocation15], 128
    $region97: #{discriminator_forward.1} parent=1 // pred_fallthru
      _
    // Predicated region
    $region98: #{discriminator_forward.1} parent=1 // pred_check
      _
    $region99: #{discriminator_forward.1} parent=1 // pred_check_branch
      %206 = sbr.rel (0) target = $region101
    $region100: #{discriminator_forward.1} parent=1 // pred_region
      %207 = dma.done [#allocation18], 24576
    $region101: #{discriminator_forward.1} parent=1 // pred_fallthru
      _
    // Predicated region
    $region102: #{discriminator_forward.1} parent=1 // pred_check
      _
    $region103: #{discriminator_forward.1} parent=1 // pred_check_branch
      %209 = sbr.rel (0) target = $region105
    $region104: #{discriminator_forward.1} parent=1 // pred_region
      %210 = dma.done [#allocation18], 192
    $region105: #{discriminator_forward.1} parent=1 // pred_fallthru
      _
    // Predicated region
    $region106: #{discriminator_forward.1} parent=1 // pred_check
      _
    $region107: #{discriminator_forward.1} parent=1 // pred_check_branch
      %212 = sbr.rel (0) target = $region109
    $region108: #{discriminator_forward.1} parent=1 // pred_region
      %213 = dma.done [#allocation21], 12288
    $region109: #{discriminator_forward.1} parent=1 // pred_fallthru
      _
    // Predicated region
    $region110: #{discriminator_forward.1} parent=1 // pred_check
      _
    $region111: #{discriminator_forward.1} parent=1 // pred_check_branch
      %215 = sbr.rel (0) target = $region113
    $region112: #{discriminator_forward.1} parent=1 // pred_region
      %216 = dma.done [#allocation21], 64
    $region113: #{discriminator_forward.1} parent=1 // pred_fallthru
      _
    // Predicated region
    $region114: #{discriminator_forward.1} parent=1 // pred_check
      _
    $region115: #{discriminator_forward.1} parent=1 // pred_check_branch
      %218 = sbr.rel (0) target = $region117
    $region116: #{discriminator_forward.1} parent=1 // pred_region
      %219 = dma.done [#allocation24], 16
    $region117: #{discriminator_forward.1} parent=1 // pred_fallthru
      _
    // Predicated region
    $region118: #{discriminator_forward.1} parent=1 // pred_check
      _
    $region119: #{discriminator_forward.1} parent=1 // pred_check_branch
      %221 = sbr.rel (0) target = $region121
    $region120: #{discriminator_forward.1} parent=1 // pred_region
      %222 = dma.done [#allocation24], 16
    $region121: #{discriminator_forward.1} parent=1 // pred_fallthru
      _
    %v224 = vld [vmem:[%s1] sm:$0x3]
    %v225 = vpack.c.bf16 %v224, %v224
    %v226 = vld [vmem:[%s3] sm:$0xf]
    %v227 = vld [vmem:[%s3 + $0x4] sm:$0xf]
    %v228 = vld [vmem:[%s3 + $0x8] sm:$0xf]
    %v229 = vld [vmem:[%s3 + $0xc] sm:$0xf]
    %v230 = vld [vmem:[%s3 + $0x10] sm:$0xf]
    %v231 = vld [vmem:[%s3 + $0x14] sm:$0xf]
    %v232 = vld [vmem:[%s3 + $0x18] sm:$0xf]
    %v233 = vld [vmem:[%s3 + $0x1c] sm:$0xf]
    %v234 = vld [vmem:[%s3 + $0x20] sm:$0xf]
    %v235 = vld [vmem:[%s3 + $0x24] sm:$0xf]
    %v236 = vld [vmem:[%s3 + $0x28] sm:$0xf]
    %v237 = vld [vmem:[%s3 + $0x2c] sm:$0xf]
    %v238 = vld [vmem:[%s3 + $0x30] sm:$0xf]
    %v239 = vld [vmem:[%s3 + $0x34] sm:$0xf]
    %v240 = vld [vmem:[%s3 + $0x38] sm:$0xf]
    %v241 = vld [vmem:[%s3 + $0x3c] sm:$0xf]
    %v258 = vunpack.c.l.b16 %v226
    %v259 = vunpack.c.l.b16 %v227
    %v260 = vunpack.c.l.b16 %v228
    %v261 = vunpack.c.l.b16 %v229
    %v262 = vunpack.c.l.b16 %v230
    %v263 = vunpack.c.l.b16 %v231
    %v264 = vunpack.c.l.b16 %v232
    %v265 = vunpack.c.l.b16 %v233
    %v266 = vunpack.c.l.b16 %v234
    %v267 = vunpack.c.l.b16 %v235
    %v268 = vunpack.c.l.b16 %v236
    %v269 = vunpack.c.l.b16 %v237
    %v270 = vunpack.c.l.b16 %v238
    %v271 = vunpack.c.l.b16 %v239
    %v272 = vunpack.c.l.b16 %v240
    %v273 = vunpack.c.l.b16 %v241
    %v274 = vpack.c.b16 %v259, %v258
    %v275 = vpack.c.b16 %v261, %v260
    %v276 = vpack.c.b16 %v263, %v262
    %v277 = vpack.c.b16 %v265, %v264
    %v278 = vpack.c.b16 %v267, %v266
    %v279 = vpack.c.b16 %v269, %v268
    %v280 = vpack.c.b16 %v271, %v270
    %v281 = vpack.c.b16 %v273, %v272
    %290 = vmatprep.subr.bf16.mxu0 0
    %291 = vmatpush1.bf16.msra.mxu0 %v274
    %292 = vmatprep.subr.bf16.mxu0 0
    %293 = vmatpush1.bf16.msra.mxu0 %v275
    %294 = vmatprep.subr.bf16.mxu0 0
    %295 = vmatpush1.bf16.msra.mxu0 %v276
    %296 = vmatprep.subr.bf16.mxu0 0
    %297 = vmatpush1.bf16.msra.mxu0 %v277
    %298 = vmatprep.subr.bf16.mxu0 0
    %299 = vmatpush1.bf16.msra.mxu0 %v278
    %300 = vmatprep.subr.bf16.mxu0 0
    %301 = vmatpush1.bf16.msra.mxu0 %v279
    %302 = vmatprep.subr.bf16.mxu0 0
    %303 = vmatpush1.bf16.msra.mxu0 %v280
    %304 = vmatprep.subr.bf16.mxu0 0
    %305 = vmatpush1.bf16.msra.mxu0 %v281
    %306 = vmatprep.subr.bf16.mxu0 0
    %307 = vmatpush1.bf16.msra.mxu0 0
    %308 = vmatprep.subr.bf16.mxu0 0
    %309 = vmatpush1.bf16.msra.mxu0 0
    %310 = vmatprep.subr.bf16.mxu0 0
    %311 = vmatpush1.bf16.msra.mxu0 0
    %312 = vmatprep.subr.bf16.mxu0 0
    %313 = vmatpush1.bf16.msra.mxu0 0
    %314 = vmatprep.subr.bf16.mxu0 0
    %315 = vmatpush1.bf16.msra.mxu0 0
    %316 = vmatprep.subr.bf16.mxu0 0
    %317 = vmatpush1.bf16.msra.mxu0 0
    %318 = vmatprep.subr.bf16.mxu0 0
    %319 = vmatpush1.bf16.msra.mxu0 0
    %320 = vmatprep.subr.bf16.mxu0 0
    %321 = vmatpush1.bf16.msra.mxu0 0
    %322 = vmatprep.mubr.bf16.mxu0 0
    %323 = vmatmul.mubr.bf16.gmra.mrb[0].mxu0 %v225
    %v324 = vpop.f32.mrb[0].mxu0
    %v325 = vadd.f32 0.0, %v324
    %v326 = vpop.f32.mrb[0].mxu0
    %v327 = vpop.f32.mrb[0].mxu0
    %v328 = vpop.f32.mrb[0].mxu0
    %329 = vdwg.mxu0
    %v330 = vld [vmem:[#allocation14] sm:$0xff]
    %v331 = vld [vmem:[#allocation14 + $0x8] sm:$0xff]
    %v332 = vld [vmem:[#allocation14 + $0x10] sm:$0xff]
    %v333 = vld [vmem:[#allocation14 + $0x18] sm:$0xff]
    %v334 = vld [vmem:[#allocation14 + $0x20] sm:$0xff]
    %v335 = vld [vmem:[#allocation14 + $0x28] sm:$0xff]
    %v336 = vld [vmem:[#allocation14 + $0x30] sm:$0xff]
    %v337 = vld [vmem:[#allocation14 + $0x38] sm:$0xff]
    %v338 = vld [vmem:[#allocation14 + $0x40] sm:$0xff]
    %v339 = vld [vmem:[#allocation14 + $0x48] sm:$0xff]
    %v340 = vld [vmem:[#allocation14 + $0x50] sm:$0xff]
    %v341 = vld [vmem:[#allocation14 + $0x58] sm:$0xff]
    %v342 = vld [vmem:[#allocation14 + $0x60] sm:$0xff]
    %v343 = vld [vmem:[#allocation14 + $0x68] sm:$0xff]
    %v344 = vld [vmem:[#allocation14 + $0x70] sm:$0xff]
    %v345 = vld [vmem:[#allocation14 + $0x78] sm:$0xff]
    %v362 = vunpack.c.l.b16 %v330
    %v363 = vunpack.c.h.b16 %v330
    %v364 = vunpack.c.l.b16 %v331
    %v365 = vunpack.c.h.b16 %v331
    %v366 = vunpack.c.l.b16 %v332
    %v367 = vunpack.c.h.b16 %v332
    %v368 = vunpack.c.l.b16 %v333
    %v369 = vunpack.c.h.b16 %v333
    %v370 = vunpack.c.l.b16 %v334
    %v371 = vunpack.c.h.b16 %v334
    %v372 = vunpack.c.l.b16 %v335
    %v373 = vunpack.c.h.b16 %v335
    %v374 = vunpack.c.l.b16 %v336
    %v375 = vunpack.c.h.b16 %v336
    %v376 = vunpack.c.l.b16 %v337
    %v377 = vunpack.c.h.b16 %v337
    %v378 = vunpack.c.l.b16 %v338
    %v379 = vunpack.c.h.b16 %v338
    %v380 = vunpack.c.l.b16 %v339
    %v381 = vunpack.c.h.b16 %v339
    %v382 = vunpack.c.l.b16 %v340
    %v383 = vunpack.c.h.b16 %v340
    %v384 = vunpack.c.l.b16 %v341
    %v385 = vunpack.c.h.b16 %v341
    %v386 = vunpack.c.l.b16 %v342
    %v387 = vunpack.c.h.b16 %v342
    %v388 = vunpack.c.l.b16 %v343
    %v389 = vunpack.c.h.b16 %v343
    %v390 = vunpack.c.l.b16 %v344
    %v391 = vunpack.c.h.b16 %v344
    %v392 = vunpack.c.l.b16 %v345
    %v393 = vunpack.c.h.b16 %v345
    %v394 = vpack.c.b16 %v364, %v362
    %v395 = vpack.c.b16 %v365, %v363
    %v396 = vpack.c.b16 %v368, %v366
    %v397 = vpack.c.b16 %v369, %v367
    %v398 = vpack.c.b16 %v372, %v370
    %v399 = vpack.c.b16 %v373, %v371
    %v400 = vpack.c.b16 %v376, %v374
    %v401 = vpack.c.b16 %v377, %v375
    %v402 = vpack.c.b16 %v380, %v378
    %v403 = vpack.c.b16 %v381, %v379
    %v404 = vpack.c.b16 %v384, %v382
    %v405 = vpack.c.b16 %v385, %v383
    %v406 = vpack.c.b16 %v388, %v386
    %v407 = vpack.c.b16 %v389, %v387
    %v408 = vpack.c.b16 %v392, %v390
    %v409 = vpack.c.b16 %v393, %v391
    %426 = vmatprep.subr.bf16.mxu0 %v395
    %427 = vmatpush1.bf16.msra.mxu0 %v394
    %428 = vmatprep.subr.bf16.mxu0 %v397
    %429 = vmatpush1.bf16.msra.mxu0 %v396
    %430 = vmatprep.subr.bf16.mxu0 %v399
    %431 = vmatpush1.bf16.msra.mxu0 %v398
    %432 = vmatprep.subr.bf16.mxu0 %v401
    %433 = vmatpush1.bf16.msra.mxu0 %v400
    %434 = vmatprep.subr.bf16.mxu0 %v403
    %435 = vmatpush1.bf16.msra.mxu0 %v402
    %436 = vmatprep.subr.bf16.mxu0 %v405
    %437 = vmatpush1.bf16.msra.mxu0 %v404
    %438 = vmatprep.subr.bf16.mxu0 %v407
    %439 = vmatpush1.bf16.msra.mxu0 %v406
    %440 = vmatprep.subr.bf16.mxu0 %v409
    %441 = vmatpush1.bf16.msra.mxu0 %v408
    %442 = vmatprep.subr.bf16.mxu0 0
    %443 = vmatpush1.bf16.msra.mxu0 0
    %444 = vmatprep.subr.bf16.mxu0 0
    %445 = vmatpush1.bf16.msra.mxu0 0
    %446 = vmatprep.subr.bf16.mxu0 0
    %447 = vmatpush1.bf16.msra.mxu0 0
    %448 = vmatprep.subr.bf16.mxu0 0
    %449 = vmatpush1.bf16.msra.mxu0 0
    %450 = vmatprep.subr.bf16.mxu0 0
    %451 = vmatpush1.bf16.msra.mxu0 0
    %452 = vmatprep.subr.bf16.mxu0 0
    %453 = vmatpush1.bf16.msra.mxu0 0
    %454 = vmatprep.subr.bf16.mxu0 0
    %455 = vmatpush1.bf16.msra.mxu0 0
    %456 = vmatprep.subr.bf16.mxu0 0
    %457 = vmatpush1.bf16.msra.mxu0 0
    %458 = vmatprep.mubr.bf16.mxu0 0
    %459 = vmatmul.mubr.bf16.gmra.mrb[0].mxu0 %v225
    %v460 = vpop.f32.mrb[0].mxu0
    %v461 = vadd.f32 0.0, %v460
    %v462 = vpop.f32.mrb[0].mxu0
    %v463 = vadd.f32 0.0, %v462
    %v464 = vpop.f32.mrb[0].mxu0
    %v465 = vpop.f32.mrb[0].mxu0
    %466 = vdwg.mxu0
    %v467 = vld [vmem:[%s0] sm:$0xff]
    %v468 = vld [vmem:[%s0 + $0x8] sm:$0x1f]
    %v469 = vpack.c.bf16 %v468, %v467
    %v470 = vld [vmem:[#allocation6] sm:$0xf]
    %v471 = vld [vmem:[#allocation6 + $0x4] sm:$0xf]
    %v472 = vld [vmem:[#allocation6 + $0x8] sm:$0xf]
    %v473 = vld [vmem:[#allocation6 + $0xc] sm:$0xf]
    %v474 = vld [vmem:[#allocation6 + $0x10] sm:$0xf]
    %v475 = vld [vmem:[#allocation6 + $0x14] sm:$0xf]
    %v476 = vld [vmem:[#allocation6 + $0x18] sm:$0xf]
    %v477 = vld [vmem:[#allocation6 + $0x1c] sm:$0xf]
    %v478 = vld [vmem:[#allocation6 + $0x20] sm:$0xf]
    %v479 = vld [vmem:[#allocation6 + $0x24] sm:$0xf]
    %v480 = vld [vmem:[#allocation6 + $0x28] sm:$0xf]
    %v481 = vld [vmem:[#allocation6 + $0x2c] sm:$0xf]
    %v482 = vld [vmem:[#allocation6 + $0x30] sm:$0xf]
    %v483 = vld [vmem:[#allocation6 + $0x34] sm:$0xf]
    %v484 = vld [vmem:[#allocation6 + $0x38] sm:$0xf]
    %v485 = vld [vmem:[#allocation6 + $0x3c] sm:$0xf]
    %v486 = vld [vmem:[%s0 + $0x1] sm:$0xff]
    %v487 = vld [vmem:[%s0 + $0x9] sm:$0x1f]
    %v488 = vpack.c.bf16 %v487, %v486
    %v489 = vld [vmem:[#allocation6 + $0x40] sm:$0xf]
    %v490 = vld [vmem:[#allocation6 + $0x44] sm:$0xf]
    %v491 = vld [vmem:[#allocation6 + $0x48] sm:$0xf]
    %v492 = vld [vmem:[#allocation6 + $0x4c] sm:$0xf]
    %v493 = vld [vmem:[#allocation6 + $0x50] sm:$0xf]
    %v494 = vld [vmem:[#allocation6 + $0x54] sm:$0xf]
    %v495 = vld [vmem:[#allocation6 + $0x58] sm:$0xf]
    %v496 = vld [vmem:[#allocation6 + $0x5c] sm:$0xf]
    %v497 = vld [vmem:[#allocation6 + $0x60] sm:$0xf]
    %v498 = vld [vmem:[#allocation6 + $0x64] sm:$0xf]
    %v499 = vld [vmem:[#allocation6 + $0x68] sm:$0xf]
    %v500 = vld [vmem:[#allocation6 + $0x6c] sm:$0xf]
    %v501 = vld [vmem:[#allocation6 + $0x70] sm:$0xf]
    %v502 = vld [vmem:[#allocation6 + $0x74] sm:$0xf]
    %v503 = vld [vmem:[#allocation6 + $0x78] sm:$0xf]
    %v504 = vld [vmem:[#allocation6 + $0x7c] sm:$0xf]
    %v521 = vunpack.c.l.b16 %v489
    %v522 = vunpack.c.l.b16 %v490
    %v523 = vunpack.c.l.b16 %v491
    %v524 = vunpack.c.l.b16 %v492
    %v525 = vunpack.c.l.b16 %v493
    %v526 = vunpack.c.l.b16 %v494
    %v527 = vunpack.c.l.b16 %v495
    %v528 = vunpack.c.l.b16 %v496
    %v529 = vunpack.c.l.b16 %v497
    %v530 = vunpack.c.l.b16 %v498
    %v531 = vunpack.c.l.b16 %v499
    %v532 = vunpack.c.l.b16 %v500
    %v533 = vunpack.c.l.b16 %v501
    %v534 = vunpack.c.l.b16 %v502
    %v535 = vunpack.c.l.b16 %v503
    %v536 = vunpack.c.l.b16 %v504
    %v537 = vpack.c.b16 %v522, %v521
    %v538 = vpack.c.b16 %v524, %v523
    %v539 = vpack.c.b16 %v526, %v525
    %v540 = vpack.c.b16 %v528, %v527
    %v541 = vpack.c.b16 %v530, %v529
    %v542 = vpack.c.b16 %v532, %v531
    %v543 = vpack.c.b16 %v534, %v533
    %v544 = vpack.c.b16 %v536, %v535
    %553 = vmatprep.subr.bf16.mxu0 0
    %554 = vmatpush1.bf16.msra.mxu0 %v537
    %555 = vmatprep.subr.bf16.mxu0 0
    %556 = vmatpush1.bf16.msra.mxu0 %v538
    %557 = vmatprep.subr.bf16.mxu0 0
    %558 = vmatpush1.bf16.msra.mxu0 %v539
    %559 = vmatprep.subr.bf16.mxu0 0
    %560 = vmatpush1.bf16.msra.mxu0 %v540
    %561 = vmatprep.subr.bf16.mxu0 0
    %562 = vmatpush1.bf16.msra.mxu0 %v541
    %563 = vmatprep.subr.bf16.mxu0 0
    %564 = vmatpush1.bf16.msra.mxu0 %v542
    %565 = vmatprep.subr.bf16.mxu0 0
    %566 = vmatpush1.bf16.msra.mxu0 %v543
    %567 = vmatprep.subr.bf16.mxu0 0
    %568 = vmatpush1.bf16.msra.mxu0 %v544
    %569 = vmatprep.subr.bf16.mxu0 0
    %570 = vmatpush1.bf16.msra.mxu0 0
    %571 = vmatprep.subr.bf16.mxu0 0
    %572 = vmatpush1.bf16.msra.mxu0 0
    %573 = vmatprep.subr.bf16.mxu0 0
    %574 = vmatpush1.bf16.msra.mxu0 0
    %575 = vmatprep.subr.bf16.mxu0 0
    %576 = vmatpush1.bf16.msra.mxu0 0
    %577 = vmatprep.subr.bf16.mxu0 0
    %578 = vmatpush1.bf16.msra.mxu0 0
    %579 = vmatprep.subr.bf16.mxu0 0
    %580 = vmatpush1.bf16.msra.mxu0 0
    %581 = vmatprep.subr.bf16.mxu0 0
    %582 = vmatpush1.bf16.msra.mxu0 0
    %583 = vmatprep.subr.bf16.mxu0 0
    %584 = vmatpush1.bf16.msra.mxu0 0
    %585 = vmatprep.mubr.bf16.mxu0 0
    %586 = vmatmul.mubr.bf16.gmra.mrb[0].mxu0 %v488
    %v587 = vpop.f32.mrb[0].mxu0
    %v588 = vadd.f32 0.0, %v587
    %v589 = vpop.f32.mrb[0].mxu0
    %v590 = vpop.f32.mrb[0].mxu0
    %v591 = vadd.f32 0.0, %v590
    %v592 = vpop.f32.mrb[0].mxu0
    %593 = vdwg.mxu0
    %v610 = vunpack.c.l.b16 %v470
    %v611 = vunpack.c.l.b16 %v471
    %v612 = vunpack.c.l.b16 %v472
    %v613 = vunpack.c.l.b16 %v473
    %v614 = vunpack.c.l.b16 %v474
    %v615 = vunpack.c.l.b16 %v475
    %v616 = vunpack.c.l.b16 %v476
    %v617 = vunpack.c.l.b16 %v477
    %v618 = vunpack.c.l.b16 %v478
    %v619 = vunpack.c.l.b16 %v479
    %v620 = vunpack.c.l.b16 %v480
    %v621 = vunpack.c.l.b16 %v481
    %v622 = vunpack.c.l.b16 %v482
    %v623 = vunpack.c.l.b16 %v483
    %v624 = vunpack.c.l.b16 %v484
    %v625 = vunpack.c.l.b16 %v485
    %v626 = vpack.c.b16 %v611, %v610
    %v627 = vpack.c.b16 %v613, %v612
    %v628 = vpack.c.b16 %v615, %v614
    %v629 = vpack.c.b16 %v617, %v616
    %v630 = vpack.c.b16 %v619, %v618
    %v631 = vpack.c.b16 %v621, %v620
    %v632 = vpack.c.b16 %v623, %v622
    %v633 = vpack.c.b16 %v625, %v624
    %642 = vmatprep.subr.bf16.mxu0 0
    %643 = vmatpush1.bf16.msra.mxu0 %v626
    %644 = vmatprep.subr.bf16.mxu0 0
    %645 = vmatpush1.bf16.msra.mxu0 %v627
    %646 = vmatprep.subr.bf16.mxu0 0
    %647 = vmatpush1.bf16.msra.mxu0 %v628
    %648 = vmatprep.subr.bf16.mxu0 0
    %649 = vmatpush1.bf16.msra.mxu0 %v629
    %650 = vmatprep.subr.bf16.mxu0 0
    %651 = vmatpush1.bf16.msra.mxu0 %v630
    %652 = vmatprep.subr.bf16.mxu0 0
    %653 = vmatpush1.bf16.msra.mxu0 %v631
    %654 = vmatprep.subr.bf16.mxu0 0
    %655 = vmatpush1.bf16.msra.mxu0 %v632
    %656 = vmatprep.subr.bf16.mxu0 0
    %657 = vmatpush1.bf16.msra.mxu0 %v633
    %658 = vmatprep.subr.bf16.mxu0 0
    %659 = vmatpush1.bf16.msra.mxu0 0
    %660 = vmatprep.subr.bf16.mxu0 0
    %661 = vmatpush1.bf16.msra.mxu0 0
    %662 = vmatprep.subr.bf16.mxu0 0
    %663 = vmatpush1.bf16.msra.mxu0 0
    %664 = vmatprep.subr.bf16.mxu0 0
    %665 = vmatpush1.bf16.msra.mxu0 0
    %666 = vmatprep.subr.bf16.mxu0 0
    %667 = vmatpush1.bf16.msra.mxu0 0
    %668 = vmatprep.subr.bf16.mxu0 0
    %669 = vmatpush1.bf16.msra.mxu0 0
    %670 = vmatprep.subr.bf16.mxu0 0
    %671 = vmatpush1.bf16.msra.mxu0 0
    %672 = vmatprep.subr.bf16.mxu0 0
    %673 = vmatpush1.bf16.msra.mxu0 0
    %674 = vmatprep.mubr.bf16.mxu0 0
    %675 = vmatmul.mubr.bf16.gmra.mrb[0].mxu0 %v469
    %v676 = vpop.f32.mrb[0].mxu0
    %v677 = vadd.f32 %v588, %v676
    %v678 = vpop.f32.mrb[0].mxu0
    %v679 = vpop.f32.mrb[0].mxu0
    %v680 = vadd.f32 %v591, %v679
    %v681 = vpop.f32.mrb[0].mxu0
    %682 = vdwg.mxu0
    %v683 = vld [vmem:[%s0 + $0x2] sm:$0xff]
    %v684 = vld [vmem:[%s0 + $0xa] sm:$0x1f]
    %v685 = vpack.c.bf16 %v684, %v683
    %v686 = vld [vmem:[#allocation6 + $0x80] sm:$0xf]
    %v687 = vld [vmem:[#allocation6 + $0x84] sm:$0xf]
    %v688 = vld [vmem:[#allocation6 + $0x88] sm:$0xf]
    %v689 = vld [vmem:[#allocation6 + $0x8c] sm:$0xf]
    %v690 = vld [vmem:[#allocation6 + $0x90] sm:$0xf]
    %v691 = vld [vmem:[#allocation6 + $0x94] sm:$0xf]
    %v692 = vld [vmem:[#allocation6 + $0x98] sm:$0xf]
    %v693 = vld [vmem:[#allocation6 + $0x9c] sm:$0xf]
    %v694 = vld [vmem:[#allocation6 + $0xa0] sm:$0xf]
    %v695 = vld [vmem:[#allocation6 + $0xa4] sm:$0xf]
    %v696 = vld [vmem:[#allocation6 + $0xa8] sm:$0xf]
    %v697 = vld [vmem:[#allocation6 + $0xac] sm:$0xf]
    %v698 = vld [vmem:[#allocation6 + $0xb0] sm:$0xf]
    %v699 = vld [vmem:[#allocation6 + $0xb4] sm:$0xf]
    %v700 = vld [vmem:[#allocation6 + $0xb8] sm:$0xf]
    %v701 = vld [vmem:[#allocation6 + $0xbc] sm:$0xf]
    %v718 = vunpack.c.l.b16 %v686
    %v719 = vunpack.c.l.b16 %v687
    %v720 = vunpack.c.l.b16 %v688
    %v721 = vunpack.c.l.b16 %v689
    %v722 = vunpack.c.l.b16 %v690
    %v723 = vunpack.c.l.b16 %v691
    %v724 = vunpack.c.l.b16 %v692
    %v725 = vunpack.c.l.b16 %v693
    %v726 = vunpack.c.l.b16 %v694
    %v727 = vunpack.c.l.b16 %v695
    %v728 = vunpack.c.l.b16 %v696
    %v729 = vunpack.c.l.b16 %v697
    %v730 = vunpack.c.l.b16 %v698
    %v731 = vunpack.c.l.b16 %v699
    %v732 = vunpack.c.l.b16 %v700
    %v733 = vunpack.c.l.b16 %v701
    %v734 = vpack.c.b16 %v719, %v718
    %v735 = vpack.c.b16 %v721, %v720
    %v736 = vpack.c.b16 %v723, %v722
    %v737 = vpack.c.b16 %v725, %v724
    %v738 = vpack.c.b16 %v727, %v726
    %v739 = vpack.c.b16 %v729, %v728
    %v740 = vpack.c.b16 %v731, %v730
    %v741 = vpack.c.b16 %v733, %v732
    %750 = vmatprep.subr.bf16.mxu0 0
    %751 = vmatpush1.bf16.msra.mxu0 %v734
    %752 = vmatprep.subr.bf16.mxu0 0
    %753 = vmatpush1.bf16.msra.mxu0 %v735
    %754 = vmatprep.subr.bf16.mxu0 0
    %755 = vmatpush1.bf16.msra.mxu0 %v736
    %756 = vmatprep.subr.bf16.mxu0 0
    %757 = vmatpush1.bf16.msra.mxu0 %v737
    %758 = vmatprep.subr.bf16.mxu0 0
    %759 = vmatpush1.bf16.msra.mxu0 %v738
    %760 = vmatprep.subr.bf16.mxu0 0
    %761 = vmatpush1.bf16.msra.mxu0 %v739
    %762 = vmatprep.subr.bf16.mxu0 0
    %763 = vmatpush1.bf16.msra.mxu0 %v740
    %764 = vmatprep.subr.bf16.mxu0 0
    %765 = vmatpush1.bf16.msra.mxu0 %v741
    %766 = vmatprep.subr.bf16.mxu0 0
    %767 = vmatpush1.bf16.msra.mxu0 0
    %768 = vmatprep.subr.bf16.mxu0 0
    %769 = vmatpush1.bf16.msra.mxu0 0
    %770 = vmatprep.subr.bf16.mxu0 0
    %771 = vmatpush1.bf16.msra.mxu0 0
    %772 = vmatprep.subr.bf16.mxu0 0
    %773 = vmatpush1.bf16.msra.mxu0 0
    %774 = vmatprep.subr.bf16.mxu0 0
    %775 = vmatpush1.bf16.msra.mxu0 0
    %776 = vmatprep.subr.bf16.mxu0 0
    %777 = vmatpush1.bf16.msra.mxu0 0
    %778 = vmatprep.subr.bf16.mxu0 0
    %779 = vmatpush1.bf16.msra.mxu0 0
    %780 = vmatprep.subr.bf16.mxu0 0
    %781 = vmatpush1.bf16.msra.mxu0 0
    %782 = vmatprep.mubr.bf16.mxu0 0
    %783 = vmatmul.mubr.bf16.gmra.mrb[0].mxu0 %v685
    %v784 = vpop.f32.mrb[0].mxu0
    %v785 = vadd.f32 0.0, %v784
    %v786 = vpop.f32.mrb[0].mxu0
    %v787 = vpop.f32.mrb[0].mxu0
    %v788 = vadd.f32 0.0, %v787
    %v789 = vpop.f32.mrb[0].mxu0
    %790 = vdwg.mxu0
    %v791 = vadd.f32 %v677, %v785
    %v792 = vadd.f32 %v680, %v788
    %v793 = vld [vmem:[%s0 + $0x3] sm:$0xff]
    %v794 = vld [vmem:[%s0 + $0xb] sm:$0x1f]
    %v795 = vpack.c.bf16 %v794, %v793
    %v796 = vld [vmem:[#allocation6 + $0xc0] sm:$0xf]
    %v797 = vld [vmem:[#allocation6 + $0xc4] sm:$0xf]
    %v798 = vld [vmem:[#allocation6 + $0xc8] sm:$0xf]
    %v799 = vld [vmem:[#allocation6 + $0xcc] sm:$0xf]
    %v800 = vld [vmem:[#allocation6 + $0xd0] sm:$0xf]
    %v801 = vld [vmem:[#allocation6 + $0xd4] sm:$0xf]
    %v802 = vld [vmem:[#allocation6 + $0xd8] sm:$0xf]
    %v803 = vld [vmem:[#allocation6 + $0xdc] sm:$0xf]
    %v804 = vld [vmem:[#allocation6 + $0xe0] sm:$0xf]
    %v805 = vld [vmem:[#allocation6 + $0xe4] sm:$0xf]
    %v806 = vld [vmem:[#allocation6 + $0xe8] sm:$0xf]
    %v807 = vld [vmem:[#allocation6 + $0xec] sm:$0xf]
    %v808 = vld [vmem:[#allocation6 + $0xf0] sm:$0xf]
    %v809 = vld [vmem:[#allocation6 + $0xf4] sm:$0xf]
    %v810 = vld [vmem:[#allocation6 + $0xf8] sm:$0xf]
    %v811 = vld [vmem:[#allocation6 + $0xfc] sm:$0xf]
    %v828 = vunpack.c.l.b16 %v796
    %v829 = vunpack.c.l.b16 %v797
    %v830 = vunpack.c.l.b16 %v798
    %v831 = vunpack.c.l.b16 %v799
    %v832 = vunpack.c.l.b16 %v800
    %v833 = vunpack.c.l.b16 %v801
    %v834 = vunpack.c.l.b16 %v802
    %v835 = vunpack.c.l.b16 %v803
    %v836 = vunpack.c.l.b16 %v804
    %v837 = vunpack.c.l.b16 %v805
    %v838 = vunpack.c.l.b16 %v806
    %v839 = vunpack.c.l.b16 %v807
    %v840 = vunpack.c.l.b16 %v808
    %v841 = vunpack.c.l.b16 %v809
    %v842 = vunpack.c.l.b16 %v810
    %v843 = vunpack.c.l.b16 %v811
    %v844 = vpack.c.b16 %v829, %v828
    %v845 = vpack.c.b16 %v831, %v830
    %v846 = vpack.c.b16 %v833, %v832
    %v847 = vpack.c.b16 %v835, %v834
    %v848 = vpack.c.b16 %v837, %v836
    %v849 = vpack.c.b16 %v839, %v838
    %v850 = vpack.c.b16 %v841, %v840
    %v851 = vpack.c.b16 %v843, %v842
    %860 = vmatprep.subr.bf16.mxu0 0
    %861 = vmatpush1.bf16.msra.mxu0 %v844
    %862 = vmatprep.subr.bf16.mxu0 0
    %863 = vmatpush1.bf16.msra.mxu0 %v845
    %864 = vmatprep.subr.bf16.mxu0 0
    %865 = vmatpush1.bf16.msra.mxu0 %v846
    %866 = vmatprep.subr.bf16.mxu0 0
    %867 = vmatpush1.bf16.msra.mxu0 %v847
    %868 = vmatprep.subr.bf16.mxu0 0
    %869 = vmatpush1.bf16.msra.mxu0 %v848
    %870 = vmatprep.subr.bf16.mxu0 0
    %871 = vmatpush1.bf16.msra.mxu0 %v849
    %872 = vmatprep.subr.bf16.mxu0 0
    %873 = vmatpush1.bf16.msra.mxu0 %v850
    %874 = vmatprep.subr.bf16.mxu0 0
    %875 = vmatpush1.bf16.msra.mxu0 %v851
    %876 = vmatprep.subr.bf16.mxu0 0
    %877 = vmatpush1.bf16.msra.mxu0 0
    %878 = vmatprep.subr.bf16.mxu0 0
    %879 = vmatpush1.bf16.msra.mxu0 0
    %880 = vmatprep.subr.bf16.mxu0 0
    %881 = vmatpush1.bf16.msra.mxu0 0
    %882 = vmatprep.subr.bf16.mxu0 0
    %883 = vmatpush1.bf16.msra.mxu0 0
    %884 = vmatprep.subr.bf16.mxu0 0
    %885 = vmatpush1.bf16.msra.mxu0 0
    %886 = vmatprep.subr.bf16.mxu0 0
    %887 = vmatpush1.bf16.msra.mxu0 0
    %888 = vmatprep.subr.bf16.mxu0 0
    %889 = vmatpush1.bf16.msra.mxu0 0
    %890 = vmatprep.subr.bf16.mxu0 0
    %891 = vmatpush1.bf16.msra.mxu0 0
    %892 = vmatprep.mubr.bf16.mxu0 0
    %893 = vmatmul.mubr.bf16.gmra.mrb[0].mxu0 %v795
    %v894 = vpop.f32.mrb[0].mxu0
    %v895 = vadd.f32 0.0, %v894
    %v896 = vpop.f32.mrb[0].mxu0
    %v897 = vpop.f32.mrb[0].mxu0
    %v898 = vadd.f32 0.0, %v897
    %v899 = vpop.f32.mrb[0].mxu0
    %900 = vdwg.mxu0
    %v901 = vadd.f32 %v791, %v895
    %v902 = vadd.f32 %v792, %v898
    %v903 = vlaneseq
    %v904 = vshrl.u32 %v903, 7
    %v905 = vsub.s32 0, %v904
    %v906 = vrot.slane %v325, %v905
    %v907 = vadd.f32 %v901, %v906
    %v908 = vadd.f32 %v902, %v906
    %v909 = vld [vmem:[%s0 + $0x10] sm:$0xff]
    %v910 = vld [vmem:[%s0 + $0x18] sm:$0x1f]
    %v911 = vpack.c.bf16 %v910, %v909
    %v912 = vld [vmem:[%s0 + $0x11] sm:$0xff]
    %v913 = vld [vmem:[%s0 + $0x19] sm:$0x1f]
    %v914 = vpack.c.bf16 %v913, %v912
    %915 = vmatprep.subr.bf16.mxu0 0
    %916 = vmatpush1.bf16.msra.mxu0 %v537
    %917 = vmatprep.subr.bf16.mxu0 0
    %918 = vmatpush1.bf16.msra.mxu0 %v538
    %919 = vmatprep.subr.bf16.mxu0 0
    %920 = vmatpush1.bf16.msra.mxu0 %v539
    %921 = vmatprep.subr.bf16.mxu0 0
    %922 = vmatpush1.bf16.msra.mxu0 %v540
    %923 = vmatprep.subr.bf16.mxu0 0
    %924 = vmatpush1.bf16.msra.mxu0 %v541
    %925 = vmatprep.subr.bf16.mxu0 0
    %926 = vmatpush1.bf16.msra.mxu0 %v542
    %927 = vmatprep.subr.bf16.mxu0 0
    %928 = vmatpush1.bf16.msra.mxu0 %v543
    %929 = vmatprep.subr.bf16.mxu0 0
    %930 = vmatpush1.bf16.msra.mxu0 %v544
    %931 = vmatprep.subr.bf16.mxu0 0
    %932 = vmatpush1.bf16.msra.mxu0 0
    %933 = vmatprep.subr.bf16.mxu0 0
    %934 = vmatpush1.bf16.msra.mxu0 0
    %935 = vmatprep.subr.bf16.mxu0 0
    %936 = vmatpush1.bf16.msra.mxu0 0
    %937 = vmatprep.subr.bf16.mxu0 0
    %938 = vmatpush1.bf16.msra.mxu0 0
    %939 = vmatprep.subr.bf16.mxu0 0
    %940 = vmatpush1.bf16.msra.mxu0 0
    %941 = vmatprep.subr.bf16.mxu0 0
    %942 = vmatpush1.bf16.msra.mxu0 0
    %943 = vmatprep.subr.bf16.mxu0 0
    %944 = vmatpush1.bf16.msra.mxu0 0
    %945 = vmatprep.subr.bf16.mxu0 0
    %946 = vmatpush1.bf16.msra.mxu0 0
    %947 = vmatprep.mubr.bf16.mxu0 0
    %948 = vmatmul.mubr.bf16.gmra.mrb[0].mxu0 %v914
    %v949 = vpop.f32.mrb[0].mxu0
    %v950 = vadd.f32 0.0, %v949
    %v951 = vpop.f32.mrb[0].mxu0
    %v952 = vpop.f32.mrb[0].mxu0
    %v953 = vadd.f32 0.0, %v952
    %v954 = vpop.f32.mrb[0].mxu0
    %955 = vdwg.mxu0
    %956 = vmatprep.subr.bf16.mxu0 0
    %957 = vmatpush1.bf16.msra.mxu0 %v626
    %958 = vmatprep.subr.bf16.mxu0 0
    %959 = vmatpush1.bf16.msra.mxu0 %v627
    %960 = vmatprep.subr.bf16.mxu0 0
    %961 = vmatpush1.bf16.msra.mxu0 %v628
    %962 = vmatprep.subr.bf16.mxu0 0
    %963 = vmatpush1.bf16.msra.mxu0 %v629
    %964 = vmatprep.subr.bf16.mxu0 0
    %965 = vmatpush1.bf16.msra.mxu0 %v630
    %966 = vmatprep.subr.bf16.mxu0 0
    %967 = vmatpush1.bf16.msra.mxu0 %v631
    %968 = vmatprep.subr.bf16.mxu0 0
    %969 = vmatpush1.bf16.msra.mxu0 %v632
    %970 = vmatprep.subr.bf16.mxu0 0
    %971 = vmatpush1.bf16.msra.mxu0 %v633
    %972 = vmatprep.subr.bf16.mxu0 0
    %973 = vmatpush1.bf16.msra.mxu0 0
    %974 = vmatprep.subr.bf16.mxu0 0
    %975 = vmatpush1.bf16.msra.mxu0 0
    %976 = vmatprep.subr.bf16.mxu0 0
    %977 = vmatpush1.bf16.msra.mxu0 0
    %978 = vmatprep.subr.bf16.mxu0 0
    %979 = vmatpush1.bf16.msra.mxu0 0
    %980 = vmatprep.subr.bf16.mxu0 0
    %981 = vmatpush1.bf16.msra.mxu0 0
    %982 = vmatprep.subr.bf16.mxu0 0
    %983 = vmatpush1.bf16.msra.mxu0 0
    %984 = vmatprep.subr.bf16.mxu0 0
    %985 = vmatpush1.bf16.msra.mxu0 0
    %986 = vmatprep.subr.bf16.mxu0 0
    %987 = vmatpush1.bf16.msra.mxu0 0
    %988 = vmatprep.mubr.bf16.mxu0 0
    %989 = vmatmul.mubr.bf16.gmra.mrb[0].mxu0 %v911
    %v990 = vpop.f32.mrb[0].mxu0
    %v991 = vadd.f32 %v950, %v990
    %v992 = vpop.f32.mrb[0].mxu0
    %v993 = vpop.f32.mrb[0].mxu0
    %v994 = vadd.f32 %v953, %v993
    %v995 = vpop.f32.mrb[0].mxu0
    %996 = vdwg.mxu0
    %v997 = vld [vmem:[%s0 + $0x12] sm:$0xff]
    %v998 = vld [vmem:[%s0 + $0x1a] sm:$0x1f]
    %v999 = vpack.c.bf16 %v998, %v997
    %1000 = vmatprep.subr.bf16.mxu0 0
    %1001 = vmatpush1.bf16.msra.mxu0 %v734
    %1002 = vmatprep.subr.bf16.mxu0 0
    %1003 = vmatpush1.bf16.msra.mxu0 %v735
    %1004 = vmatprep.subr.bf16.mxu0 0
    %1005 = vmatpush1.bf16.msra.mxu0 %v736
    %1006 = vmatprep.subr.bf16.mxu0 0
    %1007 = vmatpush1.bf16.msra.mxu0 %v737
    %1008 = vmatprep.subr.bf16.mxu0 0
    %1009 = vmatpush1.bf16.msra.mxu0 %v738
    %1010 = vmatprep.subr.bf16.mxu0 0
    %1011 = vmatpush1.bf16.msra.mxu0 %v739
    %1012 = vmatprep.subr.bf16.mxu0 0
    %1013 = vmatpush1.bf16.msra.mxu0 %v740
    %1014 = vmatprep.subr.bf16.mxu0 0
    %1015 = vmatpush1.bf16.msra.mxu0 %v741
    %1016 = vmatprep.subr.bf16.mxu0 0
    %1017 = vmatpush1.bf16.msra.mxu0 0
    %1018 = vmatprep.subr.bf16.mxu0 0
    %1019 = vmatpush1.bf16.msra.mxu0 0
    %1020 = vmatprep.subr.bf16.mxu0 0
    %1021 = vmatpush1.bf16.msra.mxu0 0
    %1022 = vmatprep.subr.bf16.mxu0 0
    %1023 = vmatpush1.bf16.msra.mxu0 0
    %1024 = vmatprep.subr.bf16.mxu0 0
    %1025 = vmatpush1.bf16.msra.mxu0 0
    %1026 = vmatprep.subr.bf16.mxu0 0
    %1027 = vmatpush1.bf16.msra.mxu0 0
    %1028 = vmatprep.subr.bf16.mxu0 0
    %1029 = vmatpush1.bf16.msra.mxu0 0
    %1030 = vmatprep.subr.bf16.mxu0 0
    %1031 = vmatpush1.bf16.msra.mxu0 0
    %1032 = vmatprep.mubr.bf16.mxu0 0
    %1033 = vmatmul.mubr.bf16.gmra.mrb[0].mxu0 %v999
    %v1034 = vpop.f32.mrb[0].mxu0
    %v1035 = vadd.f32 0.0, %v1034
    %v1036 = vpop.f32.mrb[0].mxu0
    %v1037 = vpop.f32.mrb[0].mxu0
    %v1038 = vadd.f32 0.0, %v1037
    %v1039 = vpop.f32.mrb[0].mxu0
    %1040 = vdwg.mxu0
    %v1041 = vadd.f32 %v991, %v1035
    %v1042 = vadd.f32 %v994, %v1038
    %v1043 = vld [vmem:[%s0 + $0x13] sm:$0xff]
    %v1044 = vld [vmem:[%s0 + $0x1b] sm:$0x1f]
    %v1045 = vpack.c.bf16 %v1044, %v1043
    %1046 = vmatprep.subr.bf16.mxu0 0
    %1047 = vmatpush1.bf16.msra.mxu0 %v844
    %1048 = vmatprep.subr.bf16.mxu0 0
    %1049 = vmatpush1.bf16.msra.mxu0 %v845
    %1050 = vmatprep.subr.bf16.mxu0 0
    %1051 = vmatpush1.bf16.msra.mxu0 %v846
    %1052 = vmatprep.subr.bf16.mxu0 0
    %1053 = vmatpush1.bf16.msra.mxu0 %v847
    %1054 = vmatprep.subr.bf16.mxu0 0
    %1055 = vmatpush1.bf16.msra.mxu0 %v848
    %1056 = vmatprep.subr.bf16.mxu0 0
    %1057 = vmatpush1.bf16.msra.mxu0 %v849
    %1058 = vmatprep.subr.bf16.mxu0 0
    %1059 = vmatpush1.bf16.msra.mxu0 %v850
    %1060 = vmatprep.subr.bf16.mxu0 0
    %1061 = vmatpush1.bf16.msra.mxu0 %v851
    %1062 = vmatprep.subr.bf16.mxu0 0
    %1063 = vmatpush1.bf16.msra.mxu0 0
    %1064 = vmatprep.subr.bf16.mxu0 0
    %1065 = vmatpush1.bf16.msra.mxu0 0
    %1066 = vmatprep.subr.bf16.mxu0 0
    %1067 = vmatpush1.bf16.msra.mxu0 0
    %1068 = vmatprep.subr.bf16.mxu0 0
    %1069 = vmatpush1.bf16.msra.mxu0 0
    %1070 = vmatprep.subr.bf16.mxu0 0
    %1071 = vmatpush1.bf16.msra.mxu0 0
    %1072 = vmatprep.subr.bf16.mxu0 0
    %1073 = vmatpush1.bf16.msra.mxu0 0
    %1074 = vmatprep.subr.bf16.mxu0 0
    %1075 = vmatpush1.bf16.msra.mxu0 0
    %1076 = vmatprep.subr.bf16.mxu0 0
    %1077 = vmatpush1.bf16.msra.mxu0 0
    %1078 = vmatprep.mubr.bf16.mxu0 0
    %1079 = vmatmul.mubr.bf16.gmra.mrb[0].mxu0 %v1045
    %v1080 = vpop.f32.mrb[0].mxu0
    %v1081 = vadd.f32 0.0, %v1080
    %v1082 = vpop.f32.mrb[0].mxu0
    %v1083 = vpop.f32.mrb[0].mxu0
    %v1084 = vadd.f32 0.0, %v1083
    %v1085 = vpop.f32.mrb[0].mxu0
    %1086 = vdwg.mxu0
    %v1087 = vadd.f32 %v1041, %v1081
    %v1088 = vadd.f32 %v1042, %v1084
    %v1089 = vlaneseq
    %v1090 = vshrl.u32 %v1089, 7
    %v1091 = vsub.s32 1, %v1090
    %v1092 = vrot.slane %v325, %v1091
    %v1093 = vadd.f32 %v1087, %v1092
    %v1094 = vadd.f32 %v1088, %v1092
    %v1095 = vld [vmem:[#allocation8] sm:$0x1]
    %v1096 = vld [vmem:[#allocation8 + $0x1] sm:$0x1]
    %v1097 = vld [vmem:[#allocation8 + $0x2] sm:$0x1]
    %v1098 = vlaneseq
    %v1099 = vshrl.u32 %v1098, 7
    %v1100 = vsub.s32 0, %v1099
    %v1101 = vrot.slane %v1095, %v1100
    %v1102 = vadd.f32 %v907, %v1101
    %v1103 = vadd.f32 %v908, %v1101
    %v1104 = vadd.f32 %v1093, %v1101
    %v1105 = vadd.f32 %v1094, %v1101
    %vm1106 = vcmask 1044480
    %v1107 = vsel %vm1106, %v1103, 0.0
    %v1108 = vadd.f32 %v1102, %v1107
    %v1109 = vrot.slane %v1108, 4
    %v1110 = vadd.f32 %v1108, %v1109
    %v1111 = vrot.slane %v1110, 2
    %v1112 = vadd.f32 %v1110, %v1111
    %v1113 = vrot.slane %v1112, 1
    %v1114 = vadd.f32 %v1112, %v1113
    %v1115 = vsel %vm1106, %v1105, 0.0
    %v1116 = vadd.f32 %v1104, %v1115
    %v1117 = vrot.slane %v1116, 4
    %v1118 = vadd.f32 %v1116, %v1117
    %v1119 = vrot.slane %v1118, 2
    %v1120 = vadd.f32 %v1118, %v1119
    %v1121 = vrot.slane %v1120, 1
    %v1122 = vadd.f32 %v1120, %v1121
    %v1123 = vadd.f32 %v1114, %v1122
    %v1124 = vmul.f32 %v1123, 0.03846154
    %v1125 = vsub.f32 %v1102, %v1124
    %v1126 = vsub.f32 %v1103, %v1124
    %v1127 = vmul.f32 %v1125, %v1125
    %v1128 = vmul.f32 %v1126, %v1126
    %v1129 = vsel %vm1106, %v1128, 0.0
    %v1130 = vadd.f32 %v1127, %v1129
    %v1131 = vrot.slane %v1130, 4
    %v1132 = vadd.f32 %v1130, %v1131
    %v1133 = vrot.slane %v1132, 2
    %v1134 = vadd.f32 %v1132, %v1133
    %v1135 = vrot.slane %v1134, 1
    %v1136 = vadd.f32 %v1134, %v1135
    %v1137 = vsub.f32 %v1104, %v1124
    %v1138 = vsub.f32 %v1105, %v1124
    %v1139 = vmul.f32 %v1137, %v1137
    %v1140 = vmul.f32 %v1138, %v1138
    %v1141 = vsel %vm1106, %v1140, 0.0
    %v1142 = vadd.f32 %v1139, %v1141
    %v1143 = vrot.slane %v1142, 4
    %v1144 = vadd.f32 %v1142, %v1143
    %v1145 = vrot.slane %v1144, 2
    %v1146 = vadd.f32 %v1144, %v1145
    %v1147 = vrot.slane %v1146, 1
    %v1148 = vadd.f32 %v1146, %v1147
    %v1149 = vadd.f32 %v1136, %v1148
    %v1150 = vmul.f32 %v1149, 0.03846154
    %v1151 = vadd.f32 %v1150, 1e-05
    %v1152 = vrsqrt.pop %v1151
    %v1153 = vmul.f32 %v1096, %v1152
    %v1154 = vlaneseq
    %v1155 = vshrl.u32 %v1154, 7
    %v1156 = vsub.s32 0, %v1155
    %v1157 = vrot.slane %v1153, %v1156
    %v1158 = vmul.f32 %v1125, %v1157
    %v1159 = vmul.f32 %v1126, %v1157
    %v1160 = vlaneseq
    %v1161 = vshrl.u32 %v1160, 7
    %v1162 = vsub.s32 0, %v1161
    %v1163 = vrot.slane %v1097, %v1162
    %v1164 = vadd.f32 %v1158, %v1163
    %v1165 = vadd.f32 %v1159, %v1163
    %vm1166 = vcmp.ge.f32.partialorder %v1164, 0.0
    %vm1167 = vcmp.ge.f32.partialorder %v1165, 0.0
    %v1168 = vmul.f32 %v1164, 0.2
    %v1169 = vmul.f32 %v1165, 0.2
    %v1170 = vsel %vm1166, %v1164, %v1168
    %v1171 = vsel %vm1167, %v1165, %v1169
    %v1172 = vmul.f32 %v1137, %v1157
    %v1173 = vmul.f32 %v1138, %v1157
    %v1174 = vadd.f32 %v1172, %v1163
    %v1175 = vadd.f32 %v1173, %v1163
    %vm1176 = vcmp.ge.f32.partialorder %v1174, 0.0
    %vm1177 = vcmp.ge.f32.partialorder %v1175, 0.0
    %v1178 = vmul.f32 %v1174, 0.2
    %v1179 = vmul.f32 %v1175, 0.2
    %v1180 = vsel %vm1176, %v1174, %v1178
    %v1181 = vsel %vm1177, %v1175, %v1179
    %1182 = vst [vmem:[%s17] sm:$0xff] %v1170
    %1183 = vst [vmem:[%s17 + $0x8] sm:$0x1f] %v1171
    %1184 = vst [vmem:[%s17 + $0xd] sm:$0xff] %v1180
    %1185 = vst [vmem:[%s17 + $0x15] sm:$0x1f] %v1181
    %v1186 = vld [vmem:[%s17] sm:$0xff]
    %v1187 = vld [vmem:[%s17 + $0x8] sm:$0x3]
    %v1188 = vpack.c.bf16 %v1187, %v1186
    %v1189 = vld [vmem:[#allocation10] sm:$0xf]
    %v1190 = vld [vmem:[#allocation10 + $0x4] sm:$0xf]
    %v1191 = vld [vmem:[#allocation10 + $0x8] sm:$0xf]
    %v1192 = vld [vmem:[#allocation10 + $0xc] sm:$0xf]
    %v1193 = vld [vmem:[#allocation10 + $0x10] sm:$0xf]
    %v1194 = vld [vmem:[#allocation10 + $0x14] sm:$0xf]
    %v1195 = vld [vmem:[#allocation10 + $0x18] sm:$0xf]
    %v1196 = vld [vmem:[#allocation10 + $0x1c] sm:$0xf]
    %v1197 = vld [vmem:[#allocation10 + $0x20] sm:$0xf]
    %v1198 = vld [vmem:[#allocation10 + $0x24] sm:$0xf]
    %v1199 = vld [vmem:[#allocation10 + $0x28] sm:$0xf]
    %v1200 = vld [vmem:[#allocation10 + $0x2c] sm:$0xf]
    %v1201 = vld [vmem:[#allocation10 + $0x30] sm:$0xf]
    %v1202 = vld [vmem:[#allocation10 + $0x34] sm:$0xf]
    %v1203 = vld [vmem:[#allocation10 + $0x38] sm:$0xf]
    %v1204 = vld [vmem:[#allocation10 + $0x3c] sm:$0xf]
    %v1205 = vld [vmem:[%s17 + $0x1] sm:$0xff]
    %v1206 = vld [vmem:[%s17 + $0x9] sm:$0x3]
    %v1207 = vpack.c.bf16 %v1206, %v1205
    %v1208 = vld [vmem:[#allocation10 + $0x40] sm:$0xf]
    %v1209 = vld [vmem:[#allocation10 + $0x44] sm:$0xf]
    %v1210 = vld [vmem:[#allocation10 + $0x48] sm:$0xf]
    %v1211 = vld [vmem:[#allocation10 + $0x4c] sm:$0xf]
    %v1212 = vld [vmem:[#allocation10 + $0x50] sm:$0xf]
    %v1213 = vld [vmem:[#allocation10 + $0x54] sm:$0xf]
    %v1214 = vld [vmem:[#allocation10 + $0x58] sm:$0xf]
    %v1215 = vld [vmem:[#allocation10 + $0x5c] sm:$0xf]
    %v1216 = vld [vmem:[#allocation10 + $0x60] sm:$0xf]
    %v1217 = vld [vmem:[#allocation10 + $0x64] sm:$0xf]
    %v1218 = vld [vmem:[#allocation10 + $0x68] sm:$0xf]
    %v1219 = vld [vmem:[#allocation10 + $0x6c] sm:$0xf]
    %v1220 = vld [vmem:[#allocation10 + $0x70] sm:$0xf]
    %v1221 = vld [vmem:[#allocation10 + $0x74] sm:$0xf]
    %v1222 = vld [vmem:[#allocation10 + $0x78] sm:$0xf]
    %v1223 = vld [vmem:[#allocation10 + $0x7c] sm:$0xf]
    %v1240 = vunpack.c.l.b16 %v1208
    %v1241 = vunpack.c.l.b16 %v1209
    %v1242 = vunpack.c.l.b16 %v1210
    %v1243 = vunpack.c.l.b16 %v1211
    %v1244 = vunpack.c.l.b16 %v1212
    %v1245 = vunpack.c.l.b16 %v1213
    %v1246 = vunpack.c.l.b16 %v1214
    %v1247 = vunpack.c.l.b16 %v1215
    %v1248 = vunpack.c.l.b16 %v1216
    %v1249 = vunpack.c.l.b16 %v1217
    %v1250 = vunpack.c.l.b16 %v1218
    %v1251 = vunpack.c.l.b16 %v1219
    %v1252 = vunpack.c.l.b16 %v1220
    %v1253 = vunpack.c.l.b16 %v1221
    %v1254 = vunpack.c.l.b16 %v1222
    %v1255 = vunpack.c.l.b16 %v1223
    %v1256 = vpack.c.b16 %v1241, %v1240
    %v1257 = vpack.c.b16 %v1243, %v1242
    %v1258 = vpack.c.b16 %v1245, %v1244
    %v1259 = vpack.c.b16 %v1247, %v1246
    %v1260 = vpack.c.b16 %v1249, %v1248
    %v1261 = vpack.c.b16 %v1251, %v1250
    %v1262 = vpack.c.b16 %v1253, %v1252
    %v1263 = vpack.c.b16 %v1255, %v1254
    %1272 = vmatprep.subr.bf16.mxu0 0
    %1273 = vmatpush1.bf16.msra.mxu0 %v1256
    %1274 = vmatprep.subr.bf16.mxu0 0
    %1275 = vmatpush1.bf16.msra.mxu0 %v1257
    %1276 = vmatprep.subr.bf16.mxu0 0
    %1277 = vmatpush1.bf16.msra.mxu0 %v1258
    %1278 = vmatprep.subr.bf16.mxu0 0
    %1279 = vmatpush1.bf16.msra.mxu0 %v1259
    %1280 = vmatprep.subr.bf16.mxu0 0
    %1281 = vmatpush1.bf16.msra.mxu0 %v1260
    %1282 = vmatprep.subr.bf16.mxu0 0
    %1283 = vmatpush1.bf16.msra.mxu0 %v1261
    %1284 = vmatprep.subr.bf16.mxu0 0
    %1285 = vmatpush1.bf16.msra.mxu0 %v1262
    %1286 = vmatprep.subr.bf16.mxu0 0
    %1287 = vmatpush1.bf16.msra.mxu0 %v1263
    %1288 = vmatprep.subr.bf16.mxu0 0
    %1289 = vmatpush1.bf16.msra.mxu0 0
    %1290 = vmatprep.subr.bf16.mxu0 0
    %1291 = vmatpush1.bf16.msra.mxu0 0
    %1292 = vmatprep.subr.bf16.mxu0 0
    %1293 = vmatpush1.bf16.msra.mxu0 0
    %1294 = vmatprep.subr.bf16.mxu0 0
    %1295 = vmatpush1.bf16.msra.mxu0 0
    %1296 = vmatprep.subr.bf16.mxu0 0
    %1297 = vmatpush1.bf16.msra.mxu0 0
    %1298 = vmatprep.subr.bf16.mxu0 0
    %1299 = vmatpush1.bf16.msra.mxu0 0
    %1300 = vmatprep.subr.bf16.mxu0 0
    %1301 = vmatpush1.bf16.msra.mxu0 0
    %1302 = vmatprep.subr.bf16.mxu0 0
    %1303 = vmatpush1.bf16.msra.mxu0 0
    %1304 = vmatprep.mubr.bf16.mxu0 0
    %1305 = vmatmul.mubr.bf16.gmra.mrb[0].mxu0 %v1207
    %v1306 = vpop.f32.mrb[0].mxu0
    %v1307 = vadd.f32 0.0, %v1306
    %v1308 = vpop.f32.mrb[0].mxu0
    %v1309 = vpop.f32.mrb[0].mxu0
    %v1310 = vadd.f32 0.0, %v1309
    %v1311 = vpop.f32.mrb[0].mxu0
    %1312 = vdwg.mxu0
    %v1329 = vunpack.c.l.b16 %v1189
    %v1330 = vunpack.c.l.b16 %v1190
    %v1331 = vunpack.c.l.b16 %v1191
    %v1332 = vunpack.c.l.b16 %v1192
    %v1333 = vunpack.c.l.b16 %v1193
    %v1334 = vunpack.c.l.b16 %v1194
    %v1335 = vunpack.c.l.b16 %v1195
    %v1336 = vunpack.c.l.b16 %v1196
    %v1337 = vunpack.c.l.b16 %v1197
    %v1338 = vunpack.c.l.b16 %v1198
    %v1339 = vunpack.c.l.b16 %v1199
    %v1340 = vunpack.c.l.b16 %v1200
    %v1341 = vunpack.c.l.b16 %v1201
    %v1342 = vunpack.c.l.b16 %v1202
    %v1343 = vunpack.c.l.b16 %v1203
    %v1344 = vunpack.c.l.b16 %v1204
    %v1345 = vpack.c.b16 %v1330, %v1329
    %v1346 = vpack.c.b16 %v1332, %v1331
    %v1347 = vpack.c.b16 %v1334, %v1333
    %v1348 = vpack.c.b16 %v1336, %v1335
    %v1349 = vpack.c.b16 %v1338, %v1337
    %v1350 = vpack.c.b16 %v1340, %v1339
    %v1351 = vpack.c.b16 %v1342, %v1341
    %v1352 = vpack.c.b16 %v1344, %v1343
    %1361 = vmatprep.subr.bf16.mxu0 0
    %1362 = vmatpush1.bf16.msra.mxu0 %v1345
    %1363 = vmatprep.subr.bf16.mxu0 0
    %1364 = vmatpush1.bf16.msra.mxu0 %v1346
    %1365 = vmatprep.subr.bf16.mxu0 0
    %1366 = vmatpush1.bf16.msra.mxu0 %v1347
    %1367 = vmatprep.subr.bf16.mxu0 0
    %1368 = vmatpush1.bf16.msra.mxu0 %v1348
    %1369 = vmatprep.subr.bf16.mxu0 0
    %1370 = vmatpush1.bf16.msra.mxu0 %v1349
    %1371 = vmatprep.subr.bf16.mxu0 0
    %1372 = vmatpush1.bf16.msra.mxu0 %v1350
    %1373 = vmatprep.subr.bf16.mxu0 0
    %1374 = vmatpush1.bf16.msra.mxu0 %v1351
    %1375 = vmatprep.subr.bf16.mxu0 0
    %1376 = vmatpush1.bf16.msra.mxu0 %v1352
    %1377 = vmatprep.subr.bf16.mxu0 0
    %1378 = vmatpush1.bf16.msra.mxu0 0
    %1379 = vmatprep.subr.bf16.mxu0 0
    %1380 = vmatpush1.bf16.msra.mxu0 0
    %1381 = vmatprep.subr.bf16.mxu0 0
    %1382 = vmatpush1.bf16.msra.mxu0 0
    %1383 = vmatprep.subr.bf16.mxu0 0
    %1384 = vmatpush1.bf16.msra.mxu0 0
    %1385 = vmatprep.subr.bf16.mxu0 0
    %1386 = vmatpush1.bf16.msra.mxu0 0
    %1387 = vmatprep.subr.bf16.mxu0 0
    %1388 = vmatpush1.bf16.msra.mxu0 0
    %1389 = vmatprep.subr.bf16.mxu0 0
    %1390 = vmatpush1.bf16.msra.mxu0 0
    %1391 = vmatprep.subr.bf16.mxu0 0
    %1392 = vmatpush1.bf16.msra.mxu0 0
    %1393 = vmatprep.mubr.bf16.mxu0 0
    %1394 = vmatmul.mubr.bf16.gmra.mrb[0].mxu0 %v1188
    %v1395 = vpop.f32.mrb[0].mxu0
    %v1396 = vadd.f32 %v1307, %v1395
    %v1397 = vpop.f32.mrb[0].mxu0
    %v1398 = vpop.f32.mrb[0].mxu0
    %v1399 = vadd.f32 %v1310, %v1398
    %v1400 = vpop.f32.mrb[0].mxu0
    %1401 = vdwg.mxu0
    %v1402 = vld [vmem:[%s17 + $0x2] sm:$0xff]
    %v1403 = vld [vmem:[%s17 + $0xa] sm:$0x3]
    %v1404 = vpack.c.bf16 %v1403, %v1402
    %v1405 = vld [vmem:[#allocation10 + $0x80] sm:$0xf]
    %v1406 = vld [vmem:[#allocation10 + $0x84] sm:$0xf]
    %v1407 = vld [vmem:[#allocation10 + $0x88] sm:$0xf]
    %v1408 = vld [vmem:[#allocation10 + $0x8c] sm:$0xf]
    %v1409 = vld [vmem:[#allocation10 + $0x90] sm:$0xf]
    %v1410 = vld [vmem:[#allocation10 + $0x94] sm:$0xf]
    %v1411 = vld [vmem:[#allocation10 + $0x98] sm:$0xf]
    %v1412 = vld [vmem:[#allocation10 + $0x9c] sm:$0xf]
    %v1413 = vld [vmem:[#allocation10 + $0xa0] sm:$0xf]
    %v1414 = vld [vmem:[#allocation10 + $0xa4] sm:$0xf]
    %v1415 = vld [vmem:[#allocation10 + $0xa8] sm:$0xf]
    %v1416 = vld [vmem:[#allocation10 + $0xac] sm:$0xf]
    %v1417 = vld [vmem:[#allocation10 + $0xb0] sm:$0xf]
    %v1418 = vld [vmem:[#allocation10 + $0xb4] sm:$0xf]
    %v1419 = vld [vmem:[#allocation10 + $0xb8] sm:$0xf]
    %v1420 = vld [vmem:[#allocation10 + $0xbc] sm:$0xf]
    %v1437 = vunpack.c.l.b16 %v1405
    %v1438 = vunpack.c.l.b16 %v1406
    %v1439 = vunpack.c.l.b16 %v1407
    %v1440 = vunpack.c.l.b16 %v1408
    %v1441 = vunpack.c.l.b16 %v1409
    %v1442 = vunpack.c.l.b16 %v1410
    %v1443 = vunpack.c.l.b16 %v1411
    %v1444 = vunpack.c.l.b16 %v1412
    %v1445 = vunpack.c.l.b16 %v1413
    %v1446 = vunpack.c.l.b16 %v1414
    %v1447 = vunpack.c.l.b16 %v1415
    %v1448 = vunpack.c.l.b16 %v1416
    %v1449 = vunpack.c.l.b16 %v1417
    %v1450 = vunpack.c.l.b16 %v1418
    %v1451 = vunpack.c.l.b16 %v1419
    %v1452 = vunpack.c.l.b16 %v1420
    %v1453 = vpack.c.b16 %v1438, %v1437
    %v1454 = vpack.c.b16 %v1440, %v1439
    %v1455 = vpack.c.b16 %v1442, %v1441
    %v1456 = vpack.c.b16 %v1444, %v1443
    %v1457 = vpack.c.b16 %v1446, %v1445
    %v1458 = vpack.c.b16 %v1448, %v1447
    %v1459 = vpack.c.b16 %v1450, %v1449
    %v1460 = vpack.c.b16 %v1452, %v1451
    %1469 = vmatprep.subr.bf16.mxu0 0
    %1470 = vmatpush1.bf16.msra.mxu0 %v1453
    %1471 = vmatprep.subr.bf16.mxu0 0
    %1472 = vmatpush1.bf16.msra.mxu0 %v1454
    %1473 = vmatprep.subr.bf16.mxu0 0
    %1474 = vmatpush1.bf16.msra.mxu0 %v1455
    %1475 = vmatprep.subr.bf16.mxu0 0
    %1476 = vmatpush1.bf16.msra.mxu0 %v1456
    %1477 = vmatprep.subr.bf16.mxu0 0
    %1478 = vmatpush1.bf16.msra.mxu0 %v1457
    %1479 = vmatprep.subr.bf16.mxu0 0
    %1480 = vmatpush1.bf16.msra.mxu0 %v1458
    %1481 = vmatprep.subr.bf16.mxu0 0
    %1482 = vmatpush1.bf16.msra.mxu0 %v1459
    %1483 = vmatprep.subr.bf16.mxu0 0
    %1484 = vmatpush1.bf16.msra.mxu0 %v1460
    %1485 = vmatprep.subr.bf16.mxu0 0
    %1486 = vmatpush1.bf16.msra.mxu0 0
    %1487 = vmatprep.subr.bf16.mxu0 0
    %1488 = vmatpush1.bf16.msra.mxu0 0
    %1489 = vmatprep.subr.bf16.mxu0 0
    %1490 = vmatpush1.bf16.msra.mxu0 0
    %1491 = vmatprep.subr.bf16.mxu0 0
    %1492 = vmatpush1.bf16.msra.mxu0 0
    %1493 = vmatprep.subr.bf16.mxu0 0
    %1494 = vmatpush1.bf16.msra.mxu0 0
    %1495 = vmatprep.subr.bf16.mxu0 0
    %1496 = vmatpush1.bf16.msra.mxu0 0
    %1497 = vmatprep.subr.bf16.mxu0 0
    %1498 = vmatpush1.bf16.msra.mxu0 0
    %1499 = vmatprep.subr.bf16.mxu0 0
    %1500 = vmatpush1.bf16.msra.mxu0 0
    %1501 = vmatprep.mubr.bf16.mxu0 0
    %1502 = vmatmul.mubr.bf16.gmra.mrb[0].mxu0 %v1404
    %v1503 = vpop.f32.mrb[0].mxu0
    %v1504 = vadd.f32 0.0, %v1503
    %v1505 = vpop.f32.mrb[0].mxu0
    %v1506 = vpop.f32.mrb[0].mxu0
    %v1507 = vadd.f32 0.0, %v1506
    %v1508 = vpop.f32.mrb[0].mxu0
    %1509 = vdwg.mxu0
    %v1510 = vadd.f32 %v1396, %v1504
    %v1511 = vadd.f32 %v1399, %v1507
    %v1512 = vld [vmem:[%s17 + $0x3] sm:$0xff]
    %v1513 = vld [vmem:[%s17 + $0xb] sm:$0x3]
    %v1514 = vpack.c.bf16 %v1513, %v1512
    %v1515 = vld [vmem:[#allocation10 + $0xc0] sm:$0xf]
    %v1516 = vld [vmem:[#allocation10 + $0xc4] sm:$0xf]
    %v1517 = vld [vmem:[#allocation10 + $0xc8] sm:$0xf]
    %v1518 = vld [vmem:[#allocation10 + $0xcc] sm:$0xf]
    %v1519 = vld [vmem:[#allocation10 + $0xd0] sm:$0xf]
    %v1520 = vld [vmem:[#allocation10 + $0xd4] sm:$0xf]
    %v1521 = vld [vmem:[#allocation10 + $0xd8] sm:$0xf]
    %v1522 = vld [vmem:[#allocation10 + $0xdc] sm:$0xf]
    %v1523 = vld [vmem:[#allocation10 + $0xe0] sm:$0xf]
    %v1524 = vld [vmem:[#allocation10 + $0xe4] sm:$0xf]
    %v1525 = vld [vmem:[#allocation10 + $0xe8] sm:$0xf]
    %v1526 = vld [vmem:[#allocation10 + $0xec] sm:$0xf]
    %v1527 = vld [vmem:[#allocation10 + $0xf0] sm:$0xf]
    %v1528 = vld [vmem:[#allocation10 + $0xf4] sm:$0xf]
    %v1529 = vld [vmem:[#allocation10 + $0xf8] sm:$0xf]
    %v1530 = vld [vmem:[#allocation10 + $0xfc] sm:$0xf]
    %v1547 = vunpack.c.l.b16 %v1515
    %v1548 = vunpack.c.l.b16 %v1516
    %v1549 = vunpack.c.l.b16 %v1517
    %v1550 = vunpack.c.l.b16 %v1518
    %v1551 = vunpack.c.l.b16 %v1519
    %v1552 = vunpack.c.l.b16 %v1520
    %v1553 = vunpack.c.l.b16 %v1521
    %v1554 = vunpack.c.l.b16 %v1522
    %v1555 = vunpack.c.l.b16 %v1523
    %v1556 = vunpack.c.l.b16 %v1524
    %v1557 = vunpack.c.l.b16 %v1525
    %v1558 = vunpack.c.l.b16 %v1526
    %v1559 = vunpack.c.l.b16 %v1527
    %v1560 = vunpack.c.l.b16 %v1528
    %v1561 = vunpack.c.l.b16 %v1529
    %v1562 = vunpack.c.l.b16 %v1530
    %v1563 = vpack.c.b16 %v1548, %v1547
    %v1564 = vpack.c.b16 %v1550, %v1549
    %v1565 = vpack.c.b16 %v1552, %v1551
    %v1566 = vpack.c.b16 %v1554, %v1553
    %v1567 = vpack.c.b16 %v1556, %v1555
    %v1568 = vpack.c.b16 %v1558, %v1557
    %v1569 = vpack.c.b16 %v1560, %v1559
    %v1570 = vpack.c.b16 %v1562, %v1561
    %1579 = vmatprep.subr.bf16.mxu0 0
    %1580 = vmatpush1.bf16.msra.mxu0 %v1563
    %1581 = vmatprep.subr.bf16.mxu0 0
    %1582 = vmatpush1.bf16.msra.mxu0 %v1564
    %1583 = vmatprep.subr.bf16.mxu0 0
    %1584 = vmatpush1.bf16.msra.mxu0 %v1565
    %1585 = vmatprep.subr.bf16.mxu0 0
    %1586 = vmatpush1.bf16.msra.mxu0 %v1566
    %1587 = vmatprep.subr.bf16.mxu0 0
    %1588 = vmatpush1.bf16.msra.mxu0 %v1567
    %1589 = vmatprep.subr.bf16.mxu0 0
    %1590 = vmatpush1.bf16.msra.mxu0 %v1568
    %1591 = vmatprep.subr.bf16.mxu0 0
    %1592 = vmatpush1.bf16.msra.mxu0 %v1569
    %1593 = vmatprep.subr.bf16.mxu0 0
    %1594 = vmatpush1.bf16.msra.mxu0 %v1570
    %1595 = vmatprep.subr.bf16.mxu0 0
    %1596 = vmatpush1.bf16.msra.mxu0 0
    %1597 = vmatprep.subr.bf16.mxu0 0
    %1598 = vmatpush1.bf16.msra.mxu0 0
    %1599 = vmatprep.subr.bf16.mxu0 0
    %1600 = vmatpush1.bf16.msra.mxu0 0
    %1601 = vmatprep.subr.bf16.mxu0 0
    %1602 = vmatpush1.bf16.msra.mxu0 0
    %1603 = vmatprep.subr.bf16.mxu0 0
    %1604 = vmatpush1.bf16.msra.mxu0 0
    %1605 = vmatprep.subr.bf16.mxu0 0
    %1606 = vmatpush1.bf16.msra.mxu0 0
    %1607 = vmatprep.subr.bf16.mxu0 0
    %1608 = vmatpush1.bf16.msra.mxu0 0
    %1609 = vmatprep.subr.bf16.mxu0 0
    %1610 = vmatpush1.bf16.msra.mxu0 0
    %1611 = vmatprep.mubr.bf16.mxu0 0
    %1612 = vmatmul.mubr.bf16.gmra.mrb[0].mxu0 %v1514
    %v1613 = vpop.f32.mrb[0].mxu0
    %v1614 = vadd.f32 0.0, %v1613
    %v1615 = vpop.f32.mrb[0].mxu0
    %v1616 = vpop.f32.mrb[0].mxu0
    %v1617 = vadd.f32 0.0, %v1616
    %v1618 = vpop.f32.mrb[0].mxu0
    %1619 = vdwg.mxu0
    %v1620 = vadd.f32 %v1510, %v1614
    %v1621 = vadd.f32 %v1511, %v1617
    %v1622 = vld [vmem:[%s17 + $0xd] sm:$0xff]
    %v1623 = vld [vmem:[%s17 + $0x15] sm:$0x3]
    %v1624 = vpack.c.bf16 %v1623, %v1622
    %v1625 = vld [vmem:[%s17 + $0xe] sm:$0xff]
    %v1626 = vld [vmem:[%s17 + $0x16] sm:$0x3]
    %v1627 = vpack.c.bf16 %v1626, %v1625
    %1628 = vmatprep.subr.bf16.mxu0 0
    %1629 = vmatpush1.bf16.msra.mxu0 %v1256
    %1630 = vmatprep.subr.bf16.mxu0 0
    %1631 = vmatpush1.bf16.msra.mxu0 %v1257
    %1632 = vmatprep.subr.bf16.mxu0 0
    %1633 = vmatpush1.bf16.msra.mxu0 %v1258
    %1634 = vmatprep.subr.bf16.mxu0 0
    %1635 = vmatpush1.bf16.msra.mxu0 %v1259
    %1636 = vmatprep.subr.bf16.mxu0 0
    %1637 = vmatpush1.bf16.msra.mxu0 %v1260
    %1638 = vmatprep.subr.bf16.mxu0 0
    %1639 = vmatpush1.bf16.msra.mxu0 %v1261
    %1640 = vmatprep.subr.bf16.mxu0 0
    %1641 = vmatpush1.bf16.msra.mxu0 %v1262
    %1642 = vmatprep.subr.bf16.mxu0 0
    %1643 = vmatpush1.bf16.msra.mxu0 %v1263
    %1644 = vmatprep.subr.bf16.mxu0 0
    %1645 = vmatpush1.bf16.msra.mxu0 0
    %1646 = vmatprep.subr.bf16.mxu0 0
    %1647 = vmatpush1.bf16.msra.mxu0 0
    %1648 = vmatprep.subr.bf16.mxu0 0
    %1649 = vmatpush1.bf16.msra.mxu0 0
    %1650 = vmatprep.subr.bf16.mxu0 0
    %1651 = vmatpush1.bf16.msra.mxu0 0
    %1652 = vmatprep.subr.bf16.mxu0 0
    %1653 = vmatpush1.bf16.msra.mxu0 0
    %1654 = vmatprep.subr.bf16.mxu0 0
    %1655 = vmatpush1.bf16.msra.mxu0 0
    %1656 = vmatprep.subr.bf16.mxu0 0
    %1657 = vmatpush1.bf16.msra.mxu0 0
    %1658 = vmatprep.subr.bf16.mxu0 0
    %1659 = vmatpush1.bf16.msra.mxu0 0
    %1660 = vmatprep.mubr.bf16.mxu0 0
    %1661 = vmatmul.mubr.bf16.gmra.mrb[0].mxu0 %v1627
    %v1662 = vpop.f32.mrb[0].mxu0
    %v1663 = vadd.f32 0.0, %v1662
    %v1664 = vpop.f32.mrb[0].mxu0
    %v1665 = vpop.f32.mrb[0].mxu0
    %v1666 = vadd.f32 0.0, %v1665
    %v1667 = vpop.f32.mrb[0].mxu0
    %1668 = vdwg.mxu0
    %1669 = vmatprep.subr.bf16.mxu0 0
    %1670 = vmatpush1.bf16.msra.mxu0 %v1345
    %1671 = vmatprep.subr.bf16.mxu0 0
    %1672 = vmatpush1.bf16.msra.mxu0 %v1346
    %1673 = vmatprep.subr.bf16.mxu0 0
    %1674 = vmatpush1.bf16.msra.mxu0 %v1347
    %1675 = vmatprep.subr.bf16.mxu0 0
    %1676 = vmatpush1.bf16.msra.mxu0 %v1348
    %1677 = vmatprep.subr.bf16.mxu0 0
    %1678 = vmatpush1.bf16.msra.mxu0 %v1349
    %1679 = vmatprep.subr.bf16.mxu0 0
    %1680 = vmatpush1.bf16.msra.mxu0 %v1350
    %1681 = vmatprep.subr.bf16.mxu0 0
    %1682 = vmatpush1.bf16.msra.mxu0 %v1351
    %1683 = vmatprep.subr.bf16.mxu0 0
    %1684 = vmatpush1.bf16.msra.mxu0 %v1352
    %1685 = vmatprep.subr.bf16.mxu0 0
    %1686 = vmatpush1.bf16.msra.mxu0 0
    %1687 = vmatprep.subr.bf16.mxu0 0
    %1688 = vmatpush1.bf16.msra.mxu0 0
    %1689 = vmatprep.subr.bf16.mxu0 0
    %1690 = vmatpush1.bf16.msra.mxu0 0
    %1691 = vmatprep.subr.bf16.mxu0 0
    %1692 = vmatpush1.bf16.msra.mxu0 0
    %1693 = vmatprep.subr.bf16.mxu0 0
    %1694 = vmatpush1.bf16.msra.mxu0 0
    %1695 = vmatprep.subr.bf16.mxu0 0
    %1696 = vmatpush1.bf16.msra.mxu0 0
    %1697 = vmatprep.subr.bf16.mxu0 0
    %1698 = vmatpush1.bf16.msra.mxu0 0
    %1699 = vmatprep.subr.bf16.mxu0 0
    %1700 = vmatpush1.bf16.msra.mxu0 0
    %1701 = vmatprep.mubr.bf16.mxu0 0
    %1702 = vmatmul.mubr.bf16.gmra.mrb[0].mxu0 %v1624
    %v1703 = vpop.f32.mrb[0].mxu0
    %v1704 = vadd.f32 %v1663, %v1703
    %v1705 = vpop.f32.mrb[0].mxu0
    %v1706 = vpop.f32.mrb[0].mxu0
    %v1707 = vadd.f32 %v1666, %v1706
    %v1708 = vpop.f32.mrb[0].mxu0
    %1709 = vdwg.mxu0
    %v1710 = vld [vmem:[%s17 + $0xf] sm:$0xff]
    %v1711 = vld [vmem:[%s17 + $0x17] sm:$0x3]
    %v1712 = vpack.c.bf16 %v1711, %v1710
    %1713 = vmatprep.subr.bf16.mxu0 0
    %1714 = vmatpush1.bf16.msra.mxu0 %v1453
    %1715 = vmatprep.subr.bf16.mxu0 0
    %1716 = vmatpush1.bf16.msra.mxu0 %v1454
    %1717 = vmatprep.subr.bf16.mxu0 0
    %1718 = vmatpush1.bf16.msra.mxu0 %v1455
    %1719 = vmatprep.subr.bf16.mxu0 0
    %1720 = vmatpush1.bf16.msra.mxu0 %v1456
    %1721 = vmatprep.subr.bf16.mxu0 0
    %1722 = vmatpush1.bf16.msra.mxu0 %v1457
    %1723 = vmatprep.subr.bf16.mxu0 0
    %1724 = vmatpush1.bf16.msra.mxu0 %v1458
    %1725 = vmatprep.subr.bf16.mxu0 0
    %1726 = vmatpush1.bf16.msra.mxu0 %v1459
    %1727 = vmatprep.subr.bf16.mxu0 0
    %1728 = vmatpush1.bf16.msra.mxu0 %v1460
    %1729 = vmatprep.subr.bf16.mxu0 0
    %1730 = vmatpush1.bf16.msra.mxu0 0
    %1731 = vmatprep.subr.bf16.mxu0 0
    %1732 = vmatpush1.bf16.msra.mxu0 0
    %1733 = vmatprep.subr.bf16.mxu0 0
    %1734 = vmatpush1.bf16.msra.mxu0 0
    %1735 = vmatprep.subr.bf16.mxu0 0
    %1736 = vmatpush1.bf16.msra.mxu0 0
    %1737 = vmatprep.subr.bf16.mxu0 0
    %1738 = vmatpush1.bf16.msra.mxu0 0
    %1739 = vmatprep.subr.bf16.mxu0 0
    %1740 = vmatpush1.bf16.msra.mxu0 0
    %1741 = vmatprep.subr.bf16.mxu0 0
    %1742 = vmatpush1.bf16.msra.mxu0 0
    %1743 = vmatprep.subr.bf16.mxu0 0
    %1744 = vmatpush1.bf16.msra.mxu0 0
    %1745 = vmatprep.mubr.bf16.mxu0 0
    %1746 = vmatmul.mubr.bf16.gmra.mrb[0].mxu0 %v1712
    %v1747 = vpop.f32.mrb[0].mxu0
    %v1748 = vadd.f32 0.0, %v1747
    %v1749 = vpop.f32.mrb[0].mxu0
    %v1750 = vpop.f32.mrb[0].mxu0
    %v1751 = vadd.f32 0.0, %v1750
    %v1752 = vpop.f32.mrb[0].mxu0
    %1753 = vdwg.mxu0
    %v1754 = vadd.f32 %v1704, %v1748
    %v1755 = vadd.f32 %v1707, %v1751
    %v1756 = vld [vmem:[%s17 + $0x10] sm:$0xff]
    %v1757 = vld [vmem:[%s17 + $0x18] sm:$0x3]
    %v1758 = vpack.c.bf16 %v1757, %v1756
    %1759 = vmatprep.subr.bf16.mxu0 0
    %1760 = vmatpush1.bf16.msra.mxu0 %v1563
    %1761 = vmatprep.subr.bf16.mxu0 0
    %1762 = vmatpush1.bf16.msra.mxu0 %v1564
    %1763 = vmatprep.subr.bf16.mxu0 0
    %1764 = vmatpush1.bf16.msra.mxu0 %v1565
    %1765 = vmatprep.subr.bf16.mxu0 0
    %1766 = vmatpush1.bf16.msra.mxu0 %v1566
    %1767 = vmatprep.subr.bf16.mxu0 0
    %1768 = vmatpush1.bf16.msra.mxu0 %v1567
    %1769 = vmatprep.subr.bf16.mxu0 0
    %1770 = vmatpush1.bf16.msra.mxu0 %v1568
    %1771 = vmatprep.subr.bf16.mxu0 0
    %1772 = vmatpush1.bf16.msra.mxu0 %v1569
    %1773 = vmatprep.subr.bf16.mxu0 0
    %1774 = vmatpush1.bf16.msra.mxu0 %v1570
    %1775 = vmatprep.subr.bf16.mxu0 0
    %1776 = vmatpush1.bf16.msra.mxu0 0
    %1777 = vmatprep.subr.bf16.mxu0 0
    %1778 = vmatpush1.bf16.msra.mxu0 0
    %1779 = vmatprep.subr.bf16.mxu0 0
    %1780 = vmatpush1.bf16.msra.mxu0 0
    %1781 = vmatprep.subr.bf16.mxu0 0
    %1782 = vmatpush1.bf16.msra.mxu0 0
    %1783 = vmatprep.subr.bf16.mxu0 0
    %1784 = vmatpush1.bf16.msra.mxu0 0
    %1785 = vmatprep.subr.bf16.mxu0 0
    %1786 = vmatpush1.bf16.msra.mxu0 0
    %1787 = vmatprep.subr.bf16.mxu0 0
    %1788 = vmatpush1.bf16.msra.mxu0 0
    %1789 = vmatprep.subr.bf16.mxu0 0
    %1790 = vmatpush1.bf16.msra.mxu0 0
    %1791 = vmatprep.mubr.bf16.mxu0 0
    %1792 = vmatmul.mubr.bf16.gmra.mrb[0].mxu0 %v1758
    %v1793 = vpop.f32.mrb[0].mxu0
    %v1794 = vadd.f32 0.0, %v1793
    %v1795 = vpop.f32.mrb[0].mxu0
    %v1796 = vpop.f32.mrb[0].mxu0
    %v1797 = vadd.f32 0.0, %v1796
    %v1798 = vpop.f32.mrb[0].mxu0
    %1799 = vdwg.mxu0
    %v1800 = vadd.f32 %v1754, %v1794
    %v1801 = vadd.f32 %v1755, %v1797
    %v1802 = vld [vmem:[#allocation11] sm:$0x1]
    %v1803 = vld [vmem:[#allocation11 + $0x1] sm:$0x1]
    %v1804 = vld [vmem:[#allocation11 + $0x2] sm:$0x1]
    %v1805 = vlaneseq
    %v1806 = vshrl.u32 %v1805, 7
    %v1807 = vsub.s32 0, %v1806
    %v1808 = vrot.slane %v1802, %v1807
    %v1809 = vadd.f32 %v1620, %v1808
    %v1810 = vadd.f32 %v1621, %v1808
    %v1811 = vadd.f32 %v1800, %v1808
    %v1812 = vadd.f32 %v1801, %v1808
    %vm1813 = vcmask 1041408
    %v1814 = vsel %vm1813, %v1810, 0.0
    %v1815 = vadd.f32 %v1809, %v1814
    %v1816 = vrot.slane %v1815, 4
    %v1817 = vadd.f32 %v1815, %v1816
    %v1818 = vrot.slane %v1817, 2
    %v1819 = vadd.f32 %v1817, %v1818
    %v1820 = vrot.slane %v1819, 1
    %v1821 = vadd.f32 %v1819, %v1820
    %v1822 = vsel %vm1813, %v1812, 0.0
    %v1823 = vadd.f32 %v1811, %v1822
    %v1824 = vrot.slane %v1823, 4
    %v1825 = vadd.f32 %v1823, %v1824
    %v1826 = vrot.slane %v1825, 2
    %v1827 = vadd.f32 %v1825, %v1826
    %v1828 = vrot.slane %v1827, 1
    %v1829 = vadd.f32 %v1827, %v1828
    %v1830 = vadd.f32 %v1821, %v1829
    %v1831 = vmul.f32 %v1830, 0.05
    %v1832 = vsub.f32 %v1809, %v1831
    %v1833 = vsub.f32 %v1810, %v1831
    %v1834 = vmul.f32 %v1832, %v1832
    %v1835 = vmul.f32 %v1833, %v1833
    %v1836 = vsel %vm1813, %v1835, 0.0
    %v1837 = vadd.f32 %v1834, %v1836
    %v1838 = vrot.slane %v1837, 4
    %v1839 = vadd.f32 %v1837, %v1838
    %v1840 = vrot.slane %v1839, 2
    %v1841 = vadd.f32 %v1839, %v1840
    %v1842 = vrot.slane %v1841, 1
    %v1843 = vadd.f32 %v1841, %v1842
    %v1844 = vsub.f32 %v1811, %v1831
    %v1845 = vsub.f32 %v1812, %v1831
    %v1846 = vmul.f32 %v1844, %v1844
    %v1847 = vmul.f32 %v1845, %v1845
    %v1848 = vsel %vm1813, %v1847, 0.0
    %v1849 = vadd.f32 %v1846, %v1848
    %v1850 = vrot.slane %v1849, 4
    %v1851 = vadd.f32 %v1849, %v1850
    %v1852 = vrot.slane %v1851, 2
    %v1853 = vadd.f32 %v1851, %v1852
    %v1854 = vrot.slane %v1853, 1
    %v1855 = vadd.f32 %v1853, %v1854
    %v1856 = vadd.f32 %v1843, %v1855
    %v1857 = vmul.f32 %v1856, 0.05
    %v1858 = vadd.f32 %v1857, 1e-05
    %v1859 = vrsqrt.pop %v1858
    %v1860 = vmul.f32 %v1803, %v1859
    %v1861 = vlaneseq
    %v1862 = vshrl.u32 %v1861, 7
    %v1863 = vsub.s32 0, %v1862
    %v1864 = vrot.slane %v1860, %v1863
    %v1865 = vmul.f32 %v1832, %v1864
    %v1866 = vmul.f32 %v1833, %v1864
    %v1867 = vlaneseq
    %v1868 = vshrl.u32 %v1867, 7
    %v1869 = vsub.s32 0, %v1868
    %v1870 = vrot.slane %v1804, %v1869
    %v1871 = vadd.f32 %v1865, %v1870
    %v1872 = vadd.f32 %v1866, %v1870
    %vm1873 = vcmp.ge.f32.partialorder %v1871, 0.0
    %vm1874 = vcmp.ge.f32.partialorder %v1872, 0.0
    %v1875 = vmul.f32 %v1871, 0.2
    %v1876 = vmul.f32 %v1872, 0.2
    %v1877 = vsel %vm1873, %v1871, %v1875
    %v1878 = vsel %vm1874, %v1872, %v1876
    %v1879 = vmul.f32 %v1844, %v1864
    %v1880 = vmul.f32 %v1845, %v1864
    %v1881 = vadd.f32 %v1879, %v1870
    %v1882 = vadd.f32 %v1880, %v1870
    %vm1883 = vcmp.ge.f32.partialorder %v1881, 0.0
    %vm1884 = vcmp.ge.f32.partialorder %v1882, 0.0
    %v1885 = vmul.f32 %v1881, 0.2
    %v1886 = vmul.f32 %v1882, 0.2
    %v1887 = vsel %vm1883, %v1881, %v1885
    %v1888 = vsel %vm1884, %v1882, %v1886
    %1889 = vst [vmem:[#allocation2] sm:$0xff] %v1877
    %1890 = vst [vmem:[#allocation2 + $0x8] sm:$0x3] %v1878
    %1891 = vst [vmem:[#allocation2 + $0xa] sm:$0xff] %v1887
    %1892 = vst [vmem:[#allocation2 + $0x12] sm:$0x3] %v1888
    %v1893 = vld [vmem:[#allocation2] sm:$0x7f]
    %v1894 = vpack.c.bf16 %v1893, %v1893
    %v1895 = vld [vmem:[#allocation13] sm:$0xff]
    %v1896 = vld [vmem:[#allocation13 + $0x8] sm:$0xff]
    %v1897 = vld [vmem:[#allocation13 + $0x10] sm:$0xff]
    %v1898 = vld [vmem:[#allocation13 + $0x18] sm:$0xff]
    %v1899 = vld [vmem:[#allocation13 + $0x20] sm:$0xff]
    %v1900 = vld [vmem:[#allocation13 + $0x28] sm:$0xff]
    %v1901 = vld [vmem:[#allocation13 + $0x30] sm:$0xff]
    %v1902 = vld [vmem:[#allocation13 + $0x38] sm:$0xff]
    %v1903 = vld [vmem:[#allocation13 + $0x40] sm:$0xff]
    %v1904 = vld [vmem:[#allocation13 + $0x48] sm:$0xff]
    %v1905 = vld [vmem:[#allocation13 + $0x50] sm:$0xff]
    %v1906 = vld [vmem:[#allocation13 + $0x58] sm:$0xff]
    %v1907 = vld [vmem:[#allocation13 + $0x60] sm:$0xff]
    %v1908 = vld [vmem:[#allocation13 + $0x68] sm:$0xff]
    %v1909 = vld [vmem:[#allocation13 + $0x70] sm:$0xff]
    %v1910 = vld [vmem:[#allocation13 + $0x78] sm:$0xff]
    %v1911 = vld [vmem:[#allocation2 + $0x1] sm:$0x7f]
    %v1912 = vpack.c.bf16 %v1911, %v1911
    %v1913 = vld [vmem:[#allocation13 + $0x80] sm:$0xff]
    %v1914 = vld [vmem:[#allocation13 + $0x88] sm:$0xff]
    %v1915 = vld [vmem:[#allocation13 + $0x90] sm:$0xff]
    %v1916 = vld [vmem:[#allocation13 + $0x98] sm:$0xff]
    %v1917 = vld [vmem:[#allocation13 + $0xa0] sm:$0xff]
    %v1918 = vld [vmem:[#allocation13 + $0xa8] sm:$0xff]
    %v1919 = vld [vmem:[#allocation13 + $0xb0] sm:$0xff]
    %v1920 = vld [vmem:[#allocation13 + $0xb8] sm:$0xff]
    %v1921 = vld [vmem:[#allocation13 + $0xc0] sm:$0xff]
    %v1922 = vld [vmem:[#allocation13 + $0xc8] sm:$0xff]
    %v1923 = vld [vmem:[#allocation13 + $0xd0] sm:$0xff]
    %v1924 = vld [vmem:[#allocation13 + $0xd8] sm:$0xff]
    %v1925 = vld [vmem:[#allocation13 + $0xe0] sm:$0xff]
    %v1926 = vld [vmem:[#allocation13 + $0xe8] sm:$0xff]
    %v1927 = vld [vmem:[#allocation13 + $0xf0] sm:$0xff]
    %v1928 = vld [vmem:[#allocation13 + $0xf8] sm:$0xff]
    %v1945 = vunpack.c.l.b16 %v1913
    %v1946 = vunpack.c.h.b16 %v1913
    %v1947 = vunpack.c.l.b16 %v1914
    %v1948 = vunpack.c.h.b16 %v1914
    %v1949 = vunpack.c.l.b16 %v1915
    %v1950 = vunpack.c.h.b16 %v1915
    %v1951 = vunpack.c.l.b16 %v1916
    %v1952 = vunpack.c.h.b16 %v1916
    %v1953 = vunpack.c.l.b16 %v1917
    %v1954 = vunpack.c.h.b16 %v1917
    %v1955 = vunpack.c.l.b16 %v1918
    %v1956 = vunpack.c.h.b16 %v1918
    %v1957 = vunpack.c.l.b16 %v1919
    %v1958 = vunpack.c.h.b16 %v1919
    %v1959 = vunpack.c.l.b16 %v1920
    %v1960 = vunpack.c.h.b16 %v1920
    %v1961 = vunpack.c.l.b16 %v1921
    %v1962 = vunpack.c.h.b16 %v1921
    %v1963 = vunpack.c.l.b16 %v1922
    %v1964 = vunpack.c.h.b16 %v1922
    %v1965 = vunpack.c.l.b16 %v1923
    %v1966 = vunpack.c.h.b16 %v1923
    %v1967 = vunpack.c.l.b16 %v1924
    %v1968 = vunpack.c.h.b16 %v1924
    %v1969 = vunpack.c.l.b16 %v1925
    %v1970 = vunpack.c.h.b16 %v1925
    %v1971 = vunpack.c.l.b16 %v1926
    %v1972 = vunpack.c.h.b16 %v1926
    %v1973 = vunpack.c.l.b16 %v1927
    %v1974 = vunpack.c.h.b16 %v1927
    %v1975 = vunpack.c.l.b16 %v1928
    %v1976 = vunpack.c.h.b16 %v1928
    %v1977 = vpack.c.b16 %v1947, %v1945
    %v1978 = vpack.c.b16 %v1948, %v1946
    %v1979 = vpack.c.b16 %v1951, %v1949
    %v1980 = vpack.c.b16 %v1952, %v1950
    %v1981 = vpack.c.b16 %v1955, %v1953
    %v1982 = vpack.c.b16 %v1956, %v1954
    %v1983 = vpack.c.b16 %v1959, %v1957
    %v1984 = vpack.c.b16 %v1960, %v1958
    %v1985 = vpack.c.b16 %v1963, %v1961
    %v1986 = vpack.c.b16 %v1964, %v1962
    %v1987 = vpack.c.b16 %v1967, %v1965
    %v1988 = vpack.c.b16 %v1968, %v1966
    %v1989 = vpack.c.b16 %v1971, %v1969
    %v1990 = vpack.c.b16 %v1972, %v1970
    %v1991 = vpack.c.b16 %v1975, %v1973
    %v1992 = vpack.c.b16 %v1976, %v1974
    %2009 = vmatprep.subr.bf16.mxu0 %v1978
    %2010 = vmatpush1.bf16.msra.mxu0 %v1977
    %2011 = vmatprep.subr.bf16.mxu0 %v1980
    %2012 = vmatpush1.bf16.msra.mxu0 %v1979
    %2013 = vmatprep.subr.bf16.mxu0 %v1982
    %2014 = vmatpush1.bf16.msra.mxu0 %v1981
    %2015 = vmatprep.subr.bf16.mxu0 %v1984
    %2016 = vmatpush1.bf16.msra.mxu0 %v1983
    %2017 = vmatprep.subr.bf16.mxu0 %v1986
    %2018 = vmatpush1.bf16.msra.mxu0 %v1985
    %2019 = vmatprep.subr.bf16.mxu0 %v1988
    %2020 = vmatpush1.bf16.msra.mxu0 %v1987
    %2021 = vmatprep.subr.bf16.mxu0 %v1990
    %2022 = vmatpush1.bf16.msra.mxu0 %v1989
    %2023 = vmatprep.subr.bf16.mxu0 %v1992
    %2024 = vmatpush1.bf16.msra.mxu0 %v1991
    %2025 = vmatprep.subr.bf16.mxu0 0
    %2026 = vmatpush1.bf16.msra.mxu0 0
    %2027 = vmatprep.subr.bf16.mxu0 0
    %2028 = vmatpush1.bf16.msra.mxu0 0
    %2029 = vmatprep.subr.bf16.mxu0 0
    %2030 = vmatpush1.bf16.msra.mxu0 0
    %2031 = vmatprep.subr.bf16.mxu0 0
    %2032 = vmatpush1.bf16.msra.mxu0 0
    %2033 = vmatprep.subr.bf16.mxu0 0
    %2034 = vmatpush1.bf16.msra.mxu0 0
    %2035 = vmatprep.subr.bf16.mxu0 0
    %2036 = vmatpush1.bf16.msra.mxu0 0
    %2037 = vmatprep.subr.bf16.mxu0 0
    %2038 = vmatpush1.bf16.msra.mxu0 0
    %2039 = vmatprep.subr.bf16.mxu0 0
    %2040 = vmatpush1.bf16.msra.mxu0 0
    %2041 = vmatprep.mubr.bf16.mxu0 0
    %2042 = vmatmul.mubr.bf16.gmra.mrb[0].mxu0 %v1912
    %v2043 = vpop.f32.mrb[0].mxu0
    %v2044 = vadd.f32 0.0, %v2043
    %v2045 = vpop.f32.mrb[0].mxu0
    %v2046 = vadd.f32 0.0, %v2045
    %v2047 = vpop.f32.mrb[0].mxu0
    %v2048 = vpop.f32.mrb[0].mxu0
    %2049 = vdwg.mxu0
    %v2066 = vunpack.c.l.b16 %v1895
    %v2067 = vunpack.c.h.b16 %v1895
    %v2068 = vunpack.c.l.b16 %v1896
    %v2069 = vunpack.c.h.b16 %v1896
    %v2070 = vunpack.c.l.b16 %v1897
    %v2071 = vunpack.c.h.b16 %v1897
    %v2072 = vunpack.c.l.b16 %v1898
    %v2073 = vunpack.c.h.b16 %v1898
    %v2074 = vunpack.c.l.b16 %v1899
    %v2075 = vunpack.c.h.b16 %v1899
    %v2076 = vunpack.c.l.b16 %v1900
    %v2077 = vunpack.c.h.b16 %v1900
    %v2078 = vunpack.c.l.b16 %v1901
    %v2079 = vunpack.c.h.b16 %v1901
    %v2080 = vunpack.c.l.b16 %v1902
    %v2081 = vunpack.c.h.b16 %v1902
    %v2082 = vunpack.c.l.b16 %v1903
    %v2083 = vunpack.c.h.b16 %v1903
    %v2084 = vunpack.c.l.b16 %v1904
    %v2085 = vunpack.c.h.b16 %v1904
    %v2086 = vunpack.c.l.b16 %v1905
    %v2087 = vunpack.c.h.b16 %v1905
    %v2088 = vunpack.c.l.b16 %v1906
    %v2089 = vunpack.c.h.b16 %v1906
    %v2090 = vunpack.c.l.b16 %v1907
    %v2091 = vunpack.c.h.b16 %v1907
    %v2092 = vunpack.c.l.b16 %v1908
    %v2093 = vunpack.c.h.b16 %v1908
    %v2094 = vunpack.c.l.b16 %v1909
    %v2095 = vunpack.c.h.b16 %v1909
    %v2096 = vunpack.c.l.b16 %v1910
    %v2097 = vunpack.c.h.b16 %v1910
    %v2098 = vpack.c.b16 %v2068, %v2066
    %v2099 = vpack.c.b16 %v2069, %v2067
    %v2100 = vpack.c.b16 %v2072, %v2070
    %v2101 = vpack.c.b16 %v2073, %v2071
    %v2102 = vpack.c.b16 %v2076, %v2074
    %v2103 = vpack.c.b16 %v2077, %v2075
    %v2104 = vpack.c.b16 %v2080, %v2078
    %v2105 = vpack.c.b16 %v2081, %v2079
    %v2106 = vpack.c.b16 %v2084, %v2082
    %v2107 = vpack.c.b16 %v2085, %v2083
    %v2108 = vpack.c.b16 %v2088, %v2086
    %v2109 = vpack.c.b16 %v2089, %v2087
    %v2110 = vpack.c.b16 %v2092, %v2090
    %v2111 = vpack.c.b16 %v2093, %v2091
    %v2112 = vpack.c.b16 %v2096, %v2094
    %v2113 = vpack.c.b16 %v2097, %v2095
    %2130 = vmatprep.subr.bf16.mxu0 %v2099
    %2131 = vmatpush1.bf16.msra.mxu0 %v2098
    %2132 = vmatprep.subr.bf16.mxu0 %v2101
    %2133 = vmatpush1.bf16.msra.mxu0 %v2100
    %2134 = vmatprep.subr.bf16.mxu0 %v2103
    %2135 = vmatpush1.bf16.msra.mxu0 %v2102
    %2136 = vmatprep.subr.bf16.mxu0 %v2105
    %2137 = vmatpush1.bf16.msra.mxu0 %v2104
    %2138 = vmatprep.subr.bf16.mxu0 %v2107
    %2139 = vmatpush1.bf16.msra.mxu0 %v2106
    %2140 = vmatprep.subr.bf16.mxu0 %v2109
    %2141 = vmatpush1.bf16.msra.mxu0 %v2108
    %2142 = vmatprep.subr.bf16.mxu0 %v2111
    %2143 = vmatpush1.bf16.msra.mxu0 %v2110
    %2144 = vmatprep.subr.bf16.mxu0 %v2113
    %2145 = vmatpush1.bf16.msra.mxu0 %v2112
    %2146 = vmatprep.subr.bf16.mxu0 0
    %2147 = vmatpush1.bf16.msra.mxu0 0
    %2148 = vmatprep.subr.bf16.mxu0 0
    %2149 = vmatpush1.bf16.msra.mxu0 0
    %2150 = vmatprep.subr.bf16.mxu0 0
    %2151 = vmatpush1.bf16.msra.mxu0 0
    %2152 = vmatprep.subr.bf16.mxu0 0
    %2153 = vmatpush1.bf16.msra.mxu0 0
    %2154 = vmatprep.subr.bf16.mxu0 0
    %2155 = vmatpush1.bf16.msra.mxu0 0
    %2156 = vmatprep.subr.bf16.mxu0 0
    %2157 = vmatpush1.bf16.msra.mxu0 0
    %2158 = vmatprep.subr.bf16.mxu0 0
    %2159 = vmatpush1.bf16.msra.mxu0 0
    %2160 = vmatprep.subr.bf16.mxu0 0
    %2161 = vmatpush1.bf16.msra.mxu0 0
    %2162 = vmatprep.mubr.bf16.mxu0 0
    %2163 = vmatmul.mubr.bf16.gmra.mrb[0].mxu0 %v1894
    %v2164 = vpop.f32.mrb[0].mxu0
    %v2165 = vadd.f32 %v2044, %v2164
    %v2166 = vpop.f32.mrb[0].mxu0
    %v2167 = vadd.f32 %v2046, %v2166
    %v2168 = vpop.f32.mrb[0].mxu0
    %v2169 = vpop.f32.mrb[0].mxu0
    %2170 = vdwg.mxu0
    %v2171 = vld [vmem:[#allocation2 + $0x2] sm:$0x7f]
    %v2172 = vpack.c.bf16 %v2171, %v2171
    %v2173 = vld [vmem:[#allocation13 + $0x100] sm:$0xff]
    %v2174 = vld [vmem:[#allocation13 + $0x108] sm:$0xff]
    %v2175 = vld [vmem:[#allocation13 + $0x110] sm:$0xff]
    %v2176 = vld [vmem:[#allocation13 + $0x118] sm:$0xff]
    %v2177 = vld [vmem:[#allocation13 + $0x120] sm:$0xff]
    %v2178 = vld [vmem:[#allocation13 + $0x128] sm:$0xff]
    %v2179 = vld [vmem:[#allocation13 + $0x130] sm:$0xff]
    %v2180 = vld [vmem:[#allocation13 + $0x138] sm:$0xff]
    %v2181 = vld [vmem:[#allocation13 + $0x140] sm:$0xff]
    %v2182 = vld [vmem:[#allocation13 + $0x148] sm:$0xff]
    %v2183 = vld [vmem:[#allocation13 + $0x150] sm:$0xff]
    %v2184 = vld [vmem:[#allocation13 + $0x158] sm:$0xff]
    %v2185 = vld [vmem:[#allocation13 + $0x160] sm:$0xff]
    %v2186 = vld [vmem:[#allocation13 + $0x168] sm:$0xff]
    %v2187 = vld [vmem:[#allocation13 + $0x170] sm:$0xff]
    %v2188 = vld [vmem:[#allocation13 + $0x178] sm:$0xff]
    %v2205 = vunpack.c.l.b16 %v2173
    %v2206 = vunpack.c.h.b16 %v2173
    %v2207 = vunpack.c.l.b16 %v2174
    %v2208 = vunpack.c.h.b16 %v2174
    %v2209 = vunpack.c.l.b16 %v2175
    %v2210 = vunpack.c.h.b16 %v2175
    %v2211 = vunpack.c.l.b16 %v2176
    %v2212 = vunpack.c.h.b16 %v2176
    %v2213 = vunpack.c.l.b16 %v2177
    %v2214 = vunpack.c.h.b16 %v2177
    %v2215 = vunpack.c.l.b16 %v2178
    %v2216 = vunpack.c.h.b16 %v2178
    %v2217 = vunpack.c.l.b16 %v2179
    %v2218 = vunpack.c.h.b16 %v2179
    %v2219 = vunpack.c.l.b16 %v2180
    %v2220 = vunpack.c.h.b16 %v2180
    %v2221 = vunpack.c.l.b16 %v2181
    %v2222 = vunpack.c.h.b16 %v2181
    %v2223 = vunpack.c.l.b16 %v2182
    %v2224 = vunpack.c.h.b16 %v2182
    %v2225 = vunpack.c.l.b16 %v2183
    %v2226 = vunpack.c.h.b16 %v2183
    %v2227 = vunpack.c.l.b16 %v2184
    %v2228 = vunpack.c.h.b16 %v2184
    %v2229 = vunpack.c.l.b16 %v2185
    %v2230 = vunpack.c.h.b16 %v2185
    %v2231 = vunpack.c.l.b16 %v2186
    %v2232 = vunpack.c.h.b16 %v2186
    %v2233 = vunpack.c.l.b16 %v2187
    %v2234 = vunpack.c.h.b16 %v2187
    %v2235 = vunpack.c.l.b16 %v2188
    %v2236 = vunpack.c.h.b16 %v2188
    %v2237 = vpack.c.b16 %v2207, %v2205
    %v2238 = vpack.c.b16 %v2208, %v2206
    %v2239 = vpack.c.b16 %v2211, %v2209
    %v2240 = vpack.c.b16 %v2212, %v2210
    %v2241 = vpack.c.b16 %v2215, %v2213
    %v2242 = vpack.c.b16 %v2216, %v2214
    %v2243 = vpack.c.b16 %v2219, %v2217
    %v2244 = vpack.c.b16 %v2220, %v2218
    %v2245 = vpack.c.b16 %v2223, %v2221
    %v2246 = vpack.c.b16 %v2224, %v2222
    %v2247 = vpack.c.b16 %v2227, %v2225
    %v2248 = vpack.c.b16 %v2228, %v2226
    %v2249 = vpack.c.b16 %v2231, %v2229
    %v2250 = vpack.c.b16 %v2232, %v2230
    %v2251 = vpack.c.b16 %v2235, %v2233
    %v2252 = vpack.c.b16 %v2236, %v2234
    %2269 = vmatprep.subr.bf16.mxu0 %v2238
    %2270 = vmatpush1.bf16.msra.mxu0 %v2237
    %2271 = vmatprep.subr.bf16.mxu0 %v2240
    %2272 = vmatpush1.bf16.msra.mxu0 %v2239
    %2273 = vmatprep.subr.bf16.mxu0 %v2242
    %2274 = vmatpush1.bf16.msra.mxu0 %v2241
    %2275 = vmatprep.subr.bf16.mxu0 %v2244
    %2276 = vmatpush1.bf16.msra.mxu0 %v2243
    %2277 = vmatprep.subr.bf16.mxu0 %v2246
    %2278 = vmatpush1.bf16.msra.mxu0 %v2245
    %2279 = vmatprep.subr.bf16.mxu0 %v2248
    %2280 = vmatpush1.bf16.msra.mxu0 %v2247
    %2281 = vmatprep.subr.bf16.mxu0 %v2250
    %2282 = vmatpush1.bf16.msra.mxu0 %v2249
    %2283 = vmatprep.subr.bf16.mxu0 %v2252
    %2284 = vmatpush1.bf16.msra.mxu0 %v2251
    %2285 = vmatprep.subr.bf16.mxu0 0
    %2286 = vmatpush1.bf16.msra.mxu0 0
    %2287 = vmatprep.subr.bf16.mxu0 0
    %2288 = vmatpush1.bf16.msra.mxu0 0
    %2289 = vmatprep.subr.bf16.mxu0 0
    %2290 = vmatpush1.bf16.msra.mxu0 0
    %2291 = vmatprep.subr.bf16.mxu0 0
    %2292 = vmatpush1.bf16.msra.mxu0 0
    %2293 = vmatprep.subr.bf16.mxu0 0
    %2294 = vmatpush1.bf16.msra.mxu0 0
    %2295 = vmatprep.subr.bf16.mxu0 0
    %2296 = vmatpush1.bf16.msra.mxu0 0
    %2297 = vmatprep.subr.bf16.mxu0 0
    %2298 = vmatpush1.bf16.msra.mxu0 0
    %2299 = vmatprep.subr.bf16.mxu0 0
    %2300 = vmatpush1.bf16.msra.mxu0 0
    %2301 = vmatprep.mubr.bf16.mxu0 0
    %2302 = vmatmul.mubr.bf16.gmra.mrb[0].mxu0 %v2172
    %v2303 = vpop.f32.mrb[0].mxu0
    %v2304 = vadd.f32 0.0, %v2303
    %v2305 = vpop.f32.mrb[0].mxu0
    %v2306 = vadd.f32 0.0, %v2305
    %v2307 = vpop.f32.mrb[0].mxu0
    %v2308 = vpop.f32.mrb[0].mxu0
    %2309 = vdwg.mxu0
    %v2310 = vadd.f32 %v2165, %v2304
    %v2311 = vadd.f32 %v2167, %v2306
    %v2312 = vld [vmem:[#allocation2 + $0x3] sm:$0x7f]
    %v2313 = vpack.c.bf16 %v2312, %v2312
    %v2314 = vld [vmem:[#allocation13 + $0x180] sm:$0xff]
    %v2315 = vld [vmem:[#allocation13 + $0x188] sm:$0xff]
    %v2316 = vld [vmem:[#allocation13 + $0x190] sm:$0xff]
    %v2317 = vld [vmem:[#allocation13 + $0x198] sm:$0xff]
    %v2318 = vld [vmem:[#allocation13 + $0x1a0] sm:$0xff]
    %v2319 = vld [vmem:[#allocation13 + $0x1a8] sm:$0xff]
    %v2320 = vld [vmem:[#allocation13 + $0x1b0] sm:$0xff]
    %v2321 = vld [vmem:[#allocation13 + $0x1b8] sm:$0xff]
    %v2322 = vld [vmem:[#allocation13 + $0x1c0] sm:$0xff]
    %v2323 = vld [vmem:[#allocation13 + $0x1c8] sm:$0xff]
    %v2324 = vld [vmem:[#allocation13 + $0x1d0] sm:$0xff]
    %v2325 = vld [vmem:[#allocation13 + $0x1d8] sm:$0xff]
    %v2326 = vld [vmem:[#allocation13 + $0x1e0] sm:$0xff]
    %v2327 = vld [vmem:[#allocation13 + $0x1e8] sm:$0xff]
    %v2328 = vld [vmem:[#allocation13 + $0x1f0] sm:$0xff]
    %v2329 = vld [vmem:[#allocation13 + $0x1f8] sm:$0xff]
    %v2346 = vunpack.c.l.b16 %v2314
    %v2347 = vunpack.c.h.b16 %v2314
    %v2348 = vunpack.c.l.b16 %v2315
    %v2349 = vunpack.c.h.b16 %v2315
    %v2350 = vunpack.c.l.b16 %v2316
    %v2351 = vunpack.c.h.b16 %v2316
    %v2352 = vunpack.c.l.b16 %v2317
    %v2353 = vunpack.c.h.b16 %v2317
    %v2354 = vunpack.c.l.b16 %v2318
    %v2355 = vunpack.c.h.b16 %v2318
    %v2356 = vunpack.c.l.b16 %v2319
    %v2357 = vunpack.c.h.b16 %v2319
    %v2358 = vunpack.c.l.b16 %v2320
    %v2359 = vunpack.c.h.b16 %v2320
    %v2360 = vunpack.c.l.b16 %v2321
    %v2361 = vunpack.c.h.b16 %v2321
    %v2362 = vunpack.c.l.b16 %v2322
    %v2363 = vunpack.c.h.b16 %v2322
    %v2364 = vunpack.c.l.b16 %v2323
    %v2365 = vunpack.c.h.b16 %v2323
    %v2366 = vunpack.c.l.b16 %v2324
    %v2367 = vunpack.c.h.b16 %v2324
    %v2368 = vunpack.c.l.b16 %v2325
    %v2369 = vunpack.c.h.b16 %v2325
    %v2370 = vunpack.c.l.b16 %v2326
    %v2371 = vunpack.c.h.b16 %v2326
    %v2372 = vunpack.c.l.b16 %v2327
    %v2373 = vunpack.c.h.b16 %v2327
    %v2374 = vunpack.c.l.b16 %v2328
    %v2375 = vunpack.c.h.b16 %v2328
    %v2376 = vunpack.c.l.b16 %v2329
    %v2377 = vunpack.c.h.b16 %v2329
    %v2378 = vpack.c.b16 %v2348, %v2346
    %v2379 = vpack.c.b16 %v2349, %v2347
    %v2380 = vpack.c.b16 %v2352, %v2350
    %v2381 = vpack.c.b16 %v2353, %v2351
    %v2382 = vpack.c.b16 %v2356, %v2354
    %v2383 = vpack.c.b16 %v2357, %v2355
    %v2384 = vpack.c.b16 %v2360, %v2358
    %v2385 = vpack.c.b16 %v2361, %v2359
    %v2386 = vpack.c.b16 %v2364, %v2362
    %v2387 = vpack.c.b16 %v2365, %v2363
    %v2388 = vpack.c.b16 %v2368, %v2366
    %v2389 = vpack.c.b16 %v2369, %v2367
    %v2390 = vpack.c.b16 %v2372, %v2370
    %v2391 = vpack.c.b16 %v2373, %v2371
    %v2392 = vpack.c.b16 %v2376, %v2374
    %v2393 = vpack.c.b16 %v2377, %v2375
    %2410 = vmatprep.subr.bf16.mxu0 %v2379
    %2411 = vmatpush1.bf16.msra.mxu0 %v2378
    %2412 = vmatprep.subr.bf16.mxu0 %v2381
    %2413 = vmatpush1.bf16.msra.mxu0 %v2380
    %2414 = vmatprep.subr.bf16.mxu0 %v2383
    %2415 = vmatpush1.bf16.msra.mxu0 %v2382
    %2416 = vmatprep.subr.bf16.mxu0 %v2385
    %2417 = vmatpush1.bf16.msra.mxu0 %v2384
    %2418 = vmatprep.subr.bf16.mxu0 %v2387
    %2419 = vmatpush1.bf16.msra.mxu0 %v2386
    %2420 = vmatprep.subr.bf16.mxu0 %v2389
    %2421 = vmatpush1.bf16.msra.mxu0 %v2388
    %2422 = vmatprep.subr.bf16.mxu0 %v2391
    %2423 = vmatpush1.bf16.msra.mxu0 %v2390
    %2424 = vmatprep.subr.bf16.mxu0 %v2393
    %2425 = vmatpush1.bf16.msra.mxu0 %v2392
    %2426 = vmatprep.subr.bf16.mxu0 0
    %2427 = vmatpush1.bf16.msra.mxu0 0
    %2428 = vmatprep.subr.bf16.mxu0 0
    %2429 = vmatpush1.bf16.msra.mxu0 0
    %2430 = vmatprep.subr.bf16.mxu0 0
    %2431 = vmatpush1.bf16.msra.mxu0 0
    %2432 = vmatprep.subr.bf16.mxu0 0
    %2433 = vmatpush1.bf16.msra.mxu0 0
    %2434 = vmatprep.subr.bf16.mxu0 0
    %2435 = vmatpush1.bf16.msra.mxu0 0
    %2436 = vmatprep.subr.bf16.mxu0 0
    %2437 = vmatpush1.bf16.msra.mxu0 0
    %2438 = vmatprep.subr.bf16.mxu0 0
    %2439 = vmatpush1.bf16.msra.mxu0 0
    %2440 = vmatprep.subr.bf16.mxu0 0
    %2441 = vmatpush1.bf16.msra.mxu0 0
    %2442 = vmatprep.mubr.bf16.mxu0 0
    %2443 = vmatmul.mubr.bf16.gmra.mrb[0].mxu0 %v2313
    %v2444 = vpop.f32.mrb[0].mxu0
    %v2445 = vadd.f32 0.0, %v2444
    %v2446 = vpop.f32.mrb[0].mxu0
    %v2447 = vadd.f32 0.0, %v2446
    %v2448 = vpop.f32.mrb[0].mxu0
    %v2449 = vpop.f32.mrb[0].mxu0
    %2450 = vdwg.mxu0
    %v2451 = vadd.f32 %v2310, %v2445
    %v2452 = vadd.f32 %v2311, %v2447
    %v2453 = vlaneseq
    %v2454 = vshrl.u32 %v2453, 7
    %v2455 = vsub.s32 0, %v2454
    %v2456 = vrot.slane %v461, %v2455
    %v2457 = vlaneseq
    %v2458 = vshrl.u32 %v2457, 7
    %v2459 = vsub.s32 0, %v2458
    %v2460 = vrot.slane %v463, %v2459
    %v2461 = vadd.f32 %v2451, %v2456
    %v2462 = vadd.f32 %v2452, %v2460
    %v2463 = vld [vmem:[#allocation2 + $0xa] sm:$0x7f]
    %v2464 = vpack.c.bf16 %v2463, %v2463
    %v2465 = vld [vmem:[#allocation2 + $0xb] sm:$0x7f]
    %v2466 = vpack.c.bf16 %v2465, %v2465
    %2467 = vmatprep.subr.bf16.mxu0 %v1978
    %2468 = vmatpush1.bf16.msra.mxu0 %v1977
    %2469 = vmatprep.subr.bf16.mxu0 %v1980
    %2470 = vmatpush1.bf16.msra.mxu0 %v1979
    %2471 = vmatprep.subr.bf16.mxu0 %v1982
    %2472 = vmatpush1.bf16.msra.mxu0 %v1981
    %2473 = vmatprep.subr.bf16.mxu0 %v1984
    %2474 = vmatpush1.bf16.msra.mxu0 %v1983
    %2475 = vmatprep.subr.bf16.mxu0 %v1986
    %2476 = vmatpush1.bf16.msra.mxu0 %v1985
    %2477 = vmatprep.subr.bf16.mxu0 %v1988
    %2478 = vmatpush1.bf16.msra.mxu0 %v1987
    %2479 = vmatprep.subr.bf16.mxu0 %v1990
    %2480 = vmatpush1.bf16.msra.mxu0 %v1989
    %2481 = vmatprep.subr.bf16.mxu0 %v1992
    %2482 = vmatpush1.bf16.msra.mxu0 %v1991
    %2483 = vmatprep.subr.bf16.mxu0 0
    %2484 = vmatpush1.bf16.msra.mxu0 0
    %2485 = vmatprep.subr.bf16.mxu0 0
    %2486 = vmatpush1.bf16.msra.mxu0 0
    %2487 = vmatprep.subr.bf16.mxu0 0
    %2488 = vmatpush1.bf16.msra.mxu0 0
    %2489 = vmatprep.subr.bf16.mxu0 0
    %2490 = vmatpush1.bf16.msra.mxu0 0
    %2491 = vmatprep.subr.bf16.mxu0 0
    %2492 = vmatpush1.bf16.msra.mxu0 0
    %2493 = vmatprep.subr.bf16.mxu0 0
    %2494 = vmatpush1.bf16.msra.mxu0 0
    %2495 = vmatprep.subr.bf16.mxu0 0
    %2496 = vmatpush1.bf16.msra.mxu0 0
    %2497 = vmatprep.subr.bf16.mxu0 0
    %2498 = vmatpush1.bf16.msra.mxu0 0
    %2499 = vmatprep.mubr.bf16.mxu0 0
    %2500 = vmatmul.mubr.bf16.gmra.mrb[0].mxu0 %v2466
    %v2501 = vpop.f32.mrb[0].mxu0
    %v2502 = vadd.f32 0.0, %v2501
    %v2503 = vpop.f32.mrb[0].mxu0
    %v2504 = vadd.f32 0.0, %v2503
    %v2505 = vpop.f32.mrb[0].mxu0
    %v2506 = vpop.f32.mrb[0].mxu0
    %2507 = vdwg.mxu0
    %2508 = vmatprep.subr.bf16.mxu0 %v2099
    %2509 = vmatpush1.bf16.msra.mxu0 %v2098
    %2510 = vmatprep.subr.bf16.mxu0 %v2101
    %2511 = vmatpush1.bf16.msra.mxu0 %v2100
    %2512 = vmatprep.subr.bf16.mxu0 %v2103
    %2513 = vmatpush1.bf16.msra.mxu0 %v2102
    %2514 = vmatprep.subr.bf16.mxu0 %v2105
    %2515 = vmatpush1.bf16.msra.mxu0 %v2104
    %2516 = vmatprep.subr.bf16.mxu0 %v2107
    %2517 = vmatpush1.bf16.msra.mxu0 %v2106
    %2518 = vmatprep.subr.bf16.mxu0 %v2109
    %2519 = vmatpush1.bf16.msra.mxu0 %v2108
    %2520 = vmatprep.subr.bf16.mxu0 %v2111
    %2521 = vmatpush1.bf16.msra.mxu0 %v2110
    %2522 = vmatprep.subr.bf16.mxu0 %v2113
    %2523 = vmatpush1.bf16.msra.mxu0 %v2112
    %2524 = vmatprep.subr.bf16.mxu0 0
    %2525 = vmatpush1.bf16.msra.mxu0 0
    %2526 = vmatprep.subr.bf16.mxu0 0
    %2527 = vmatpush1.bf16.msra.mxu0 0
    %2528 = vmatprep.subr.bf16.mxu0 0
    %2529 = vmatpush1.bf16.msra.mxu0 0
    %2530 = vmatprep.subr.bf16.mxu0 0
    %2531 = vmatpush1.bf16.msra.mxu0 0
    %2532 = vmatprep.subr.bf16.mxu0 0
    %2533 = vmatpush1.bf16.msra.mxu0 0
    %2534 = vmatprep.subr.bf16.mxu0 0
    %2535 = vmatpush1.bf16.msra.mxu0 0
    %2536 = vmatprep.subr.bf16.mxu0 0
    %2537 = vmatpush1.bf16.msra.mxu0 0
    %2538 = vmatprep.subr.bf16.mxu0 0
    %2539 = vmatpush1.bf16.msra.mxu0 0
    %2540 = vmatprep.mubr.bf16.mxu0 0
    %2541 = vmatmul.mubr.bf16.gmra.mrb[0].mxu0 %v2464
    %v2542 = vpop.f32.mrb[0].mxu0
    %v2543 = vadd.f32 %v2502, %v2542
    %v2544 = vpop.f32.mrb[0].mxu0
    %v2545 = vadd.f32 %v2504, %v2544
    %v2546 = vpop.f32.mrb[0].mxu0
    %v2547 = vpop.f32.mrb[0].mxu0
    %2548 = vdwg.mxu0
    %v2549 = vld [vmem:[#allocation2 + $0xc] sm:$0x7f]
    %v2550 = vpack.c.bf16 %v2549, %v2549
    %2551 = vmatprep.subr.bf16.mxu0 %v2238
    %2552 = vmatpush1.bf16.msra.mxu0 %v2237
    %2553 = vmatprep.subr.bf16.mxu0 %v2240
    %2554 = vmatpush1.bf16.msra.mxu0 %v2239
    %2555 = vmatprep.subr.bf16.mxu0 %v2242
    %2556 = vmatpush1.bf16.msra.mxu0 %v2241
    %2557 = vmatprep.subr.bf16.mxu0 %v2244
    %2558 = vmatpush1.bf16.msra.mxu0 %v2243
    %2559 = vmatprep.subr.bf16.mxu0 %v2246
    %2560 = vmatpush1.bf16.msra.mxu0 %v2245
    %2561 = vmatprep.subr.bf16.mxu0 %v2248
    %2562 = vmatpush1.bf16.msra.mxu0 %v2247
    %2563 = vmatprep.subr.bf16.mxu0 %v2250
    %2564 = vmatpush1.bf16.msra.mxu0 %v2249
    %2565 = vmatprep.subr.bf16.mxu0 %v2252
    %2566 = vmatpush1.bf16.msra.mxu0 %v2251
    %2567 = vmatprep.subr.bf16.mxu0 0
    %2568 = vmatpush1.bf16.msra.mxu0 0
    %2569 = vmatprep.subr.bf16.mxu0 0
    %2570 = vmatpush1.bf16.msra.mxu0 0
    %2571 = vmatprep.subr.bf16.mxu0 0
    %2572 = vmatpush1.bf16.msra.mxu0 0
    %2573 = vmatprep.subr.bf16.mxu0 0
    %2574 = vmatpush1.bf16.msra.mxu0 0
    %2575 = vmatprep.subr.bf16.mxu0 0
    %2576 = vmatpush1.bf16.msra.mxu0 0
    %2577 = vmatprep.subr.bf16.mxu0 0
    %2578 = vmatpush1.bf16.msra.mxu0 0
    %2579 = vmatprep.subr.bf16.mxu0 0
    %2580 = vmatpush1.bf16.msra.mxu0 0
    %2581 = vmatprep.subr.bf16.mxu0 0
    %2582 = vmatpush1.bf16.msra.mxu0 0
    %2583 = vmatprep.mubr.bf16.mxu0 0
    %2584 = vmatmul.mubr.bf16.gmra.mrb[0].mxu0 %v2550
    %v2585 = vpop.f32.mrb[0].mxu0
    %v2586 = vadd.f32 0.0, %v2585
    %v2587 = vpop.f32.mrb[0].mxu0
    %v2588 = vadd.f32 0.0, %v2587
    %v2589 = vpop.f32.mrb[0].mxu0
    %v2590 = vpop.f32.mrb[0].mxu0
    %2591 = vdwg.mxu0
    %v2592 = vadd.f32 %v2543, %v2586
    %v2593 = vadd.f32 %v2545, %v2588
    %v2594 = vld [vmem:[#allocation2 + $0xd] sm:$0x7f]
    %v2595 = vpack.c.bf16 %v2594, %v2594
    %2596 = vmatprep.subr.bf16.mxu0 %v2379
    %2597 = vmatpush1.bf16.msra.mxu0 %v2378
    %2598 = vmatprep.subr.bf16.mxu0 %v2381
    %2599 = vmatpush1.bf16.msra.mxu0 %v2380
    %2600 = vmatprep.subr.bf16.mxu0 %v2383
    %2601 = vmatpush1.bf16.msra.mxu0 %v2382
    %2602 = vmatprep.subr.bf16.mxu0 %v2385
    %2603 = vmatpush1.bf16.msra.mxu0 %v2384
    %2604 = vmatprep.subr.bf16.mxu0 %v2387
    %2605 = vmatpush1.bf16.msra.mxu0 %v2386
    %2606 = vmatprep.subr.bf16.mxu0 %v2389
    %2607 = vmatpush1.bf16.msra.mxu0 %v2388
    %2608 = vmatprep.subr.bf16.mxu0 %v2391
    %2609 = vmatpush1.bf16.msra.mxu0 %v2390
    %2610 = vmatprep.subr.bf16.mxu0 %v2393
    %2611 = vmatpush1.bf16.msra.mxu0 %v2392
    %2612 = vmatprep.subr.bf16.mxu0 0
    %2613 = vmatpush1.bf16.msra.mxu0 0
    %2614 = vmatprep.subr.bf16.mxu0 0
    %2615 = vmatpush1.bf16.msra.mxu0 0
    %2616 = vmatprep.subr.bf16.mxu0 0
    %2617 = vmatpush1.bf16.msra.mxu0 0
    %2618 = vmatprep.subr.bf16.mxu0 0
    %2619 = vmatpush1.bf16.msra.mxu0 0
    %2620 = vmatprep.subr.bf16.mxu0 0
    %2621 = vmatpush1.bf16.msra.mxu0 0
    %2622 = vmatprep.subr.bf16.mxu0 0
    %2623 = vmatpush1.bf16.msra.mxu0 0
    %2624 = vmatprep.subr.bf16.mxu0 0
    %2625 = vmatpush1.bf16.msra.mxu0 0
    %2626 = vmatprep.subr.bf16.mxu0 0
    %2627 = vmatpush1.bf16.msra.mxu0 0
    %2628 = vmatprep.mubr.bf16.mxu0 0
    %2629 = vmatmul.mubr.bf16.gmra.mrb[0].mxu0 %v2595
    %v2630 = vpop.f32.mrb[0].mxu0
    %v2631 = vadd.f32 0.0, %v2630
    %v2632 = vpop.f32.mrb[0].mxu0
    %v2633 = vadd.f32 0.0, %v2632
    %v2634 = vpop.f32.mrb[0].mxu0
    %v2635 = vpop.f32.mrb[0].mxu0
    %2636 = vdwg.mxu0
    %v2637 = vadd.f32 %v2592, %v2631
    %v2638 = vadd.f32 %v2593, %v2633
    %v2639 = vlaneseq
    %v2640 = vshrl.u32 %v2639, 7
    %v2641 = vsub.s32 1, %v2640
    %v2642 = vrot.slane %v461, %v2641
    %v2643 = vlaneseq
    %v2644 = vshrl.u32 %v2643, 7
    %v2645 = vsub.s32 1, %v2644
    %v2646 = vrot.slane %v463, %v2645
    %v2647 = vadd.f32 %v2637, %v2642
    %v2648 = vadd.f32 %v2638, %v2646
    %v2649 = vld [vmem:[#allocation16] ss:$4 sm:$0x3]
    %s2650 = scalar_lea.vmem [#allocation16], 1
    %v2651 = vld [vmem:[%s2650] ss:$4 sm:$0x3]
    %s2652 = scalar_lea.vmem [#allocation16], 2
    %v2653 = vld [vmem:[%s2652] ss:$4 sm:$0x3]
    %v2655 = vlaneseq
    %v2656 = vshrl.u32 %v2655, 7
    %v2657 = vsub.s32 0, %v2656
    %v2658 = vrot.slane %v2649, %v2657
    %v2659 = vlaneseq
    %v2660 = vshrl.u32 %v2659, 7
    %v2661 = vsub.s32 1, %v2660
    %v2662 = vrot.slane %v2649, %v2661
    %v2665 = vadd.f32 %v2461, %v2658
    %v2666 = vadd.f32 %v2462, %v2662
    %v2667 = vadd.f32 %v2647, %v2658
    %v2668 = vadd.f32 %v2648, %v2662
    %vm2669 = vcmask 1046528
    %v2670 = vsel %vm2669, %v2665, 0.0
    %v2671 = vrot.slane %v2670, 4
    %v2672 = vadd.f32 %v2670, %v2671
    %v2673 = vrot.slane %v2672, 2
    %v2674 = vadd.f32 %v2672, %v2673
    %v2675 = vrot.slane %v2674, 1
    %v2676 = vadd.f32 %v2674, %v2675
    %v2677 = vsel %vm2669, %v2666, 0.0
    %v2678 = vrot.slane %v2677, 4
    %v2679 = vadd.f32 %v2677, %v2678
    %v2680 = vrot.slane %v2679, 2
    %v2681 = vadd.f32 %v2679, %v2680
    %v2682 = vrot.slane %v2681, 1
    %v2683 = vadd.f32 %v2681, %v2682
    %v2684 = vsel %vm2669, %v2667, 0.0
    %v2685 = vrot.slane %v2684, 4
    %v2686 = vadd.f32 %v2684, %v2685
    %v2687 = vrot.slane %v2686, 2
    %v2688 = vadd.f32 %v2686, %v2687
    %v2689 = vrot.slane %v2688, 1
    %v2690 = vadd.f32 %v2688, %v2689
    %v2691 = vsel %vm2669, %v2668, 0.0
    %v2692 = vrot.slane %v2691, 4
    %v2693 = vadd.f32 %v2691, %v2692
    %v2694 = vrot.slane %v2693, 2
    %v2695 = vadd.f32 %v2693, %v2694
    %v2696 = vrot.slane %v2695, 1
    %v2697 = vadd.f32 %v2695, %v2696
    %v2698 = vadd.f32 %v2676, %v2690
    %v2699 = vadd.f32 %v2683, %v2697
    %v2700 = vmul.f32 %v2698, 0.071428575
    %v2701 = vmul.f32 %v2699, 0.071428575
    %v2702 = vsub.f32 %v2665, %v2700
    %v2703 = vsub.f32 %v2666, %v2701
    %v2704 = vmul.f32 %v2702, %v2702
    %v2705 = vmul.f32 %v2703, %v2703
    %v2706 = vsel %vm2669, %v2704, 0.0
    %v2707 = vrot.slane %v2706, 4
    %v2708 = vadd.f32 %v2706, %v2707
    %v2709 = vrot.slane %v2708, 2
    %v2710 = vadd.f32 %v2708, %v2709
    %v2711 = vrot.slane %v2710, 1
    %v2712 = vadd.f32 %v2710, %v2711
    %v2713 = vsel %vm2669, %v2705, 0.0
    %v2714 = vrot.slane %v2713, 4
    %v2715 = vadd.f32 %v2713, %v2714
    %v2716 = vrot.slane %v2715, 2
    %v2717 = vadd.f32 %v2715, %v2716
    %v2718 = vrot.slane %v2717, 1
    %v2719 = vadd.f32 %v2717, %v2718
    %v2720 = vsub.f32 %v2667, %v2700
    %v2721 = vsub.f32 %v2668, %v2701
    %v2722 = vmul.f32 %v2720, %v2720
    %v2723 = vmul.f32 %v2721, %v2721
    %v2724 = vsel %vm2669, %v2722, 0.0
    %v2725 = vrot.slane %v2724, 4
    %v2726 = vadd.f32 %v2724, %v2725
    %v2727 = vrot.slane %v2726, 2
    %v2728 = vadd.f32 %v2726, %v2727
    %v2729 = vrot.slane %v2728, 1
    %v2730 = vadd.f32 %v2728, %v2729
    %v2731 = vsel %vm2669, %v2723, 0.0
    %v2732 = vrot.slane %v2731, 4
    %v2733 = vadd.f32 %v2731, %v2732
    %v2734 = vrot.slane %v2733, 2
    %v2735 = vadd.f32 %v2733, %v2734
    %v2736 = vrot.slane %v2735, 1
    %v2737 = vadd.f32 %v2735, %v2736
    %v2738 = vadd.f32 %v2712, %v2730
    %v2739 = vadd.f32 %v2719, %v2737
    %v2740 = vmul.f32 %v2738, 0.071428575
    %v2741 = vmul.f32 %v2739, 0.071428575
    %v2742 = vadd.f32 %v2740, 1e-05
    %v2743 = vadd.f32 %v2741, 1e-05
    %v2744 = vrsqrt.pop %v2742
    %v2745 = vrsqrt.pop %v2743
    %v2748 = vcombine.low %v2744, %v2745
    %v2750 = vunpack.c.l.s4 1966171168
    %v2751 = vunpack.c.0.s8 %v2750
    %v2752 = vlaneseq
    %v2753 = vshrl.u32 %v2752, 7
    %v2754 = vsub.s32 %v2751, %v2753
    %v2755 = vrot.slane %v2748, %v2754
    %v2757 = vunpack.c.l.s4 1966171168
    %v2758 = vunpack.c.0.s8 %v2757
    %v2759 = vlaneseq
    %v2760 = vshrl.u32 %v2759, 7
    %v2761 = vsub.s32 %v2758, %v2760
    %v2762 = vrot.slane %v2755, %v2761
    %v2764 = vmul.f32 %v2651, %v2762
    %v2766 = vlaneseq
    %v2767 = vshrl.u32 %v2766, 7
    %v2768 = vsub.s32 0, %v2767
    %v2769 = vrot.slane %v2764, %v2768
    %v2770 = vlaneseq
    %v2771 = vshrl.u32 %v2770, 7
    %v2772 = vsub.s32 1, %v2771
    %v2773 = vrot.slane %v2764, %v2772
    %v2776 = vmul.f32 %v2702, %v2769
    %v2777 = vmul.f32 %v2703, %v2773
    %v2779 = vlaneseq
    %v2780 = vshrl.u32 %v2779, 7
    %v2781 = vsub.s32 0, %v2780
    %v2782 = vrot.slane %v2653, %v2781
    %v2783 = vlaneseq
    %v2784 = vshrl.u32 %v2783, 7
    %v2785 = vsub.s32 1, %v2784
    %v2786 = vrot.slane %v2653, %v2785
    %v2789 = vadd.f32 %v2776, %v2782
    %v2790 = vadd.f32 %v2777, %v2786
    %vm2791 = vcmp.ge.f32.partialorder %v2789, 0.0
    %vm2792 = vcmp.ge.f32.partialorder %v2790, 0.0
    %v2793 = vmul.f32 %v2789, 0.2
    %v2794 = vmul.f32 %v2790, 0.2
    %v2795 = vsel %vm2791, %v2789, %v2793
    %v2796 = vsel %vm2792, %v2790, %v2794
    %v2797 = vmul.f32 %v2720, %v2769
    %v2798 = vmul.f32 %v2721, %v2773
    %v2799 = vadd.f32 %v2797, %v2782
    %v2800 = vadd.f32 %v2798, %v2786
    %vm2801 = vcmp.ge.f32.partialorder %v2799, 0.0
    %vm2802 = vcmp.ge.f32.partialorder %v2800, 0.0
    %v2803 = vmul.f32 %v2799, 0.2
    %v2804 = vmul.f32 %v2800, 0.2
    %v2805 = vsel %vm2801, %v2799, %v2803
    %v2806 = vsel %vm2802, %v2800, %v2804
    %2807 = vst [vmem:[#allocation3] sm:$0x7f] %v2795
    %2808 = vst [vmem:[#allocation3 + $0x8] sm:$0x7f] %v2796
    %v2811 = vrot.slane %v2805, 1
    %v2812 = vrot.slane %v2806, 1
    %2815 = vst [vmem:[#allocation3] sm:$0x80] %v2811
    %2816 = vst [vmem:[#allocation3 + $0x8] sm:$0x80] %v2812
    %2817 = vst [vmem:[#allocation3 + $0x10] sm:$0x3f] %v2811
    %2818 = vst [vmem:[#allocation3 + $0x18] sm:$0x3f] %v2812
    %v2819 = vld [vmem:[#allocation3] sm:$0xf]
    %v2820 = vld [vmem:[#allocation3 + $0x8] sm:$0xf]
    %v2821 = vpack.c.bf16 %v2819, %v2819
    %v2822 = vpack.c.bf16 %v2820, %v2820
    %v2823 = vld [vmem:[#allocation17] sm:$0xff]
    %v2824 = vld [vmem:[#allocation17 + $0x8] sm:$0xf]
    %v2825 = vld [vmem:[#allocation17 + $0xc] sm:$0xff]
    %v2826 = vld [vmem:[#allocation17 + $0x14] sm:$0xf]
    %v2827 = vld [vmem:[#allocation17 + $0x18] sm:$0xff]
    %v2828 = vld [vmem:[#allocation17 + $0x20] sm:$0xf]
    %v2829 = vld [vmem:[#allocation17 + $0x24] sm:$0xff]
    %v2830 = vld [vmem:[#allocation17 + $0x2c] sm:$0xf]
    %v2831 = vld [vmem:[#allocation17 + $0x30] sm:$0xff]
    %v2832 = vld [vmem:[#allocation17 + $0x38] sm:$0xf]
    %v2833 = vld [vmem:[#allocation17 + $0x3c] sm:$0xff]
    %v2834 = vld [vmem:[#allocation17 + $0x44] sm:$0xf]
    %v2835 = vld [vmem:[#allocation17 + $0x48] sm:$0xff]
    %v2836 = vld [vmem:[#allocation17 + $0x50] sm:$0xf]
    %v2837 = vld [vmem:[#allocation17 + $0x54] sm:$0xff]
    %v2838 = vld [vmem:[#allocation17 + $0x5c] sm:$0xf]
    %v2839 = vld [vmem:[#allocation17 + $0x60] sm:$0xff]
    %v2840 = vld [vmem:[#allocation17 + $0x68] sm:$0xf]
    %v2841 = vld [vmem:[#allocation17 + $0x6c] sm:$0xff]
    %v2842 = vld [vmem:[#allocation17 + $0x74] sm:$0xf]
    %v2843 = vld [vmem:[#allocation17 + $0x78] sm:$0xff]
    %v2844 = vld [vmem:[#allocation17 + $0x80] sm:$0xf]
    %v2845 = vld [vmem:[#allocation17 + $0x84] sm:$0xff]
    %v2846 = vld [vmem:[#allocation17 + $0x8c] sm:$0xf]
    %v2847 = vld [vmem:[#allocation17 + $0x90] sm:$0xff]
    %v2848 = vld [vmem:[#allocation17 + $0x98] sm:$0xf]
    %v2849 = vld [vmem:[#allocation17 + $0x9c] sm:$0xff]
    %v2850 = vld [vmem:[#allocation17 + $0xa4] sm:$0xf]
    %v2851 = vld [vmem:[#allocation17 + $0xa8] sm:$0xff]
    %v2852 = vld [vmem:[#allocation17 + $0xb0] sm:$0xf]
    %v2853 = vld [vmem:[#allocation17 + $0xb4] sm:$0xff]
    %v2854 = vld [vmem:[#allocation17 + $0xbc] sm:$0xf]
    %v2855 = vld [vmem:[#allocation17 + $0xc0] sm:$0xff]
    %v2856 = vld [vmem:[#allocation17 + $0xc8] sm:$0xf]
    %v2857 = vld [vmem:[#allocation17 + $0xcc] sm:$0xff]
    %v2858 = vld [vmem:[#allocation17 + $0xd4] sm:$0xf]
    %v2859 = vld [vmem:[#allocation17 + $0xd8] sm:$0xff]
    %v2860 = vld [vmem:[#allocation17 + $0xe0] sm:$0xf]
    %v2861 = vld [vmem:[#allocation17 + $0xe4] sm:$0xff]
    %v2862 = vld [vmem:[#allocation17 + $0xec] sm:$0xf]
    %v2863 = vld [vmem:[#allocation17 + $0xf0] sm:$0xff]
    %v2864 = vld [vmem:[#allocation17 + $0xf8] sm:$0xf]
    %v2865 = vld [vmem:[#allocation17 + $0xfc] sm:$0xff]
    %v2866 = vld [vmem:[#allocation17 + $0x104] sm:$0xf]
    %v2867 = vld [vmem:[#allocation17 + $0x108] sm:$0xff]
    %v2868 = vld [vmem:[#allocation17 + $0x110] sm:$0xf]
    %v2869 = vld [vmem:[#allocation17 + $0x114] sm:$0xff]
    %v2870 = vld [vmem:[#allocation17 + $0x11c] sm:$0xf]
    %v2871 = vld [vmem:[#allocation17 + $0x120] sm:$0xff]
    %v2872 = vld [vmem:[#allocation17 + $0x128] sm:$0xf]
    %v2873 = vld [vmem:[#allocation17 + $0x12c] sm:$0xff]
    %v2874 = vld [vmem:[#allocation17 + $0x134] sm:$0xf]
    %v2875 = vld [vmem:[#allocation17 + $0x138] sm:$0xff]
    %v2876 = vld [vmem:[#allocation17 + $0x140] sm:$0xf]
    %v2877 = vld [vmem:[#allocation17 + $0x144] sm:$0xff]
    %v2878 = vld [vmem:[#allocation17 + $0x14c] sm:$0xf]
    %v2879 = vld [vmem:[#allocation17 + $0x150] sm:$0xff]
    %v2880 = vld [vmem:[#allocation17 + $0x158] sm:$0xf]
    %v2881 = vld [vmem:[#allocation17 + $0x15c] sm:$0xff]
    %v2882 = vld [vmem:[#allocation17 + $0x164] sm:$0xf]
    %v2883 = vld [vmem:[#allocation17 + $0x168] sm:$0xff]
    %v2884 = vld [vmem:[#allocation17 + $0x170] sm:$0xf]
    %v2885 = vld [vmem:[#allocation17 + $0x174] sm:$0xff]
    %v2886 = vld [vmem:[#allocation17 + $0x17c] sm:$0xf]
    %v2887 = vld [vmem:[#allocation3] sm:$0x1e]
    %v2888 = vld [vmem:[#allocation3 + $0x8] sm:$0x1e]
    %v2889 = vpack.c.bf16 %v2887, %v2887
    %v2890 = vpack.c.bf16 %v2888, %v2888
    %v2891 = vld [vmem:[#allocation17 + $0x180] sm:$0xff]
    %v2892 = vld [vmem:[#allocation17 + $0x188] sm:$0xf]
    %v2893 = vld [vmem:[#allocation17 + $0x18c] sm:$0xff]
    %v2894 = vld [vmem:[#allocation17 + $0x194] sm:$0xf]
    %v2895 = vld [vmem:[#allocation17 + $0x198] sm:$0xff]
    %v2896 = vld [vmem:[#allocation17 + $0x1a0] sm:$0xf]
    %v2897 = vld [vmem:[#allocation17 + $0x1a4] sm:$0xff]
    %v2898 = vld [vmem:[#allocation17 + $0x1ac] sm:$0xf]
    %v2899 = vld [vmem:[#allocation17 + $0x1b0] sm:$0xff]
    %v2900 = vld [vmem:[#allocation17 + $0x1b8] sm:$0xf]
    %v2901 = vld [vmem:[#allocation17 + $0x1bc] sm:$0xff]
    %v2902 = vld [vmem:[#allocation17 + $0x1c4] sm:$0xf]
    %v2903 = vld [vmem:[#allocation17 + $0x1c8] sm:$0xff]
    %v2904 = vld [vmem:[#allocation17 + $0x1d0] sm:$0xf]
    %v2905 = vld [vmem:[#allocation17 + $0x1d4] sm:$0xff]
    %v2906 = vld [vmem:[#allocation17 + $0x1dc] sm:$0xf]
    %v2907 = vld [vmem:[#allocation17 + $0x1e0] sm:$0xff]
    %v2908 = vld [vmem:[#allocation17 + $0x1e8] sm:$0xf]
    %v2909 = vld [vmem:[#allocation17 + $0x1ec] sm:$0xff]
    %v2910 = vld [vmem:[#allocation17 + $0x1f4] sm:$0xf]
    %v2911 = vld [vmem:[#allocation17 + $0x1f8] sm:$0xff]
    %v2912 = vld [vmem:[#allocation17 + $0x200] sm:$0xf]
    %v2913 = vld [vmem:[#allocation17 + $0x204] sm:$0xff]
    %v2914 = vld [vmem:[#allocation17 + $0x20c] sm:$0xf]
    %v2915 = vld [vmem:[#allocation17 + $0x210] sm:$0xff]
    %v2916 = vld [vmem:[#allocation17 + $0x218] sm:$0xf]
    %v2917 = vld [vmem:[#allocation17 + $0x21c] sm:$0xff]
    %v2918 = vld [vmem:[#allocation17 + $0x224] sm:$0xf]
    %v2919 = vld [vmem:[#allocation17 + $0x228] sm:$0xff]
    %v2920 = vld [vmem:[#allocation17 + $0x230] sm:$0xf]
    %v2921 = vld [vmem:[#allocation17 + $0x234] sm:$0xff]
    %v2922 = vld [vmem:[#allocation17 + $0x23c] sm:$0xf]
    %v2923 = vld [vmem:[#allocation17 + $0x240] sm:$0xff]
    %v2924 = vld [vmem:[#allocation17 + $0x248] sm:$0xf]
    %v2925 = vld [vmem:[#allocation17 + $0x24c] sm:$0xff]
    %v2926 = vld [vmem:[#allocation17 + $0x254] sm:$0xf]
    %v2927 = vld [vmem:[#allocation17 + $0x258] sm:$0xff]
    %v2928 = vld [vmem:[#allocation17 + $0x260] sm:$0xf]
    %v2929 = vld [vmem:[#allocation17 + $0x264] sm:$0xff]
    %v2930 = vld [vmem:[#allocation17 + $0x26c] sm:$0xf]
    %v2931 = vld [vmem:[#allocation17 + $0x270] sm:$0xff]
    %v2932 = vld [vmem:[#allocation17 + $0x278] sm:$0xf]
    %v2933 = vld [vmem:[#allocation17 + $0x27c] sm:$0xff]
    %v2934 = vld [vmem:[#allocation17 + $0x284] sm:$0xf]
    %v2935 = vld [vmem:[#allocation17 + $0x288] sm:$0xff]
    %v2936 = vld [vmem:[#allocation17 + $0x290] sm:$0xf]
    %v2937 = vld [vmem:[#allocation17 + $0x294] sm:$0xff]
    %v2938 = vld [vmem:[#allocation17 + $0x29c] sm:$0xf]
    %v2939 = vld [vmem:[#allocation17 + $0x2a0] sm:$0xff]
    %v2940 = vld [vmem:[#allocation17 + $0x2a8] sm:$0xf]
    %v2941 = vld [vmem:[#allocation17 + $0x2ac] sm:$0xff]
    %v2942 = vld [vmem:[#allocation17 + $0x2b4] sm:$0xf]
    %v2943 = vld [vmem:[#allocation17 + $0x2b8] sm:$0xff]
    %v2944 = vld [vmem:[#allocation17 + $0x2c0] sm:$0xf]
    %v2945 = vld [vmem:[#allocation17 + $0x2c4] sm:$0xff]
    %v2946 = vld [vmem:[#allocation17 + $0x2cc] sm:$0xf]
    %v2947 = vld [vmem:[#allocation17 + $0x2d0] sm:$0xff]
    %v2948 = vld [vmem:[#allocation17 + $0x2d8] sm:$0xf]
    %v2949 = vld [vmem:[#allocation17 + $0x2dc] sm:$0xff]
    %v2950 = vld [vmem:[#allocation17 + $0x2e4] sm:$0xf]
    %v2951 = vld [vmem:[#allocation17 + $0x2e8] sm:$0xff]
    %v2952 = vld [vmem:[#allocation17 + $0x2f0] sm:$0xf]
    %v2953 = vld [vmem:[#allocation17 + $0x2f4] sm:$0xff]
    %v2954 = vld [vmem:[#allocation17 + $0x2fc] sm:$0xf]
    %v2956 = vshrl.u32 %v2889, 16
    %v2958 = vshll.u32 %v2889, 16
    %v2960 = vrot.slane %v2958, 1
    %v2961 = vor.u32 %v2956, %v2960
    %v2963 = vshrl.u32 %v2890, 16
    %v2965 = vshll.u32 %v2890, 16
    %v2967 = vrot.slane %v2965, 1
    %v2968 = vor.u32 %v2963, %v2967
    %v3035 = vunpack.c.l.b16 %v2891
    %v3036 = vunpack.c.h.b16 %v2891
    %v3037 = vunpack.c.l.b16 %v2892
    %v3038 = vunpack.c.l.b16 %v2893
    %v3039 = vunpack.c.h.b16 %v2893
    %v3040 = vunpack.c.l.b16 %v2894
    %v3041 = vunpack.c.l.b16 %v2895
    %v3042 = vunpack.c.h.b16 %v2895
    %v3043 = vunpack.c.l.b16 %v2896
    %v3044 = vunpack.c.l.b16 %v2897
    %v3045 = vunpack.c.h.b16 %v2897
    %v3046 = vunpack.c.l.b16 %v2898
    %v3047 = vunpack.c.l.b16 %v2899
    %v3048 = vunpack.c.h.b16 %v2899
    %v3049 = vunpack.c.l.b16 %v2900
    %v3050 = vunpack.c.l.b16 %v2901
    %v3051 = vunpack.c.h.b16 %v2901
    %v3052 = vunpack.c.l.b16 %v2902
    %v3053 = vunpack.c.l.b16 %v2903
    %v3054 = vunpack.c.h.b16 %v2903
    %v3055 = vunpack.c.l.b16 %v2904
    %v3056 = vunpack.c.l.b16 %v2905
    %v3057 = vunpack.c.h.b16 %v2905
    %v3058 = vunpack.c.l.b16 %v2906
    %v3059 = vunpack.c.l.b16 %v2907
    %v3060 = vunpack.c.h.b16 %v2907
    %v3061 = vunpack.c.l.b16 %v2908
    %v3062 = vunpack.c.l.b16 %v2909
    %v3063 = vunpack.c.h.b16 %v2909
    %v3064 = vunpack.c.l.b16 %v2910
    %v3065 = vunpack.c.l.b16 %v2911
    %v3066 = vunpack.c.h.b16 %v2911
    %v3067 = vunpack.c.l.b16 %v2912
    %v3068 = vunpack.c.l.b16 %v2913
    %v3069 = vunpack.c.h.b16 %v2913
    %v3070 = vunpack.c.l.b16 %v2914
    %v3071 = vunpack.c.l.b16 %v2915
    %v3072 = vunpack.c.h.b16 %v2915
    %v3073 = vunpack.c.l.b16 %v2916
    %v3074 = vunpack.c.l.b16 %v2917
    %v3075 = vunpack.c.h.b16 %v2917
    %v3076 = vunpack.c.l.b16 %v2918
    %v3077 = vunpack.c.l.b16 %v2919
    %v3078 = vunpack.c.h.b16 %v2919
    %v3079 = vunpack.c.l.b16 %v2920
    %v3080 = vunpack.c.l.b16 %v2921
    %v3081 = vunpack.c.h.b16 %v2921
    %v3082 = vunpack.c.l.b16 %v2922
    %v3083 = vunpack.c.l.b16 %v2923
    %v3084 = vunpack.c.h.b16 %v2923
    %v3085 = vunpack.c.l.b16 %v2924
    %v3086 = vunpack.c.l.b16 %v2925
    %v3087 = vunpack.c.h.b16 %v2925
    %v3088 = vunpack.c.l.b16 %v2926
    %v3089 = vunpack.c.l.b16 %v2927
    %v3090 = vunpack.c.h.b16 %v2927
    %v3091 = vunpack.c.l.b16 %v2928
    %v3092 = vunpack.c.l.b16 %v2929
    %v3093 = vunpack.c.h.b16 %v2929
    %v3094 = vunpack.c.l.b16 %v2930
    %v3095 = vunpack.c.l.b16 %v2931
    %v3096 = vunpack.c.h.b16 %v2931
    %v3097 = vunpack.c.l.b16 %v2932
    %v3098 = vunpack.c.l.b16 %v2933
    %v3099 = vunpack.c.h.b16 %v2933
    %v3100 = vunpack.c.l.b16 %v2934
    %v3101 = vunpack.c.l.b16 %v2935
    %v3102 = vunpack.c.h.b16 %v2935
    %v3103 = vunpack.c.l.b16 %v2936
    %v3104 = vunpack.c.l.b16 %v2937
    %v3105 = vunpack.c.h.b16 %v2937
    %v3106 = vunpack.c.l.b16 %v2938
    %v3107 = vunpack.c.l.b16 %v2939
    %v3108 = vunpack.c.h.b16 %v2939
    %v3109 = vunpack.c.l.b16 %v2940
    %v3110 = vunpack.c.l.b16 %v2941
    %v3111 = vunpack.c.h.b16 %v2941
    %v3112 = vunpack.c.l.b16 %v2942
    %v3113 = vunpack.c.l.b16 %v2943
    %v3114 = vunpack.c.h.b16 %v2943
    %v3115 = vunpack.c.l.b16 %v2944
    %v3116 = vunpack.c.l.b16 %v2945
    %v3117 = vunpack.c.h.b16 %v2945
    %v3118 = vunpack.c.l.b16 %v2946
    %v3119 = vunpack.c.l.b16 %v2947
    %v3120 = vunpack.c.h.b16 %v2947
    %v3121 = vunpack.c.l.b16 %v2948
    %v3122 = vunpack.c.l.b16 %v2949
    %v3123 = vunpack.c.h.b16 %v2949
    %v3124 = vunpack.c.l.b16 %v2950
    %v3125 = vunpack.c.l.b16 %v2951
    %v3126 = vunpack.c.h.b16 %v2951
    %v3127 = vunpack.c.l.b16 %v2952
    %v3128 = vunpack.c.l.b16 %v2953
    %v3129 = vunpack.c.h.b16 %v2953
    %v3130 = vunpack.c.l.b16 %v2954
    %v3131 = vpack.c.b16 %v3038, %v3035
    %v3132 = vpack.c.b16 %v3039, %v3036
    %v3133 = vpack.c.b16 %v3040, %v3037
    %v3134 = vpack.c.b16 %v3044, %v3041
    %v3135 = vpack.c.b16 %v3045, %v3042
    %v3136 = vpack.c.b16 %v3046, %v3043
    %v3137 = vpack.c.b16 %v3050, %v3047
    %v3138 = vpack.c.b16 %v3051, %v3048
    %v3139 = vpack.c.b16 %v3052, %v3049
    %v3140 = vpack.c.b16 %v3056, %v3053
    %v3141 = vpack.c.b16 %v3057, %v3054
    %v3142 = vpack.c.b16 %v3058, %v3055
    %v3143 = vpack.c.b16 %v3062, %v3059
    %v3144 = vpack.c.b16 %v3063, %v3060
    %v3145 = vpack.c.b16 %v3064, %v3061
    %v3146 = vpack.c.b16 %v3068, %v3065
    %v3147 = vpack.c.b16 %v3069, %v3066
    %v3148 = vpack.c.b16 %v3070, %v3067
    %v3149 = vpack.c.b16 %v3074, %v3071
    %v3150 = vpack.c.b16 %v3075, %v3072
    %v3151 = vpack.c.b16 %v3076, %v3073
    %v3152 = vpack.c.b16 %v3080, %v3077
    %v3153 = vpack.c.b16 %v3081, %v3078
    %v3154 = vpack.c.b16 %v3082, %v3079
    %v3155 = vpack.c.b16 %v3086, %v3083
    %v3156 = vpack.c.b16 %v3087, %v3084
    %v3157 = vpack.c.b16 %v3088, %v3085
    %v3158 = vpack.c.b16 %v3092, %v3089
    %v3159 = vpack.c.b16 %v3093, %v3090
    %v3160 = vpack.c.b16 %v3094, %v3091
    %v3161 = vpack.c.b16 %v3098, %v3095
    %v3162 = vpack.c.b16 %v3099, %v3096
    %v3163 = vpack.c.b16 %v3100, %v3097
    %v3164 = vpack.c.b16 %v3104, %v3101
    %v3165 = vpack.c.b16 %v3105, %v3102
    %v3166 = vpack.c.b16 %v3106, %v3103
    %v3167 = vpack.c.b16 %v3110, %v3107
    %v3168 = vpack.c.b16 %v3111, %v3108
    %v3169 = vpack.c.b16 %v3112, %v3109
    %v3170 = vpack.c.b16 %v3116, %v3113
    %v3171 = vpack.c.b16 %v3117, %v3114
    %v3172 = vpack.c.b16 %v3118, %v3115
    %v3173 = vpack.c.b16 %v3122, %v3119
    %v3174 = vpack.c.b16 %v3123, %v3120
    %v3175 = vpack.c.b16 %v3124, %v3121
    %v3176 = vpack.c.b16 %v3128, %v3125
    %v3177 = vpack.c.b16 %v3129, %v3126
    %v3178 = vpack.c.b16 %v3130, %v3127
    %3227 = vmatprep.subr.bf16.mxu0 %v3132
    %3228 = vmatpush1.bf16.msra.mxu0 %v3131
    %3229 = vmatprep.subr.bf16.mxu0 %v3135
    %3230 = vmatpush1.bf16.msra.mxu0 %v3134
    %3231 = vmatprep.subr.bf16.mxu0 %v3138
    %3232 = vmatpush1.bf16.msra.mxu0 %v3137
    %3233 = vmatprep.subr.bf16.mxu0 %v3141
    %3234 = vmatpush1.bf16.msra.mxu0 %v3140
    %3235 = vmatprep.subr.bf16.mxu0 %v3144
    %3236 = vmatpush1.bf16.msra.mxu0 %v3143
    %3237 = vmatprep.subr.bf16.mxu0 %v3147
    %3238 = vmatpush1.bf16.msra.mxu0 %v3146
    %3239 = vmatprep.subr.bf16.mxu0 %v3150
    %3240 = vmatpush1.bf16.msra.mxu0 %v3149
    %3241 = vmatprep.subr.bf16.mxu0 %v3153
    %3242 = vmatpush1.bf16.msra.mxu0 %v3152
    %3243 = vmatprep.subr.bf16.mxu0 %v3156
    %3244 = vmatpush1.bf16.msra.mxu0 %v3155
    %3245 = vmatprep.subr.bf16.mxu0 %v3159
    %3246 = vmatpush1.bf16.msra.mxu0 %v3158
    %3247 = vmatprep.subr.bf16.mxu0 %v3162
    %3248 = vmatpush1.bf16.msra.mxu0 %v3161
    %3249 = vmatprep.subr.bf16.mxu0 %v3165
    %3250 = vmatpush1.bf16.msra.mxu0 %v3164
    %3251 = vmatprep.subr.bf16.mxu0 %v3168
    %3252 = vmatpush1.bf16.msra.mxu0 %v3167
    %3253 = vmatprep.subr.bf16.mxu0 %v3171
    %3254 = vmatpush1.bf16.msra.mxu0 %v3170
    %3255 = vmatprep.subr.bf16.mxu0 %v3174
    %3256 = vmatpush1.bf16.msra.mxu0 %v3173
    %3257 = vmatprep.subr.bf16.mxu0 %v3177
    %3258 = vmatpush1.bf16.msra.mxu0 %v3176
    %3259 = vmatprep.mubr.bf16.mxu0 %v2968
    %3260 = vmatmul.mubr.bf16.gmra.mrb[0].mxu0 %v2961
    %v3261 = vpop.f32.mrb[0].mxu0
    %v3262 = vadd.f32 0.0, %v3261
    %v3263 = vpop.f32.mrb[0].mxu0
    %v3264 = vadd.f32 0.0, %v3263
    %v3265 = vpop.f32.mrb[0].mxu0
    %v3266 = vpop.f32.mrb[0].mxu0
    %3267 = vdwg.mxu0
    %3268 = vmatprep.subr.bf16.mxu0 0
    %3269 = vmatpush1.bf16.msra.mxu0 %v3133
    %3270 = vmatprep.subr.bf16.mxu0 0
    %3271 = vmatpush1.bf16.msra.mxu0 %v3136
    %3272 = vmatprep.subr.bf16.mxu0 0
    %3273 = vmatpush1.bf16.msra.mxu0 %v3139
    %3274 = vmatprep.subr.bf16.mxu0 0
    %3275 = vmatpush1.bf16.msra.mxu0 %v3142
    %3276 = vmatprep.subr.bf16.mxu0 0
    %3277 = vmatpush1.bf16.msra.mxu0 %v3145
    %3278 = vmatprep.subr.bf16.mxu0 0
    %3279 = vmatpush1.bf16.msra.mxu0 %v3148
    %3280 = vmatprep.subr.bf16.mxu0 0
    %3281 = vmatpush1.bf16.msra.mxu0 %v3151
    %3282 = vmatprep.subr.bf16.mxu0 0
    %3283 = vmatpush1.bf16.msra.mxu0 %v3154
    %3284 = vmatprep.subr.bf16.mxu0 0
    %3285 = vmatpush1.bf16.msra.mxu0 %v3157
    %3286 = vmatprep.subr.bf16.mxu0 0
    %3287 = vmatpush1.bf16.msra.mxu0 %v3160
    %3288 = vmatprep.subr.bf16.mxu0 0
    %3289 = vmatpush1.bf16.msra.mxu0 %v3163
    %3290 = vmatprep.subr.bf16.mxu0 0
    %3291 = vmatpush1.bf16.msra.mxu0 %v3166
    %3292 = vmatprep.subr.bf16.mxu0 0
    %3293 = vmatpush1.bf16.msra.mxu0 %v3169
    %3294 = vmatprep.subr.bf16.mxu0 0
    %3295 = vmatpush1.bf16.msra.mxu0 %v3172
    %3296 = vmatprep.subr.bf16.mxu0 0
    %3297 = vmatpush1.bf16.msra.mxu0 %v3175
    %3298 = vmatprep.subr.bf16.mxu0 0
    %3299 = vmatpush1.bf16.msra.mxu0 %v3178
    %3300 = vmatprep.mubr.bf16.mxu0 %v2968
    %3301 = vmatmul.mubr.bf16.gmra.mrb[0].mxu0 %v2961
    %v3302 = vpop.f32.mrb[0].mxu0
    %v3303 = vadd.f32 0.0, %v3302
    %v3304 = vpop.f32.mrb[0].mxu0
    %v3305 = vpop.f32.mrb[0].mxu0
    %v3306 = vpop.f32.mrb[0].mxu0
    %3307 = vdwg.mxu0
    %v3372 = vunpack.c.l.b16 %v2823
    %v3373 = vunpack.c.h.b16 %v2823
    %v3374 = vunpack.c.l.b16 %v2824
    %v3375 = vunpack.c.l.b16 %v2825
    %v3376 = vunpack.c.h.b16 %v2825
    %v3377 = vunpack.c.l.b16 %v2826
    %v3378 = vunpack.c.l.b16 %v2827
    %v3379 = vunpack.c.h.b16 %v2827
    %v3380 = vunpack.c.l.b16 %v2828
    %v3381 = vunpack.c.l.b16 %v2829
    %v3382 = vunpack.c.h.b16 %v2829
    %v3383 = vunpack.c.l.b16 %v2830
    %v3384 = vunpack.c.l.b16 %v2831
    %v3385 = vunpack.c.h.b16 %v2831
    %v3386 = vunpack.c.l.b16 %v2832
    %v3387 = vunpack.c.l.b16 %v2833
    %v3388 = vunpack.c.h.b16 %v2833
    %v3389 = vunpack.c.l.b16 %v2834
    %v3390 = vunpack.c.l.b16 %v2835
    %v3391 = vunpack.c.h.b16 %v2835
    %v3392 = vunpack.c.l.b16 %v2836
    %v3393 = vunpack.c.l.b16 %v2837
    %v3394 = vunpack.c.h.b16 %v2837
    %v3395 = vunpack.c.l.b16 %v2838
    %v3396 = vunpack.c.l.b16 %v2839
    %v3397 = vunpack.c.h.b16 %v2839
    %v3398 = vunpack.c.l.b16 %v2840
    %v3399 = vunpack.c.l.b16 %v2841
    %v3400 = vunpack.c.h.b16 %v2841
    %v3401 = vunpack.c.l.b16 %v2842
    %v3402 = vunpack.c.l.b16 %v2843
    %v3403 = vunpack.c.h.b16 %v2843
    %v3404 = vunpack.c.l.b16 %v2844
    %v3405 = vunpack.c.l.b16 %v2845
    %v3406 = vunpack.c.h.b16 %v2845
    %v3407 = vunpack.c.l.b16 %v2846
    %v3408 = vunpack.c.l.b16 %v2847
    %v3409 = vunpack.c.h.b16 %v2847
    %v3410 = vunpack.c.l.b16 %v2848
    %v3411 = vunpack.c.l.b16 %v2849
    %v3412 = vunpack.c.h.b16 %v2849
    %v3413 = vunpack.c.l.b16 %v2850
    %v3414 = vunpack.c.l.b16 %v2851
    %v3415 = vunpack.c.h.b16 %v2851
    %v3416 = vunpack.c.l.b16 %v2852
    %v3417 = vunpack.c.l.b16 %v2853
    %v3418 = vunpack.c.h.b16 %v2853
    %v3419 = vunpack.c.l.b16 %v2854
    %v3420 = vunpack.c.l.b16 %v2855
    %v3421 = vunpack.c.h.b16 %v2855
    %v3422 = vunpack.c.l.b16 %v2856
    %v3423 = vunpack.c.l.b16 %v2857
    %v3424 = vunpack.c.h.b16 %v2857
    %v3425 = vunpack.c.l.b16 %v2858
    %v3426 = vunpack.c.l.b16 %v2859
    %v3427 = vunpack.c.h.b16 %v2859
    %v3428 = vunpack.c.l.b16 %v2860
    %v3429 = vunpack.c.l.b16 %v2861
    %v3430 = vunpack.c.h.b16 %v2861
    %v3431 = vunpack.c.l.b16 %v2862
    %v3432 = vunpack.c.l.b16 %v2863
    %v3433 = vunpack.c.h.b16 %v2863
    %v3434 = vunpack.c.l.b16 %v2864
    %v3435 = vunpack.c.l.b16 %v2865
    %v3436 = vunpack.c.h.b16 %v2865
    %v3437 = vunpack.c.l.b16 %v2866
    %v3438 = vunpack.c.l.b16 %v2867
    %v3439 = vunpack.c.h.b16 %v2867
    %v3440 = vunpack.c.l.b16 %v2868
    %v3441 = vunpack.c.l.b16 %v2869
    %v3442 = vunpack.c.h.b16 %v2869
    %v3443 = vunpack.c.l.b16 %v2870
    %v3444 = vunpack.c.l.b16 %v2871
    %v3445 = vunpack.c.h.b16 %v2871
    %v3446 = vunpack.c.l.b16 %v2872
    %v3447 = vunpack.c.l.b16 %v2873
    %v3448 = vunpack.c.h.b16 %v2873
    %v3449 = vunpack.c.l.b16 %v2874
    %v3450 = vunpack.c.l.b16 %v2875
    %v3451 = vunpack.c.h.b16 %v2875
    %v3452 = vunpack.c.l.b16 %v2876
    %v3453 = vunpack.c.l.b16 %v2877
    %v3454 = vunpack.c.h.b16 %v2877
    %v3455 = vunpack.c.l.b16 %v2878
    %v3456 = vunpack.c.l.b16 %v2879
    %v3457 = vunpack.c.h.b16 %v2879
    %v3458 = vunpack.c.l.b16 %v2880
    %v3459 = vunpack.c.l.b16 %v2881
    %v3460 = vunpack.c.h.b16 %v2881
    %v3461 = vunpack.c.l.b16 %v2882
    %v3462 = vunpack.c.l.b16 %v2883
    %v3463 = vunpack.c.h.b16 %v2883
    %v3464 = vunpack.c.l.b16 %v2884
    %v3465 = vunpack.c.l.b16 %v2885
    %v3466 = vunpack.c.h.b16 %v2885
    %v3467 = vunpack.c.l.b16 %v2886
    %v3468 = vpack.c.b16 %v3375, %v3372
    %v3469 = vpack.c.b16 %v3376, %v3373
    %v3470 = vpack.c.b16 %v3377, %v3374
    %v3471 = vpack.c.b16 %v3381, %v3378
    %v3472 = vpack.c.b16 %v3382, %v3379
    %v3473 = vpack.c.b16 %v3383, %v3380
    %v3474 = vpack.c.b16 %v3387, %v3384
    %v3475 = vpack.c.b16 %v3388, %v3385
    %v3476 = vpack.c.b16 %v3389, %v3386
    %v3477 = vpack.c.b16 %v3393, %v3390
    %v3478 = vpack.c.b16 %v3394, %v3391
    %v3479 = vpack.c.b16 %v3395, %v3392
    %v3480 = vpack.c.b16 %v3399, %v3396
    %v3481 = vpack.c.b16 %v3400, %v3397
    %v3482 = vpack.c.b16 %v3401, %v3398
    %v3483 = vpack.c.b16 %v3405, %v3402
    %v3484 = vpack.c.b16 %v3406, %v3403
    %v3485 = vpack.c.b16 %v3407, %v3404
    %v3486 = vpack.c.b16 %v3411, %v3408
    %v3487 = vpack.c.b16 %v3412, %v3409
    %v3488 = vpack.c.b16 %v3413, %v3410
    %v3489 = vpack.c.b16 %v3417, %v3414
    %v3490 = vpack.c.b16 %v3418, %v3415
    %v3491 = vpack.c.b16 %v3419, %v3416
    %v3492 = vpack.c.b16 %v3423, %v3420
    %v3493 = vpack.c.b16 %v3424, %v3421
    %v3494 = vpack.c.b16 %v3425, %v3422
    %v3495 = vpack.c.b16 %v3429, %v3426
    %v3496 = vpack.c.b16 %v3430, %v3427
    %v3497 = vpack.c.b16 %v3431, %v3428
    %v3498 = vpack.c.b16 %v3435, %v3432
    %v3499 = vpack.c.b16 %v3436, %v3433
    %v3500 = vpack.c.b16 %v3437, %v3434
    %v3501 = vpack.c.b16 %v3441, %v3438
    %v3502 = vpack.c.b16 %v3442, %v3439
    %v3503 = vpack.c.b16 %v3443, %v3440
    %v3504 = vpack.c.b16 %v3447, %v3444
    %v3505 = vpack.c.b16 %v3448, %v3445
    %v3506 = vpack.c.b16 %v3449, %v3446
    %v3507 = vpack.c.b16 %v3453, %v3450
    %v3508 = vpack.c.b16 %v3454, %v3451
    %v3509 = vpack.c.b16 %v3455, %v3452
    %v3510 = vpack.c.b16 %v3459, %v3456
    %v3511 = vpack.c.b16 %v3460, %v3457
    %v3512 = vpack.c.b16 %v3461, %v3458
    %v3513 = vpack.c.b16 %v3465, %v3462
    %v3514 = vpack.c.b16 %v3466, %v3463
    %v3515 = vpack.c.b16 %v3467, %v3464
    %3564 = vmatprep.subr.bf16.mxu0 %v3469
    %3565 = vmatpush1.bf16.msra.mxu0 %v3468
    %3566 = vmatprep.subr.bf16.mxu0 %v3472
    %3567 = vmatpush1.bf16.msra.mxu0 %v3471
    %3568 = vmatprep.subr.bf16.mxu0 %v3475
    %3569 = vmatpush1.bf16.msra.mxu0 %v3474
    %3570 = vmatprep.subr.bf16.mxu0 %v3478
    %3571 = vmatpush1.bf16.msra.mxu0 %v3477
    %3572 = vmatprep.subr.bf16.mxu0 %v3481
    %3573 = vmatpush1.bf16.msra.mxu0 %v3480
    %3574 = vmatprep.subr.bf16.mxu0 %v3484
    %3575 = vmatpush1.bf16.msra.mxu0 %v3483
    %3576 = vmatprep.subr.bf16.mxu0 %v3487
    %3577 = vmatpush1.bf16.msra.mxu0 %v3486
    %3578 = vmatprep.subr.bf16.mxu0 %v3490
    %3579 = vmatpush1.bf16.msra.mxu0 %v3489
    %3580 = vmatprep.subr.bf16.mxu0 %v3493
    %3581 = vmatpush1.bf16.msra.mxu0 %v3492
    %3582 = vmatprep.subr.bf16.mxu0 %v3496
    %3583 = vmatpush1.bf16.msra.mxu0 %v3495
    %3584 = vmatprep.subr.bf16.mxu0 %v3499
    %3585 = vmatpush1.bf16.msra.mxu0 %v3498
    %3586 = vmatprep.subr.bf16.mxu0 %v3502
    %3587 = vmatpush1.bf16.msra.mxu0 %v3501
    %3588 = vmatprep.subr.bf16.mxu0 %v3505
    %3589 = vmatpush1.bf16.msra.mxu0 %v3504
    %3590 = vmatprep.subr.bf16.mxu0 %v3508
    %3591 = vmatpush1.bf16.msra.mxu0 %v3507
    %3592 = vmatprep.subr.bf16.mxu0 %v3511
    %3593 = vmatpush1.bf16.msra.mxu0 %v3510
    %3594 = vmatprep.subr.bf16.mxu0 %v3514
    %3595 = vmatpush1.bf16.msra.mxu0 %v3513
    %3596 = vmatprep.mubr.bf16.mxu0 %v2822
    %3597 = vmatmul.mubr.bf16.gmra.mrb[0].mxu0 %v2821
    %v3598 = vpop.f32.mrb[0].mxu0
    %v3599 = vadd.f32 %v3262, %v3598
    %v3600 = vpop.f32.mrb[0].mxu0
    %v3601 = vadd.f32 %v3264, %v3600
    %v3602 = vpop.f32.mrb[0].mxu0
    %v3603 = vpop.f32.mrb[0].mxu0
    %3604 = vdwg.mxu0
    %3605 = vmatprep.subr.bf16.mxu0 0
    %3606 = vmatpush1.bf16.msra.mxu0 %v3470
    %3607 = vmatprep.subr.bf16.mxu0 0
    %3608 = vmatpush1.bf16.msra.mxu0 %v3473
    %3609 = vmatprep.subr.bf16.mxu0 0
    %3610 = vmatpush1.bf16.msra.mxu0 %v3476
    %3611 = vmatprep.subr.bf16.mxu0 0
    %3612 = vmatpush1.bf16.msra.mxu0 %v3479
    %3613 = vmatprep.subr.bf16.mxu0 0
    %3614 = vmatpush1.bf16.msra.mxu0 %v3482
    %3615 = vmatprep.subr.bf16.mxu0 0
    %3616 = vmatpush1.bf16.msra.mxu0 %v3485
    %3617 = vmatprep.subr.bf16.mxu0 0
    %3618 = vmatpush1.bf16.msra.mxu0 %v3488
    %3619 = vmatprep.subr.bf16.mxu0 0
    %3620 = vmatpush1.bf16.msra.mxu0 %v3491
    %3621 = vmatprep.subr.bf16.mxu0 0
    %3622 = vmatpush1.bf16.msra.mxu0 %v3494
    %3623 = vmatprep.subr.bf16.mxu0 0
    %3624 = vmatpush1.bf16.msra.mxu0 %v3497
    %3625 = vmatprep.subr.bf16.mxu0 0
    %3626 = vmatpush1.bf16.msra.mxu0 %v3500
    %3627 = vmatprep.subr.bf16.mxu0 0
    %3628 = vmatpush1.bf16.msra.mxu0 %v3503
    %3629 = vmatprep.subr.bf16.mxu0 0
    %3630 = vmatpush1.bf16.msra.mxu0 %v3506
    %3631 = vmatprep.subr.bf16.mxu0 0
    %3632 = vmatpush1.bf16.msra.mxu0 %v3509
    %3633 = vmatprep.subr.bf16.mxu0 0
    %3634 = vmatpush1.bf16.msra.mxu0 %v3512
    %3635 = vmatprep.subr.bf16.mxu0 0
    %3636 = vmatpush1.bf16.msra.mxu0 %v3515
    %3637 = vmatprep.mubr.bf16.mxu0 %v2822
    %3638 = vmatmul.mubr.bf16.gmra.mrb[0].mxu0 %v2821
    %v3639 = vpop.f32.mrb[0].mxu0
    %v3640 = vadd.f32 %v3303, %v3639
    %v3641 = vpop.f32.mrb[0].mxu0
    %v3642 = vpop.f32.mrb[0].mxu0
    %v3643 = vpop.f32.mrb[0].mxu0
    %3644 = vdwg.mxu0
    %v3645 = vld [vmem:[#allocation3] sm:$0x3c]
    %v3646 = vld [vmem:[#allocation3 + $0x8] sm:$0x3c]
    %v3647 = vpack.c.bf16 %v3645, %v3645
    %v3648 = vpack.c.bf16 %v3646, %v3646
    %v3649 = vld [vmem:[#allocation17 + $0x300] sm:$0xff]
    %v3650 = vld [vmem:[#allocation17 + $0x308] sm:$0xf]
    %v3651 = vld [vmem:[#allocation17 + $0x30c] sm:$0xff]
    %v3652 = vld [vmem:[#allocation17 + $0x314] sm:$0xf]
    %v3653 = vld [vmem:[#allocation17 + $0x318] sm:$0xff]
    %v3654 = vld [vmem:[#allocation17 + $0x320] sm:$0xf]
    %v3655 = vld [vmem:[#allocation17 + $0x324] sm:$0xff]
    %v3656 = vld [vmem:[#allocation17 + $0x32c] sm:$0xf]
    %v3657 = vld [vmem:[#allocation17 + $0x330] sm:$0xff]
    %v3658 = vld [vmem:[#allocation17 + $0x338] sm:$0xf]
    %v3659 = vld [vmem:[#allocation17 + $0x33c] sm:$0xff]
    %v3660 = vld [vmem:[#allocation17 + $0x344] sm:$0xf]
    %v3661 = vld [vmem:[#allocation17 + $0x348] sm:$0xff]
    %v3662 = vld [vmem:[#allocation17 + $0x350] sm:$0xf]
    %v3663 = vld [vmem:[#allocation17 + $0x354] sm:$0xff]
    %v3664 = vld [vmem:[#allocation17 + $0x35c] sm:$0xf]
    %v3665 = vld [vmem:[#allocation17 + $0x360] sm:$0xff]
    %v3666 = vld [vmem:[#allocation17 + $0x368] sm:$0xf]
    %v3667 = vld [vmem:[#allocation17 + $0x36c] sm:$0xff]
    %v3668 = vld [vmem:[#allocation17 + $0x374] sm:$0xf]
    %v3669 = vld [vmem:[#allocation17 + $0x378] sm:$0xff]
    %v3670 = vld [vmem:[#allocation17 + $0x380] sm:$0xf]
    %v3671 = vld [vmem:[#allocation17 + $0x384] sm:$0xff]
    %v3672 = vld [vmem:[#allocation17 + $0x38c] sm:$0xf]
    %v3673 = vld [vmem:[#allocation17 + $0x390] sm:$0xff]
    %v3674 = vld [vmem:[#allocation17 + $0x398] sm:$0xf]
    %v3675 = vld [vmem:[#allocation17 + $0x39c] sm:$0xff]
    %v3676 = vld [vmem:[#allocation17 + $0x3a4] sm:$0xf]
    %v3677 = vld [vmem:[#allocation17 + $0x3a8] sm:$0xff]
    %v3678 = vld [vmem:[#allocation17 + $0x3b0] sm:$0xf]
    %v3679 = vld [vmem:[#allocation17 + $0x3b4] sm:$0xff]
    %v3680 = vld [vmem:[#allocation17 + $0x3bc] sm:$0xf]
    %v3681 = vld [vmem:[#allocation17 + $0x3c0] sm:$0xff]
    %v3682 = vld [vmem:[#allocation17 + $0x3c8] sm:$0xf]
    %v3683 = vld [vmem:[#allocation17 + $0x3cc] sm:$0xff]
    %v3684 = vld [vmem:[#allocation17 + $0x3d4] sm:$0xf]
    %v3685 = vld [vmem:[#allocation17 + $0x3d8] sm:$0xff]
    %v3686 = vld [vmem:[#allocation17 + $0x3e0] sm:$0xf]
    %v3687 = vld [vmem:[#allocation17 + $0x3e4] sm:$0xff]
    %v3688 = vld [vmem:[#allocation17 + $0x3ec] sm:$0xf]
    %v3689 = vld [vmem:[#allocation17 + $0x3f0] sm:$0xff]
    %v3690 = vld [vmem:[#allocation17 + $0x3f8] sm:$0xf]
    %v3691 = vld [vmem:[#allocation17 + $0x3fc] sm:$0xff]
    %v3692 = vld [vmem:[#allocation17 + $0x404] sm:$0xf]
    %v3693 = vld [vmem:[#allocation17 + $0x408] sm:$0xff]
    %v3694 = vld [vmem:[#allocation17 + $0x410] sm:$0xf]
    %v3695 = vld [vmem:[#allocation17 + $0x414] sm:$0xff]
    %v3696 = vld [vmem:[#allocation17 + $0x41c] sm:$0xf]
    %v3697 = vld [vmem:[#allocation17 + $0x420] sm:$0xff]
    %v3698 = vld [vmem:[#allocation17 + $0x428] sm:$0xf]
    %v3699 = vld [vmem:[#allocation17 + $0x42c] sm:$0xff]
    %v3700 = vld [vmem:[#allocation17 + $0x434] sm:$0xf]
    %v3701 = vld [vmem:[#allocation17 + $0x438] sm:$0xff]
    %v3702 = vld [vmem:[#allocation17 + $0x440] sm:$0xf]
    %v3703 = vld [vmem:[#allocation17 + $0x444] sm:$0xff]
    %v3704 = vld [vmem:[#allocation17 + $0x44c] sm:$0xf]
    %v3705 = vld [vmem:[#allocation17 + $0x450] sm:$0xff]
    %v3706 = vld [vmem:[#allocation17 + $0x458] sm:$0xf]
    %v3707 = vld [vmem:[#allocation17 + $0x45c] sm:$0xff]
    %v3708 = vld [vmem:[#allocation17 + $0x464] sm:$0xf]
    %v3709 = vld [vmem:[#allocation17 + $0x468] sm:$0xff]
    %v3710 = vld [vmem:[#allocation17 + $0x470] sm:$0xf]
    %v3711 = vld [vmem:[#allocation17 + $0x474] sm:$0xff]
    %v3712 = vld [vmem:[#allocation17 + $0x47c] sm:$0xf]
    %v3715 = vrot.slane %v3647, 1
    %v3716 = vrot.slane %v3648, 1
    %v3783 = vunpack.c.l.b16 %v3649
    %v3784 = vunpack.c.h.b16 %v3649
    %v3785 = vunpack.c.l.b16 %v3650
    %v3786 = vunpack.c.l.b16 %v3651
    %v3787 = vunpack.c.h.b16 %v3651
    %v3788 = vunpack.c.l.b16 %v3652
    %v3789 = vunpack.c.l.b16 %v3653
    %v3790 = vunpack.c.h.b16 %v3653
    %v3791 = vunpack.c.l.b16 %v3654
    %v3792 = vunpack.c.l.b16 %v3655
    %v3793 = vunpack.c.h.b16 %v3655
    %v3794 = vunpack.c.l.b16 %v3656
    %v3795 = vunpack.c.l.b16 %v3657
    %v3796 = vunpack.c.h.b16 %v3657
    %v3797 = vunpack.c.l.b16 %v3658
    %v3798 = vunpack.c.l.b16 %v3659
    %v3799 = vunpack.c.h.b16 %v3659
    %v3800 = vunpack.c.l.b16 %v3660
    %v3801 = vunpack.c.l.b16 %v3661
    %v3802 = vunpack.c.h.b16 %v3661
    %v3803 = vunpack.c.l.b16 %v3662
    %v3804 = vunpack.c.l.b16 %v3663
    %v3805 = vunpack.c.h.b16 %v3663
    %v3806 = vunpack.c.l.b16 %v3664
    %v3807 = vunpack.c.l.b16 %v3665
    %v3808 = vunpack.c.h.b16 %v3665
    %v3809 = vunpack.c.l.b16 %v3666
    %v3810 = vunpack.c.l.b16 %v3667
    %v3811 = vunpack.c.h.b16 %v3667
    %v3812 = vunpack.c.l.b16 %v3668
    %v3813 = vunpack.c.l.b16 %v3669
    %v3814 = vunpack.c.h.b16 %v3669
    %v3815 = vunpack.c.l.b16 %v3670
    %v3816 = vunpack.c.l.b16 %v3671
    %v3817 = vunpack.c.h.b16 %v3671
    %v3818 = vunpack.c.l.b16 %v3672
    %v3819 = vunpack.c.l.b16 %v3673
    %v3820 = vunpack.c.h.b16 %v3673
    %v3821 = vunpack.c.l.b16 %v3674
    %v3822 = vunpack.c.l.b16 %v3675
    %v3823 = vunpack.c.h.b16 %v3675
    %v3824 = vunpack.c.l.b16 %v3676
    %v3825 = vunpack.c.l.b16 %v3677
    %v3826 = vunpack.c.h.b16 %v3677
    %v3827 = vunpack.c.l.b16 %v3678
    %v3828 = vunpack.c.l.b16 %v3679
    %v3829 = vunpack.c.h.b16 %v3679
    %v3830 = vunpack.c.l.b16 %v3680
    %v3831 = vunpack.c.l.b16 %v3681
    %v3832 = vunpack.c.h.b16 %v3681
    %v3833 = vunpack.c.l.b16 %v3682
    %v3834 = vunpack.c.l.b16 %v3683
    %v3835 = vunpack.c.h.b16 %v3683
    %v3836 = vunpack.c.l.b16 %v3684
    %v3837 = vunpack.c.l.b16 %v3685
    %v3838 = vunpack.c.h.b16 %v3685
    %v3839 = vunpack.c.l.b16 %v3686
    %v3840 = vunpack.c.l.b16 %v3687
    %v3841 = vunpack.c.h.b16 %v3687
    %v3842 = vunpack.c.l.b16 %v3688
    %v3843 = vunpack.c.l.b16 %v3689
    %v3844 = vunpack.c.h.b16 %v3689
    %v3845 = vunpack.c.l.b16 %v3690
    %v3846 = vunpack.c.l.b16 %v3691
    %v3847 = vunpack.c.h.b16 %v3691
    %v3848 = vunpack.c.l.b16 %v3692
    %v3849 = vunpack.c.l.b16 %v3693
    %v3850 = vunpack.c.h.b16 %v3693
    %v3851 = vunpack.c.l.b16 %v3694
    %v3852 = vunpack.c.l.b16 %v3695
    %v3853 = vunpack.c.h.b16 %v3695
    %v3854 = vunpack.c.l.b16 %v3696
    %v3855 = vunpack.c.l.b16 %v3697
    %v3856 = vunpack.c.h.b16 %v3697
    %v3857 = vunpack.c.l.b16 %v3698
    %v3858 = vunpack.c.l.b16 %v3699
    %v3859 = vunpack.c.h.b16 %v3699
    %v3860 = vunpack.c.l.b16 %v3700
    %v3861 = vunpack.c.l.b16 %v3701
    %v3862 = vunpack.c.h.b16 %v3701
    %v3863 = vunpack.c.l.b16 %v3702
    %v3864 = vunpack.c.l.b16 %v3703
    %v3865 = vunpack.c.h.b16 %v3703
    %v3866 = vunpack.c.l.b16 %v3704
    %v3867 = vunpack.c.l.b16 %v3705
    %v3868 = vunpack.c.h.b16 %v3705
    %v3869 = vunpack.c.l.b16 %v3706
    %v3870 = vunpack.c.l.b16 %v3707
    %v3871 = vunpack.c.h.b16 %v3707
    %v3872 = vunpack.c.l.b16 %v3708
    %v3873 = vunpack.c.l.b16 %v3709
    %v3874 = vunpack.c.h.b16 %v3709
    %v3875 = vunpack.c.l.b16 %v3710
    %v3876 = vunpack.c.l.b16 %v3711
    %v3877 = vunpack.c.h.b16 %v3711
    %v3878 = vunpack.c.l.b16 %v3712
    %v3879 = vpack.c.b16 %v3786, %v3783
    %v3880 = vpack.c.b16 %v3787, %v3784
    %v3881 = vpack.c.b16 %v3788, %v3785
    %v3882 = vpack.c.b16 %v3792, %v3789
    %v3883 = vpack.c.b16 %v3793, %v3790
    %v3884 = vpack.c.b16 %v3794, %v3791
    %v3885 = vpack.c.b16 %v3798, %v3795
    %v3886 = vpack.c.b16 %v3799, %v3796
    %v3887 = vpack.c.b16 %v3800, %v3797
    %v3888 = vpack.c.b16 %v3804, %v3801
    %v3889 = vpack.c.b16 %v3805, %v3802
    %v3890 = vpack.c.b16 %v3806, %v3803
    %v3891 = vpack.c.b16 %v3810, %v3807
    %v3892 = vpack.c.b16 %v3811, %v3808
    %v3893 = vpack.c.b16 %v3812, %v3809
    %v3894 = vpack.c.b16 %v3816, %v3813
    %v3895 = vpack.c.b16 %v3817, %v3814
    %v3896 = vpack.c.b16 %v3818, %v3815
    %v3897 = vpack.c.b16 %v3822, %v3819
    %v3898 = vpack.c.b16 %v3823, %v3820
    %v3899 = vpack.c.b16 %v3824, %v3821
    %v3900 = vpack.c.b16 %v3828, %v3825
    %v3901 = vpack.c.b16 %v3829, %v3826
    %v3902 = vpack.c.b16 %v3830, %v3827
    %v3903 = vpack.c.b16 %v3834, %v3831
    %v3904 = vpack.c.b16 %v3835, %v3832
    %v3905 = vpack.c.b16 %v3836, %v3833
    %v3906 = vpack.c.b16 %v3840, %v3837
    %v3907 = vpack.c.b16 %v3841, %v3838
    %v3908 = vpack.c.b16 %v3842, %v3839
    %v3909 = vpack.c.b16 %v3846, %v3843
    %v3910 = vpack.c.b16 %v3847, %v3844
    %v3911 = vpack.c.b16 %v3848, %v3845
    %v3912 = vpack.c.b16 %v3852, %v3849
    %v3913 = vpack.c.b16 %v3853, %v3850
    %v3914 = vpack.c.b16 %v3854, %v3851
    %v3915 = vpack.c.b16 %v3858, %v3855
    %v3916 = vpack.c.b16 %v3859, %v3856
    %v3917 = vpack.c.b16 %v3860, %v3857
    %v3918 = vpack.c.b16 %v3864, %v3861
    %v3919 = vpack.c.b16 %v3865, %v3862
    %v3920 = vpack.c.b16 %v3866, %v3863
    %v3921 = vpack.c.b16 %v3870, %v3867
    %v3922 = vpack.c.b16 %v3871, %v3868
    %v3923 = vpack.c.b16 %v3872, %v3869
    %v3924 = vpack.c.b16 %v3876, %v3873
    %v3925 = vpack.c.b16 %v3877, %v3874
    %v3926 = vpack.c.b16 %v3878, %v3875
    %3975 = vmatprep.subr.bf16.mxu0 %v3880
    %3976 = vmatpush1.bf16.msra.mxu0 %v3879
    %3977 = vmatprep.subr.bf16.mxu0 %v3883
    %3978 = vmatpush1.bf16.msra.mxu0 %v3882
    %3979 = vmatprep.subr.bf16.mxu0 %v3886
    %3980 = vmatpush1.bf16.msra.mxu0 %v3885
    %3981 = vmatprep.subr.bf16.mxu0 %v3889
    %3982 = vmatpush1.bf16.msra.mxu0 %v3888
    %3983 = vmatprep.subr.bf16.mxu0 %v3892
    %3984 = vmatpush1.bf16.msra.mxu0 %v3891
    %3985 = vmatprep.subr.bf16.mxu0 %v3895
    %3986 = vmatpush1.bf16.msra.mxu0 %v3894
    %3987 = vmatprep.subr.bf16.mxu0 %v3898
    %3988 = vmatpush1.bf16.msra.mxu0 %v3897
    %3989 = vmatprep.subr.bf16.mxu0 %v3901
    %3990 = vmatpush1.bf16.msra.mxu0 %v3900
    %3991 = vmatprep.subr.bf16.mxu0 %v3904
    %3992 = vmatpush1.bf16.msra.mxu0 %v3903
    %3993 = vmatprep.subr.bf16.mxu0 %v3907
    %3994 = vmatpush1.bf16.msra.mxu0 %v3906
    %3995 = vmatprep.subr.bf16.mxu0 %v3910
    %3996 = vmatpush1.bf16.msra.mxu0 %v3909
    %3997 = vmatprep.subr.bf16.mxu0 %v3913
    %3998 = vmatpush1.bf16.msra.mxu0 %v3912
    %3999 = vmatprep.subr.bf16.mxu0 %v3916
    %4000 = vmatpush1.bf16.msra.mxu0 %v3915
    %4001 = vmatprep.subr.bf16.mxu0 %v3919
    %4002 = vmatpush1.bf16.msra.mxu0 %v3918
    %4003 = vmatprep.subr.bf16.mxu0 %v3922
    %4004 = vmatpush1.bf16.msra.mxu0 %v3921
    %4005 = vmatprep.subr.bf16.mxu0 %v3925
    %4006 = vmatpush1.bf16.msra.mxu0 %v3924
    %4007 = vmatprep.mubr.bf16.mxu0 %v3716
    %4008 = vmatmul.mubr.bf16.gmra.mrb[0].mxu0 %v3715
    %v4009 = vpop.f32.mrb[0].mxu0
    %v4010 = vadd.f32 0.0, %v4009
    %v4011 = vpop.f32.mrb[0].mxu0
    %v4012 = vadd.f32 0.0, %v4011
    %v4013 = vpop.f32.mrb[0].mxu0
    %v4014 = vpop.f32.mrb[0].mxu0
    %4015 = vdwg.mxu0
    %4016 = vmatprep.subr.bf16.mxu0 0
    %4017 = vmatpush1.bf16.msra.mxu0 %v3881
    %4018 = vmatprep.subr.bf16.mxu0 0
    %4019 = vmatpush1.bf16.msra.mxu0 %v3884
    %4020 = vmatprep.subr.bf16.mxu0 0
    %4021 = vmatpush1.bf16.msra.mxu0 %v3887
    %4022 = vmatprep.subr.bf16.mxu0 0
    %4023 = vmatpush1.bf16.msra.mxu0 %v3890
    %4024 = vmatprep.subr.bf16.mxu0 0
    %4025 = vmatpush1.bf16.msra.mxu0 %v3893
    %4026 = vmatprep.subr.bf16.mxu0 0
    %4027 = vmatpush1.bf16.msra.mxu0 %v3896
    %4028 = vmatprep.subr.bf16.mxu0 0
    %4029 = vmatpush1.bf16.msra.mxu0 %v3899
    %4030 = vmatprep.subr.bf16.mxu0 0
    %4031 = vmatpush1.bf16.msra.mxu0 %v3902
    %4032 = vmatprep.subr.bf16.mxu0 0
    %4033 = vmatpush1.bf16.msra.mxu0 %v3905
    %4034 = vmatprep.subr.bf16.mxu0 0
    %4035 = vmatpush1.bf16.msra.mxu0 %v3908
    %4036 = vmatprep.subr.bf16.mxu0 0
    %4037 = vmatpush1.bf16.msra.mxu0 %v3911
    %4038 = vmatprep.subr.bf16.mxu0 0
    %4039 = vmatpush1.bf16.msra.mxu0 %v3914
    %4040 = vmatprep.subr.bf16.mxu0 0
    %4041 = vmatpush1.bf16.msra.mxu0 %v3917
    %4042 = vmatprep.subr.bf16.mxu0 0
    %4043 = vmatpush1.bf16.msra.mxu0 %v3920
    %4044 = vmatprep.subr.bf16.mxu0 0
    %4045 = vmatpush1.bf16.msra.mxu0 %v3923
    %4046 = vmatprep.subr.bf16.mxu0 0
    %4047 = vmatpush1.bf16.msra.mxu0 %v3926
    %4048 = vmatprep.mubr.bf16.mxu0 %v3716
    %4049 = vmatmul.mubr.bf16.gmra.mrb[0].mxu0 %v3715
    %v4050 = vpop.f32.mrb[0].mxu0
    %v4051 = vadd.f32 0.0, %v4050
    %v4052 = vpop.f32.mrb[0].mxu0
    %v4053 = vpop.f32.mrb[0].mxu0
    %v4054 = vpop.f32.mrb[0].mxu0
    %4055 = vdwg.mxu0
    %v4056 = vadd.f32 %v3599, %v4010
    %v4057 = vadd.f32 %v3601, %v4012
    %v4058 = vadd.f32 %v3640, %v4051
    %v4059 = vld [vmem:[#allocation3] sm:$0x78]
    %v4060 = vld [vmem:[#allocation3 + $0x8] sm:$0x78]
    %v4061 = vpack.c.bf16 %v4059, %v4059
    %v4062 = vpack.c.bf16 %v4060, %v4060
    %v4063 = vld [vmem:[#allocation17 + $0x480] sm:$0xff]
    %v4064 = vld [vmem:[#allocation17 + $0x488] sm:$0xf]
    %v4065 = vld [vmem:[#allocation17 + $0x48c] sm:$0xff]
    %v4066 = vld [vmem:[#allocation17 + $0x494] sm:$0xf]
    %v4067 = vld [vmem:[#allocation17 + $0x498] sm:$0xff]
    %v4068 = vld [vmem:[#allocation17 + $0x4a0] sm:$0xf]
    %v4069 = vld [vmem:[#allocation17 + $0x4a4] sm:$0xff]
    %v4070 = vld [vmem:[#allocation17 + $0x4ac] sm:$0xf]
    %v4071 = vld [vmem:[#allocation17 + $0x4b0] sm:$0xff]
    %v4072 = vld [vmem:[#allocation17 + $0x4b8] sm:$0xf]
    %v4073 = vld [vmem:[#allocation17 + $0x4bc] sm:$0xff]
    %v4074 = vld [vmem:[#allocation17 + $0x4c4] sm:$0xf]
    %v4075 = vld [vmem:[#allocation17 + $0x4c8] sm:$0xff]
    %v4076 = vld [vmem:[#allocation17 + $0x4d0] sm:$0xf]
    %v4077 = vld [vmem:[#allocation17 + $0x4d4] sm:$0xff]
    %v4078 = vld [vmem:[#allocation17 + $0x4dc] sm:$0xf]
    %v4079 = vld [vmem:[#allocation17 + $0x4e0] sm:$0xff]
    %v4080 = vld [vmem:[#allocation17 + $0x4e8] sm:$0xf]
    %v4081 = vld [vmem:[#allocation17 + $0x4ec] sm:$0xff]
    %v4082 = vld [vmem:[#allocation17 + $0x4f4] sm:$0xf]
    %v4083 = vld [vmem:[#allocation17 + $0x4f8] sm:$0xff]
    %v4084 = vld [vmem:[#allocation17 + $0x500] sm:$0xf]
    %v4085 = vld [vmem:[#allocation17 + $0x504] sm:$0xff]
    %v4086 = vld [vmem:[#allocation17 + $0x50c] sm:$0xf]
    %v4087 = vld [vmem:[#allocation17 + $0x510] sm:$0xff]
    %v4088 = vld [vmem:[#allocation17 + $0x518] sm:$0xf]
    %v4089 = vld [vmem:[#allocation17 + $0x51c] sm:$0xff]
    %v4090 = vld [vmem:[#allocation17 + $0x524] sm:$0xf]
    %v4091 = vld [vmem:[#allocation17 + $0x528] sm:$0xff]
    %v4092 = vld [vmem:[#allocation17 + $0x530] sm:$0xf]
    %v4093 = vld [vmem:[#allocation17 + $0x534] sm:$0xff]
    %v4094 = vld [vmem:[#allocation17 + $0x53c] sm:$0xf]
    %v4095 = vld [vmem:[#allocation17 + $0x540] sm:$0xff]
    %v4096 = vld [vmem:[#allocation17 + $0x548] sm:$0xf]
    %v4097 = vld [vmem:[#allocation17 + $0x54c] sm:$0xff]
    %v4098 = vld [vmem:[#allocation17 + $0x554] sm:$0xf]
    %v4099 = vld [vmem:[#allocation17 + $0x558] sm:$0xff]
    %v4100 = vld [vmem:[#allocation17 + $0x560] sm:$0xf]
    %v4101 = vld [vmem:[#allocation17 + $0x564] sm:$0xff]
    %v4102 = vld [vmem:[#allocation17 + $0x56c] sm:$0xf]
    %v4103 = vld [vmem:[#allocation17 + $0x570] sm:$0xff]
    %v4104 = vld [vmem:[#allocation17 + $0x578] sm:$0xf]
    %v4105 = vld [vmem:[#allocation17 + $0x57c] sm:$0xff]
    %v4106 = vld [vmem:[#allocation17 + $0x584] sm:$0xf]
    %v4107 = vld [vmem:[#allocation17 + $0x588] sm:$0xff]
    %v4108 = vld [vmem:[#allocation17 + $0x590] sm:$0xf]
    %v4109 = vld [vmem:[#allocation17 + $0x594] sm:$0xff]
    %v4110 = vld [vmem:[#allocation17 + $0x59c] sm:$0xf]
    %v4111 = vld [vmem:[#allocation17 + $0x5a0] sm:$0xff]
    %v4112 = vld [vmem:[#allocation17 + $0x5a8] sm:$0xf]
    %v4113 = vld [vmem:[#allocation17 + $0x5ac] sm:$0xff]
    %v4114 = vld [vmem:[#allocation17 + $0x5b4] sm:$0xf]
    %v4115 = vld [vmem:[#allocation17 + $0x5b8] sm:$0xff]
    %v4116 = vld [vmem:[#allocation17 + $0x5c0] sm:$0xf]
    %v4117 = vld [vmem:[#allocation17 + $0x5c4] sm:$0xff]
    %v4118 = vld [vmem:[#allocation17 + $0x5cc] sm:$0xf]
    %v4119 = vld [vmem:[#allocation17 + $0x5d0] sm:$0xff]
    %v4120 = vld [vmem:[#allocation17 + $0x5d8] sm:$0xf]
    %v4121 = vld [vmem:[#allocation17 + $0x5dc] sm:$0xff]
    %v4122 = vld [vmem:[#allocation17 + $0x5e4] sm:$0xf]
    %v4123 = vld [vmem:[#allocation17 + $0x5e8] sm:$0xff]
    %v4124 = vld [vmem:[#allocation17 + $0x5f0] sm:$0xf]
    %v4125 = vld [vmem:[#allocation17 + $0x5f4] sm:$0xff]
    %v4126 = vld [vmem:[#allocation17 + $0x5fc] sm:$0xf]
    %v4128 = vshrl.u32 %v4061, 16
    %v4130 = vrot.slane %v4128, 1
    %v4131 = vshll.u32 %v4061, 16
    %v4133 = vrot.slane %v4131, 2
    %v4134 = vor.u32 %v4130, %v4133
    %v4136 = vshrl.u32 %v4062, 16
    %v4138 = vrot.slane %v4136, 1
    %v4139 = vshll.u32 %v4062, 16
    %v4141 = vrot.slane %v4139, 2
    %v4142 = vor.u32 %v4138, %v4141
    %v4209 = vunpack.c.l.b16 %v4063
    %v4210 = vunpack.c.h.b16 %v4063
    %v4211 = vunpack.c.l.b16 %v4064
    %v4212 = vunpack.c.l.b16 %v4065
    %v4213 = vunpack.c.h.b16 %v4065
    %v4214 = vunpack.c.l.b16 %v4066
    %v4215 = vunpack.c.l.b16 %v4067
    %v4216 = vunpack.c.h.b16 %v4067
    %v4217 = vunpack.c.l.b16 %v4068
    %v4218 = vunpack.c.l.b16 %v4069
    %v4219 = vunpack.c.h.b16 %v4069
    %v4220 = vunpack.c.l.b16 %v4070
    %v4221 = vunpack.c.l.b16 %v4071
    %v4222 = vunpack.c.h.b16 %v4071
    %v4223 = vunpack.c.l.b16 %v4072
    %v4224 = vunpack.c.l.b16 %v4073
    %v4225 = vunpack.c.h.b16 %v4073
    %v4226 = vunpack.c.l.b16 %v4074
    %v4227 = vunpack.c.l.b16 %v4075
    %v4228 = vunpack.c.h.b16 %v4075
    %v4229 = vunpack.c.l.b16 %v4076
    %v4230 = vunpack.c.l.b16 %v4077
    %v4231 = vunpack.c.h.b16 %v4077
    %v4232 = vunpack.c.l.b16 %v4078
    %v4233 = vunpack.c.l.b16 %v4079
    %v4234 = vunpack.c.h.b16 %v4079
    %v4235 = vunpack.c.l.b16 %v4080
    %v4236 = vunpack.c.l.b16 %v4081
    %v4237 = vunpack.c.h.b16 %v4081
    %v4238 = vunpack.c.l.b16 %v4082
    %v4239 = vunpack.c.l.b16 %v4083
    %v4240 = vunpack.c.h.b16 %v4083
    %v4241 = vunpack.c.l.b16 %v4084
    %v4242 = vunpack.c.l.b16 %v4085
    %v4243 = vunpack.c.h.b16 %v4085
    %v4244 = vunpack.c.l.b16 %v4086
    %v4245 = vunpack.c.l.b16 %v4087
    %v4246 = vunpack.c.h.b16 %v4087
    %v4247 = vunpack.c.l.b16 %v4088
    %v4248 = vunpack.c.l.b16 %v4089
    %v4249 = vunpack.c.h.b16 %v4089
    %v4250 = vunpack.c.l.b16 %v4090
    %v4251 = vunpack.c.l.b16 %v4091
    %v4252 = vunpack.c.h.b16 %v4091
    %v4253 = vunpack.c.l.b16 %v4092
    %v4254 = vunpack.c.l.b16 %v4093
    %v4255 = vunpack.c.h.b16 %v4093
    %v4256 = vunpack.c.l.b16 %v4094
    %v4257 = vunpack.c.l.b16 %v4095
    %v4258 = vunpack.c.h.b16 %v4095
    %v4259 = vunpack.c.l.b16 %v4096
    %v4260 = vunpack.c.l.b16 %v4097
    %v4261 = vunpack.c.h.b16 %v4097
    %v4262 = vunpack.c.l.b16 %v4098
    %v4263 = vunpack.c.l.b16 %v4099
    %v4264 = vunpack.c.h.b16 %v4099
    %v4265 = vunpack.c.l.b16 %v4100
    %v4266 = vunpack.c.l.b16 %v4101
    %v4267 = vunpack.c.h.b16 %v4101
    %v4268 = vunpack.c.l.b16 %v4102
    %v4269 = vunpack.c.l.b16 %v4103
    %v4270 = vunpack.c.h.b16 %v4103
    %v4271 = vunpack.c.l.b16 %v4104
    %v4272 = vunpack.c.l.b16 %v4105
    %v4273 = vunpack.c.h.b16 %v4105
    %v4274 = vunpack.c.l.b16 %v4106
    %v4275 = vunpack.c.l.b16 %v4107
    %v4276 = vunpack.c.h.b16 %v4107
    %v4277 = vunpack.c.l.b16 %v4108
    %v4278 = vunpack.c.l.b16 %v4109
    %v4279 = vunpack.c.h.b16 %v4109
    %v4280 = vunpack.c.l.b16 %v4110
    %v4281 = vunpack.c.l.b16 %v4111
    %v4282 = vunpack.c.h.b16 %v4111
    %v4283 = vunpack.c.l.b16 %v4112
    %v4284 = vunpack.c.l.b16 %v4113
    %v4285 = vunpack.c.h.b16 %v4113
    %v4286 = vunpack.c.l.b16 %v4114
    %v4287 = vunpack.c.l.b16 %v4115
    %v4288 = vunpack.c.h.b16 %v4115
    %v4289 = vunpack.c.l.b16 %v4116
    %v4290 = vunpack.c.l.b16 %v4117
    %v4291 = vunpack.c.h.b16 %v4117
    %v4292 = vunpack.c.l.b16 %v4118
    %v4293 = vunpack.c.l.b16 %v4119
    %v4294 = vunpack.c.h.b16 %v4119
    %v4295 = vunpack.c.l.b16 %v4120
    %v4296 = vunpack.c.l.b16 %v4121
    %v4297 = vunpack.c.h.b16 %v4121
    %v4298 = vunpack.c.l.b16 %v4122
    %v4299 = vunpack.c.l.b16 %v4123
    %v4300 = vunpack.c.h.b16 %v4123
    %v4301 = vunpack.c.l.b16 %v4124
    %v4302 = vunpack.c.l.b16 %v4125
    %v4303 = vunpack.c.h.b16 %v4125
    %v4304 = vunpack.c.l.b16 %v4126
    %v4305 = vpack.c.b16 %v4212, %v4209
    %v4306 = vpack.c.b16 %v4213, %v4210
    %v4307 = vpack.c.b16 %v4214, %v4211
    %v4308 = vpack.c.b16 %v4218, %v4215
    %v4309 = vpack.c.b16 %v4219, %v4216
    %v4310 = vpack.c.b16 %v4220, %v4217
    %v4311 = vpack.c.b16 %v4224, %v4221
    %v4312 = vpack.c.b16 %v4225, %v4222
    %v4313 = vpack.c.b16 %v4226, %v4223
    %v4314 = vpack.c.b16 %v4230, %v4227
    %v4315 = vpack.c.b16 %v4231, %v4228
    %v4316 = vpack.c.b16 %v4232, %v4229
    %v4317 = vpack.c.b16 %v4236, %v4233
    %v4318 = vpack.c.b16 %v4237, %v4234
    %v4319 = vpack.c.b16 %v4238, %v4235
    %v4320 = vpack.c.b16 %v4242, %v4239
    %v4321 = vpack.c.b16 %v4243, %v4240
    %v4322 = vpack.c.b16 %v4244, %v4241
    %v4323 = vpack.c.b16 %v4248, %v4245
    %v4324 = vpack.c.b16 %v4249, %v4246
    %v4325 = vpack.c.b16 %v4250, %v4247
    %v4326 = vpack.c.b16 %v4254, %v4251
    %v4327 = vpack.c.b16 %v4255, %v4252
    %v4328 = vpack.c.b16 %v4256, %v4253
    %v4329 = vpack.c.b16 %v4260, %v4257
    %v4330 = vpack.c.b16 %v4261, %v4258
    %v4331 = vpack.c.b16 %v4262, %v4259
    %v4332 = vpack.c.b16 %v4266, %v4263
    %v4333 = vpack.c.b16 %v4267, %v4264
    %v4334 = vpack.c.b16 %v4268, %v4265
    %v4335 = vpack.c.b16 %v4272, %v4269
    %v4336 = vpack.c.b16 %v4273, %v4270
    %v4337 = vpack.c.b16 %v4274, %v4271
    %v4338 = vpack.c.b16 %v4278, %v4275
    %v4339 = vpack.c.b16 %v4279, %v4276
    %v4340 = vpack.c.b16 %v4280, %v4277
    %v4341 = vpack.c.b16 %v4284, %v4281
    %v4342 = vpack.c.b16 %v4285, %v4282
    %v4343 = vpack.c.b16 %v4286, %v4283
    %v4344 = vpack.c.b16 %v4290, %v4287
    %v4345 = vpack.c.b16 %v4291, %v4288
    %v4346 = vpack.c.b16 %v4292, %v4289
    %v4347 = vpack.c.b16 %v4296, %v4293
    %v4348 = vpack.c.b16 %v4297, %v4294
    %v4349 = vpack.c.b16 %v4298, %v4295
    %v4350 = vpack.c.b16 %v4302, %v4299
    %v4351 = vpack.c.b16 %v4303, %v4300
    %v4352 = vpack.c.b16 %v4304, %v4301
    %4401 = vmatprep.subr.bf16.mxu0 %v4306
    %4402 = vmatpush1.bf16.msra.mxu0 %v4305
    %4403 = vmatprep.subr.bf16.mxu0 %v4309
    %4404 = vmatpush1.bf16.msra.mxu0 %v4308
    %4405 = vmatprep.subr.bf16.mxu0 %v4312
    %4406 = vmatpush1.bf16.msra.mxu0 %v4311
    %4407 = vmatprep.subr.bf16.mxu0 %v4315
    %4408 = vmatpush1.bf16.msra.mxu0 %v4314
    %4409 = vmatprep.subr.bf16.mxu0 %v4318
    %4410 = vmatpush1.bf16.msra.mxu0 %v4317
    %4411 = vmatprep.subr.bf16.mxu0 %v4321
    %4412 = vmatpush1.bf16.msra.mxu0 %v4320
    %4413 = vmatprep.subr.bf16.mxu0 %v4324
    %4414 = vmatpush1.bf16.msra.mxu0 %v4323
    %4415 = vmatprep.subr.bf16.mxu0 %v4327
    %4416 = vmatpush1.bf16.msra.mxu0 %v4326
    %4417 = vmatprep.subr.bf16.mxu0 %v4330
    %4418 = vmatpush1.bf16.msra.mxu0 %v4329
    %4419 = vmatprep.subr.bf16.mxu0 %v4333
    %4420 = vmatpush1.bf16.msra.mxu0 %v4332
    %4421 = vmatprep.subr.bf16.mxu0 %v4336
    %4422 = vmatpush1.bf16.msra.mxu0 %v4335
    %4423 = vmatprep.subr.bf16.mxu0 %v4339
    %4424 = vmatpush1.bf16.msra.mxu0 %v4338
    %4425 = vmatprep.subr.bf16.mxu0 %v4342
    %4426 = vmatpush1.bf16.msra.mxu0 %v4341
    %4427 = vmatprep.subr.bf16.mxu0 %v4345
    %4428 = vmatpush1.bf16.msra.mxu0 %v4344
    %4429 = vmatprep.subr.bf16.mxu0 %v4348
    %4430 = vmatpush1.bf16.msra.mxu0 %v4347
    %4431 = vmatprep.subr.bf16.mxu0 %v4351
    %4432 = vmatpush1.bf16.msra.mxu0 %v4350
    %4433 = vmatprep.mubr.bf16.mxu0 %v4142
    %4434 = vmatmul.mubr.bf16.gmra.mrb[0].mxu0 %v4134
    %v4435 = vpop.f32.mrb[0].mxu0
    %v4436 = vadd.f32 0.0, %v4435
    %v4437 = vpop.f32.mrb[0].mxu0
    %v4438 = vadd.f32 0.0, %v4437
    %v4439 = vpop.f32.mrb[0].mxu0
    %v4440 = vpop.f32.mrb[0].mxu0
    %4441 = vdwg.mxu0
    %4442 = vmatprep.subr.bf16.mxu0 0
    %4443 = vmatpush1.bf16.msra.mxu0 %v4307
    %4444 = vmatprep.subr.bf16.mxu0 0
    %4445 = vmatpush1.bf16.msra.mxu0 %v4310
    %4446 = vmatprep.subr.bf16.mxu0 0
    %4447 = vmatpush1.bf16.msra.mxu0 %v4313
    %4448 = vmatprep.subr.bf16.mxu0 0
    %4449 = vmatpush1.bf16.msra.mxu0 %v4316
    %4450 = vmatprep.subr.bf16.mxu0 0
    %4451 = vmatpush1.bf16.msra.mxu0 %v4319
    %4452 = vmatprep.subr.bf16.mxu0 0
    %4453 = vmatpush1.bf16.msra.mxu0 %v4322
    %4454 = vmatprep.subr.bf16.mxu0 0
    %4455 = vmatpush1.bf16.msra.mxu0 %v4325
    %4456 = vmatprep.subr.bf16.mxu0 0
    %4457 = vmatpush1.bf16.msra.mxu0 %v4328
    %4458 = vmatprep.subr.bf16.mxu0 0
    %4459 = vmatpush1.bf16.msra.mxu0 %v4331
    %4460 = vmatprep.subr.bf16.mxu0 0
    %4461 = vmatpush1.bf16.msra.mxu0 %v4334
    %4462 = vmatprep.subr.bf16.mxu0 0
    %4463 = vmatpush1.bf16.msra.mxu0 %v4337
    %4464 = vmatprep.subr.bf16.mxu0 0
    %4465 = vmatpush1.bf16.msra.mxu0 %v4340
    %4466 = vmatprep.subr.bf16.mxu0 0
    %4467 = vmatpush1.bf16.msra.mxu0 %v4343
    %4468 = vmatprep.subr.bf16.mxu0 0
    %4469 = vmatpush1.bf16.msra.mxu0 %v4346
    %4470 = vmatprep.subr.bf16.mxu0 0
    %4471 = vmatpush1.bf16.msra.mxu0 %v4349
    %4472 = vmatprep.subr.bf16.mxu0 0
    %4473 = vmatpush1.bf16.msra.mxu0 %v4352
    %4474 = vmatprep.mubr.bf16.mxu0 %v4142
    %4475 = vmatmul.mubr.bf16.gmra.mrb[0].mxu0 %v4134
    %v4476 = vpop.f32.mrb[0].mxu0
    %v4477 = vadd.f32 0.0, %v4476
    %v4478 = vpop.f32.mrb[0].mxu0
    %v4479 = vpop.f32.mrb[0].mxu0
    %v4480 = vpop.f32.mrb[0].mxu0
    %4481 = vdwg.mxu0
    %v4482 = vadd.f32 %v4056, %v4436
    %v4483 = vadd.f32 %v4057, %v4438
    %v4484 = vadd.f32 %v4058, %v4477
    %v4485 = vld [vmem:[#allocation3] sm:$0x80]
    %v4486 = vld [vmem:[#allocation3 + $0x8] sm:$0x80]
    %v4487 = vld [vmem:[#allocation3 + $0x10] sm:$0x7]
    %v4488 = vld [vmem:[#allocation3 + $0x18] sm:$0x7]
    %v4489 = vpack.c.bf16 %v4487, %v4485
    %v4490 = vpack.c.bf16 %v4488, %v4486
    %v4491 = vld [vmem:[#allocation3 + $0x10] sm:$0xf]
    %v4492 = vld [vmem:[#allocation3 + $0x18] sm:$0xf]
    %v4493 = vpack.c.bf16 %v4491, %v4491
    %v4494 = vpack.c.bf16 %v4492, %v4492
    %4495 = vmatprep.subr.bf16.mxu0 %v3132
    %4496 = vmatpush1.bf16.msra.mxu0 %v3131
    %4497 = vmatprep.subr.bf16.mxu0 %v3135
    %4498 = vmatpush1.bf16.msra.mxu0 %v3134
    %4499 = vmatprep.subr.bf16.mxu0 %v3138
    %4500 = vmatpush1.bf16.msra.mxu0 %v3137
    %4501 = vmatprep.subr.bf16.mxu0 %v3141
    %4502 = vmatpush1.bf16.msra.mxu0 %v3140
    %4503 = vmatprep.subr.bf16.mxu0 %v3144
    %4504 = vmatpush1.bf16.msra.mxu0 %v3143
    %4505 = vmatprep.subr.bf16.mxu0 %v3147
    %4506 = vmatpush1.bf16.msra.mxu0 %v3146
    %4507 = vmatprep.subr.bf16.mxu0 %v3150
    %4508 = vmatpush1.bf16.msra.mxu0 %v3149
    %4509 = vmatprep.subr.bf16.mxu0 %v3153
    %4510 = vmatpush1.bf16.msra.mxu0 %v3152
    %4511 = vmatprep.subr.bf16.mxu0 %v3156
    %4512 = vmatpush1.bf16.msra.mxu0 %v3155
    %4513 = vmatprep.subr.bf16.mxu0 %v3159
    %4514 = vmatpush1.bf16.msra.mxu0 %v3158
    %4515 = vmatprep.subr.bf16.mxu0 %v3162
    %4516 = vmatpush1.bf16.msra.mxu0 %v3161
    %4517 = vmatprep.subr.bf16.mxu0 %v3165
    %4518 = vmatpush1.bf16.msra.mxu0 %v3164
    %4519 = vmatprep.subr.bf16.mxu0 %v3168
    %4520 = vmatpush1.bf16.msra.mxu0 %v3167
    %4521 = vmatprep.subr.bf16.mxu0 %v3171
    %4522 = vmatpush1.bf16.msra.mxu0 %v3170
    %4523 = vmatprep.subr.bf16.mxu0 %v3174
    %4524 = vmatpush1.bf16.msra.mxu0 %v3173
    %4525 = vmatprep.subr.bf16.mxu0 %v3177
    %4526 = vmatpush1.bf16.msra.mxu0 %v3176
    %4527 = vmatprep.mubr.bf16.mxu0 %v4494
    %4528 = vmatmul.mubr.bf16.gmra.mrb[0].mxu0 %v4493
    %v4529 = vpop.f32.mrb[0].mxu0
    %v4530 = vadd.f32 0.0, %v4529
    %v4531 = vpop.f32.mrb[0].mxu0
    %v4532 = vadd.f32 0.0, %v4531
    %v4533 = vpop.f32.mrb[0].mxu0
    %v4534 = vpop.f32.mrb[0].mxu0
    %4535 = vdwg.mxu0
    %4536 = vmatprep.subr.bf16.mxu0 0
    %4537 = vmatpush1.bf16.msra.mxu0 %v3133
    %4538 = vmatprep.subr.bf16.mxu0 0
    %4539 = vmatpush1.bf16.msra.mxu0 %v3136
    %4540 = vmatprep.subr.bf16.mxu0 0
    %4541 = vmatpush1.bf16.msra.mxu0 %v3139
    %4542 = vmatprep.subr.bf16.mxu0 0
    %4543 = vmatpush1.bf16.msra.mxu0 %v3142
    %4544 = vmatprep.subr.bf16.mxu0 0
    %4545 = vmatpush1.bf16.msra.mxu0 %v3145
    %4546 = vmatprep.subr.bf16.mxu0 0
    %4547 = vmatpush1.bf16.msra.mxu0 %v3148
    %4548 = vmatprep.subr.bf16.mxu0 0
    %4549 = vmatpush1.bf16.msra.mxu0 %v3151
    %4550 = vmatprep.subr.bf16.mxu0 0
    %4551 = vmatpush1.bf16.msra.mxu0 %v3154
    %4552 = vmatprep.subr.bf16.mxu0 0
    %4553 = vmatpush1.bf16.msra.mxu0 %v3157
    %4554 = vmatprep.subr.bf16.mxu0 0
    %4555 = vmatpush1.bf16.msra.mxu0 %v3160
    %4556 = vmatprep.subr.bf16.mxu0 0
    %4557 = vmatpush1.bf16.msra.mxu0 %v3163
    %4558 = vmatprep.subr.bf16.mxu0 0
    %4559 = vmatpush1.bf16.msra.mxu0 %v3166
    %4560 = vmatprep.subr.bf16.mxu0 0
    %4561 = vmatpush1.bf16.msra.mxu0 %v3169
    %4562 = vmatprep.subr.bf16.mxu0 0
    %4563 = vmatpush1.bf16.msra.mxu0 %v3172
    %4564 = vmatprep.subr.bf16.mxu0 0
    %4565 = vmatpush1.bf16.msra.mxu0 %v3175
    %4566 = vmatprep.subr.bf16.mxu0 0
    %4567 = vmatpush1.bf16.msra.mxu0 %v3178
    %4568 = vmatprep.mubr.bf16.mxu0 %v4494
    %4569 = vmatmul.mubr.bf16.gmra.mrb[0].mxu0 %v4493
    %v4570 = vpop.f32.mrb[0].mxu0
    %v4571 = vadd.f32 0.0, %v4570
    %v4572 = vpop.f32.mrb[0].mxu0
    %v4573 = vpop.f32.mrb[0].mxu0
    %v4574 = vpop.f32.mrb[0].mxu0
    %4575 = vdwg.mxu0
    %v4577 = vshrl.u32 %v4489, 16
    %v4579 = vrot.slane %v4577, 3
    %v4580 = vshll.u32 %v4489, 16
    %v4582 = vrot.slane %v4580, 4
    %v4583 = vor.u32 %v4579, %v4582
    %v4585 = vshrl.u32 %v4490, 16
    %v4587 = vrot.slane %v4585, 3
    %v4588 = vshll.u32 %v4490, 16
    %v4590 = vrot.slane %v4588, 4
    %v4591 = vor.u32 %v4587, %v4590
    %4594 = vmatprep.subr.bf16.mxu0 %v3469
    %4595 = vmatpush1.bf16.msra.mxu0 %v3468
    %4596 = vmatprep.subr.bf16.mxu0 %v3472
    %4597 = vmatpush1.bf16.msra.mxu0 %v3471
    %4598 = vmatprep.subr.bf16.mxu0 %v3475
    %4599 = vmatpush1.bf16.msra.mxu0 %v3474
    %4600 = vmatprep.subr.bf16.mxu0 %v3478
    %4601 = vmatpush1.bf16.msra.mxu0 %v3477
    %4602 = vmatprep.subr.bf16.mxu0 %v3481
    %4603 = vmatpush1.bf16.msra.mxu0 %v3480
    %4604 = vmatprep.subr.bf16.mxu0 %v3484
    %4605 = vmatpush1.bf16.msra.mxu0 %v3483
    %4606 = vmatprep.subr.bf16.mxu0 %v3487
    %4607 = vmatpush1.bf16.msra.mxu0 %v3486
    %4608 = vmatprep.subr.bf16.mxu0 %v3490
    %4609 = vmatpush1.bf16.msra.mxu0 %v3489
    %4610 = vmatprep.subr.bf16.mxu0 %v3493
    %4611 = vmatpush1.bf16.msra.mxu0 %v3492
    %4612 = vmatprep.subr.bf16.mxu0 %v3496
    %4613 = vmatpush1.bf16.msra.mxu0 %v3495
    %4614 = vmatprep.subr.bf16.mxu0 %v3499
    %4615 = vmatpush1.bf16.msra.mxu0 %v3498
    %4616 = vmatprep.subr.bf16.mxu0 %v3502
    %4617 = vmatpush1.bf16.msra.mxu0 %v3501
    %4618 = vmatprep.subr.bf16.mxu0 %v3505
    %4619 = vmatpush1.bf16.msra.mxu0 %v3504
    %4620 = vmatprep.subr.bf16.mxu0 %v3508
    %4621 = vmatpush1.bf16.msra.mxu0 %v3507
    %4622 = vmatprep.subr.bf16.mxu0 %v3511
    %4623 = vmatpush1.bf16.msra.mxu0 %v3510
    %4624 = vmatprep.subr.bf16.mxu0 %v3514
    %4625 = vmatpush1.bf16.msra.mxu0 %v3513
    %4626 = vmatprep.mubr.bf16.mxu0 %v4591
    %4627 = vmatmul.mubr.bf16.gmra.mrb[0].mxu0 %v4583
    %v4628 = vpop.f32.mrb[0].mxu0
    %v4629 = vadd.f32 %v4530, %v4628
    %v4630 = vpop.f32.mrb[0].mxu0
    %v4631 = vadd.f32 %v4532, %v4630
    %v4632 = vpop.f32.mrb[0].mxu0
    %v4633 = vpop.f32.mrb[0].mxu0
    %4634 = vdwg.mxu0
    %4635 = vmatprep.subr.bf16.mxu0 0
    %4636 = vmatpush1.bf16.msra.mxu0 %v3470
    %4637 = vmatprep.subr.bf16.mxu0 0
    %4638 = vmatpush1.bf16.msra.mxu0 %v3473
    %4639 = vmatprep.subr.bf16.mxu0 0
    %4640 = vmatpush1.bf16.msra.mxu0 %v3476
    %4641 = vmatprep.subr.bf16.mxu0 0
    %4642 = vmatpush1.bf16.msra.mxu0 %v3479
    %4643 = vmatprep.subr.bf16.mxu0 0
    %4644 = vmatpush1.bf16.msra.mxu0 %v3482
    %4645 = vmatprep.subr.bf16.mxu0 0
    %4646 = vmatpush1.bf16.msra.mxu0 %v3485
    %4647 = vmatprep.subr.bf16.mxu0 0
    %4648 = vmatpush1.bf16.msra.mxu0 %v3488
    %4649 = vmatprep.subr.bf16.mxu0 0
    %4650 = vmatpush1.bf16.msra.mxu0 %v3491
    %4651 = vmatprep.subr.bf16.mxu0 0
    %4652 = vmatpush1.bf16.msra.mxu0 %v3494
    %4653 = vmatprep.subr.bf16.mxu0 0
    %4654 = vmatpush1.bf16.msra.mxu0 %v3497
    %4655 = vmatprep.subr.bf16.mxu0 0
    %4656 = vmatpush1.bf16.msra.mxu0 %v3500
    %4657 = vmatprep.subr.bf16.mxu0 0
    %4658 = vmatpush1.bf16.msra.mxu0 %v3503
    %4659 = vmatprep.subr.bf16.mxu0 0
    %4660 = vmatpush1.bf16.msra.mxu0 %v3506
    %4661 = vmatprep.subr.bf16.mxu0 0
    %4662 = vmatpush1.bf16.msra.mxu0 %v3509
    %4663 = vmatprep.subr.bf16.mxu0 0
    %4664 = vmatpush1.bf16.msra.mxu0 %v3512
    %4665 = vmatprep.subr.bf16.mxu0 0
    %4666 = vmatpush1.bf16.msra.mxu0 %v3515
    %4667 = vmatprep.mubr.bf16.mxu0 %v4591
    %4668 = vmatmul.mubr.bf16.gmra.mrb[0].mxu0 %v4583
    %v4669 = vpop.f32.mrb[0].mxu0
    %v4670 = vadd.f32 %v4571, %v4669
    %v4671 = vpop.f32.mrb[0].mxu0
    %v4672 = vpop.f32.mrb[0].mxu0
    %v4673 = vpop.f32.mrb[0].mxu0
    %4674 = vdwg.mxu0
    %v4675 = vld [vmem:[#allocation3 + $0x10] sm:$0x1e]
    %v4676 = vld [vmem:[#allocation3 + $0x18] sm:$0x1e]
    %v4677 = vpack.c.bf16 %v4675, %v4675
    %v4678 = vpack.c.bf16 %v4676, %v4676
    %v4680 = vshrl.u32 %v4677, 16
    %v4682 = vshll.u32 %v4677, 16
    %v4684 = vrot.slane %v4682, 1
    %v4685 = vor.u32 %v4680, %v4684
    %v4687 = vshrl.u32 %v4678, 16
    %v4689 = vshll.u32 %v4678, 16
    %v4691 = vrot.slane %v4689, 1
    %v4692 = vor.u32 %v4687, %v4691
    %4695 = vmatprep.subr.bf16.mxu0 %v3880
    %4696 = vmatpush1.bf16.msra.mxu0 %v3879
    %4697 = vmatprep.subr.bf16.mxu0 %v3883
    %4698 = vmatpush1.bf16.msra.mxu0 %v3882
    %4699 = vmatprep.subr.bf16.mxu0 %v3886
    %4700 = vmatpush1.bf16.msra.mxu0 %v3885
    %4701 = vmatprep.subr.bf16.mxu0 %v3889
    %4702 = vmatpush1.bf16.msra.mxu0 %v3888
    %4703 = vmatprep.subr.bf16.mxu0 %v3892
    %4704 = vmatpush1.bf16.msra.mxu0 %v3891
    %4705 = vmatprep.subr.bf16.mxu0 %v3895
    %4706 = vmatpush1.bf16.msra.mxu0 %v3894
    %4707 = vmatprep.subr.bf16.mxu0 %v3898
    %4708 = vmatpush1.bf16.msra.mxu0 %v3897
    %4709 = vmatprep.subr.bf16.mxu0 %v3901
    %4710 = vmatpush1.bf16.msra.mxu0 %v3900
    %4711 = vmatprep.subr.bf16.mxu0 %v3904
    %4712 = vmatpush1.bf16.msra.mxu0 %v3903
    %4713 = vmatprep.subr.bf16.mxu0 %v3907
    %4714 = vmatpush1.bf16.msra.mxu0 %v3906
    %4715 = vmatprep.subr.bf16.mxu0 %v3910
    %4716 = vmatpush1.bf16.msra.mxu0 %v3909
    %4717 = vmatprep.subr.bf16.mxu0 %v3913
    %4718 = vmatpush1.bf16.msra.mxu0 %v3912
    %4719 = vmatprep.subr.bf16.mxu0 %v3916
    %4720 = vmatpush1.bf16.msra.mxu0 %v3915
    %4721 = vmatprep.subr.bf16.mxu0 %v3919
    %4722 = vmatpush1.bf16.msra.mxu0 %v3918
    %4723 = vmatprep.subr.bf16.mxu0 %v3922
    %4724 = vmatpush1.bf16.msra.mxu0 %v3921
    %4725 = vmatprep.subr.bf16.mxu0 %v3925
    %4726 = vmatpush1.bf16.msra.mxu0 %v3924
    %4727 = vmatprep.mubr.bf16.mxu0 %v4692
    %4728 = vmatmul.mubr.bf16.gmra.mrb[0].mxu0 %v4685
    %v4729 = vpop.f32.mrb[0].mxu0
    %v4730 = vadd.f32 0.0, %v4729
    %v4731 = vpop.f32.mrb[0].mxu0
    %v4732 = vadd.f32 0.0, %v4731
    %v4733 = vpop.f32.mrb[0].mxu0
    %v4734 = vpop.f32.mrb[0].mxu0
    %4735 = vdwg.mxu0
    %4736 = vmatprep.subr.bf16.mxu0 0
    %4737 = vmatpush1.bf16.msra.mxu0 %v3881
    %4738 = vmatprep.subr.bf16.mxu0 0
    %4739 = vmatpush1.bf16.msra.mxu0 %v3884
    %4740 = vmatprep.subr.bf16.mxu0 0
    %4741 = vmatpush1.bf16.msra.mxu0 %v3887
    %4742 = vmatprep.subr.bf16.mxu0 0
    %4743 = vmatpush1.bf16.msra.mxu0 %v3890
    %4744 = vmatprep.subr.bf16.mxu0 0
    %4745 = vmatpush1.bf16.msra.mxu0 %v3893
    %4746 = vmatprep.subr.bf16.mxu0 0
    %4747 = vmatpush1.bf16.msra.mxu0 %v3896
    %4748 = vmatprep.subr.bf16.mxu0 0
    %4749 = vmatpush1.bf16.msra.mxu0 %v3899
    %4750 = vmatprep.subr.bf16.mxu0 0
    %4751 = vmatpush1.bf16.msra.mxu0 %v3902
    %4752 = vmatprep.subr.bf16.mxu0 0
    %4753 = vmatpush1.bf16.msra.mxu0 %v3905
    %4754 = vmatprep.subr.bf16.mxu0 0
    %4755 = vmatpush1.bf16.msra.mxu0 %v3908
    %4756 = vmatprep.subr.bf16.mxu0 0
    %4757 = vmatpush1.bf16.msra.mxu0 %v3911
    %4758 = vmatprep.subr.bf16.mxu0 0
    %4759 = vmatpush1.bf16.msra.mxu0 %v3914
    %4760 = vmatprep.subr.bf16.mxu0 0
    %4761 = vmatpush1.bf16.msra.mxu0 %v3917
    %4762 = vmatprep.subr.bf16.mxu0 0
    %4763 = vmatpush1.bf16.msra.mxu0 %v3920
    %4764 = vmatprep.subr.bf16.mxu0 0
    %4765 = vmatpush1.bf16.msra.mxu0 %v3923
    %4766 = vmatprep.subr.bf16.mxu0 0
    %4767 = vmatpush1.bf16.msra.mxu0 %v3926
    %4768 = vmatprep.mubr.bf16.mxu0 %v4692
    %4769 = vmatmul.mubr.bf16.gmra.mrb[0].mxu0 %v4685
    %v4770 = vpop.f32.mrb[0].mxu0
    %v4771 = vadd.f32 0.0, %v4770
    %v4772 = vpop.f32.mrb[0].mxu0
    %v4773 = vpop.f32.mrb[0].mxu0
    %v4774 = vpop.f32.mrb[0].mxu0
    %4775 = vdwg.mxu0
    %v4776 = vadd.f32 %v4629, %v4730
    %v4777 = vadd.f32 %v4631, %v4732
    %v4778 = vadd.f32 %v4670, %v4771
    %v4779 = vld [vmem:[#allocation3 + $0x10] sm:$0x3c]
    %v4780 = vld [vmem:[#allocation3 + $0x18] sm:$0x3c]
    %v4781 = vpack.c.bf16 %v4779, %v4779
    %v4782 = vpack.c.bf16 %v4780, %v4780
    %v4785 = vrot.slane %v4781, 1
    %v4786 = vrot.slane %v4782, 1
    %4789 = vmatprep.subr.bf16.mxu0 %v4306
    %4790 = vmatpush1.bf16.msra.mxu0 %v4305
    %4791 = vmatprep.subr.bf16.mxu0 %v4309
    %4792 = vmatpush1.bf16.msra.mxu0 %v4308
    %4793 = vmatprep.subr.bf16.mxu0 %v4312
    %4794 = vmatpush1.bf16.msra.mxu0 %v4311
    %4795 = vmatprep.subr.bf16.mxu0 %v4315
    %4796 = vmatpush1.bf16.msra.mxu0 %v4314
    %4797 = vmatprep.subr.bf16.mxu0 %v4318
    %4798 = vmatpush1.bf16.msra.mxu0 %v4317
    %4799 = vmatprep.subr.bf16.mxu0 %v4321
    %4800 = vmatpush1.bf16.msra.mxu0 %v4320
    %4801 = vmatprep.subr.bf16.mxu0 %v4324
    %4802 = vmatpush1.bf16.msra.mxu0 %v4323
    %4803 = vmatprep.subr.bf16.mxu0 %v4327
    %4804 = vmatpush1.bf16.msra.mxu0 %v4326
    %4805 = vmatprep.subr.bf16.mxu0 %v4330
    %4806 = vmatpush1.bf16.msra.mxu0 %v4329
    %4807 = vmatprep.subr.bf16.mxu0 %v4333
    %4808 = vmatpush1.bf16.msra.mxu0 %v4332
    %4809 = vmatprep.subr.bf16.mxu0 %v4336
    %4810 = vmatpush1.bf16.msra.mxu0 %v4335
    %4811 = vmatprep.subr.bf16.mxu0 %v4339
    %4812 = vmatpush1.bf16.msra.mxu0 %v4338
    %4813 = vmatprep.subr.bf16.mxu0 %v4342
    %4814 = vmatpush1.bf16.msra.mxu0 %v4341
    %4815 = vmatprep.subr.bf16.mxu0 %v4345
    %4816 = vmatpush1.bf16.msra.mxu0 %v4344
    %4817 = vmatprep.subr.bf16.mxu0 %v4348
    %4818 = vmatpush1.bf16.msra.mxu0 %v4347
    %4819 = vmatprep.subr.bf16.mxu0 %v4351
    %4820 = vmatpush1.bf16.msra.mxu0 %v4350
    %4821 = vmatprep.mubr.bf16.mxu0 %v4786
    %4822 = vmatmul.mubr.bf16.gmra.mrb[0].mxu0 %v4785
    %v4823 = vpop.f32.mrb[0].mxu0
    %v4824 = vadd.f32 0.0, %v4823
    %v4825 = vpop.f32.mrb[0].mxu0
    %v4826 = vadd.f32 0.0, %v4825
    %v4827 = vpop.f32.mrb[0].mxu0
    %v4828 = vpop.f32.mrb[0].mxu0
    %4829 = vdwg.mxu0
    %4830 = vmatprep.subr.bf16.mxu0 0
    %4831 = vmatpush1.bf16.msra.mxu0 %v4307
    %4832 = vmatprep.subr.bf16.mxu0 0
    %4833 = vmatpush1.bf16.msra.mxu0 %v4310
    %4834 = vmatprep.subr.bf16.mxu0 0
    %4835 = vmatpush1.bf16.msra.mxu0 %v4313
    %4836 = vmatprep.subr.bf16.mxu0 0
    %4837 = vmatpush1.bf16.msra.mxu0 %v4316
    %4838 = vmatprep.subr.bf16.mxu0 0
    %4839 = vmatpush1.bf16.msra.mxu0 %v4319
    %4840 = vmatprep.subr.bf16.mxu0 0
    %4841 = vmatpush1.bf16.msra.mxu0 %v4322
    %4842 = vmatprep.subr.bf16.mxu0 0
    %4843 = vmatpush1.bf16.msra.mxu0 %v4325
    %4844 = vmatprep.subr.bf16.mxu0 0
    %4845 = vmatpush1.bf16.msra.mxu0 %v4328
    %4846 = vmatprep.subr.bf16.mxu0 0
    %4847 = vmatpush1.bf16.msra.mxu0 %v4331
    %4848 = vmatprep.subr.bf16.mxu0 0
    %4849 = vmatpush1.bf16.msra.mxu0 %v4334
    %4850 = vmatprep.subr.bf16.mxu0 0
    %4851 = vmatpush1.bf16.msra.mxu0 %v4337
    %4852 = vmatprep.subr.bf16.mxu0 0
    %4853 = vmatpush1.bf16.msra.mxu0 %v4340
    %4854 = vmatprep.subr.bf16.mxu0 0
    %4855 = vmatpush1.bf16.msra.mxu0 %v4343
    %4856 = vmatprep.subr.bf16.mxu0 0
    %4857 = vmatpush1.bf16.msra.mxu0 %v4346
    %4858 = vmatprep.subr.bf16.mxu0 0
    %4859 = vmatpush1.bf16.msra.mxu0 %v4349
    %4860 = vmatprep.subr.bf16.mxu0 0
    %4861 = vmatpush1.bf16.msra.mxu0 %v4352
    %4862 = vmatprep.mubr.bf16.mxu0 %v4786
    %4863 = vmatmul.mubr.bf16.gmra.mrb[0].mxu0 %v4785
    %v4864 = vpop.f32.mrb[0].mxu0
    %v4865 = vadd.f32 0.0, %v4864
    %v4866 = vpop.f32.mrb[0].mxu0
    %v4867 = vpop.f32.mrb[0].mxu0
    %v4868 = vpop.f32.mrb[0].mxu0
    %4869 = vdwg.mxu0
    %v4870 = vadd.f32 %v4776, %v4824
    %v4871 = vadd.f32 %v4777, %v4826
    %v4872 = vadd.f32 %v4778, %v4865
    %v4873 = vld [vmem:[#allocation19] ss:$4 sm:$0x7]
    %s4874 = scalar_lea.vmem [#allocation19], 1
    %v4875 = vld [vmem:[%s4874] ss:$4 sm:$0x7]
    %s4876 = scalar_lea.vmem [#allocation19], 2
    %v4877 = vld [vmem:[%s4876] ss:$4 sm:$0x7]
    %v4879 = vlaneseq
    %v4880 = vshrl.u32 %v4879, 7
    %v4881 = vsub.s32 0, %v4880
    %v4882 = vrot.slane %v4873, %v4881
    %v4883 = vlaneseq
    %v4884 = vshrl.u32 %v4883, 7
    %v4885 = vsub.s32 1, %v4884
    %v4886 = vrot.slane %v4873, %v4885
    %v4887 = vlaneseq
    %v4888 = vshrl.u32 %v4887, 7
    %v4889 = vsub.s32 2, %v4888
    %v4890 = vrot.slane %v4873, %v4889
    %v4894 = vadd.f32 %v4482, %v4882
    %v4895 = vadd.f32 %v4483, %v4886
    %v4896 = vadd.f32 %v4484, %v4890
    %v4897 = vadd.f32 %v4870, %v4882
    %v4898 = vadd.f32 %v4871, %v4886
    %v4899 = vadd.f32 %v4872, %v4890
    %vm4900 = vcmask 1043456
    %v4901 = vsel %vm4900, %v4894, 0.0
    %v4902 = vrot.slane %v4901, 4
    %v4903 = vadd.f32 %v4901, %v4902
    %v4904 = vrot.slane %v4903, 2
    %v4905 = vadd.f32 %v4903, %v4904
    %v4906 = vrot.slane %v4905, 1
    %v4907 = vadd.f32 %v4905, %v4906
    %v4908 = vsel %vm4900, %v4895, 0.0
    %v4909 = vrot.slane %v4908, 4
    %v4910 = vadd.f32 %v4908, %v4909
    %v4911 = vrot.slane %v4910, 2
    %v4912 = vadd.f32 %v4910, %v4911
    %v4913 = vrot.slane %v4912, 1
    %v4914 = vadd.f32 %v4912, %v4913
    %v4915 = vsel %vm4900, %v4896, 0.0
    %v4916 = vrot.slane %v4915, 4
    %v4917 = vadd.f32 %v4915, %v4916
    %v4918 = vrot.slane %v4917, 2
    %v4919 = vadd.f32 %v4917, %v4918
    %v4920 = vrot.slane %v4919, 1
    %v4921 = vadd.f32 %v4919, %v4920
    %v4922 = vsel %vm4900, %v4897, 0.0
    %v4923 = vrot.slane %v4922, 4
    %v4924 = vadd.f32 %v4922, %v4923
    %v4925 = vrot.slane %v4924, 2
    %v4926 = vadd.f32 %v4924, %v4925
    %v4927 = vrot.slane %v4926, 1
    %v4928 = vadd.f32 %v4926, %v4927
    %v4929 = vsel %vm4900, %v4898, 0.0
    %v4930 = vrot.slane %v4929, 4
    %v4931 = vadd.f32 %v4929, %v4930
    %v4932 = vrot.slane %v4931, 2
    %v4933 = vadd.f32 %v4931, %v4932
    %v4934 = vrot.slane %v4933, 1
    %v4935 = vadd.f32 %v4933, %v4934
    %v4936 = vsel %vm4900, %v4899, 0.0
    %v4937 = vrot.slane %v4936, 4
    %v4938 = vadd.f32 %v4936, %v4937
    %v4939 = vrot.slane %v4938, 2
    %v4940 = vadd.f32 %v4938, %v4939
    %v4941 = vrot.slane %v4940, 1
    %v4942 = vadd.f32 %v4940, %v4941
    %v4943 = vadd.f32 %v4907, %v4928
    %v4944 = vadd.f32 %v4914, %v4935
    %v4945 = vadd.f32 %v4921, %v4942
    %v4946 = vmul.f32 %v4943, 0.125
    %v4947 = vmul.f32 %v4944, 0.125
    %v4948 = vmul.f32 %v4945, 0.125
    %v4949 = vsub.f32 %v4894, %v4946
    %v4950 = vsub.f32 %v4895, %v4947
    %v4951 = vsub.f32 %v4896, %v4948
    %v4952 = vmul.f32 %v4949, %v4949
    %v4953 = vmul.f32 %v4950, %v4950
    %v4954 = vmul.f32 %v4951, %v4951
    %v4955 = vsel %vm4900, %v4952, 0.0
    %v4956 = vrot.slane %v4955, 4
    %v4957 = vadd.f32 %v4955, %v4956
    %v4958 = vrot.slane %v4957, 2
    %v4959 = vadd.f32 %v4957, %v4958
    %v4960 = vrot.slane %v4959, 1
    %v4961 = vadd.f32 %v4959, %v4960
    %v4962 = vsel %vm4900, %v4953, 0.0
    %v4963 = vrot.slane %v4962, 4
    %v4964 = vadd.f32 %v4962, %v4963
    %v4965 = vrot.slane %v4964, 2
    %v4966 = vadd.f32 %v4964, %v4965
    %v4967 = vrot.slane %v4966, 1
    %v4968 = vadd.f32 %v4966, %v4967
    %v4969 = vsel %vm4900, %v4954, 0.0
    %v4970 = vrot.slane %v4969, 4
    %v4971 = vadd.f32 %v4969, %v4970
    %v4972 = vrot.slane %v4971, 2
    %v4973 = vadd.f32 %v4971, %v4972
    %v4974 = vrot.slane %v4973, 1
    %v4975 = vadd.f32 %v4973, %v4974
    %v4976 = vsub.f32 %v4897, %v4946
    %v4977 = vsub.f32 %v4898, %v4947
    %v4978 = vsub.f32 %v4899, %v4948
    %v4979 = vmul.f32 %v4976, %v4976
    %v4980 = vmul.f32 %v4977, %v4977
    %v4981 = vmul.f32 %v4978, %v4978
    %v4982 = vsel %vm4900, %v4979, 0.0
    %v4983 = vrot.slane %v4982, 4
    %v4984 = vadd.f32 %v4982, %v4983
    %v4985 = vrot.slane %v4984, 2
    %v4986 = vadd.f32 %v4984, %v4985
    %v4987 = vrot.slane %v4986, 1
    %v4988 = vadd.f32 %v4986, %v4987
    %v4989 = vsel %vm4900, %v4980, 0.0
    %v4990 = vrot.slane %v4989, 4
    %v4991 = vadd.f32 %v4989, %v4990
    %v4992 = vrot.slane %v4991, 2
    %v4993 = vadd.f32 %v4991, %v4992
    %v4994 = vrot.slane %v4993, 1
    %v4995 = vadd.f32 %v4993, %v4994
    %v4996 = vsel %vm4900, %v4981, 0.0
    %v4997 = vrot.slane %v4996, 4
    %v4998 = vadd.f32 %v4996, %v4997
    %v4999 = vrot.slane %v4998, 2
    %v5000 = vadd.f32 %v4998, %v4999
    %v5001 = vrot.slane %v5000, 1
    %v5002 = vadd.f32 %v5000, %v5001
    %v5003 = vadd.f32 %v4961, %v4988
    %v5004 = vadd.f32 %v4968, %v4995
    %v5005 = vadd.f32 %v4975, %v5002
    %v5006 = vmul.f32 %v5003, 0.125
    %v5007 = vmul.f32 %v5004, 0.125
    %v5008 = vmul.f32 %v5005, 0.125
    %v5009 = vadd.f32 %v5006, 1e-05
    %v5010 = vadd.f32 %v5007, 1e-05
    %v5011 = vadd.f32 %v5008, 1e-05
    %v5012 = vrsqrt.pop %v5009
    %v5013 = vrsqrt.pop %v5010
    %v5014 = vrsqrt.pop %v5011
    %v5018 = vcombine.low %v5012, %v5013
    %v5020 = vunpack.c.l.s4 1966171168
    %v5021 = vunpack.c.0.s8 %v5020
    %v5022 = vlaneseq
    %v5023 = vshrl.u32 %v5022, 7
    %v5024 = vsub.s32 %v5021, %v5023
    %v5025 = vrot.slane %v5018, %v5024
    %v5027 = vunpack.c.l.s4 1966171168
    %v5028 = vunpack.c.0.s8 %v5027
    %v5029 = vlaneseq
    %v5030 = vshrl.u32 %v5029, 7
    %v5031 = vsub.s32 %v5028, %v5030
    %v5032 = vrot.slane %v5014, %v5031
    %v5033 = vcombine.low %v5025, %v5032
    %v5035 = vunpack.c.l.s4 1966171168
    %v5036 = vunpack.c.0.s8 %v5035
    %v5037 = vlaneseq
    %v5038 = vshrl.u32 %v5037, 7
    %v5039 = vsub.s32 %v5036, %v5038
    %v5040 = vrot.slane %v5033, %v5039
    %v5042 = vmul.f32 %v4875, %v5040
    %v5044 = vlaneseq
    %v5045 = vshrl.u32 %v5044, 7
    %v5046 = vsub.s32 0, %v5045
    %v5047 = vrot.slane %v5042, %v5046
    %v5048 = vlaneseq
    %v5049 = vshrl.u32 %v5048, 7
    %v5050 = vsub.s32 1, %v5049
    %v5051 = vrot.slane %v5042, %v5050
    %v5052 = vlaneseq
    %v5053 = vshrl.u32 %v5052, 7
    %v5054 = vsub.s32 2, %v5053
    %v5055 = vrot.slane %v5042, %v5054
    %v5059 = vmul.f32 %v4949, %v5047
    %v5060 = vmul.f32 %v4950, %v5051
    %v5061 = vmul.f32 %v4951, %v5055
    %v5063 = vlaneseq
    %v5064 = vshrl.u32 %v5063, 7
    %v5065 = vsub.s32 0, %v5064
    %v5066 = vrot.slane %v4877, %v5065
    %v5067 = vlaneseq
    %v5068 = vshrl.u32 %v5067, 7
    %v5069 = vsub.s32 1, %v5068
    %v5070 = vrot.slane %v4877, %v5069
    %v5071 = vlaneseq
    %v5072 = vshrl.u32 %v5071, 7
    %v5073 = vsub.s32 2, %v5072
    %v5074 = vrot.slane %v4877, %v5073
    %v5078 = vadd.f32 %v5059, %v5066
    %v5079 = vadd.f32 %v5060, %v5070
    %v5080 = vadd.f32 %v5061, %v5074
    %vm5081 = vcmp.ge.f32.partialorder %v5078, 0.0
    %vm5082 = vcmp.ge.f32.partialorder %v5079, 0.0
    %vm5083 = vcmp.ge.f32.partialorder %v5080, 0.0
    %v5084 = vmul.f32 %v5078, 0.2
    %v5085 = vmul.f32 %v5079, 0.2
    %v5086 = vmul.f32 %v5080, 0.2
    %v5087 = vsel %vm5081, %v5078, %v5084
    %v5088 = vsel %vm5082, %v5079, %v5085
    %v5089 = vsel %vm5083, %v5080, %v5086
    %v5090 = vmul.f32 %v4976, %v5047
    %v5091 = vmul.f32 %v4977, %v5051
    %v5092 = vmul.f32 %v4978, %v5055
    %v5093 = vadd.f32 %v5090, %v5066
    %v5094 = vadd.f32 %v5091, %v5070
    %v5095 = vadd.f32 %v5092, %v5074
    %vm5096 = vcmp.ge.f32.partialorder %v5093, 0.0
    %vm5097 = vcmp.ge.f32.partialorder %v5094, 0.0
    %vm5098 = vcmp.ge.f32.partialorder %v5095, 0.0
    %v5099 = vmul.f32 %v5093, 0.2
    %v5100 = vmul.f32 %v5094, 0.2
    %v5101 = vmul.f32 %v5095, 0.2
    %v5102 = vsel %vm5096, %v5093, %v5099
    %v5103 = vsel %vm5097, %v5094, %v5100
    %v5104 = vsel %vm5098, %v5095, %v5101
    %5105 = vst [vmem:[#allocation4] sm:$0xf] %v5087
    %5106 = vst [vmem:[#allocation4 + $0x8] sm:$0xf] %v5088
    %5107 = vst [vmem:[#allocation4 + $0x10] sm:$0xf] %v5089
    %v5111 = vrot.slane %v5102, 4
    %v5112 = vrot.slane %v5103, 4
    %v5113 = vrot.slane %v5104, 4
    %5117 = vst [vmem:[#allocation4] sm:$0xf0] %v5111
    %5118 = vst [vmem:[#allocation4 + $0x8] sm:$0xf0] %v5112
    %5119 = vst [vmem:[#allocation4 + $0x10] sm:$0xf0] %v5113
    %v5120 = vld [vmem:[#allocation4] ss:$8 sm:$0x7]
    %v5122 = vlaneseq
    %v5123 = vshrl.u32 %v5122, 7
    %v5124 = vsub.s32 0, %v5123
    %v5125 = vrot.slane %v5120, %v5124
    %v5126 = vlaneseq
    %v5127 = vshrl.u32 %v5126, 7
    %v5128 = vsub.s32 1, %v5127
    %v5129 = vrot.slane %v5120, %v5128
    %v5130 = vlaneseq
    %v5131 = vshrl.u32 %v5130, 7
    %v5132 = vsub.s32 2, %v5131
    %v5133 = vrot.slane %v5120, %v5132
    %v5137 = vpack.c.bf16 %v5125, %v5125
    %v5138 = vpack.c.bf16 %v5129, %v5129
    %v5139 = vpack.c.bf16 %v5133, %v5133
    %v5140 = vld [vmem:[#allocation20] sm:$0xf]
    %v5141 = vld [vmem:[#allocation20 + $0x4] sm:$0xf]
    %v5142 = vld [vmem:[#allocation20 + $0x8] sm:$0xf]
    %v5143 = vld [vmem:[#allocation20 + $0xc] sm:$0xf]
    %v5144 = vld [vmem:[#allocation20 + $0x10] sm:$0xf]
    %v5145 = vld [vmem:[#allocation20 + $0x14] sm:$0xf]
    %v5146 = vld [vmem:[#allocation20 + $0x18] sm:$0xf]
    %v5147 = vld [vmem:[#allocation20 + $0x1c] sm:$0xf]
    %v5148 = vld [vmem:[#allocation20 + $0x20] sm:$0xf]
    %v5149 = vld [vmem:[#allocation20 + $0x24] sm:$0xf]
    %v5150 = vld [vmem:[#allocation20 + $0x28] sm:$0xf]
    %v5151 = vld [vmem:[#allocation20 + $0x2c] sm:$0xf]
    %v5152 = vld [vmem:[#allocation20 + $0x30] sm:$0xf]
    %v5153 = vld [vmem:[#allocation20 + $0x34] sm:$0xf]
    %v5154 = vld [vmem:[#allocation20 + $0x38] sm:$0xf]
    %v5155 = vld [vmem:[#allocation20 + $0x3c] sm:$0xf]
    %v5156 = vld [vmem:[#allocation20 + $0x40] sm:$0xf]
    %v5157 = vld [vmem:[#allocation20 + $0x44] sm:$0xf]
    %v5158 = vld [vmem:[#allocation20 + $0x48] sm:$0xf]
    %v5159 = vld [vmem:[#allocation20 + $0x4c] sm:$0xf]
    %v5160 = vld [vmem:[#allocation20 + $0x50] sm:$0xf]
    %v5161 = vld [vmem:[#allocation20 + $0x54] sm:$0xf]
    %v5162 = vld [vmem:[#allocation20 + $0x58] sm:$0xf]
    %v5163 = vld [vmem:[#allocation20 + $0x5c] sm:$0xf]
    %v5164 = vld [vmem:[#allocation20 + $0x60] sm:$0xf]
    %v5165 = vld [vmem:[#allocation20 + $0x64] sm:$0xf]
    %v5166 = vld [vmem:[#allocation20 + $0x68] sm:$0xf]
    %v5167 = vld [vmem:[#allocation20 + $0x6c] sm:$0xf]
    %v5168 = vld [vmem:[#allocation20 + $0x70] sm:$0xf]
    %v5169 = vld [vmem:[#allocation20 + $0x74] sm:$0xf]
    %v5170 = vld [vmem:[#allocation20 + $0x78] sm:$0xf]
    %v5171 = vld [vmem:[#allocation20 + $0x7c] sm:$0xf]
    %v5172 = vld [vmem:[#allocation20 + $0x80] sm:$0xf]
    %v5173 = vld [vmem:[#allocation20 + $0x84] sm:$0xf]
    %v5174 = vld [vmem:[#allocation20 + $0x88] sm:$0xf]
    %v5175 = vld [vmem:[#allocation20 + $0x8c] sm:$0xf]
    %v5176 = vld [vmem:[#allocation20 + $0x90] sm:$0xf]
    %v5177 = vld [vmem:[#allocation20 + $0x94] sm:$0xf]
    %v5178 = vld [vmem:[#allocation20 + $0x98] sm:$0xf]
    %v5179 = vld [vmem:[#allocation20 + $0x9c] sm:$0xf]
    %v5180 = vld [vmem:[#allocation20 + $0xa0] sm:$0xf]
    %v5181 = vld [vmem:[#allocation20 + $0xa4] sm:$0xf]
    %v5182 = vld [vmem:[#allocation20 + $0xa8] sm:$0xf]
    %v5183 = vld [vmem:[#allocation20 + $0xac] sm:$0xf]
    %v5184 = vld [vmem:[#allocation20 + $0xb0] sm:$0xf]
    %v5185 = vld [vmem:[#allocation20 + $0xb4] sm:$0xf]
    %v5186 = vld [vmem:[#allocation20 + $0xb8] sm:$0xf]
    %v5187 = vld [vmem:[#allocation20 + $0xbc] sm:$0xf]
    %s5188 = scalar_lea.vmem [#allocation4], 1
    %v5189 = vld [vmem:[%s5188] ss:$8 sm:$0x7]
    %v5191 = vlaneseq
    %v5192 = vshrl.u32 %v5191, 7
    %v5193 = vsub.s32 0, %v5192
    %v5194 = vrot.slane %v5189, %v5193
    %v5195 = vlaneseq
    %v5196 = vshrl.u32 %v5195, 7
    %v5197 = vsub.s32 1, %v5196
    %v5198 = vrot.slane %v5189, %v5197
    %v5199 = vlaneseq
    %v5200 = vshrl.u32 %v5199, 7
    %v5201 = vsub.s32 2, %v5200
    %v5202 = vrot.slane %v5189, %v5201
    %v5206 = vpack.c.bf16 %v5194, %v5194
    %v5207 = vpack.c.bf16 %v5198, %v5198
    %v5208 = vpack.c.bf16 %v5202, %v5202
    %v5209 = vld [vmem:[#allocation20 + $0xc0] sm:$0xf]
    %v5210 = vld [vmem:[#allocation20 + $0xc4] sm:$0xf]
    %v5211 = vld [vmem:[#allocation20 + $0xc8] sm:$0xf]
    %v5212 = vld [vmem:[#allocation20 + $0xcc] sm:$0xf]
    %v5213 = vld [vmem:[#allocation20 + $0xd0] sm:$0xf]
    %v5214 = vld [vmem:[#allocation20 + $0xd4] sm:$0xf]
    %v5215 = vld [vmem:[#allocation20 + $0xd8] sm:$0xf]
    %v5216 = vld [vmem:[#allocation20 + $0xdc] sm:$0xf]
    %v5217 = vld [vmem:[#allocation20 + $0xe0] sm:$0xf]
    %v5218 = vld [vmem:[#allocation20 + $0xe4] sm:$0xf]
    %v5219 = vld [vmem:[#allocation20 + $0xe8] sm:$0xf]
    %v5220 = vld [vmem:[#allocation20 + $0xec] sm:$0xf]
    %v5221 = vld [vmem:[#allocation20 + $0xf0] sm:$0xf]
    %v5222 = vld [vmem:[#allocation20 + $0xf4] sm:$0xf]
    %v5223 = vld [vmem:[#allocation20 + $0xf8] sm:$0xf]
    %v5224 = vld [vmem:[#allocation20 + $0xfc] sm:$0xf]
    %v5225 = vld [vmem:[#allocation20 + $0x100] sm:$0xf]
    %v5226 = vld [vmem:[#allocation20 + $0x104] sm:$0xf]
    %v5227 = vld [vmem:[#allocation20 + $0x108] sm:$0xf]
    %v5228 = vld [vmem:[#allocation20 + $0x10c] sm:$0xf]
    %v5229 = vld [vmem:[#allocation20 + $0x110] sm:$0xf]
    %v5230 = vld [vmem:[#allocation20 + $0x114] sm:$0xf]
    %v5231 = vld [vmem:[#allocation20 + $0x118] sm:$0xf]
    %v5232 = vld [vmem:[#allocation20 + $0x11c] sm:$0xf]
    %v5233 = vld [vmem:[#allocation20 + $0x120] sm:$0xf]
    %v5234 = vld [vmem:[#allocation20 + $0x124] sm:$0xf]
    %v5235 = vld [vmem:[#allocation20 + $0x128] sm:$0xf]
    %v5236 = vld [vmem:[#allocation20 + $0x12c] sm:$0xf]
    %v5237 = vld [vmem:[#allocation20 + $0x130] sm:$0xf]
    %v5238 = vld [vmem:[#allocation20 + $0x134] sm:$0xf]
    %v5239 = vld [vmem:[#allocation20 + $0x138] sm:$0xf]
    %v5240 = vld [vmem:[#allocation20 + $0x13c] sm:$0xf]
    %v5241 = vld [vmem:[#allocation20 + $0x140] sm:$0xf]
    %v5242 = vld [vmem:[#allocation20 + $0x144] sm:$0xf]
    %v5243 = vld [vmem:[#allocation20 + $0x148] sm:$0xf]
    %v5244 = vld [vmem:[#allocation20 + $0x14c] sm:$0xf]
    %v5245 = vld [vmem:[#allocation20 + $0x150] sm:$0xf]
    %v5246 = vld [vmem:[#allocation20 + $0x154] sm:$0xf]
    %v5247 = vld [vmem:[#allocation20 + $0x158] sm:$0xf]
    %v5248 = vld [vmem:[#allocation20 + $0x15c] sm:$0xf]
    %v5249 = vld [vmem:[#allocation20 + $0x160] sm:$0xf]
    %v5250 = vld [vmem:[#allocation20 + $0x164] sm:$0xf]
    %v5251 = vld [vmem:[#allocation20 + $0x168] sm:$0xf]
    %v5252 = vld [vmem:[#allocation20 + $0x16c] sm:$0xf]
    %v5253 = vld [vmem:[#allocation20 + $0x170] sm:$0xf]
    %v5254 = vld [vmem:[#allocation20 + $0x174] sm:$0xf]
    %v5255 = vld [vmem:[#allocation20 + $0x178] sm:$0xf]
    %v5256 = vld [vmem:[#allocation20 + $0x17c] sm:$0xf]
    %v5305 = vunpack.c.l.b16 %v5209
    %v5306 = vunpack.c.l.b16 %v5210
    %v5307 = vunpack.c.l.b16 %v5211
    %v5308 = vunpack.c.l.b16 %v5212
    %v5309 = vunpack.c.l.b16 %v5213
    %v5310 = vunpack.c.l.b16 %v5214
    %v5311 = vunpack.c.l.b16 %v5215
    %v5312 = vunpack.c.l.b16 %v5216
    %v5313 = vunpack.c.l.b16 %v5217
    %v5314 = vunpack.c.l.b16 %v5218
    %v5315 = vunpack.c.l.b16 %v5219
    %v5316 = vunpack.c.l.b16 %v5220
    %v5317 = vunpack.c.l.b16 %v5221
    %v5318 = vunpack.c.l.b16 %v5222
    %v5319 = vunpack.c.l.b16 %v5223
    %v5320 = vunpack.c.l.b16 %v5224
    %v5321 = vunpack.c.l.b16 %v5225
    %v5322 = vunpack.c.l.b16 %v5226
    %v5323 = vunpack.c.l.b16 %v5227
    %v5324 = vunpack.c.l.b16 %v5228
    %v5325 = vunpack.c.l.b16 %v5229
    %v5326 = vunpack.c.l.b16 %v5230
    %v5327 = vunpack.c.l.b16 %v5231
    %v5328 = vunpack.c.l.b16 %v5232
    %v5329 = vunpack.c.l.b16 %v5233
    %v5330 = vunpack.c.l.b16 %v5234
    %v5331 = vunpack.c.l.b16 %v5235
    %v5332 = vunpack.c.l.b16 %v5236
    %v5333 = vunpack.c.l.b16 %v5237
    %v5334 = vunpack.c.l.b16 %v5238
    %v5335 = vunpack.c.l.b16 %v5239
    %v5336 = vunpack.c.l.b16 %v5240
    %v5337 = vunpack.c.l.b16 %v5241
    %v5338 = vunpack.c.l.b16 %v5242
    %v5339 = vunpack.c.l.b16 %v5243
    %v5340 = vunpack.c.l.b16 %v5244
    %v5341 = vunpack.c.l.b16 %v5245
    %v5342 = vunpack.c.l.b16 %v5246
    %v5343 = vunpack.c.l.b16 %v5247
    %v5344 = vunpack.c.l.b16 %v5248
    %v5345 = vunpack.c.l.b16 %v5249
    %v5346 = vunpack.c.l.b16 %v5250
    %v5347 = vunpack.c.l.b16 %v5251
    %v5348 = vunpack.c.l.b16 %v5252
    %v5349 = vunpack.c.l.b16 %v5253
    %v5350 = vunpack.c.l.b16 %v5254
    %v5351 = vunpack.c.l.b16 %v5255
    %v5352 = vunpack.c.l.b16 %v5256
    %v5353 = vpack.c.b16 %v5306, %v5305
    %v5354 = vpack.c.b16 %v5308, %v5307
    %v5355 = vpack.c.b16 %v5310, %v5309
    %v5356 = vpack.c.b16 %v5312, %v5311
    %v5357 = vpack.c.b16 %v5314, %v5313
    %v5358 = vpack.c.b16 %v5316, %v5315
    %v5359 = vpack.c.b16 %v5318, %v5317
    %v5360 = vpack.c.b16 %v5320, %v5319
    %v5361 = vpack.c.b16 %v5322, %v5321
    %v5362 = vpack.c.b16 %v5324, %v5323
    %v5363 = vpack.c.b16 %v5326, %v5325
    %v5364 = vpack.c.b16 %v5328, %v5327
    %v5365 = vpack.c.b16 %v5330, %v5329
    %v5366 = vpack.c.b16 %v5332, %v5331
    %v5367 = vpack.c.b16 %v5334, %v5333
    %v5368 = vpack.c.b16 %v5336, %v5335
    %v5369 = vpack.c.b16 %v5338, %v5337
    %v5370 = vpack.c.b16 %v5340, %v5339
    %v5371 = vpack.c.b16 %v5342, %v5341
    %v5372 = vpack.c.b16 %v5344, %v5343
    %v5373 = vpack.c.b16 %v5346, %v5345
    %v5374 = vpack.c.b16 %v5348, %v5347
    %v5375 = vpack.c.b16 %v5350, %v5349
    %v5376 = vpack.c.b16 %v5352, %v5351
    %5401 = vmatprep.subr.bf16.mxu0 0
    %5402 = vmatpush1.bf16.msra.mxu0 %v5353
    %5403 = vmatprep.subr.bf16.mxu0 0
    %5404 = vmatpush1.bf16.msra.mxu0 %v5354
    %5405 = vmatprep.subr.bf16.mxu0 0
    %5406 = vmatpush1.bf16.msra.mxu0 %v5355
    %5407 = vmatprep.subr.bf16.mxu0 0
    %5408 = vmatpush1.bf16.msra.mxu0 %v5356
    %5409 = vmatprep.subr.bf16.mxu0 0
    %5410 = vmatpush1.bf16.msra.mxu0 %v5357
    %5411 = vmatprep.subr.bf16.mxu0 0
    %5412 = vmatpush1.bf16.msra.mxu0 %v5358
    %5413 = vmatprep.subr.bf16.mxu0 0
    %5414 = vmatpush1.bf16.msra.mxu0 %v5359
    %5415 = vmatprep.subr.bf16.mxu0 0
    %5416 = vmatpush1.bf16.msra.mxu0 %v5360
    %5417 = vmatprep.subr.bf16.mxu0 0
    %5418 = vmatpush1.bf16.msra.mxu0 %v5361
    %5419 = vmatprep.subr.bf16.mxu0 0
    %5420 = vmatpush1.bf16.msra.mxu0 %v5362
    %5421 = vmatprep.subr.bf16.mxu0 0
    %5422 = vmatpush1.bf16.msra.mxu0 %v5363
    %5423 = vmatprep.subr.bf16.mxu0 0
    %5424 = vmatpush1.bf16.msra.mxu0 %v5364
    %5425 = vmatprep.subr.bf16.mxu0 0
    %5426 = vmatpush1.bf16.msra.mxu0 %v5365
    %5427 = vmatprep.subr.bf16.mxu0 0
    %5428 = vmatpush1.bf16.msra.mxu0 %v5366
    %5429 = vmatprep.subr.bf16.mxu0 0
    %5430 = vmatpush1.bf16.msra.mxu0 %v5367
    %5431 = vmatprep.subr.bf16.mxu0 0
    %5432 = vmatpush1.bf16.msra.mxu0 %v5368
    %5433 = vmatprep.mubr.bf16.mxu0 %v5207
    %5434 = vmatmul.mubr.bf16.gmra.mrb[0].mxu0 %v5206
    %v5435 = vpop.f32.mrb[0].mxu0
    %v5436 = vadd.f32 0.0, %v5435
    %v5437 = vpop.f32.mrb[0].mxu0
    %v5438 = vpop.f32.mrb[0].mxu0
    %v5439 = vpop.f32.mrb[0].mxu0
    %5440 = vdwg.mxu0
    %5441 = vmatprep.subr.bf16.mxu0 0
    %5442 = vmatpush1.bf16.msra.mxu0 %v5369
    %5443 = vmatprep.subr.bf16.mxu0 0
    %5444 = vmatpush1.bf16.msra.mxu0 %v5370
    %5445 = vmatprep.subr.bf16.mxu0 0
    %5446 = vmatpush1.bf16.msra.mxu0 %v5371
    %5447 = vmatprep.subr.bf16.mxu0 0
    %5448 = vmatpush1.bf16.msra.mxu0 %v5372
    %5449 = vmatprep.subr.bf16.mxu0 0
    %5450 = vmatpush1.bf16.msra.mxu0 %v5373
    %5451 = vmatprep.subr.bf16.mxu0 0
    %5452 = vmatpush1.bf16.msra.mxu0 %v5374
    %5453 = vmatprep.subr.bf16.mxu0 0
    %5454 = vmatpush1.bf16.msra.mxu0 %v5375
    %5455 = vmatprep.subr.bf16.mxu0 0
    %5456 = vmatpush1.bf16.msra.mxu0 %v5376
    %5457 = vmatprep.subr.bf16.mxu0 0
    %5458 = vmatpush1.bf16.msra.mxu0 0
    %5459 = vmatprep.subr.bf16.mxu0 0
    %5460 = vmatpush1.bf16.msra.mxu0 0
    %5461 = vmatprep.subr.bf16.mxu0 0
    %5462 = vmatpush1.bf16.msra.mxu0 0
    %5463 = vmatprep.subr.bf16.mxu0 0
    %5464 = vmatpush1.bf16.msra.mxu0 0
    %5465 = vmatprep.subr.bf16.mxu0 0
    %5466 = vmatpush1.bf16.msra.mxu0 0
    %5467 = vmatprep.subr.bf16.mxu0 0
    %5468 = vmatpush1.bf16.msra.mxu0 0
    %5469 = vmatprep.subr.bf16.mxu0 0
    %5470 = vmatpush1.bf16.msra.mxu0 0
    %5471 = vmatprep.subr.bf16.mxu0 0
    %5472 = vmatpush1.bf16.msra.mxu0 0
    %5473 = vmatprep.mubr.bf16.mxu0 0
    %5474 = vmatmul.mubr.bf16.gmra.mrb[0].mxu0 %v5208
    %v5475 = vpop.f32.mrb[0].mxu0
    %v5476 = vadd.f32 %v5436, %v5475
    %v5477 = vpop.f32.mrb[0].mxu0
    %v5478 = vpop.f32.mrb[0].mxu0
    %v5479 = vpop.f32.mrb[0].mxu0
    %5480 = vdwg.mxu0
    %v5529 = vunpack.c.l.b16 %v5140
    %v5530 = vunpack.c.l.b16 %v5141
    %v5531 = vunpack.c.l.b16 %v5142
    %v5532 = vunpack.c.l.b16 %v5143
    %v5533 = vunpack.c.l.b16 %v5144
    %v5534 = vunpack.c.l.b16 %v5145
    %v5535 = vunpack.c.l.b16 %v5146
    %v5536 = vunpack.c.l.b16 %v5147
    %v5537 = vunpack.c.l.b16 %v5148
    %v5538 = vunpack.c.l.b16 %v5149
    %v5539 = vunpack.c.l.b16 %v5150
    %v5540 = vunpack.c.l.b16 %v5151
    %v5541 = vunpack.c.l.b16 %v5152
    %v5542 = vunpack.c.l.b16 %v5153
    %v5543 = vunpack.c.l.b16 %v5154
    %v5544 = vunpack.c.l.b16 %v5155
    %v5545 = vunpack.c.l.b16 %v5156
    %v5546 = vunpack.c.l.b16 %v5157
    %v5547 = vunpack.c.l.b16 %v5158
    %v5548 = vunpack.c.l.b16 %v5159
    %v5549 = vunpack.c.l.b16 %v5160
    %v5550 = vunpack.c.l.b16 %v5161
    %v5551 = vunpack.c.l.b16 %v5162
    %v5552 = vunpack.c.l.b16 %v5163
    %v5553 = vunpack.c.l.b16 %v5164
    %v5554 = vunpack.c.l.b16 %v5165
    %v5555 = vunpack.c.l.b16 %v5166
    %v5556 = vunpack.c.l.b16 %v5167
    %v5557 = vunpack.c.l.b16 %v5168
    %v5558 = vunpack.c.l.b16 %v5169
    %v5559 = vunpack.c.l.b16 %v5170
    %v5560 = vunpack.c.l.b16 %v5171
    %v5561 = vunpack.c.l.b16 %v5172
    %v5562 = vunpack.c.l.b16 %v5173
    %v5563 = vunpack.c.l.b16 %v5174
    %v5564 = vunpack.c.l.b16 %v5175
    %v5565 = vunpack.c.l.b16 %v5176
    %v5566 = vunpack.c.l.b16 %v5177
    %v5567 = vunpack.c.l.b16 %v5178
    %v5568 = vunpack.c.l.b16 %v5179
    %v5569 = vunpack.c.l.b16 %v5180
    %v5570 = vunpack.c.l.b16 %v5181
    %v5571 = vunpack.c.l.b16 %v5182
    %v5572 = vunpack.c.l.b16 %v5183
    %v5573 = vunpack.c.l.b16 %v5184
    %v5574 = vunpack.c.l.b16 %v5185
    %v5575 = vunpack.c.l.b16 %v5186
    %v5576 = vunpack.c.l.b16 %v5187
    %v5577 = vpack.c.b16 %v5530, %v5529
    %v5578 = vpack.c.b16 %v5532, %v5531
    %v5579 = vpack.c.b16 %v5534, %v5533
    %v5580 = vpack.c.b16 %v5536, %v5535
    %v5581 = vpack.c.b16 %v5538, %v5537
    %v5582 = vpack.c.b16 %v5540, %v5539
    %v5583 = vpack.c.b16 %v5542, %v5541
    %v5584 = vpack.c.b16 %v5544, %v5543
    %v5585 = vpack.c.b16 %v5546, %v5545
    %v5586 = vpack.c.b16 %v5548, %v5547
    %v5587 = vpack.c.b16 %v5550, %v5549
    %v5588 = vpack.c.b16 %v5552, %v5551
    %v5589 = vpack.c.b16 %v5554, %v5553
    %v5590 = vpack.c.b16 %v5556, %v5555
    %v5591 = vpack.c.b16 %v5558, %v5557
    %v5592 = vpack.c.b16 %v5560, %v5559
    %v5593 = vpack.c.b16 %v5562, %v5561
    %v5594 = vpack.c.b16 %v5564, %v5563
    %v5595 = vpack.c.b16 %v5566, %v5565
    %v5596 = vpack.c.b16 %v5568, %v5567
    %v5597 = vpack.c.b16 %v5570, %v5569
    %v5598 = vpack.c.b16 %v5572, %v5571
    %v5599 = vpack.c.b16 %v5574, %v5573
    %v5600 = vpack.c.b16 %v5576, %v5575
    %5625 = vmatprep.subr.bf16.mxu0 0
    %5626 = vmatpush1.bf16.msra.mxu0 %v5577
    %5627 = vmatprep.subr.bf16.mxu0 0
    %5628 = vmatpush1.bf16.msra.mxu0 %v5578
    %5629 = vmatprep.subr.bf16.mxu0 0
    %5630 = vmatpush1.bf16.msra.mxu0 %v5579
    %5631 = vmatprep.subr.bf16.mxu0 0
    %5632 = vmatpush1.bf16.msra.mxu0 %v5580
    %5633 = vmatprep.subr.bf16.mxu0 0
    %5634 = vmatpush1.bf16.msra.mxu0 %v5581
    %5635 = vmatprep.subr.bf16.mxu0 0
    %5636 = vmatpush1.bf16.msra.mxu0 %v5582
    %5637 = vmatprep.subr.bf16.mxu0 0
    %5638 = vmatpush1.bf16.msra.mxu0 %v5583
    %5639 = vmatprep.subr.bf16.mxu0 0
    %5640 = vmatpush1.bf16.msra.mxu0 %v5584
    %5641 = vmatprep.subr.bf16.mxu0 0
    %5642 = vmatpush1.bf16.msra.mxu0 %v5585
    %5643 = vmatprep.subr.bf16.mxu0 0
    %5644 = vmatpush1.bf16.msra.mxu0 %v5586
    %5645 = vmatprep.subr.bf16.mxu0 0
    %5646 = vmatpush1.bf16.msra.mxu0 %v5587
    %5647 = vmatprep.subr.bf16.mxu0 0
    %5648 = vmatpush1.bf16.msra.mxu0 %v5588
    %5649 = vmatprep.subr.bf16.mxu0 0
    %5650 = vmatpush1.bf16.msra.mxu0 %v5589
    %5651 = vmatprep.subr.bf16.mxu0 0
    %5652 = vmatpush1.bf16.msra.mxu0 %v5590
    %5653 = vmatprep.subr.bf16.mxu0 0
    %5654 = vmatpush1.bf16.msra.mxu0 %v5591
    %5655 = vmatprep.subr.bf16.mxu0 0
    %5656 = vmatpush1.bf16.msra.mxu0 %v5592
    %5657 = vmatprep.mubr.bf16.mxu0 %v5138
    %5658 = vmatmul.mubr.bf16.gmra.mrb[0].mxu0 %v5137
    %v5659 = vpop.f32.mrb[0].mxu0
    %v5660 = vadd.f32 %v5476, %v5659
    %v5661 = vpop.f32.mrb[0].mxu0
    %v5662 = vpop.f32.mrb[0].mxu0
    %v5663 = vpop.f32.mrb[0].mxu0
    %5664 = vdwg.mxu0
    %5665 = vmatprep.subr.bf16.mxu0 0
    %5666 = vmatpush1.bf16.msra.mxu0 %v5593
    %5667 = vmatprep.subr.bf16.mxu0 0
    %5668 = vmatpush1.bf16.msra.mxu0 %v5594
    %5669 = vmatprep.subr.bf16.mxu0 0
    %5670 = vmatpush1.bf16.msra.mxu0 %v5595
    %5671 = vmatprep.subr.bf16.mxu0 0
    %5672 = vmatpush1.bf16.msra.mxu0 %v5596
    %5673 = vmatprep.subr.bf16.mxu0 0
    %5674 = vmatpush1.bf16.msra.mxu0 %v5597
    %5675 = vmatprep.subr.bf16.mxu0 0
    %5676 = vmatpush1.bf16.msra.mxu0 %v5598
    %5677 = vmatprep.subr.bf16.mxu0 0
    %5678 = vmatpush1.bf16.msra.mxu0 %v5599
    %5679 = vmatprep.subr.bf16.mxu0 0
    %5680 = vmatpush1.bf16.msra.mxu0 %v5600
    %5681 = vmatprep.subr.bf16.mxu0 0
    %5682 = vmatpush1.bf16.msra.mxu0 0
    %5683 = vmatprep.subr.bf16.mxu0 0
    %5684 = vmatpush1.bf16.msra.mxu0 0
    %5685 = vmatprep.subr.bf16.mxu0 0
    %5686 = vmatpush1.bf16.msra.mxu0 0
    %5687 = vmatprep.subr.bf16.mxu0 0
    %5688 = vmatpush1.bf16.msra.mxu0 0
    %5689 = vmatprep.subr.bf16.mxu0 0
    %5690 = vmatpush1.bf16.msra.mxu0 0
    %5691 = vmatprep.subr.bf16.mxu0 0
    %5692 = vmatpush1.bf16.msra.mxu0 0
    %5693 = vmatprep.subr.bf16.mxu0 0
    %5694 = vmatpush1.bf16.msra.mxu0 0
    %5695 = vmatprep.subr.bf16.mxu0 0
    %5696 = vmatpush1.bf16.msra.mxu0 0
    %5697 = vmatprep.mubr.bf16.mxu0 0
    %5698 = vmatmul.mubr.bf16.gmra.mrb[0].mxu0 %v5139
    %v5699 = vpop.f32.mrb[0].mxu0
    %v5700 = vadd.f32 %v5660, %v5699
    %v5701 = vpop.f32.mrb[0].mxu0
    %v5702 = vpop.f32.mrb[0].mxu0
    %v5703 = vpop.f32.mrb[0].mxu0
    %5704 = vdwg.mxu0
    %s5705 = scalar_lea.vmem [#allocation4], 2
    %v5706 = vld [vmem:[%s5705] ss:$8 sm:$0x7]
    %v5708 = vlaneseq
    %v5709 = vshrl.u32 %v5708, 7
    %v5710 = vsub.s32 0, %v5709
    %v5711 = vrot.slane %v5706, %v5710
    %v5712 = vlaneseq
    %v5713 = vshrl.u32 %v5712, 7
    %v5714 = vsub.s32 1, %v5713
    %v5715 = vrot.slane %v5706, %v5714
    %v5716 = vlaneseq
    %v5717 = vshrl.u32 %v5716, 7
    %v5718 = vsub.s32 2, %v5717
    %v5719 = vrot.slane %v5706, %v5718
    %v5723 = vpack.c.bf16 %v5711, %v5711
    %v5724 = vpack.c.bf16 %v5715, %v5715
    %v5725 = vpack.c.bf16 %v5719, %v5719
    %v5726 = vld [vmem:[#allocation20 + $0x180] sm:$0xf]
    %v5727 = vld [vmem:[#allocation20 + $0x184] sm:$0xf]
    %v5728 = vld [vmem:[#allocation20 + $0x188] sm:$0xf]
    %v5729 = vld [vmem:[#allocation20 + $0x18c] sm:$0xf]
    %v5730 = vld [vmem:[#allocation20 + $0x190] sm:$0xf]
    %v5731 = vld [vmem:[#allocation20 + $0x194] sm:$0xf]
    %v5732 = vld [vmem:[#allocation20 + $0x198] sm:$0xf]
    %v5733 = vld [vmem:[#allocation20 + $0x19c] sm:$0xf]
    %v5734 = vld [vmem:[#allocation20 + $0x1a0] sm:$0xf]
    %v5735 = vld [vmem:[#allocation20 + $0x1a4] sm:$0xf]
    %v5736 = vld [vmem:[#allocation20 + $0x1a8] sm:$0xf]
    %v5737 = vld [vmem:[#allocation20 + $0x1ac] sm:$0xf]
    %v5738 = vld [vmem:[#allocation20 + $0x1b0] sm:$0xf]
    %v5739 = vld [vmem:[#allocation20 + $0x1b4] sm:$0xf]
    %v5740 = vld [vmem:[#allocation20 + $0x1b8] sm:$0xf]
    %v5741 = vld [vmem:[#allocation20 + $0x1bc] sm:$0xf]
    %v5742 = vld [vmem:[#allocation20 + $0x1c0] sm:$0xf]
    %v5743 = vld [vmem:[#allocation20 + $0x1c4] sm:$0xf]
    %v5744 = vld [vmem:[#allocation20 + $0x1c8] sm:$0xf]
    %v5745 = vld [vmem:[#allocation20 + $0x1cc] sm:$0xf]
    %v5746 = vld [vmem:[#allocation20 + $0x1d0] sm:$0xf]
    %v5747 = vld [vmem:[#allocation20 + $0x1d4] sm:$0xf]
    %v5748 = vld [vmem:[#allocation20 + $0x1d8] sm:$0xf]
    %v5749 = vld [vmem:[#allocation20 + $0x1dc] sm:$0xf]
    %v5750 = vld [vmem:[#allocation20 + $0x1e0] sm:$0xf]
    %v5751 = vld [vmem:[#allocation20 + $0x1e4] sm:$0xf]
    %v5752 = vld [vmem:[#allocation20 + $0x1e8] sm:$0xf]
    %v5753 = vld [vmem:[#allocation20 + $0x1ec] sm:$0xf]
    %v5754 = vld [vmem:[#allocation20 + $0x1f0] sm:$0xf]
    %v5755 = vld [vmem:[#allocation20 + $0x1f4] sm:$0xf]
    %v5756 = vld [vmem:[#allocation20 + $0x1f8] sm:$0xf]
    %v5757 = vld [vmem:[#allocation20 + $0x1fc] sm:$0xf]
    %v5758 = vld [vmem:[#allocation20 + $0x200] sm:$0xf]
    %v5759 = vld [vmem:[#allocation20 + $0x204] sm:$0xf]
    %v5760 = vld [vmem:[#allocation20 + $0x208] sm:$0xf]
    %v5761 = vld [vmem:[#allocation20 + $0x20c] sm:$0xf]
    %v5762 = vld [vmem:[#allocation20 + $0x210] sm:$0xf]
    %v5763 = vld [vmem:[#allocation20 + $0x214] sm:$0xf]
    %v5764 = vld [vmem:[#allocation20 + $0x218] sm:$0xf]
    %v5765 = vld [vmem:[#allocation20 + $0x21c] sm:$0xf]
    %v5766 = vld [vmem:[#allocation20 + $0x220] sm:$0xf]
    %v5767 = vld [vmem:[#allocation20 + $0x224] sm:$0xf]
    %v5768 = vld [vmem:[#allocation20 + $0x228] sm:$0xf]
    %v5769 = vld [vmem:[#allocation20 + $0x22c] sm:$0xf]
    %v5770 = vld [vmem:[#allocation20 + $0x230] sm:$0xf]
    %v5771 = vld [vmem:[#allocation20 + $0x234] sm:$0xf]
    %v5772 = vld [vmem:[#allocation20 + $0x238] sm:$0xf]
    %v5773 = vld [vmem:[#allocation20 + $0x23c] sm:$0xf]
    %v5822 = vunpack.c.l.b16 %v5726
    %v5823 = vunpack.c.l.b16 %v5727
    %v5824 = vunpack.c.l.b16 %v5728
    %v5825 = vunpack.c.l.b16 %v5729
    %v5826 = vunpack.c.l.b16 %v5730
    %v5827 = vunpack.c.l.b16 %v5731
    %v5828 = vunpack.c.l.b16 %v5732
    %v5829 = vunpack.c.l.b16 %v5733
    %v5830 = vunpack.c.l.b16 %v5734
    %v5831 = vunpack.c.l.b16 %v5735
    %v5832 = vunpack.c.l.b16 %v5736
    %v5833 = vunpack.c.l.b16 %v5737
    %v5834 = vunpack.c.l.b16 %v5738
    %v5835 = vunpack.c.l.b16 %v5739
    %v5836 = vunpack.c.l.b16 %v5740
    %v5837 = vunpack.c.l.b16 %v5741
    %v5838 = vunpack.c.l.b16 %v5742
    %v5839 = vunpack.c.l.b16 %v5743
    %v5840 = vunpack.c.l.b16 %v5744
    %v5841 = vunpack.c.l.b16 %v5745
    %v5842 = vunpack.c.l.b16 %v5746
    %v5843 = vunpack.c.l.b16 %v5747
    %v5844 = vunpack.c.l.b16 %v5748
    %v5845 = vunpack.c.l.b16 %v5749
    %v5846 = vunpack.c.l.b16 %v5750
    %v5847 = vunpack.c.l.b16 %v5751
    %v5848 = vunpack.c.l.b16 %v5752
    %v5849 = vunpack.c.l.b16 %v5753
    %v5850 = vunpack.c.l.b16 %v5754
    %v5851 = vunpack.c.l.b16 %v5755
    %v5852 = vunpack.c.l.b16 %v5756
    %v5853 = vunpack.c.l.b16 %v5757
    %v5854 = vunpack.c.l.b16 %v5758
    %v5855 = vunpack.c.l.b16 %v5759
    %v5856 = vunpack.c.l.b16 %v5760
    %v5857 = vunpack.c.l.b16 %v5761
    %v5858 = vunpack.c.l.b16 %v5762
    %v5859 = vunpack.c.l.b16 %v5763
    %v5860 = vunpack.c.l.b16 %v5764
    %v5861 = vunpack.c.l.b16 %v5765
    %v5862 = vunpack.c.l.b16 %v5766
    %v5863 = vunpack.c.l.b16 %v5767
    %v5864 = vunpack.c.l.b16 %v5768
    %v5865 = vunpack.c.l.b16 %v5769
    %v5866 = vunpack.c.l.b16 %v5770
    %v5867 = vunpack.c.l.b16 %v5771
    %v5868 = vunpack.c.l.b16 %v5772
    %v5869 = vunpack.c.l.b16 %v5773
    %v5870 = vpack.c.b16 %v5823, %v5822
    %v5871 = vpack.c.b16 %v5825, %v5824
    %v5872 = vpack.c.b16 %v5827, %v5826
    %v5873 = vpack.c.b16 %v5829, %v5828
    %v5874 = vpack.c.b16 %v5831, %v5830
    %v5875 = vpack.c.b16 %v5833, %v5832
    %v5876 = vpack.c.b16 %v5835, %v5834
    %v5877 = vpack.c.b16 %v5837, %v5836
    %v5878 = vpack.c.b16 %v5839, %v5838
    %v5879 = vpack.c.b16 %v5841, %v5840
    %v5880 = vpack.c.b16 %v5843, %v5842
    %v5881 = vpack.c.b16 %v5845, %v5844
    %v5882 = vpack.c.b16 %v5847, %v5846
    %v5883 = vpack.c.b16 %v5849, %v5848
    %v5884 = vpack.c.b16 %v5851, %v5850
    %v5885 = vpack.c.b16 %v5853, %v5852
    %v5886 = vpack.c.b16 %v5855, %v5854
    %v5887 = vpack.c.b16 %v5857, %v5856
    %v5888 = vpack.c.b16 %v5859, %v5858
    %v5889 = vpack.c.b16 %v5861, %v5860
    %v5890 = vpack.c.b16 %v5863, %v5862
    %v5891 = vpack.c.b16 %v5865, %v5864
    %v5892 = vpack.c.b16 %v5867, %v5866
    %v5893 = vpack.c.b16 %v5869, %v5868
    %5918 = vmatprep.subr.bf16.mxu0 0
    %5919 = vmatpush1.bf16.msra.mxu0 %v5870
    %5920 = vmatprep.subr.bf16.mxu0 0
    %5921 = vmatpush1.bf16.msra.mxu0 %v5871
    %5922 = vmatprep.subr.bf16.mxu0 0
    %5923 = vmatpush1.bf16.msra.mxu0 %v5872
    %5924 = vmatprep.subr.bf16.mxu0 0
    %5925 = vmatpush1.bf16.msra.mxu0 %v5873
    %5926 = vmatprep.subr.bf16.mxu0 0
    %5927 = vmatpush1.bf16.msra.mxu0 %v5874
    %5928 = vmatprep.subr.bf16.mxu0 0
    %5929 = vmatpush1.bf16.msra.mxu0 %v5875
    %5930 = vmatprep.subr.bf16.mxu0 0
    %5931 = vmatpush1.bf16.msra.mxu0 %v5876
    %5932 = vmatprep.subr.bf16.mxu0 0
    %5933 = vmatpush1.bf16.msra.mxu0 %v5877
    %5934 = vmatprep.subr.bf16.mxu0 0
    %5935 = vmatpush1.bf16.msra.mxu0 %v5878
    %5936 = vmatprep.subr.bf16.mxu0 0
    %5937 = vmatpush1.bf16.msra.mxu0 %v5879
    %5938 = vmatprep.subr.bf16.mxu0 0
    %5939 = vmatpush1.bf16.msra.mxu0 %v5880
    %5940 = vmatprep.subr.bf16.mxu0 0
    %5941 = vmatpush1.bf16.msra.mxu0 %v5881
    %5942 = vmatprep.subr.bf16.mxu0 0
    %5943 = vmatpush1.bf16.msra.mxu0 %v5882
    %5944 = vmatprep.subr.bf16.mxu0 0
    %5945 = vmatpush1.bf16.msra.mxu0 %v5883
    %5946 = vmatprep.subr.bf16.mxu0 0
    %5947 = vmatpush1.bf16.msra.mxu0 %v5884
    %5948 = vmatprep.subr.bf16.mxu0 0
    %5949 = vmatpush1.bf16.msra.mxu0 %v5885
    %5950 = vmatprep.mubr.bf16.mxu0 %v5724
    %5951 = vmatmul.mubr.bf16.gmra.mrb[0].mxu0 %v5723
    %v5952 = vpop.f32.mrb[0].mxu0
    %v5953 = vadd.f32 0.0, %v5952
    %v5954 = vpop.f32.mrb[0].mxu0
    %v5955 = vpop.f32.mrb[0].mxu0
    %v5956 = vpop.f32.mrb[0].mxu0
    %5957 = vdwg.mxu0
    %5958 = vmatprep.subr.bf16.mxu0 0
    %5959 = vmatpush1.bf16.msra.mxu0 %v5886
    %5960 = vmatprep.subr.bf16.mxu0 0
    %5961 = vmatpush1.bf16.msra.mxu0 %v5887
    %5962 = vmatprep.subr.bf16.mxu0 0
    %5963 = vmatpush1.bf16.msra.mxu0 %v5888
    %5964 = vmatprep.subr.bf16.mxu0 0
    %5965 = vmatpush1.bf16.msra.mxu0 %v5889
    %5966 = vmatprep.subr.bf16.mxu0 0
    %5967 = vmatpush1.bf16.msra.mxu0 %v5890
    %5968 = vmatprep.subr.bf16.mxu0 0
    %5969 = vmatpush1.bf16.msra.mxu0 %v5891
    %5970 = vmatprep.subr.bf16.mxu0 0
    %5971 = vmatpush1.bf16.msra.mxu0 %v5892
    %5972 = vmatprep.subr.bf16.mxu0 0
    %5973 = vmatpush1.bf16.msra.mxu0 %v5893
    %5974 = vmatprep.subr.bf16.mxu0 0
    %5975 = vmatpush1.bf16.msra.mxu0 0
    %5976 = vmatprep.subr.bf16.mxu0 0
    %5977 = vmatpush1.bf16.msra.mxu0 0
    %5978 = vmatprep.subr.bf16.mxu0 0
    %5979 = vmatpush1.bf16.msra.mxu0 0
    %5980 = vmatprep.subr.bf16.mxu0 0
    %5981 = vmatpush1.bf16.msra.mxu0 0
    %5982 = vmatprep.subr.bf16.mxu0 0
    %5983 = vmatpush1.bf16.msra.mxu0 0
    %5984 = vmatprep.subr.bf16.mxu0 0
    %5985 = vmatpush1.bf16.msra.mxu0 0
    %5986 = vmatprep.subr.bf16.mxu0 0
    %5987 = vmatpush1.bf16.msra.mxu0 0
    %5988 = vmatprep.subr.bf16.mxu0 0
    %5989 = vmatpush1.bf16.msra.mxu0 0
    %5990 = vmatprep.mubr.bf16.mxu0 0
    %5991 = vmatmul.mubr.bf16.gmra.mrb[0].mxu0 %v5725
    %v5992 = vpop.f32.mrb[0].mxu0
    %v5993 = vadd.f32 %v5953, %v5992
    %v5994 = vpop.f32.mrb[0].mxu0
    %v5995 = vpop.f32.mrb[0].mxu0
    %v5996 = vpop.f32.mrb[0].mxu0
    %5997 = vdwg.mxu0
    %v5998 = vadd.f32 %v5700, %v5993
    %s5999 = scalar_lea.vmem [#allocation4], 3
    %v6000 = vld [vmem:[%s5999] ss:$8 sm:$0x7]
    %v6002 = vlaneseq
    %v6003 = vshrl.u32 %v6002, 7
    %v6004 = vsub.s32 0, %v6003
    %v6005 = vrot.slane %v6000, %v6004
    %v6006 = vlaneseq
    %v6007 = vshrl.u32 %v6006, 7
    %v6008 = vsub.s32 1, %v6007
    %v6009 = vrot.slane %v6000, %v6008
    %v6010 = vlaneseq
    %v6011 = vshrl.u32 %v6010, 7
    %v6012 = vsub.s32 2, %v6011
    %v6013 = vrot.slane %v6000, %v6012
    %v6017 = vpack.c.bf16 %v6005, %v6005
    %v6018 = vpack.c.bf16 %v6009, %v6009
    %v6019 = vpack.c.bf16 %v6013, %v6013
    %v6020 = vld [vmem:[#allocation20 + $0x240] sm:$0xf]
    %v6021 = vld [vmem:[#allocation20 + $0x244] sm:$0xf]
    %v6022 = vld [vmem:[#allocation20 + $0x248] sm:$0xf]
    %v6023 = vld [vmem:[#allocation20 + $0x24c] sm:$0xf]
    %v6024 = vld [vmem:[#allocation20 + $0x250] sm:$0xf]
    %v6025 = vld [vmem:[#allocation20 + $0x254] sm:$0xf]
    %v6026 = vld [vmem:[#allocation20 + $0x258] sm:$0xf]
    %v6027 = vld [vmem:[#allocation20 + $0x25c] sm:$0xf]
    %v6028 = vld [vmem:[#allocation20 + $0x260] sm:$0xf]
    %v6029 = vld [vmem:[#allocation20 + $0x264] sm:$0xf]
    %v6030 = vld [vmem:[#allocation20 + $0x268] sm:$0xf]
    %v6031 = vld [vmem:[#allocation20 + $0x26c] sm:$0xf]
    %v6032 = vld [vmem:[#allocation20 + $0x270] sm:$0xf]
    %v6033 = vld [vmem:[#allocation20 + $0x274] sm:$0xf]
    %v6034 = vld [vmem:[#allocation20 + $0x278] sm:$0xf]
    %v6035 = vld [vmem:[#allocation20 + $0x27c] sm:$0xf]
    %v6036 = vld [vmem:[#allocation20 + $0x280] sm:$0xf]
    %v6037 = vld [vmem:[#allocation20 + $0x284] sm:$0xf]
    %v6038 = vld [vmem:[#allocation20 + $0x288] sm:$0xf]
    %v6039 = vld [vmem:[#allocation20 + $0x28c] sm:$0xf]
    %v6040 = vld [vmem:[#allocation20 + $0x290] sm:$0xf]
    %v6041 = vld [vmem:[#allocation20 + $0x294] sm:$0xf]
    %v6042 = vld [vmem:[#allocation20 + $0x298] sm:$0xf]
    %v6043 = vld [vmem:[#allocation20 + $0x29c] sm:$0xf]
    %v6044 = vld [vmem:[#allocation20 + $0x2a0] sm:$0xf]
    %v6045 = vld [vmem:[#allocation20 + $0x2a4] sm:$0xf]
    %v6046 = vld [vmem:[#allocation20 + $0x2a8] sm:$0xf]
    %v6047 = vld [vmem:[#allocation20 + $0x2ac] sm:$0xf]
    %v6048 = vld [vmem:[#allocation20 + $0x2b0] sm:$0xf]
    %v6049 = vld [vmem:[#allocation20 + $0x2b4] sm:$0xf]
    %v6050 = vld [vmem:[#allocation20 + $0x2b8] sm:$0xf]
    %v6051 = vld [vmem:[#allocation20 + $0x2bc] sm:$0xf]
    %v6052 = vld [vmem:[#allocation20 + $0x2c0] sm:$0xf]
    %v6053 = vld [vmem:[#allocation20 + $0x2c4] sm:$0xf]
    %v6054 = vld [vmem:[#allocation20 + $0x2c8] sm:$0xf]
    %v6055 = vld [vmem:[#allocation20 + $0x2cc] sm:$0xf]
    %v6056 = vld [vmem:[#allocation20 + $0x2d0] sm:$0xf]
    %v6057 = vld [vmem:[#allocation20 + $0x2d4] sm:$0xf]
    %v6058 = vld [vmem:[#allocation20 + $0x2d8] sm:$0xf]
    %v6059 = vld [vmem:[#allocation20 + $0x2dc] sm:$0xf]
    %v6060 = vld [vmem:[#allocation20 + $0x2e0] sm:$0xf]
    %v6061 = vld [vmem:[#allocation20 + $0x2e4] sm:$0xf]
    %v6062 = vld [vmem:[#allocation20 + $0x2e8] sm:$0xf]
    %v6063 = vld [vmem:[#allocation20 + $0x2ec] sm:$0xf]
    %v6064 = vld [vmem:[#allocation20 + $0x2f0] sm:$0xf]
    %v6065 = vld [vmem:[#allocation20 + $0x2f4] sm:$0xf]
    %v6066 = vld [vmem:[#allocation20 + $0x2f8] sm:$0xf]
    %v6067 = vld [vmem:[#allocation20 + $0x2fc] sm:$0xf]
    %v6116 = vunpack.c.l.b16 %v6020
    %v6117 = vunpack.c.l.b16 %v6021
    %v6118 = vunpack.c.l.b16 %v6022
    %v6119 = vunpack.c.l.b16 %v6023
    %v6120 = vunpack.c.l.b16 %v6024
    %v6121 = vunpack.c.l.b16 %v6025
    %v6122 = vunpack.c.l.b16 %v6026
    %v6123 = vunpack.c.l.b16 %v6027
    %v6124 = vunpack.c.l.b16 %v6028
    %v6125 = vunpack.c.l.b16 %v6029
    %v6126 = vunpack.c.l.b16 %v6030
    %v6127 = vunpack.c.l.b16 %v6031
    %v6128 = vunpack.c.l.b16 %v6032
    %v6129 = vunpack.c.l.b16 %v6033
    %v6130 = vunpack.c.l.b16 %v6034
    %v6131 = vunpack.c.l.b16 %v6035
    %v6132 = vunpack.c.l.b16 %v6036
    %v6133 = vunpack.c.l.b16 %v6037
    %v6134 = vunpack.c.l.b16 %v6038
    %v6135 = vunpack.c.l.b16 %v6039
    %v6136 = vunpack.c.l.b16 %v6040
    %v6137 = vunpack.c.l.b16 %v6041
    %v6138 = vunpack.c.l.b16 %v6042
    %v6139 = vunpack.c.l.b16 %v6043
    %v6140 = vunpack.c.l.b16 %v6044
    %v6141 = vunpack.c.l.b16 %v6045
    %v6142 = vunpack.c.l.b16 %v6046
    %v6143 = vunpack.c.l.b16 %v6047
    %v6144 = vunpack.c.l.b16 %v6048
    %v6145 = vunpack.c.l.b16 %v6049
    %v6146 = vunpack.c.l.b16 %v6050
    %v6147 = vunpack.c.l.b16 %v6051
    %v6148 = vunpack.c.l.b16 %v6052
    %v6149 = vunpack.c.l.b16 %v6053
    %v6150 = vunpack.c.l.b16 %v6054
    %v6151 = vunpack.c.l.b16 %v6055
    %v6152 = vunpack.c.l.b16 %v6056
    %v6153 = vunpack.c.l.b16 %v6057
    %v6154 = vunpack.c.l.b16 %v6058
    %v6155 = vunpack.c.l.b16 %v6059
    %v6156 = vunpack.c.l.b16 %v6060
    %v6157 = vunpack.c.l.b16 %v6061
    %v6158 = vunpack.c.l.b16 %v6062
    %v6159 = vunpack.c.l.b16 %v6063
    %v6160 = vunpack.c.l.b16 %v6064
    %v6161 = vunpack.c.l.b16 %v6065
    %v6162 = vunpack.c.l.b16 %v6066
    %v6163 = vunpack.c.l.b16 %v6067
    %v6164 = vpack.c.b16 %v6117, %v6116
    %v6165 = vpack.c.b16 %v6119, %v6118
    %v6166 = vpack.c.b16 %v6121, %v6120
    %v6167 = vpack.c.b16 %v6123, %v6122
    %v6168 = vpack.c.b16 %v6125, %v6124
    %v6169 = vpack.c.b16 %v6127, %v6126
    %v6170 = vpack.c.b16 %v6129, %v6128
    %v6171 = vpack.c.b16 %v6131, %v6130
    %v6172 = vpack.c.b16 %v6133, %v6132
    %v6173 = vpack.c.b16 %v6135, %v6134
    %v6174 = vpack.c.b16 %v6137, %v6136
    %v6175 = vpack.c.b16 %v6139, %v6138
    %v6176 = vpack.c.b16 %v6141, %v6140
    %v6177 = vpack.c.b16 %v6143, %v6142
    %v6178 = vpack.c.b16 %v6145, %v6144
    %v6179 = vpack.c.b16 %v6147, %v6146
    %v6180 = vpack.c.b16 %v6149, %v6148
    %v6181 = vpack.c.b16 %v6151, %v6150
    %v6182 = vpack.c.b16 %v6153, %v6152
    %v6183 = vpack.c.b16 %v6155, %v6154
    %v6184 = vpack.c.b16 %v6157, %v6156
    %v6185 = vpack.c.b16 %v6159, %v6158
    %v6186 = vpack.c.b16 %v6161, %v6160
    %v6187 = vpack.c.b16 %v6163, %v6162
    %6212 = vmatprep.subr.bf16.mxu0 0
    %6213 = vmatpush1.bf16.msra.mxu0 %v6164
    %6214 = vmatprep.subr.bf16.mxu0 0
    %6215 = vmatpush1.bf16.msra.mxu0 %v6165
    %6216 = vmatprep.subr.bf16.mxu0 0
    %6217 = vmatpush1.bf16.msra.mxu0 %v6166
    %6218 = vmatprep.subr.bf16.mxu0 0
    %6219 = vmatpush1.bf16.msra.mxu0 %v6167
    %6220 = vmatprep.subr.bf16.mxu0 0
    %6221 = vmatpush1.bf16.msra.mxu0 %v6168
    %6222 = vmatprep.subr.bf16.mxu0 0
    %6223 = vmatpush1.bf16.msra.mxu0 %v6169
    %6224 = vmatprep.subr.bf16.mxu0 0
    %6225 = vmatpush1.bf16.msra.mxu0 %v6170
    %6226 = vmatprep.subr.bf16.mxu0 0
    %6227 = vmatpush1.bf16.msra.mxu0 %v6171
    %6228 = vmatprep.subr.bf16.mxu0 0
    %6229 = vmatpush1.bf16.msra.mxu0 %v6172
    %6230 = vmatprep.subr.bf16.mxu0 0
    %6231 = vmatpush1.bf16.msra.mxu0 %v6173
    %6232 = vmatprep.subr.bf16.mxu0 0
    %6233 = vmatpush1.bf16.msra.mxu0 %v6174
    %6234 = vmatprep.subr.bf16.mxu0 0
    %6235 = vmatpush1.bf16.msra.mxu0 %v6175
    %6236 = vmatprep.subr.bf16.mxu0 0
    %6237 = vmatpush1.bf16.msra.mxu0 %v6176
    %6238 = vmatprep.subr.bf16.mxu0 0
    %6239 = vmatpush1.bf16.msra.mxu0 %v6177
    %6240 = vmatprep.subr.bf16.mxu0 0
    %6241 = vmatpush1.bf16.msra.mxu0 %v6178
    %6242 = vmatprep.subr.bf16.mxu0 0
    %6243 = vmatpush1.bf16.msra.mxu0 %v6179
    %6244 = vmatprep.mubr.bf16.mxu0 %v6018
    %6245 = vmatmul.mubr.bf16.gmra.mrb[0].mxu0 %v6017
    %v6246 = vpop.f32.mrb[0].mxu0
    %v6247 = vadd.f32 0.0, %v6246
    %v6248 = vpop.f32.mrb[0].mxu0
    %v6249 = vpop.f32.mrb[0].mxu0
    %v6250 = vpop.f32.mrb[0].mxu0
    %6251 = vdwg.mxu0
    %6252 = vmatprep.subr.bf16.mxu0 0
    %6253 = vmatpush1.bf16.msra.mxu0 %v6180
    %6254 = vmatprep.subr.bf16.mxu0 0
    %6255 = vmatpush1.bf16.msra.mxu0 %v6181
    %6256 = vmatprep.subr.bf16.mxu0 0
    %6257 = vmatpush1.bf16.msra.mxu0 %v6182
    %6258 = vmatprep.subr.bf16.mxu0 0
    %6259 = vmatpush1.bf16.msra.mxu0 %v6183
    %6260 = vmatprep.subr.bf16.mxu0 0
    %6261 = vmatpush1.bf16.msra.mxu0 %v6184
    %6262 = vmatprep.subr.bf16.mxu0 0
    %6263 = vmatpush1.bf16.msra.mxu0 %v6185
    %6264 = vmatprep.subr.bf16.mxu0 0
    %6265 = vmatpush1.bf16.msra.mxu0 %v6186
    %6266 = vmatprep.subr.bf16.mxu0 0
    %6267 = vmatpush1.bf16.msra.mxu0 %v6187
    %6268 = vmatprep.subr.bf16.mxu0 0
    %6269 = vmatpush1.bf16.msra.mxu0 0
    %6270 = vmatprep.subr.bf16.mxu0 0
    %6271 = vmatpush1.bf16.msra.mxu0 0
    %6272 = vmatprep.subr.bf16.mxu0 0
    %6273 = vmatpush1.bf16.msra.mxu0 0
    %6274 = vmatprep.subr.bf16.mxu0 0
    %6275 = vmatpush1.bf16.msra.mxu0 0
    %6276 = vmatprep.subr.bf16.mxu0 0
    %6277 = vmatpush1.bf16.msra.mxu0 0
    %6278 = vmatprep.subr.bf16.mxu0 0
    %6279 = vmatpush1.bf16.msra.mxu0 0
    %6280 = vmatprep.subr.bf16.mxu0 0
    %6281 = vmatpush1.bf16.msra.mxu0 0
    %6282 = vmatprep.subr.bf16.mxu0 0
    %6283 = vmatpush1.bf16.msra.mxu0 0
    %6284 = vmatprep.mubr.bf16.mxu0 0
    %6285 = vmatmul.mubr.bf16.gmra.mrb[0].mxu0 %v6019
    %v6286 = vpop.f32.mrb[0].mxu0
    %v6287 = vadd.f32 %v6247, %v6286
    %v6288 = vpop.f32.mrb[0].mxu0
    %v6289 = vpop.f32.mrb[0].mxu0
    %v6290 = vpop.f32.mrb[0].mxu0
    %6291 = vdwg.mxu0
    %v6292 = vadd.f32 %v5998, %v6287
    %s6293 = scalar_lea.vmem [#allocation4], 4
    %v6294 = vld [vmem:[%s6293] ss:$8 sm:$0x7]
    %v6296 = vlaneseq
    %v6297 = vshrl.u32 %v6296, 7
    %v6298 = vsub.s32 0, %v6297
    %v6299 = vrot.slane %v6294, %v6298
    %v6300 = vlaneseq
    %v6301 = vshrl.u32 %v6300, 7
    %v6302 = vsub.s32 1, %v6301
    %v6303 = vrot.slane %v6294, %v6302
    %v6304 = vlaneseq
    %v6305 = vshrl.u32 %v6304, 7
    %v6306 = vsub.s32 2, %v6305
    %v6307 = vrot.slane %v6294, %v6306
    %v6311 = vpack.c.bf16 %v6299, %v6299
    %v6312 = vpack.c.bf16 %v6303, %v6303
    %v6313 = vpack.c.bf16 %v6307, %v6307
    %s6314 = scalar_lea.vmem [#allocation4], 5
    %v6315 = vld [vmem:[%s6314] ss:$8 sm:$0x7]
    %v6317 = vlaneseq
    %v6318 = vshrl.u32 %v6317, 7
    %v6319 = vsub.s32 0, %v6318
    %v6320 = vrot.slane %v6315, %v6319
    %v6321 = vlaneseq
    %v6322 = vshrl.u32 %v6321, 7
    %v6323 = vsub.s32 1, %v6322
    %v6324 = vrot.slane %v6315, %v6323
    %v6325 = vlaneseq
    %v6326 = vshrl.u32 %v6325, 7
    %v6327 = vsub.s32 2, %v6326
    %v6328 = vrot.slane %v6315, %v6327
    %v6332 = vpack.c.bf16 %v6320, %v6320
    %v6333 = vpack.c.bf16 %v6324, %v6324
    %v6334 = vpack.c.bf16 %v6328, %v6328
    %6335 = vmatprep.subr.bf16.mxu0 0
    %6336 = vmatpush1.bf16.msra.mxu0 %v5353
    %6337 = vmatprep.subr.bf16.mxu0 0
    %6338 = vmatpush1.bf16.msra.mxu0 %v5354
    %6339 = vmatprep.subr.bf16.mxu0 0
    %6340 = vmatpush1.bf16.msra.mxu0 %v5355
    %6341 = vmatprep.subr.bf16.mxu0 0
    %6342 = vmatpush1.bf16.msra.mxu0 %v5356
    %6343 = vmatprep.subr.bf16.mxu0 0
    %6344 = vmatpush1.bf16.msra.mxu0 %v5357
    %6345 = vmatprep.subr.bf16.mxu0 0
    %6346 = vmatpush1.bf16.msra.mxu0 %v5358
    %6347 = vmatprep.subr.bf16.mxu0 0
    %6348 = vmatpush1.bf16.msra.mxu0 %v5359
    %6349 = vmatprep.subr.bf16.mxu0 0
    %6350 = vmatpush1.bf16.msra.mxu0 %v5360
    %6351 = vmatprep.subr.bf16.mxu0 0
    %6352 = vmatpush1.bf16.msra.mxu0 %v5361
    %6353 = vmatprep.subr.bf16.mxu0 0
    %6354 = vmatpush1.bf16.msra.mxu0 %v5362
    %6355 = vmatprep.subr.bf16.mxu0 0
    %6356 = vmatpush1.bf16.msra.mxu0 %v5363
    %6357 = vmatprep.subr.bf16.mxu0 0
    %6358 = vmatpush1.bf16.msra.mxu0 %v5364
    %6359 = vmatprep.subr.bf16.mxu0 0
    %6360 = vmatpush1.bf16.msra.mxu0 %v5365
    %6361 = vmatprep.subr.bf16.mxu0 0
    %6362 = vmatpush1.bf16.msra.mxu0 %v5366
    %6363 = vmatprep.subr.bf16.mxu0 0
    %6364 = vmatpush1.bf16.msra.mxu0 %v5367
    %6365 = vmatprep.subr.bf16.mxu0 0
    %6366 = vmatpush1.bf16.msra.mxu0 %v5368
    %6367 = vmatprep.mubr.bf16.mxu0 %v6333
    %6368 = vmatmul.mubr.bf16.gmra.mrb[0].mxu0 %v6332
    %v6369 = vpop.f32.mrb[0].mxu0
    %v6370 = vadd.f32 0.0, %v6369
    %v6371 = vpop.f32.mrb[0].mxu0
    %v6372 = vpop.f32.mrb[0].mxu0
    %v6373 = vpop.f32.mrb[0].mxu0
    %6374 = vdwg.mxu0
    %6375 = vmatprep.subr.bf16.mxu0 0
    %6376 = vmatpush1.bf16.msra.mxu0 %v5369
    %6377 = vmatprep.subr.bf16.mxu0 0
    %6378 = vmatpush1.bf16.msra.mxu0 %v5370
    %6379 = vmatprep.subr.bf16.mxu0 0
    %6380 = vmatpush1.bf16.msra.mxu0 %v5371
    %6381 = vmatprep.subr.bf16.mxu0 0
    %6382 = vmatpush1.bf16.msra.mxu0 %v5372
    %6383 = vmatprep.subr.bf16.mxu0 0
    %6384 = vmatpush1.bf16.msra.mxu0 %v5373
    %6385 = vmatprep.subr.bf16.mxu0 0
    %6386 = vmatpush1.bf16.msra.mxu0 %v5374
    %6387 = vmatprep.subr.bf16.mxu0 0
    %6388 = vmatpush1.bf16.msra.mxu0 %v5375
    %6389 = vmatprep.subr.bf16.mxu0 0
    %6390 = vmatpush1.bf16.msra.mxu0 %v5376
    %6391 = vmatprep.subr.bf16.mxu0 0
    %6392 = vmatpush1.bf16.msra.mxu0 0
    %6393 = vmatprep.subr.bf16.mxu0 0
    %6394 = vmatpush1.bf16.msra.mxu0 0
    %6395 = vmatprep.subr.bf16.mxu0 0
    %6396 = vmatpush1.bf16.msra.mxu0 0
    %6397 = vmatprep.subr.bf16.mxu0 0
    %6398 = vmatpush1.bf16.msra.mxu0 0
    %6399 = vmatprep.subr.bf16.mxu0 0
    %6400 = vmatpush1.bf16.msra.mxu0 0
    %6401 = vmatprep.subr.bf16.mxu0 0
    %6402 = vmatpush1.bf16.msra.mxu0 0
    %6403 = vmatprep.subr.bf16.mxu0 0
    %6404 = vmatpush1.bf16.msra.mxu0 0
    %6405 = vmatprep.subr.bf16.mxu0 0
    %6406 = vmatpush1.bf16.msra.mxu0 0
    %6407 = vmatprep.mubr.bf16.mxu0 0
    %6408 = vmatmul.mubr.bf16.gmra.mrb[0].mxu0 %v6334
    %v6409 = vpop.f32.mrb[0].mxu0
    %v6410 = vadd.f32 %v6370, %v6409
    %v6411 = vpop.f32.mrb[0].mxu0
    %v6412 = vpop.f32.mrb[0].mxu0
    %v6413 = vpop.f32.mrb[0].mxu0
    %6414 = vdwg.mxu0
    %6415 = vmatprep.subr.bf16.mxu0 0
    %6416 = vmatpush1.bf16.msra.mxu0 %v5577
    %6417 = vmatprep.subr.bf16.mxu0 0
    %6418 = vmatpush1.bf16.msra.mxu0 %v5578
    %6419 = vmatprep.subr.bf16.mxu0 0
    %6420 = vmatpush1.bf16.msra.mxu0 %v5579
    %6421 = vmatprep.subr.bf16.mxu0 0
    %6422 = vmatpush1.bf16.msra.mxu0 %v5580
    %6423 = vmatprep.subr.bf16.mxu0 0
    %6424 = vmatpush1.bf16.msra.mxu0 %v5581
    %6425 = vmatprep.subr.bf16.mxu0 0
    %6426 = vmatpush1.bf16.msra.mxu0 %v5582
    %6427 = vmatprep.subr.bf16.mxu0 0
    %6428 = vmatpush1.bf16.msra.mxu0 %v5583
    %6429 = vmatprep.subr.bf16.mxu0 0
    %6430 = vmatpush1.bf16.msra.mxu0 %v5584
    %6431 = vmatprep.subr.bf16.mxu0 0
    %6432 = vmatpush1.bf16.msra.mxu0 %v5585
    %6433 = vmatprep.subr.bf16.mxu0 0
    %6434 = vmatpush1.bf16.msra.mxu0 %v5586
    %6435 = vmatprep.subr.bf16.mxu0 0
    %6436 = vmatpush1.bf16.msra.mxu0 %v5587
    %6437 = vmatprep.subr.bf16.mxu0 0
    %6438 = vmatpush1.bf16.msra.mxu0 %v5588
    %6439 = vmatprep.subr.bf16.mxu0 0
    %6440 = vmatpush1.bf16.msra.mxu0 %v5589
    %6441 = vmatprep.subr.bf16.mxu0 0
    %6442 = vmatpush1.bf16.msra.mxu0 %v5590
    %6443 = vmatprep.subr.bf16.mxu0 0
    %6444 = vmatpush1.bf16.msra.mxu0 %v5591
    %6445 = vmatprep.subr.bf16.mxu0 0
    %6446 = vmatpush1.bf16.msra.mxu0 %v5592
    %6447 = vmatprep.mubr.bf16.mxu0 %v6312
    %6448 = vmatmul.mubr.bf16.gmra.mrb[0].mxu0 %v6311
    %v6449 = vpop.f32.mrb[0].mxu0
    %v6450 = vadd.f32 %v6410, %v6449
    %v6451 = vpop.f32.mrb[0].mxu0
    %v6452 = vpop.f32.mrb[0].mxu0
    %v6453 = vpop.f32.mrb[0].mxu0
    %6454 = vdwg.mxu0
    %6455 = vmatprep.subr.bf16.mxu0 0
    %6456 = vmatpush1.bf16.msra.mxu0 %v5593
    %6457 = vmatprep.subr.bf16.mxu0 0
    %6458 = vmatpush1.bf16.msra.mxu0 %v5594
    %6459 = vmatprep.subr.bf16.mxu0 0
    %6460 = vmatpush1.bf16.msra.mxu0 %v5595
    %6461 = vmatprep.subr.bf16.mxu0 0
    %6462 = vmatpush1.bf16.msra.mxu0 %v5596
    %6463 = vmatprep.subr.bf16.mxu0 0
    %6464 = vmatpush1.bf16.msra.mxu0 %v5597
    %6465 = vmatprep.subr.bf16.mxu0 0
    %6466 = vmatpush1.bf16.msra.mxu0 %v5598
    %6467 = vmatprep.subr.bf16.mxu0 0
    %6468 = vmatpush1.bf16.msra.mxu0 %v5599
    %6469 = vmatprep.subr.bf16.mxu0 0
    %6470 = vmatpush1.bf16.msra.mxu0 %v5600
    %6471 = vmatprep.subr.bf16.mxu0 0
    %6472 = vmatpush1.bf16.msra.mxu0 0
    %6473 = vmatprep.subr.bf16.mxu0 0
    %6474 = vmatpush1.bf16.msra.mxu0 0
    %6475 = vmatprep.subr.bf16.mxu0 0
    %6476 = vmatpush1.bf16.msra.mxu0 0
    %6477 = vmatprep.subr.bf16.mxu0 0
    %6478 = vmatpush1.bf16.msra.mxu0 0
    %6479 = vmatprep.subr.bf16.mxu0 0
    %6480 = vmatpush1.bf16.msra.mxu0 0
    %6481 = vmatprep.subr.bf16.mxu0 0
    %6482 = vmatpush1.bf16.msra.mxu0 0
    %6483 = vmatprep.subr.bf16.mxu0 0
    %6484 = vmatpush1.bf16.msra.mxu0 0
    %6485 = vmatprep.subr.bf16.mxu0 0
    %6486 = vmatpush1.bf16.msra.mxu0 0
    %6487 = vmatprep.mubr.bf16.mxu0 0
    %6488 = vmatmul.mubr.bf16.gmra.mrb[0].mxu0 %v6313
    %v6489 = vpop.f32.mrb[0].mxu0
    %v6490 = vadd.f32 %v6450, %v6489
    %v6491 = vpop.f32.mrb[0].mxu0
    %v6492 = vpop.f32.mrb[0].mxu0
    %v6493 = vpop.f32.mrb[0].mxu0
    %6494 = vdwg.mxu0
    %s6495 = scalar_lea.vmem [#allocation4], 6
    %v6496 = vld [vmem:[%s6495] ss:$8 sm:$0x7]
    %v6498 = vlaneseq
    %v6499 = vshrl.u32 %v6498, 7
    %v6500 = vsub.s32 0, %v6499
    %v6501 = vrot.slane %v6496, %v6500
    %v6502 = vlaneseq
    %v6503 = vshrl.u32 %v6502, 7
    %v6504 = vsub.s32 1, %v6503
    %v6505 = vrot.slane %v6496, %v6504
    %v6506 = vlaneseq
    %v6507 = vshrl.u32 %v6506, 7
    %v6508 = vsub.s32 2, %v6507
    %v6509 = vrot.slane %v6496, %v6508
    %v6513 = vpack.c.bf16 %v6501, %v6501
    %v6514 = vpack.c.bf16 %v6505, %v6505
    %v6515 = vpack.c.bf16 %v6509, %v6509
    %6516 = vmatprep.subr.bf16.mxu0 0
    %6517 = vmatpush1.bf16.msra.mxu0 %v5870
    %6518 = vmatprep.subr.bf16.mxu0 0
    %6519 = vmatpush1.bf16.msra.mxu0 %v5871
    %6520 = vmatprep.subr.bf16.mxu0 0
    %6521 = vmatpush1.bf16.msra.mxu0 %v5872
    %6522 = vmatprep.subr.bf16.mxu0 0
    %6523 = vmatpush1.bf16.msra.mxu0 %v5873
    %6524 = vmatprep.subr.bf16.mxu0 0
    %6525 = vmatpush1.bf16.msra.mxu0 %v5874
    %6526 = vmatprep.subr.bf16.mxu0 0
    %6527 = vmatpush1.bf16.msra.mxu0 %v5875
    %6528 = vmatprep.subr.bf16.mxu0 0
    %6529 = vmatpush1.bf16.msra.mxu0 %v5876
    %6530 = vmatprep.subr.bf16.mxu0 0
    %6531 = vmatpush1.bf16.msra.mxu0 %v5877
    %6532 = vmatprep.subr.bf16.mxu0 0
    %6533 = vmatpush1.bf16.msra.mxu0 %v5878
    %6534 = vmatprep.subr.bf16.mxu0 0
    %6535 = vmatpush1.bf16.msra.mxu0 %v5879
    %6536 = vmatprep.subr.bf16.mxu0 0
    %6537 = vmatpush1.bf16.msra.mxu0 %v5880
    %6538 = vmatprep.subr.bf16.mxu0 0
    %6539 = vmatpush1.bf16.msra.mxu0 %v5881
    %6540 = vmatprep.subr.bf16.mxu0 0
    %6541 = vmatpush1.bf16.msra.mxu0 %v5882
    %6542 = vmatprep.subr.bf16.mxu0 0
    %6543 = vmatpush1.bf16.msra.mxu0 %v5883
    %6544 = vmatprep.subr.bf16.mxu0 0
    %6545 = vmatpush1.bf16.msra.mxu0 %v5884
    %6546 = vmatprep.subr.bf16.mxu0 0
    %6547 = vmatpush1.bf16.msra.mxu0 %v5885
    %6548 = vmatprep.mubr.bf16.mxu0 %v6514
    %6549 = vmatmul.mubr.bf16.gmra.mrb[0].mxu0 %v6513
    %v6550 = vpop.f32.mrb[0].mxu0
    %v6551 = vadd.f32 0.0, %v6550
    %v6552 = vpop.f32.mrb[0].mxu0
    %v6553 = vpop.f32.mrb[0].mxu0
    %v6554 = vpop.f32.mrb[0].mxu0
    %6555 = vdwg.mxu0
    %6556 = vmatprep.subr.bf16.mxu0 0
    %6557 = vmatpush1.bf16.msra.mxu0 %v5886
    %6558 = vmatprep.subr.bf16.mxu0 0
    %6559 = vmatpush1.bf16.msra.mxu0 %v5887
    %6560 = vmatprep.subr.bf16.mxu0 0
    %6561 = vmatpush1.bf16.msra.mxu0 %v5888
    %6562 = vmatprep.subr.bf16.mxu0 0
    %6563 = vmatpush1.bf16.msra.mxu0 %v5889
    %6564 = vmatprep.subr.bf16.mxu0 0
    %6565 = vmatpush1.bf16.msra.mxu0 %v5890
    %6566 = vmatprep.subr.bf16.mxu0 0
    %6567 = vmatpush1.bf16.msra.mxu0 %v5891
    %6568 = vmatprep.subr.bf16.mxu0 0
    %6569 = vmatpush1.bf16.msra.mxu0 %v5892
    %6570 = vmatprep.subr.bf16.mxu0 0
    %6571 = vmatpush1.bf16.msra.mxu0 %v5893
    %6572 = vmatprep.subr.bf16.mxu0 0
    %6573 = vmatpush1.bf16.msra.mxu0 0
    %6574 = vmatprep.subr.bf16.mxu0 0
    %6575 = vmatpush1.bf16.msra.mxu0 0
    %6576 = vmatprep.subr.bf16.mxu0 0
    %6577 = vmatpush1.bf16.msra.mxu0 0
    %6578 = vmatprep.subr.bf16.mxu0 0
    %6579 = vmatpush1.bf16.msra.mxu0 0
    %6580 = vmatprep.subr.bf16.mxu0 0
    %6581 = vmatpush1.bf16.msra.mxu0 0
    %6582 = vmatprep.subr.bf16.mxu0 0
    %6583 = vmatpush1.bf16.msra.mxu0 0
    %6584 = vmatprep.subr.bf16.mxu0 0
    %6585 = vmatpush1.bf16.msra.mxu0 0
    %6586 = vmatprep.subr.bf16.mxu0 0
    %6587 = vmatpush1.bf16.msra.mxu0 0
    %6588 = vmatprep.mubr.bf16.mxu0 0
    %6589 = vmatmul.mubr.bf16.gmra.mrb[0].mxu0 %v6515
    %v6590 = vpop.f32.mrb[0].mxu0
    %v6591 = vadd.f32 %v6551, %v6590
    %v6592 = vpop.f32.mrb[0].mxu0
    %v6593 = vpop.f32.mrb[0].mxu0
    %v6594 = vpop.f32.mrb[0].mxu0
    %6595 = vdwg.mxu0
    %v6596 = vadd.f32 %v6490, %v6591
    %s6597 = scalar_lea.vmem [#allocation4], 7
    %v6598 = vld [vmem:[%s6597] ss:$8 sm:$0x7]
    %v6600 = vlaneseq
    %v6601 = vshrl.u32 %v6600, 7
    %v6602 = vsub.s32 0, %v6601
    %v6603 = vrot.slane %v6598, %v6602
    %v6604 = vlaneseq
    %v6605 = vshrl.u32 %v6604, 7
    %v6606 = vsub.s32 1, %v6605
    %v6607 = vrot.slane %v6598, %v6606
    %v6608 = vlaneseq
    %v6609 = vshrl.u32 %v6608, 7
    %v6610 = vsub.s32 2, %v6609
    %v6611 = vrot.slane %v6598, %v6610
    %v6615 = vpack.c.bf16 %v6603, %v6603
    %v6616 = vpack.c.bf16 %v6607, %v6607
    %v6617 = vpack.c.bf16 %v6611, %v6611
    %6618 = vmatprep.subr.bf16.mxu0 0
    %6619 = vmatpush1.bf16.msra.mxu0 %v6164
    %6620 = vmatprep.subr.bf16.mxu0 0
    %6621 = vmatpush1.bf16.msra.mxu0 %v6165
    %6622 = vmatprep.subr.bf16.mxu0 0
    %6623 = vmatpush1.bf16.msra.mxu0 %v6166
    %6624 = vmatprep.subr.bf16.mxu0 0
    %6625 = vmatpush1.bf16.msra.mxu0 %v6167
    %6626 = vmatprep.subr.bf16.mxu0 0
    %6627 = vmatpush1.bf16.msra.mxu0 %v6168
    %6628 = vmatprep.subr.bf16.mxu0 0
    %6629 = vmatpush1.bf16.msra.mxu0 %v6169
    %6630 = vmatprep.subr.bf16.mxu0 0
    %6631 = vmatpush1.bf16.msra.mxu0 %v6170
    %6632 = vmatprep.subr.bf16.mxu0 0
    %6633 = vmatpush1.bf16.msra.mxu0 %v6171
    %6634 = vmatprep.subr.bf16.mxu0 0
    %6635 = vmatpush1.bf16.msra.mxu0 %v6172
    %6636 = vmatprep.subr.bf16.mxu0 0
    %6637 = vmatpush1.bf16.msra.mxu0 %v6173
    %6638 = vmatprep.subr.bf16.mxu0 0
    %6639 = vmatpush1.bf16.msra.mxu0 %v6174
    %6640 = vmatprep.subr.bf16.mxu0 0
    %6641 = vmatpush1.bf16.msra.mxu0 %v6175
    %6642 = vmatprep.subr.bf16.mxu0 0
    %6643 = vmatpush1.bf16.msra.mxu0 %v6176
    %6644 = vmatprep.subr.bf16.mxu0 0
    %6645 = vmatpush1.bf16.msra.mxu0 %v6177
    %6646 = vmatprep.subr.bf16.mxu0 0
    %6647 = vmatpush1.bf16.msra.mxu0 %v6178
    %6648 = vmatprep.subr.bf16.mxu0 0
    %6649 = vmatpush1.bf16.msra.mxu0 %v6179
    %6650 = vmatprep.mubr.bf16.mxu0 %v6616
    %6651 = vmatmul.mubr.bf16.gmra.mrb[0].mxu0 %v6615
    %v6652 = vpop.f32.mrb[0].mxu0
    %v6653 = vadd.f32 0.0, %v6652
    %v6654 = vpop.f32.mrb[0].mxu0
    %v6655 = vpop.f32.mrb[0].mxu0
    %v6656 = vpop.f32.mrb[0].mxu0
    %6657 = vdwg.mxu0
    %6658 = vmatprep.subr.bf16.mxu0 0
    %6659 = vmatpush1.bf16.msra.mxu0 %v6180
    %6660 = vmatprep.subr.bf16.mxu0 0
    %6661 = vmatpush1.bf16.msra.mxu0 %v6181
    %6662 = vmatprep.subr.bf16.mxu0 0
    %6663 = vmatpush1.bf16.msra.mxu0 %v6182
    %6664 = vmatprep.subr.bf16.mxu0 0
    %6665 = vmatpush1.bf16.msra.mxu0 %v6183
    %6666 = vmatprep.subr.bf16.mxu0 0
    %6667 = vmatpush1.bf16.msra.mxu0 %v6184
    %6668 = vmatprep.subr.bf16.mxu0 0
    %6669 = vmatpush1.bf16.msra.mxu0 %v6185
    %6670 = vmatprep.subr.bf16.mxu0 0
    %6671 = vmatpush1.bf16.msra.mxu0 %v6186
    %6672 = vmatprep.subr.bf16.mxu0 0
    %6673 = vmatpush1.bf16.msra.mxu0 %v6187
    %6674 = vmatprep.subr.bf16.mxu0 0
    %6675 = vmatpush1.bf16.msra.mxu0 0
    %6676 = vmatprep.subr.bf16.mxu0 0
    %6677 = vmatpush1.bf16.msra.mxu0 0
    %6678 = vmatprep.subr.bf16.mxu0 0
    %6679 = vmatpush1.bf16.msra.mxu0 0
    %6680 = vmatprep.subr.bf16.mxu0 0
    %6681 = vmatpush1.bf16.msra.mxu0 0
    %6682 = vmatprep.subr.bf16.mxu0 0
    %6683 = vmatpush1.bf16.msra.mxu0 0
    %6684 = vmatprep.subr.bf16.mxu0 0
    %6685 = vmatpush1.bf16.msra.mxu0 0
    %6686 = vmatprep.subr.bf16.mxu0 0
    %6687 = vmatpush1.bf16.msra.mxu0 0
    %6688 = vmatprep.subr.bf16.mxu0 0
    %6689 = vmatpush1.bf16.msra.mxu0 0
    %6690 = vmatprep.mubr.bf16.mxu0 0
    %6691 = vmatmul.mubr.bf16.gmra.mrb[0].mxu0 %v6617
    %v6692 = vpop.f32.mrb[0].mxu0
    %v6693 = vadd.f32 %v6653, %v6692
    %v6694 = vpop.f32.mrb[0].mxu0
    %v6695 = vpop.f32.mrb[0].mxu0
    %v6696 = vpop.f32.mrb[0].mxu0
    %6697 = vdwg.mxu0
    %v6698 = vadd.f32 %v6596, %v6693
    %v6699 = vld [vmem:[#allocation22] sm:$0x1]
    %v6700 = vld [vmem:[#allocation22 + $0x1] sm:$0x1]
    %v6701 = vld [vmem:[#allocation22 + $0x2] sm:$0x1]
    %v6702 = vadd.f32 %v6292, %v6699
    %v6703 = vadd.f32 %v6698, %v6699
    %v6704 = vadd.f32 %v6702, 0.0
    %v6705 = vadd.f32 %v6703, 0.0
    %v6706 = vadd.f32 %v6704, %v6705
    %v6707 = vmul.f32 %v6706, 0.5
    %v6708 = vsub.f32 %v6702, %v6707
    %v6709 = vmul.f32 %v6708, %v6708
    %v6710 = vadd.f32 %v6709, 0.0
    %v6711 = vsub.f32 %v6703, %v6707
    %v6712 = vmul.f32 %v6711, %v6711
    %v6713 = vadd.f32 %v6712, 0.0
    %v6714 = vadd.f32 %v6710, %v6713
    %v6715 = vmul.f32 %v6714, 0.5
    %v6716 = vadd.f32 %v6715, 1e-05
    %v6717 = vrsqrt.pop %v6716
    %v6718 = vmul.f32 %v6700, %v6717
    %v6719 = vmul.f32 %v6708, %v6718
    %v6720 = vadd.f32 %v6719, %v6701
    %vm6721 = vcmp.ge.f32.partialorder %v6720, 0.0
    %v6722 = vmul.f32 %v6720, 0.2
    %v6723 = vsel %vm6721, %v6720, %v6722
    %v6724 = vmul.f32 %v6711, %v6718
    %v6725 = vadd.f32 %v6724, %v6701
    %vm6726 = vcmp.ge.f32.partialorder %v6725, 0.0
    %v6727 = vmul.f32 %v6725, 0.2
    %v6728 = vsel %vm6726, %v6725, %v6727
    %v6729 = vld [vmem:[#allocation23] sm:$0x1]
    %v6730 = vld [vmem:[#allocation25] sm:$0x1]
    %v6731 = vld [vmem:[#allocation5] sm:$0x1]
    %v6732 = vmul.f32 %v6723, %v6729
    %vm6733 = vcmask 1040384
    %v6734 = vsel %vm6733, %v6732, 0.0
    %6735 = vadd.xlane.f32.xlu0 %v6734
    %v6736 = vpop.xlane.xlu0 %6735
    %v6737 = vmul.f32 %v224, %v6730
    %v6738 = vsel %vm6733, %v6737, 0.0
    %6739 = vadd.xlane.f32.xlu0 %v6738
    %v6740 = vpop.xlane.xlu0 %6739
    %v6741 = vadd.f32 %v6736, %v6740
    %v6742 = vadd.f32 %v6741, %v6731
    %vm6743 = vcmask 0
    %6744 = vst.msk [vmem:[%s19] sm:$0x1] %vm6743, %v6742
    %v6745 = vxor.u32 %v6742, 2147483648
    %v6746 = vmul.f32 %v6745, 1.442695
    %v6747 = vpow.pop %v6746
    %v6748 = vadd.f32 %v6747, 1.0
    %v6749 = vrcp.pop %v6748
    %v6750 = vmul.f32 1.0, %v6749
    %6751 = vst.msk [vmem:[%s18] sm:$0x1] %vm6743, %v6750
    %v6752 = vmul.f32 %v6728, %v6729
    %v6753 = vsel %vm6733, %v6752, 0.0
    %6754 = vadd.xlane.f32.xlu0 %v6753
    %v6755 = vpop.xlane.xlu0 %6754
    %v6757 = vlaneseq
    %v6758 = vshrl.u32 %v6757, 7
    %v6759 = vsub.s32 0, %v6758
    %v6760 = vrot.slane %v6730, %v6759
    %v6762 = vmul.f32 %v224, %v6760
    %vm6763 = vcmask 1041409
    %v6764 = vsel %vm6763, %v6762, 0.0
    %6765 = vadd.xlane.f32.xlu0 %v6764
    %v6766 = vpop.xlane.xlu0 %6765
    %v6768 = vrot.slane %v6766, 1
    %v6770 = vadd.f32 %v6755, %v6768
    %v6771 = vadd.f32 %v6770, %v6731
    %6772 = vst.msk [vmem:[%s19 + $0x1] sm:$0x1] %vm6743, %v6771
    %v6773 = vxor.u32 %v6771, 2147483648
    %v6774 = vmul.f32 %v6773, 1.442695
    %v6775 = vpow.pop %v6774
    %v6776 = vadd.f32 %v6775, 1.0
    %v6777 = vrcp.pop %v6776
    %v6778 = vmul.f32 1.0, %v6777
    %6779 = vst.msk [vmem:[%s18 + $0x1] sm:$0x1] %vm6743, %v6778
    // Predicated region
    $region122: #{discriminator_forward.1} parent=1 // pred_check
      _
    $region123: #{discriminator_forward.1} parent=1 // pred_check_branch
      %6781 = sbr.rel (0) target = $region125
    $region124: #{discriminator_forward.1} parent=1 // pred_region
      _
    $region125: #{discriminator_forward.1} parent=1 // pred_fallthru
      _
    // Predicated region
    $region126: #{discriminator_forward.1} parent=1 // pred_check
      _
    $region127: #{discriminator_forward.1} parent=1 // pred_check_branch
      %6783 = sbr.rel (0) target = $region129
    $region128: #{discriminator_forward.1} parent=1 // pred_region
      _
    $region129: #{discriminator_forward.1} parent=1 // pred_fallthru
      _
    // Predicated region
    $region130: #{discriminator_forward.1} parent=1 // pred_check
      _
    $region131: #{discriminator_forward.1} parent=1 // pred_check_branch
      %6785 = sbr.rel (0) target = $region133
    $region132: #{discriminator_forward.1} parent=1 // pred_region
      _
    $region133: #{discriminator_forward.1} parent=1 // pred_fallthru
      _
    // Predicated region
    $region134: #{discriminator_forward.1} parent=1 // pred_check
      _
    $region135: #{discriminator_forward.1} parent=1 // pred_check_branch
      %6787 = sbr.rel (0) target = $region137
    $region136: #{discriminator_forward.1} parent=1 // pred_region
      _
    $region137: #{discriminator_forward.1} parent=1 // pred_fallthru
      _
    // Predicated region
    $region138: #{discriminator_forward.1} parent=1 // pred_check
      _
    $region139: #{discriminator_forward.1} parent=1 // pred_check_branch
      %6789 = sbr.rel (0) target = $region141
    $region140: #{discriminator_forward.1} parent=1 // pred_region
      _
    $region141: #{discriminator_forward.1} parent=1 // pred_fallthru
      _
    // Predicated region
    $region142: #{discriminator_forward.1} parent=1 // pred_check
      _
    $region143: #{discriminator_forward.1} parent=1 // pred_check_branch
      %6791 = sbr.rel (0) target = $region145
    $region144: #{discriminator_forward.1} parent=1 // pred_region
      _
    $region145: #{discriminator_forward.1} parent=1 // pred_fallthru
      _
    %6792 = vsyncpa [#allocation7], 1
    %6793 = vsyncpa [#allocation9], 1
    %6794 = vsyncpa [#allocation12], 1
    %6795 = vsyncpa [#allocation15], 1
    %6796 = vsyncpa [#allocation18], 1
    %6797 = vsyncpa [#allocation21], 1
    %6798 = vsyncpa [#allocation24], 1

</llo_original>
